<compile_context>
chip_gen: v7x
topology: tpu7x:2x2x1
jax: 0.10.0
libtpu: 0.0.40
codegen_flags: <defaults>
</compile_context>

<pallas_src>
import jax
import jax.numpy as jnp
from jax.experimental import pallas as pl

# ---------------- small, self-consistent configuration ----------------
# Original defaults: channels=(64, 32, 16), encoded_shape=(1, 64, 8, 8, 8).
# Scaled down here: channels=(16, 8, 4), encoded_shape=(1, 4, 4, 4, 4).
CHANNELS = (16, 8, 4)
OUTPUT_CHANNELS = 1
KERNEL_SIZE = 3
STRIDE = 1
PADDING = KERNEL_SIZE // 2          # = 1
OUTPUT_PADDING = 0                  # see TODO(synk) above
ENCODED_SHAPE = (1, 4, 4, 4, 4)     # (N, C, D, H, W); C matches reversed(CHANNELS)[0]
BN_EPS = 1e-5

# encoder_features list (as passed to forward); forward consumes [-1], [-2], [-3]:
#   encoder_features[2] : (1, 4,  6,  6,  6)   used at stage 1
#   encoder_features[1] : (1, 8,  8,  8,  8)   used at stage 2
#   encoder_features[0] : (1, 2, 10, 10, 10)   used at stage 3
EF_SHAPES = ((1, 2, 10, 10, 10), (1, 8, 8, 8, 8), (1, 4, 6, 6, 6))


# ---------------------------- Pallas kernels ----------------------------
def _bn_relu(x, gamma, beta):
    """Training-mode BatchNorm over the M (lane) axis + ReLU.  x: (C, M)."""
    inv_m = 1.0 / x.shape[1]
    s1 = jnp.sum(x, axis=1, keepdims=True)            # one sweep: sum
    s2 = jnp.sum(x * x, axis=1, keepdims=True)        #            sum of squares
    mean = s1 * inv_m
    var = s2 * inv_m - mean * mean                    # biased batch variance
    inv = jax.lax.rsqrt(var + BN_EPS)
    return jnp.maximum((x - mean) * (inv * gamma) + beta, 0.0)


def _stage_bn_relu_kernel(p_ref, w_ref, b_ref, ef_ref, g_ref, be_ref, o_ref):
    """Fused: conv-transpose (im2col matmul) + bias + concat + BatchNorm + ReLU.

    p_ref:  (K^3*Cin, M) im2col patches          w_ref: (Cout, K^3*Cin)
    b_ref:  (Cout, 1)                            ef_ref: (Cef, M)
    g_ref / be_ref: (Cout+Cef, 1)                o_ref: (Cout+Cef, M)
    """
    cout = w_ref.shape[0]
    conv = jnp.dot(w_ref[...], p_ref[...],
                   preferred_element_type=jnp.float32) + b_ref[...]
    g = g_ref[...]
    be = be_ref[...]
    # Concat realized as two adjacent row-range stores into one VMEM output ref.
    o_ref[0:cout, :] = _bn_relu(conv, g[0:cout], be[0:cout])
    o_ref[cout:, :] = _bn_relu(ef_ref[...], g[cout:], be[cout:])


def _stage_sigmoid_kernel(p_ref, w_ref, b_ref, ef_ref, o_ref):
    """Fused: conv-transpose (im2col matmul) + bias + concat + Sigmoid."""
    cout = w_ref.shape[0]
    conv = jnp.dot(w_ref[...], p_ref[...],
                   preferred_element_type=jnp.float32) + b_ref[...]
    o_ref[0:cout, :] = jax.nn.sigmoid(conv)
    o_ref[cout:, :] = jax.nn.sigmoid(ef_ref[...])


# ---------------------------- Pallas wrappers ----------------------------
def stage_bn_relu(patches, w_mat, bias, ef2d, gamma, beta):
    ctot, m = gamma.shape[0], patches.shape[1]
    return pl.pallas_call(
        _stage_bn_relu_kernel,
        out_shape=jax.ShapeDtypeStruct((ctot, m), jnp.float32),
    )(patches, w_mat, bias, ef2d, gamma, beta)


def stage_sigmoid(patches, w_mat, bias, ef2d):
    cout, cef, m = w_mat.shape[0], ef2d.shape[0], patches.shape[1]
    return pl.pallas_call(
        _stage_sigmoid_kernel,
        out_shape=jax.ShapeDtypeStruct((cout + cef, m), jnp.float32),
    )(patches, w_mat, bias, ef2d)


# ----------------- XLA glue: resize / pad / im2col (pure data movement) -----------------
def _interp_matrix(out_size, in_size):
    """Per-axis linear interpolation matrix matching F.interpolate(align_corners=False)."""
    i = jnp.arange(out_size, dtype=jnp.float32)
    scale = in_size / out_size
    src = jnp.maximum(scale * (i + 0.5) - 0.5, 0.0)
    lo = jnp.floor(src)
    lam = src - lo
    lo_i = jnp.clip(lo.astype(jnp.int32), 0, in_size - 1)
    hi_i = jnp.clip(lo_i + 1, 0, in_size - 1)
    rows = jnp.arange(out_size)
    A = jnp.zeros((out_size, in_size), jnp.float32)
    A = A.at[rows, lo_i].add(1.0 - lam)
    A = A.at[rows, hi_i].add(lam)
    return A


def trilinear_resize(x, out_spatial):
    """x: (C, D, H, W) -> (C, D', H', W'); separable linear resize == trilinear.

    Tiny constant-foldable einsums; intentionally left to XLA (no pallas_call)."""
    d, h, w = x.shape[1:]
    dn, hn, wn = out_spatial
    if dn != d:
        x = jnp.einsum('od,cdhw->cohw', _interp_matrix(dn, d), x)
    if hn != h:
        x = jnp.einsum('oh,cdhw->cdow', _interp_matrix(hn, h), x)
    if wn != w:
        x = jnp.einsum('ow,cdhw->cdho', _interp_matrix(wn, w), x)
    return x


def _im2col(x, k, pad):
    """x: (C, D, H, W) -> (K^3*C, D*H*W); tap-major / channel-minor row order,
    matching the prepared weight matrix layout."""
    c, d, h, w = x.shape
    xp = jnp.pad(x, ((0, 0), (pad, pad), (pad, pad), (pad, pad)))
    taps = []
    for kd in range(k):
        for kh in range(k):
            for kw in range(k):
                taps.append(
                    xp[:, kd:kd + d, kh:kh + h, kw:kw + w].reshape(c, d * h * w))
    return jnp.concatenate(taps, axis=0)


# ---------------------------- full forward ----------------------------
def decoder3d_forward(x_flat, encoder_features, params):
    # UnFlatten -> channels-first (C, D, H, W); batch is 1.
    x = x_flat.reshape(ENCODED_SHAPE)[0]
    efs = [e[0] for e in encoder_features]
    pad = KERNEL_SIZE - 1 - PADDING        # stride-1 conv-transpose == correlation
                                           # with flipped weights and pad K-1-P

    def stage(x, ef, w, b, g=None, be=None):
        x = trilinear_resize(x, ef.shape[1:])
        p = _im2col(x, KERNEL_SIZE, pad)
        ef2 = ef.reshape(ef.shape[0], -1)
        if g is None:
            y = stage_sigmoid(p, w, b, ef2)
        else:
            y = stage_bn_relu(p, w, b, ef2, g, be)
        return y.reshape(y.shape[0], *ef.shape[1:])

    # stage 1: interpolate -> ConvT -> cat -> BN -> ReLU (one fused kernel)
    x = stage(x, efs[-1], params["w1"], params["b1"], params["g1"], params["be1"])
    # stage 2
    x = stage(x, efs[-2], params["w2"], params["b2"], params["g2"], params["be2"])
    # stage 3: interpolate -> ConvT -> cat -> Sigmoid (one fused kernel)
    x = stage(x, efs[-3], params["w3"], params["b3"])

    return x[None]                         # back to (1, C, D, H, W)


# ---------------------------- parameter init / prep ----------------------------
def init_params(key):
    """Raw parameters in PyTorch layouts: ConvTranspose3d weight (Cin, Cout, K, K, K)."""
    rc = list(reversed(CHANNELS))                          # [4, 8, 16]
    ef_ch = [EF_SHAPES[2][1], EF_SHAPES[1][1], EF_SHAPES[0][1]]  # [4, 8, 2] per stage
    K = KERNEL_SIZE
    ks = jax.random.split(key, 10)

    c1_in, c1_out = rc[0], rc[1]                           # 4 -> 8
    bn1_c = c1_out + ef_ch[0]                              # 12 (post-concat)
    c2_in, c2_out = bn1_c, rc[2]                           # 12 -> 16
    bn2_c = c2_out + ef_ch[1]                              # 24 (post-concat)
    c3_in, c3_out = bn2_c, OUTPUT_CHANNELS                 # 24 -> 1

    def w(k, cin, cout):
        return 0.1 * jax.random.normal(k, (cin, cout, K, K, K), jnp.float32)

    return {
        "w1": w(ks[0], c1_in, c1_out),
        "b1": 0.1 * jax.random.normal(ks[1], (c1_out,), jnp.float32),
        "g1": 1.0 + 0.1 * jax.random.normal(ks[2], (bn1_c,), jnp.float32),
        "be1": 0.1 * jax.random.normal(ks[3], (bn1_c,), jnp.float32),
        "w2": w(ks[4], c2_in, c2_out),
        "b2": 0.1 * jax.random.normal(ks[5], (c2_out,), jnp.float32),
        "g2": 1.0 + 0.1 * jax.random.normal(ks[6], (bn2_c,), jnp.float32),
        "be2": 0.1 * jax.random.normal(ks[7], (bn2_c,), jnp.float32),
        "w3": w(ks[8], c3_in, c3_out),
        "b3": 0.1 * jax.random.normal(ks[9], (c3_out,), jnp.float32),
    }


def prepare_params(raw):
    """One-time packing (hoisted out of the forward path)."""
    k = KERNEL_SIZE

    def prep_w(w):
        # (Cin, Cout, K, K, K) -> (Cout, K^3*Cin); conv-transpose == correlation
        # with spatially flipped weights. Column order = (kd, kh, kw, cin),
        # matching _im2col's row order.
        cin, cout = w.shape[0], w.shape[1]
        w_flip = w[:, :, ::-1, ::-1, ::-1]
        return jnp.transpose(w_flip, (1, 2, 3, 4, 0)).reshape(cout, k * k * k * cin)

    def col(v):
        return v.reshape(-1, 1).astype(jnp.float32)

    return {
        "w1": prep_w(raw["w1"]), "b1": col(raw["b1"]),
        "g1": col(raw["g1"]), "be1": col(raw["be1"]),
        "w2": prep_w(raw["w2"]), "b2": col(raw["b2"]),
        "g2": col(raw["g2"]), "be2": col(raw["be2"]),
        "w3": prep_w(raw["w3"]), "b3": col(raw["b3"]),
    }


if __name__ == "__main__":
    root = jax.random.PRNGKey(0)
    k_params, k_x, k_e0, k_e1, k_e2 = jax.random.split(root, 5)

    params = prepare_params(init_params(k_params))   # executed once, outside jit

    n_lat = 1
    for d in ENCODED_SHAPE:
        n_lat *= d
    x = jax.random.normal(k_x, (1, n_lat), jnp.float32)    # flattened latent -> UnFlatten

    encoder_features = (
        jax.random.normal(k_e0, EF_SHAPES[0], jnp.float32),
        jax.random.normal(k_e1, EF_SHAPES[1], jnp.float32),
        jax.random.normal(k_e2, EF_SHAPES[2], jnp.float32),
    )

    fwd = jax.jit(decoder3d_forward)
    out = jax.block_until_ready(fwd(x, encoder_features, params))

    expected = (1, OUTPUT_CHANNELS + EF_SHAPES[0][1]) + EF_SHAPES[0][2:]
    assert out.shape == expected, (out.shape, expected)
    assert bool(jnp.all(jnp.isfinite(out)))
    print("KERNEL_OK")
</pallas_src>

<mosaic_0001>
module attributes {stable_mosaic.version = 11 : i64} {
  func.func @_stage_bn_relu_kernel(%arg0: memref<108x216xf32, #tpu.memory_space<vmem>>, %arg1: memref<8x108xf32, #tpu.memory_space<vmem>>, %arg2: memref<8x1xf32, #tpu.memory_space<vmem>>, %arg3: memref<4x216xf32, #tpu.memory_space<vmem>>, %arg4: memref<12x1xf32, #tpu.memory_space<vmem>>, %arg5: memref<12x1xf32, #tpu.memory_space<vmem>>, %arg6: memref<12x216xf32, #tpu.memory_space<vmem>>) attributes {dimension_semantics = [], scalar_prefetch = 0 : i64, scratch_operands = 0 : i64, tpu.core_type = #tpu.core_type<tc>} {
    %c0 = arith.constant 0 : index
    %c0_0 = arith.constant 0 : index
    %0 = vector.load %arg1[%c0, %c0_0] : memref<8x108xf32, #tpu.memory_space<vmem>>, vector<8x108xf32>
    %c0_1 = arith.constant 0 : index
    %c0_2 = arith.constant 0 : index
    %1 = vector.load %arg0[%c0_1, %c0_2] : memref<108x216xf32, #tpu.memory_space<vmem>>, vector<108x216xf32>
    %cst = arith.constant dense<0.000000e+00> : vector<8x216xf32>
    %2 = tpu.matmul %0, %1, %cst {dimension_numbers = #tpu.dot_dimension_numbers<[1], [0], [0], [1], [0, 0, 1, 1], [], []>} : vector<8x108xf32>, vector<108x216xf32>, vector<8x216xf32> -> vector<8x216xf32>
    %c0_3 = arith.constant 0 : index
    %c0_4 = arith.constant 0 : index
    %3 = vector.load %arg2[%c0_3, %c0_4] : memref<8x1xf32, #tpu.memory_space<vmem>>, vector<8x1xf32>
    %4 = vector.broadcast %3 : vector<8x1xf32> to vector<8x216xf32>
    %5 = arith.addf %2, %4 : vector<8x216xf32>
    %c0_5 = arith.constant 0 : index
    %c0_6 = arith.constant 0 : index
    %6 = vector.load %arg4[%c0_5, %c0_6] : memref<12x1xf32, #tpu.memory_space<vmem>>, vector<12x1xf32>
    %c0_7 = arith.constant 0 : index
    %c0_8 = arith.constant 0 : index
    %7 = vector.load %arg5[%c0_7, %c0_8] : memref<12x1xf32, #tpu.memory_space<vmem>>, vector<12x1xf32>
    %8 = vector.extract_strided_slice %6 {offsets = [0, 0], sizes = [8, 1], strides = [1, 1]} : vector<12x1xf32> to vector<8x1xf32>
    %9 = vector.extract_strided_slice %7 {offsets = [0, 0], sizes = [8, 1], strides = [1, 1]} : vector<12x1xf32> to vector<8x1xf32>
    %cst_9 = arith.constant dense<0.000000e+00> : vector<8xf32>
    %10 = vector.multi_reduction <add>, %5, %cst_9 [1] : vector<8x216xf32> to vector<8xf32>
    %11 = vector.shape_cast %10 : vector<8xf32> to vector<8x1xf32>
    %12 = arith.mulf %5, %5 : vector<8x216xf32>
    %cst_10 = arith.constant dense<0.000000e+00> : vector<8xf32>
    %13 = vector.multi_reduction <add>, %12, %cst_10 [1] : vector<8x216xf32> to vector<8xf32>
    %14 = vector.shape_cast %13 : vector<8xf32> to vector<8x1xf32>
    %cst_11 = arith.constant 0.00462962966 : f32
    %15 = vector.broadcast %cst_11 : f32 to vector<8x1xf32>
    %16 = arith.mulf %11, %15 : vector<8x1xf32>
    %cst_12 = arith.constant 0.00462962966 : f32
    %17 = vector.broadcast %cst_12 : f32 to vector<8x1xf32>
    %18 = arith.mulf %14, %17 : vector<8x1xf32>
    %19 = arith.mulf %16, %16 : vector<8x1xf32>
    %20 = arith.subf %18, %19 : vector<8x1xf32>
    %cst_13 = arith.constant 9.99999974E-6 : f32
    %21 = vector.broadcast %cst_13 : f32 to vector<8x1xf32>
    %22 = arith.addf %20, %21 : vector<8x1xf32>
    %23 = math.rsqrt %22 : vector<8x1xf32>
    %24 = vector.broadcast %16 : vector<8x1xf32> to vector<8x216xf32>
    %25 = arith.subf %5, %24 : vector<8x216xf32>
    %26 = arith.mulf %23, %8 : vector<8x1xf32>
    %27 = vector.broadcast %26 : vector<8x1xf32> to vector<8x216xf32>
    %28 = arith.mulf %25, %27 : vector<8x216xf32>
    %29 = vector.broadcast %9 : vector<8x1xf32> to vector<8x216xf32>
    %30 = arith.addf %28, %29 : vector<8x216xf32>
    %cst_14 = arith.constant 0.000000e+00 : f32
    %31 = vector.broadcast %cst_14 : f32 to vector<8x216xf32>
    %32 = arith.maximumf %30, %31 : vector<8x216xf32>
    %c0_15 = arith.constant 0 : index
    %c0_16 = arith.constant 0 : index
    %33 = vector.load %arg6[%c0_15, %c0_16] : memref<12x216xf32, #tpu.memory_space<vmem>>, vector<8x216xf32>
    tpu.vector_store %arg6[%c0_15, %c0_16], %32 {strides = array<i32>} : memref<12x216xf32, #tpu.memory_space<vmem>>, vector<8x216xf32>,
    %c0_17 = arith.constant 0 : index
    %c0_18 = arith.constant 0 : index
    %34 = vector.load %arg3[%c0_17, %c0_18] : memref<4x216xf32, #tpu.memory_space<vmem>>, vector<4x216xf32>
    %35 = vector.extract_strided_slice %6 {offsets = [8, 0], sizes = [4, 1], strides = [1, 1]} : vector<12x1xf32> to vector<4x1xf32>
    %36 = vector.extract_strided_slice %7 {offsets = [8, 0], sizes = [4, 1], strides = [1, 1]} : vector<12x1xf32> to vector<4x1xf32>
    %cst_19 = arith.constant dense<0.000000e+00> : vector<4xf32>
    %37 = vector.multi_reduction <add>, %34, %cst_19 [1] : vector<4x216xf32> to vector<4xf32>
    %38 = vector.shape_cast %37 : vector<4xf32> to vector<4x1xf32>
    %39 = arith.mulf %34, %34 : vector<4x216xf32>
    %cst_20 = arith.constant dense<0.000000e+00> : vector<4xf32>
    %40 = vector.multi_reduction <add>, %39, %cst_20 [1] : vector<4x216xf32> to vector<4xf32>
    %41 = vector.shape_cast %40 : vector<4xf32> to vector<4x1xf32>
    %cst_21 = arith.constant 0.00462962966 : f32
    %42 = vector.broadcast %cst_21 : f32 to vector<4x1xf32>
    %43 = arith.mulf %38, %42 : vector<4x1xf32>
    %cst_22 = arith.constant 0.00462962966 : f32
    %44 = vector.broadcast %cst_22 : f32 to vector<4x1xf32>
    %45 = arith.mulf %41, %44 : vector<4x1xf32>
    %46 = arith.mulf %43, %43 : vector<4x1xf32>
    %47 = arith.subf %45, %46 : vector<4x1xf32>
    %cst_23 = arith.constant 9.99999974E-6 : f32
    %48 = vector.broadcast %cst_23 : f32 to vector<4x1xf32>
    %49 = arith.addf %47, %48 : vector<4x1xf32>
    %50 = math.rsqrt %49 : vector<4x1xf32>
    %51 = vector.broadcast %43 : vector<4x1xf32> to vector<4x216xf32>
    %52 = arith.subf %34, %51 : vector<4x216xf32>
    %53 = arith.mulf %50, %35 : vector<4x1xf32>
    %54 = vector.broadcast %53 : vector<4x1xf32> to vector<4x216xf32>
    %55 = arith.mulf %52, %54 : vector<4x216xf32>
    %56 = vector.broadcast %36 : vector<4x1xf32> to vector<4x216xf32>
    %57 = arith.addf %55, %56 : vector<4x216xf32>
    %cst_24 = arith.constant 0.000000e+00 : f32
    %58 = vector.broadcast %cst_24 : f32 to vector<4x216xf32>
    %59 = arith.maximumf %57, %58 : vector<4x216xf32>
    %c8 = arith.constant 8 : index
    %c0_25 = arith.constant 0 : index
    %60 = vector.load %arg6[%c8, %c0_25] : memref<12x216xf32, #tpu.memory_space<vmem>>, vector<4x216xf32>
    tpu.vector_store %arg6[%c8, %c0_25], %59 {strides = array<i32>} : memref<12x216xf32, #tpu.memory_space<vmem>>, vector<4x216xf32>,
    return
  }
}

module attributes {stable_mosaic.version = 11 : i64} {
  func.func @_stage_bn_relu_kernel(%arg0: memref<324x512xf32, #tpu.memory_space<vmem>>, %arg1: memref<16x324xf32, #tpu.memory_space<vmem>>, %arg2: memref<16x1xf32, #tpu.memory_space<vmem>>, %arg3: memref<8x512xf32, #tpu.memory_space<vmem>>, %arg4: memref<24x1xf32, #tpu.memory_space<vmem>>, %arg5: memref<24x1xf32, #tpu.memory_space<vmem>>, %arg6: memref<24x512xf32, #tpu.memory_space<vmem>>) attributes {dimension_semantics = [], scalar_prefetch = 0 : i64, scratch_operands = 0 : i64, tpu.core_type = #tpu.core_type<tc>} {
    %c0 = arith.constant 0 : index
    %c0_0 = arith.constant 0 : index
    %0 = vector.load %arg1[%c0, %c0_0] : memref<16x324xf32, #tpu.memory_space<vmem>>, vector<16x324xf32>
    %c0_1 = arith.constant 0 : index
    %c0_2 = arith.constant 0 : index
    %1 = vector.load %arg0[%c0_1, %c0_2] : memref<324x512xf32, #tpu.memory_space<vmem>>, vector<324x512xf32>
    %cst = arith.constant dense<0.000000e+00> : vector<16x512xf32>
    %2 = tpu.matmul %0, %1, %cst {dimension_numbers = #tpu.dot_dimension_numbers<[1], [0], [0], [1], [0, 0, 1, 1], [], []>} : vector<16x324xf32>, vector<324x512xf32>, vector<16x512xf32> -> vector<16x512xf32>
    %c0_3 = arith.constant 0 : index
    %c0_4 = arith.constant 0 : index
    %3 = vector.load %arg2[%c0_3, %c0_4] : memref<16x1xf32, #tpu.memory_space<vmem>>, vector<16x1xf32>
    %4 = vector.broadcast %3 : vector<16x1xf32> to vector<16x512xf32>
    %5 = arith.addf %2, %4 : vector<16x512xf32>
    %c0_5 = arith.constant 0 : index
    %c0_6 = arith.constant 0 : index
    %6 = vector.load %arg4[%c0_5, %c0_6] : memref<24x1xf32, #tpu.memory_space<vmem>>, vector<24x1xf32>
    %c0_7 = arith.constant 0 : index
    %c0_8 = arith.constant 0 : index
    %7 = vector.load %arg5[%c0_7, %c0_8] : memref<24x1xf32, #tpu.memory_space<vmem>>, vector<24x1xf32>
    %8 = vector.extract_strided_slice %6 {offsets = [0, 0], sizes = [16, 1], strides = [1, 1]} : vector<24x1xf32> to vector<16x1xf32>
    %9 = vector.extract_strided_slice %7 {offsets = [0, 0], sizes = [16, 1], strides = [1, 1]} : vector<24x1xf32> to vector<16x1xf32>
    %cst_9 = arith.constant dense<0.000000e+00> : vector<16xf32>
    %10 = vector.multi_reduction <add>, %5, %cst_9 [1] : vector<16x512xf32> to vector<16xf32>
    %11 = vector.shape_cast %10 : vector<16xf32> to vector<16x1xf32>
    %12 = arith.mulf %5, %5 : vector<16x512xf32>
    %cst_10 = arith.constant dense<0.000000e+00> : vector<16xf32>
    %13 = vector.multi_reduction <add>, %12, %cst_10 [1] : vector<16x512xf32> to vector<16xf32>
    %14 = vector.shape_cast %13 : vector<16xf32> to vector<16x1xf32>
    %cst_11 = arith.constant 0.001953125 : f32
    %15 = vector.broadcast %cst_11 : f32 to vector<16x1xf32>
    %16 = arith.mulf %11, %15 : vector<16x1xf32>
    %cst_12 = arith.constant 0.001953125 : f32
    %17 = vector.broadcast %cst_12 : f32 to vector<16x1xf32>
    %18 = arith.mulf %14, %17 : vector<16x1xf32>
    %19 = arith.mulf %16, %16 : vector<16x1xf32>
    %20 = arith.subf %18, %19 : vector<16x1xf32>
    %cst_13 = arith.constant 9.99999974E-6 : f32
    %21 = vector.broadcast %cst_13 : f32 to vector<16x1xf32>
    %22 = arith.addf %20, %21 : vector<16x1xf32>
    %23 = math.rsqrt %22 : vector<16x1xf32>
    %24 = vector.broadcast %16 : vector<16x1xf32> to vector<16x512xf32>
    %25 = arith.subf %5, %24 : vector<16x512xf32>
    %26 = arith.mulf %23, %8 : vector<16x1xf32>
    %27 = vector.broadcast %26 : vector<16x1xf32> to vector<16x512xf32>
    %28 = arith.mulf %25, %27 : vector<16x512xf32>
    %29 = vector.broadcast %9 : vector<16x1xf32> to vector<16x512xf32>
    %30 = arith.addf %28, %29 : vector<16x512xf32>
    %cst_14 = arith.constant 0.000000e+00 : f32
    %31 = vector.broadcast %cst_14 : f32 to vector<16x512xf32>
    %32 = arith.maximumf %30, %31 : vector<16x512xf32>
    %c0_15 = arith.constant 0 : index
    %c0_16 = arith.constant 0 : index
    %33 = vector.load %arg6[%c0_15, %c0_16] : memref<24x512xf32, #tpu.memory_space<vmem>>, vector<16x512xf32>
    tpu.vector_store %arg6[%c0_15, %c0_16], %32 {strides = array<i32>} : memref<24x512xf32, #tpu.memory_space<vmem>>, vector<16x512xf32>,
    %c0_17 = arith.constant 0 : index
    %c0_18 = arith.constant 0 : index
    %34 = vector.load %arg3[%c0_17, %c0_18] : memref<8x512xf32, #tpu.memory_space<vmem>>, vector<8x512xf32>
    %35 = vector.extract_strided_slice %6 {offsets = [16, 0], sizes = [8, 1], strides = [1, 1]} : vector<24x1xf32> to vector<8x1xf32>
    %36 = vector.extract_strided_slice %7 {offsets = [16, 0], sizes = [8, 1], strides = [1, 1]} : vector<24x1xf32> to vector<8x1xf32>
    %cst_19 = arith.constant dense<0.000000e+00> : vector<8xf32>
    %37 = vector.multi_reduction <add>, %34, %cst_19 [1] : vector<8x512xf32> to vector<8xf32>
    %38 = vector.shape_cast %37 : vector<8xf32> to vector<8x1xf32>
    %39 = arith.mulf %34, %34 : vector<8x512xf32>
    %cst_20 = arith.constant dense<0.000000e+00> : vector<8xf32>
    %40 = vector.multi_reduction <add>, %39, %cst_20 [1] : vector<8x512xf32> to vector<8xf32>
    %41 = vector.shape_cast %40 : vector<8xf32> to vector<8x1xf32>
    %cst_21 = arith.constant 0.001953125 : f32
    %42 = vector.broadcast %cst_21 : f32 to vector<8x1xf32>
    %43 = arith.mulf %38, %42 : vector<8x1xf32>
    %cst_22 = arith.constant 0.001953125 : f32
    %44 = vector.broadcast %cst_22 : f32 to vector<8x1xf32>
    %45 = arith.mulf %41, %44 : vector<8x1xf32>
    %46 = arith.mulf %43, %43 : vector<8x1xf32>
    %47 = arith.subf %45, %46 : vector<8x1xf32>
    %cst_23 = arith.constant 9.99999974E-6 : f32
    %48 = vector.broadcast %cst_23 : f32 to vector<8x1xf32>
    %49 = arith.addf %47, %48 : vector<8x1xf32>
    %50 = math.rsqrt %49 : vector<8x1xf32>
    %51 = vector.broadcast %43 : vector<8x1xf32> to vector<8x512xf32>
    %52 = arith.subf %34, %51 : vector<8x512xf32>
    %53 = arith.mulf %50, %35 : vector<8x1xf32>
    %54 = vector.broadcast %53 : vector<8x1xf32> to vector<8x512xf32>
    %55 = arith.mulf %52, %54 : vector<8x512xf32>
    %56 = vector.broadcast %36 : vector<8x1xf32> to vector<8x512xf32>
    %57 = arith.addf %55, %56 : vector<8x512xf32>
    %cst_24 = arith.constant 0.000000e+00 : f32
    %58 = vector.broadcast %cst_24 : f32 to vector<8x512xf32>
    %59 = arith.maximumf %57, %58 : vector<8x512xf32>
    %c16 = arith.constant 16 : index
    %c0_25 = arith.constant 0 : index
    %60 = vector.load %arg6[%c16, %c0_25] : memref<24x512xf32, #tpu.memory_space<vmem>>, vector<8x512xf32>
    tpu.vector_store %arg6[%c16, %c0_25], %59 {strides = array<i32>} : memref<24x512xf32, #tpu.memory_space<vmem>>, vector<8x512xf32>,
    return
  }
}

module attributes {stable_mosaic.version = 11 : i64} {
  func.func @_stage_sigmoid_kernel(%arg0: memref<648x1000xf32, #tpu.memory_space<vmem>>, %arg1: memref<1x648xf32, #tpu.memory_space<vmem>>, %arg2: memref<1x1xf32, #tpu.memory_space<vmem>>, %arg3: memref<2x1000xf32, #tpu.memory_space<vmem>>, %arg4: memref<3x1000xf32, #tpu.memory_space<vmem>>) attributes {dimension_semantics = [], scalar_prefetch = 0 : i64, scratch_operands = 0 : i64, tpu.core_type = #tpu.core_type<tc>} {
    %c0 = arith.constant 0 : index
    %c0_0 = arith.constant 0 : index
    %0 = vector.load %arg1[%c0, %c0_0] : memref<1x648xf32, #tpu.memory_space<vmem>>, vector<1x648xf32>
    %c0_1 = arith.constant 0 : index
    %c0_2 = arith.constant 0 : index
    %1 = vector.load %arg0[%c0_1, %c0_2] : memref<648x1000xf32, #tpu.memory_space<vmem>>, vector<648x1000xf32>
    %cst = arith.constant dense<0.000000e+00> : vector<1x1000xf32>
    %2 = tpu.matmul %0, %1, %cst {dimension_numbers = #tpu.dot_dimension_numbers<[1], [0], [0], [1], [0, 0, 1, 1], [], []>} : vector<1x648xf32>, vector<648x1000xf32>, vector<1x1000xf32> -> vector<1x1000xf32>
    %c0_3 = arith.constant 0 : index
    %c0_4 = arith.constant 0 : index
    %3 = vector.load %arg2[%c0_3, %c0_4] : memref<1x1xf32, #tpu.memory_space<vmem>>, vector<1x1xf32>
    %4 = vector.broadcast %3 : vector<1x1xf32> to vector<1x1000xf32>
    %5 = arith.addf %2, %4 : vector<1x1000xf32>
    %6 = arith.negf %5 : vector<1x1000xf32>
    %7 = math.exp %6 : vector<1x1000xf32>
    %cst_5 = arith.constant 1.000000e+00 : f32
    %8 = vector.broadcast %cst_5 : f32 to vector<1x1000xf32>
    %9 = arith.addf %8, %7 : vector<1x1000xf32>
    %10 = arith.divf %8, %9 : vector<1x1000xf32>
    %c0_6 = arith.constant 0 : index
    %c0_7 = arith.constant 0 : index
    %11 = vector.load %arg4[%c0_6, %c0_7] : memref<3x1000xf32, #tpu.memory_space<vmem>>, vector<1x1000xf32>
    tpu.vector_store %arg4[%c0_6, %c0_7], %10 {strides = array<i32>} : memref<3x1000xf32, #tpu.memory_space<vmem>>, vector<1x1000xf32>,
    %c0_8 = arith.constant 0 : index
    %c0_9 = arith.constant 0 : index
    %12 = vector.load %arg3[%c0_8, %c0_9] : memref<2x1000xf32, #tpu.memory_space<vmem>>, vector<2x1000xf32>
    %13 = arith.negf %12 : vector<2x1000xf32>
    %14 = math.exp %13 : vector<2x1000xf32>
    %cst_10 = arith.constant 1.000000e+00 : f32
    %15 = vector.broadcast %cst_10 : f32 to vector<2x1000xf32>
    %16 = arith.addf %15, %14 : vector<2x1000xf32>
    %17 = arith.divf %15, %16 : vector<2x1000xf32>
    %c1 = arith.constant 1 : index
    %c0_11 = arith.constant 0 : index
    %18 = vector.load %arg4[%c1, %c0_11] : memref<3x1000xf32, #tpu.memory_space<vmem>>, vector<2x1000xf32>
    tpu.vector_store %arg4[%c1, %c0_11], %17 {strides = array<i32>} : memref<3x1000xf32, #tpu.memory_space<vmem>>, vector<2x1000xf32>,
    return
  }
}

</mosaic_0001>

<llo_original>
// kernel: squeeze.4
$region0: #{squeeze.4}
  %s0 = inlined_call_operand.vmem [shape: f32[1,8,8,8,8], index: 0, kind: input, shape index: {}]
  %s1 = inlined_call_operand.vmem [shape: f32[8,512], index: 1, kind: output, shape index: {}]
  %s2 = smov 3
  %v3 = vld [vmem:[%s0] ss:$16 sm:%s2]
  %s4 = smov 12
  %v5 = vld [vmem:[%s0] ss:$16 sm:%s4]
  %vm6 = vcmask 1043458
  %v7 = vsel %vm6, %v5, %v3
  %s8 = smov 48
  %v9 = vld [vmem:[%s0] ss:$16 sm:%s8]
  %vm10 = vcmask 1045508
  %v11 = vsel %vm10, %v9, %v7
  %s12 = smov 192
  %v13 = vld [vmem:[%s0] ss:$16 sm:%s12]
  %vm14 = vcmask 1047558
  %v15 = vsel %vm14, %v13, %v11
  %vm16 = vcmask 64512
  %17 = vst.msk [vmem:[%s1] ss:$8 sm:$0xf] %vm16, %v15
  %s18 = scalar_lea.vmem %s1, 4294967265
  %19 = vst.msk [vmem:[%s18] ss:$8 sm:$0xf0] %vm16, %v15
  %s20 = scalar_lea.vmem %s0, 128
  %s21 = smov 3
  %v22 = vld [vmem:[%s20] ss:$16 sm:%s21]
  %s23 = scalar_lea.vmem %s0, 128
  %s24 = smov 12
  %v25 = vld [vmem:[%s23] ss:$16 sm:%s24]
  %vm26 = vcmask 1043458
  %v27 = vsel %vm26, %v25, %v22
  %s28 = scalar_lea.vmem %s0, 128
  %s29 = smov 48
  %v30 = vld [vmem:[%s28] ss:$16 sm:%s29]
  %vm31 = vcmask 1045508
  %v32 = vsel %vm31, %v30, %v27
  %s33 = scalar_lea.vmem %s0, 128
  %s34 = smov 192
  %v35 = vld [vmem:[%s33] ss:$16 sm:%s34]
  %vm36 = vcmask 1047558
  %v37 = vsel %vm36, %v35, %v32
  %vm38 = vcmask 64512
  %s39 = scalar_lea.vmem %s1, 2
  %40 = vst.msk [vmem:[%s39] ss:$8 sm:$0xf] %vm38, %v37
  %s41 = scalar_lea.vmem %s1, 4294967267
  %42 = vst.msk [vmem:[%s41] ss:$8 sm:$0xf0] %vm38, %v37
  %s43 = scalar_lea.vmem %s0, 256
  %s44 = smov 3
  %v45 = vld [vmem:[%s43] ss:$16 sm:%s44]
  %s46 = scalar_lea.vmem %s0, 256
  %s47 = smov 12
  %v48 = vld [vmem:[%s46] ss:$16 sm:%s47]
  %vm49 = vcmask 1043458
  %v50 = vsel %vm49, %v48, %v45
  %s51 = scalar_lea.vmem %s0, 256
  %s52 = smov 48
  %v53 = vld [vmem:[%s51] ss:$16 sm:%s52]
  %vm54 = vcmask 1045508
  %v55 = vsel %vm54, %v53, %v50
  %s56 = scalar_lea.vmem %s0, 256
  %s57 = smov 192
  %v58 = vld [vmem:[%s56] ss:$16 sm:%s57]
  %vm59 = vcmask 1047558
  %v60 = vsel %vm59, %v58, %v55
  %vm61 = vcmask 64512
  %s62 = scalar_lea.vmem %s1, 4
  %63 = vst.msk [vmem:[%s62] ss:$8 sm:$0xf] %vm61, %v60
  %s64 = scalar_lea.vmem %s1, 4294967269
  %65 = vst.msk [vmem:[%s64] ss:$8 sm:$0xf0] %vm61, %v60
  %s66 = scalar_lea.vmem %s0, 384
  %s67 = smov 3
  %v68 = vld [vmem:[%s66] ss:$16 sm:%s67]
  %s69 = scalar_lea.vmem %s0, 384
  %s70 = smov 12
  %v71 = vld [vmem:[%s69] ss:$16 sm:%s70]
  %vm72 = vcmask 1043458
  %v73 = vsel %vm72, %v71, %v68
  %s74 = scalar_lea.vmem %s0, 384
  %s75 = smov 48
  %v76 = vld [vmem:[%s74] ss:$16 sm:%s75]
  %vm77 = vcmask 1045508
  %v78 = vsel %vm77, %v76, %v73
  %s79 = scalar_lea.vmem %s0, 384
  %s80 = smov 192
  %v81 = vld [vmem:[%s79] ss:$16 sm:%s80]
  %vm82 = vcmask 1047558
  %v83 = vsel %vm82, %v81, %v78
  %vm84 = vcmask 64512
  %s85 = scalar_lea.vmem %s1, 6
  %86 = vst.msk [vmem:[%s85] ss:$8 sm:$0xf] %vm84, %v83
  %s87 = scalar_lea.vmem %s1, 4294967271
  %88 = vst.msk [vmem:[%s87] ss:$8 sm:$0xf0] %vm84, %v83
  %s89 = scalar_lea.vmem %s0, 15
  %v90 = vld [vmem:[%s89] sm:$0x1]
  %s91 = scalar_lea.vmem %s0, 78
  %v92 = vld [vmem:[%s91] sm:$0x2]
  %vm93 = vcmask 1041409
  %v94 = vsel %vm93, %v92, %v90
  %s95 = scalar_lea.vmem %s0, 141
  %v96 = vld [vmem:[%s95] sm:$0x4]
  %vm97 = vcmask 1042434
  %v98 = vsel %vm97, %v96, %v94
  %s99 = scalar_lea.vmem %s0, 204
  %v100 = vld [vmem:[%s99] sm:$0x8]
  %vm101 = vcmask 1043459
  %v102 = vsel %vm101, %v100, %v98
  %s103 = scalar_lea.vmem %s0, 267
  %v104 = vld [vmem:[%s103] sm:$0x10]
  %vm105 = vcmask 1044484
  %v106 = vsel %vm105, %v104, %v102
  %s107 = scalar_lea.vmem %s0, 330
  %v108 = vld [vmem:[%s107] sm:$0x20]
  %vm109 = vcmask 1045509
  %v110 = vsel %vm109, %v108, %v106
  %s111 = scalar_lea.vmem %s0, 393
  %v112 = vld [vmem:[%s111] sm:$0x40]
  %vm113 = vcmask 1046534
  %v114 = vsel %vm113, %v112, %v110
  %s115 = scalar_lea.vmem %s0, 456
  %v116 = vld [vmem:[%s115] sm:$0x80]
  %vm117 = vcmask 1047559
  %v118 = vsel %vm117, %v116, %v114
  %119 = vrot.lane.b32.xlu0 %v118, 120
  %v120 = vpop.permute.xlu0 %119
  %vm121 = vcmask 1048512
  %122 = vst.msk [vmem:[%s1] sm:$0xff] %vm121, %v120
  %s123 = scalar_lea.vmem %s0, 31
  %v124 = vld [vmem:[%s123] sm:$0x1]
  %s125 = scalar_lea.vmem %s0, 94
  %v126 = vld [vmem:[%s125] sm:$0x2]
  %vm127 = vcmask 1041409
  %v128 = vsel %vm127, %v126, %v124
  %s129 = scalar_lea.vmem %s0, 157
  %v130 = vld [vmem:[%s129] sm:$0x4]
  %vm131 = vcmask 1042434
  %v132 = vsel %vm131, %v130, %v128
  %s133 = scalar_lea.vmem %s0, 220
  %v134 = vld [vmem:[%s133] sm:$0x8]
  %vm135 = vcmask 1043459
  %v136 = vsel %vm135, %v134, %v132
  %s137 = scalar_lea.vmem %s0, 283
  %v138 = vld [vmem:[%s137] sm:$0x10]
  %vm139 = vcmask 1044484
  %v140 = vsel %vm139, %v138, %v136
  %s141 = scalar_lea.vmem %s0, 346
  %v142 = vld [vmem:[%s141] sm:$0x20]
  %vm143 = vcmask 1045509
  %v144 = vsel %vm143, %v142, %v140
  %s145 = scalar_lea.vmem %s0, 409
  %v146 = vld [vmem:[%s145] sm:$0x40]
  %vm147 = vcmask 1046534
  %v148 = vsel %vm147, %v146, %v144
  %s149 = scalar_lea.vmem %s0, 472
  %v150 = vld [vmem:[%s149] sm:$0x80]
  %vm151 = vcmask 1047559
  %v152 = vsel %vm151, %v150, %v148
  %153 = vrot.lane.b32.xlu0 %v152, 120
  %v154 = vpop.permute.xlu0 %153
  %vm155 = vcmask 1048512
  %s156 = scalar_lea.vmem %s1, 8
  %157 = vst.msk [vmem:[%s156] sm:$0xff] %vm155, %v154
  %s158 = scalar_lea.vmem %s0, 47
  %v159 = vld [vmem:[%s158] sm:$0x1]
  %s160 = scalar_lea.vmem %s0, 110
  %v161 = vld [vmem:[%s160] sm:$0x2]
  %vm162 = vcmask 1041409
  %v163 = vsel %vm162, %v161, %v159
  %s164 = scalar_lea.vmem %s0, 173
  %v165 = vld [vmem:[%s164] sm:$0x4]
  %vm166 = vcmask 1042434
  %v167 = vsel %vm166, %v165, %v163
  %s168 = scalar_lea.vmem %s0, 236
  %v169 = vld [vmem:[%s168] sm:$0x8]
  %vm170 = vcmask 1043459
  %v171 = vsel %vm170, %v169, %v167
  %s172 = scalar_lea.vmem %s0, 299
  %v173 = vld [vmem:[%s172] sm:$0x10]
  %vm174 = vcmask 1044484
  %v175 = vsel %vm174, %v173, %v171
  %s176 = scalar_lea.vmem %s0, 362
  %v177 = vld [vmem:[%s176] sm:$0x20]
  %vm178 = vcmask 1045509
  %v179 = vsel %vm178, %v177, %v175
  %s180 = scalar_lea.vmem %s0, 425
  %v181 = vld [vmem:[%s180] sm:$0x40]
  %vm182 = vcmask 1046534
  %v183 = vsel %vm182, %v181, %v179
  %s184 = scalar_lea.vmem %s0, 488
  %v185 = vld [vmem:[%s184] sm:$0x80]
  %vm186 = vcmask 1047559
  %v187 = vsel %vm186, %v185, %v183
  %188 = vrot.lane.b32.xlu0 %v187, 120
  %v189 = vpop.permute.xlu0 %188
  %vm190 = vcmask 1048512
  %s191 = scalar_lea.vmem %s1, 16
  %192 = vst.msk [vmem:[%s191] sm:$0xff] %vm190, %v189
  %s193 = scalar_lea.vmem %s0, 63
  %v194 = vld [vmem:[%s193] sm:$0x1]
  %s195 = scalar_lea.vmem %s0, 126
  %v196 = vld [vmem:[%s195] sm:$0x2]
  %vm197 = vcmask 1041409
  %v198 = vsel %vm197, %v196, %v194
  %s199 = scalar_lea.vmem %s0, 189
  %v200 = vld [vmem:[%s199] sm:$0x4]
  %vm201 = vcmask 1042434
  %v202 = vsel %vm201, %v200, %v198
  %s203 = scalar_lea.vmem %s0, 252
  %v204 = vld [vmem:[%s203] sm:$0x8]
  %vm205 = vcmask 1043459
  %v206 = vsel %vm205, %v204, %v202
  %s207 = scalar_lea.vmem %s0, 315
  %v208 = vld [vmem:[%s207] sm:$0x10]
  %vm209 = vcmask 1044484
  %v210 = vsel %vm209, %v208, %v206
  %s211 = scalar_lea.vmem %s0, 378
  %v212 = vld [vmem:[%s211] sm:$0x20]
  %vm213 = vcmask 1045509
  %v214 = vsel %vm213, %v212, %v210
  %s215 = scalar_lea.vmem %s0, 441
  %v216 = vld [vmem:[%s215] sm:$0x40]
  %vm217 = vcmask 1046534
  %v218 = vsel %vm217, %v216, %v214
  %s219 = scalar_lea.vmem %s0, 504
  %v220 = vld [vmem:[%s219] sm:$0x80]
  %vm221 = vcmask 1047559
  %v222 = vsel %vm221, %v220, %v218
  %223 = vrot.lane.b32.xlu0 %v222, 120
  %v224 = vpop.permute.xlu0 %223
  %vm225 = vcmask 1048512
  %s226 = scalar_lea.vmem %s1, 24
  %227 = vst.msk [vmem:[%s226] sm:$0xff] %vm225, %v224
  %s228 = scalar_lea.vmem %s0, 14
  %v229 = vld [vmem:[%s228] sm:$0x1]
  %s230 = scalar_lea.vmem %s0, 77
  %v231 = vld [vmem:[%s230] sm:$0x2]
  %vm232 = vcmask 1041409
  %v233 = vsel %vm232, %v231, %v229
  %s234 = scalar_lea.vmem %s0, 140
  %v235 = vld [vmem:[%s234] sm:$0x4]
  %vm236 = vcmask 1042434
  %v237 = vsel %vm236, %v235, %v233
  %s238 = scalar_lea.vmem %s0, 203
  %v239 = vld [vmem:[%s238] sm:$0x8]
  %vm240 = vcmask 1043459
  %v241 = vsel %vm240, %v239, %v237
  %s242 = scalar_lea.vmem %s0, 266
  %v243 = vld [vmem:[%s242] sm:$0x10]
  %vm244 = vcmask 1044484
  %v245 = vsel %vm244, %v243, %v241
  %s246 = scalar_lea.vmem %s0, 329
  %v247 = vld [vmem:[%s246] sm:$0x20]
  %vm248 = vcmask 1045509
  %v249 = vsel %vm248, %v247, %v245
  %s250 = scalar_lea.vmem %s0, 392
  %v251 = vld [vmem:[%s250] sm:$0x40]
  %vm252 = vcmask 1046534
  %v253 = vsel %vm252, %v251, %v249
  %s254 = scalar_lea.vmem %s0, 455
  %v255 = vld [vmem:[%s254] sm:$0x80]
  %vm256 = vcmask 1047559
  %v257 = vsel %vm256, %v255, %v253
  %258 = vrot.lane.b32.xlu0 %v257, 112
  %v259 = vpop.permute.xlu0 %258
  %vm260 = vcmask 982912
  %261 = vst.msk [vmem:[%s1] sm:$0xff] %vm260, %v259
  %s262 = scalar_lea.vmem %s0, 30
  %v263 = vld [vmem:[%s262] sm:$0x1]
  %s264 = scalar_lea.vmem %s0, 93
  %v265 = vld [vmem:[%s264] sm:$0x2]
  %vm266 = vcmask 1041409
  %v267 = vsel %vm266, %v265, %v263
  %s268 = scalar_lea.vmem %s0, 156
  %v269 = vld [vmem:[%s268] sm:$0x4]
  %vm270 = vcmask 1042434
  %v271 = vsel %vm270, %v269, %v267
  %s272 = scalar_lea.vmem %s0, 219
  %v273 = vld [vmem:[%s272] sm:$0x8]
  %vm274 = vcmask 1043459
  %v275 = vsel %vm274, %v273, %v271
  %s276 = scalar_lea.vmem %s0, 282
  %v277 = vld [vmem:[%s276] sm:$0x10]
  %vm278 = vcmask 1044484
  %v279 = vsel %vm278, %v277, %v275
  %s280 = scalar_lea.vmem %s0, 345
  %v281 = vld [vmem:[%s280] sm:$0x20]
  %vm282 = vcmask 1045509
  %v283 = vsel %vm282, %v281, %v279
  %s284 = scalar_lea.vmem %s0, 408
  %v285 = vld [vmem:[%s284] sm:$0x40]
  %vm286 = vcmask 1046534
  %v287 = vsel %vm286, %v285, %v283
  %s288 = scalar_lea.vmem %s0, 471
  %v289 = vld [vmem:[%s288] sm:$0x80]
  %vm290 = vcmask 1047559
  %v291 = vsel %vm290, %v289, %v287
  %292 = vrot.lane.b32.xlu0 %v291, 112
  %v293 = vpop.permute.xlu0 %292
  %vm294 = vcmask 982912
  %s295 = scalar_lea.vmem %s1, 8
  %296 = vst.msk [vmem:[%s295] sm:$0xff] %vm294, %v293
  %s297 = scalar_lea.vmem %s0, 46
  %v298 = vld [vmem:[%s297] sm:$0x1]
  %s299 = scalar_lea.vmem %s0, 109
  %v300 = vld [vmem:[%s299] sm:$0x2]
  %vm301 = vcmask 1041409
  %v302 = vsel %vm301, %v300, %v298
  %s303 = scalar_lea.vmem %s0, 172
  %v304 = vld [vmem:[%s303] sm:$0x4]
  %vm305 = vcmask 1042434
  %v306 = vsel %vm305, %v304, %v302
  %s307 = scalar_lea.vmem %s0, 235
  %v308 = vld [vmem:[%s307] sm:$0x8]
  %vm309 = vcmask 1043459
  %v310 = vsel %vm309, %v308, %v306
  %s311 = scalar_lea.vmem %s0, 298
  %v312 = vld [vmem:[%s311] sm:$0x10]
  %vm313 = vcmask 1044484
  %v314 = vsel %vm313, %v312, %v310
  %s315 = scalar_lea.vmem %s0, 361
  %v316 = vld [vmem:[%s315] sm:$0x20]
  %vm317 = vcmask 1045509
  %v318 = vsel %vm317, %v316, %v314
  %s319 = scalar_lea.vmem %s0, 424
  %v320 = vld [vmem:[%s319] sm:$0x40]
  %vm321 = vcmask 1046534
  %v322 = vsel %vm321, %v320, %v318
  %s323 = scalar_lea.vmem %s0, 487
  %v324 = vld [vmem:[%s323] sm:$0x80]
  %vm325 = vcmask 1047559
  %v326 = vsel %vm325, %v324, %v322
  %327 = vrot.lane.b32.xlu0 %v326, 112
  %v328 = vpop.permute.xlu0 %327
  %vm329 = vcmask 982912
  %s330 = scalar_lea.vmem %s1, 16
  %331 = vst.msk [vmem:[%s330] sm:$0xff] %vm329, %v328
  %s332 = scalar_lea.vmem %s0, 62
  %v333 = vld [vmem:[%s332] sm:$0x1]
  %s334 = scalar_lea.vmem %s0, 125
  %v335 = vld [vmem:[%s334] sm:$0x2]
  %vm336 = vcmask 1041409
  %v337 = vsel %vm336, %v335, %v333
  %s338 = scalar_lea.vmem %s0, 188
  %v339 = vld [vmem:[%s338] sm:$0x4]
  %vm340 = vcmask 1042434
  %v341 = vsel %vm340, %v339, %v337
  %s342 = scalar_lea.vmem %s0, 251
  %v343 = vld [vmem:[%s342] sm:$0x8]
  %vm344 = vcmask 1043459
  %v345 = vsel %vm344, %v343, %v341
  %s346 = scalar_lea.vmem %s0, 314
  %v347 = vld [vmem:[%s346] sm:$0x10]
  %vm348 = vcmask 1044484
  %v349 = vsel %vm348, %v347, %v345
  %s350 = scalar_lea.vmem %s0, 377
  %v351 = vld [vmem:[%s350] sm:$0x20]
  %vm352 = vcmask 1045509
  %v353 = vsel %vm352, %v351, %v349
  %s354 = scalar_lea.vmem %s0, 440
  %v355 = vld [vmem:[%s354] sm:$0x40]
  %vm356 = vcmask 1046534
  %v357 = vsel %vm356, %v355, %v353
  %s358 = scalar_lea.vmem %s0, 503
  %v359 = vld [vmem:[%s358] sm:$0x80]
  %vm360 = vcmask 1047559
  %v361 = vsel %vm360, %v359, %v357
  %362 = vrot.lane.b32.xlu0 %v361, 112
  %v363 = vpop.permute.xlu0 %362
  %vm364 = vcmask 982912
  %s365 = scalar_lea.vmem %s1, 24
  %366 = vst.msk [vmem:[%s365] sm:$0xff] %vm364, %v363
  %s367 = scalar_lea.vmem %s0, 13
  %v368 = vld [vmem:[%s367] sm:$0x1]
  %s369 = scalar_lea.vmem %s0, 76
  %v370 = vld [vmem:[%s369] sm:$0x2]
  %vm371 = vcmask 1041409
  %v372 = vsel %vm371, %v370, %v368
  %s373 = scalar_lea.vmem %s0, 139
  %v374 = vld [vmem:[%s373] sm:$0x4]
  %vm375 = vcmask 1042434
  %v376 = vsel %vm375, %v374, %v372
  %s377 = scalar_lea.vmem %s0, 202
  %v378 = vld [vmem:[%s377] sm:$0x8]
  %vm379 = vcmask 1043459
  %v380 = vsel %vm379, %v378, %v376
  %s381 = scalar_lea.vmem %s0, 265
  %v382 = vld [vmem:[%s381] sm:$0x10]
  %vm383 = vcmask 1044484
  %v384 = vsel %vm383, %v382, %v380
  %s385 = scalar_lea.vmem %s0, 328
  %v386 = vld [vmem:[%s385] sm:$0x20]
  %vm387 = vcmask 1045509
  %v388 = vsel %vm387, %v386, %v384
  %s389 = scalar_lea.vmem %s0, 391
  %v390 = vld [vmem:[%s389] sm:$0x40]
  %vm391 = vcmask 1046534
  %v392 = vsel %vm391, %v390, %v388
  %s393 = scalar_lea.vmem %s0, 454
  %v394 = vld [vmem:[%s393] sm:$0x80]
  %vm395 = vcmask 1047559
  %v396 = vsel %vm395, %v394, %v392
  %397 = vrot.lane.b32.xlu0 %v396, 104
  %v398 = vpop.permute.xlu0 %397
  %vm399 = vcmask 917312
  %400 = vst.msk [vmem:[%s1] sm:$0xff] %vm399, %v398
  %s401 = scalar_lea.vmem %s0, 29
  %v402 = vld [vmem:[%s401] sm:$0x1]
  %s403 = scalar_lea.vmem %s0, 92
  %v404 = vld [vmem:[%s403] sm:$0x2]
  %vm405 = vcmask 1041409
  %v406 = vsel %vm405, %v404, %v402
  %s407 = scalar_lea.vmem %s0, 155
  %v408 = vld [vmem:[%s407] sm:$0x4]
  %vm409 = vcmask 1042434
  %v410 = vsel %vm409, %v408, %v406
  %s411 = scalar_lea.vmem %s0, 218
  %v412 = vld [vmem:[%s411] sm:$0x8]
  %vm413 = vcmask 1043459
  %v414 = vsel %vm413, %v412, %v410
  %s415 = scalar_lea.vmem %s0, 281
  %v416 = vld [vmem:[%s415] sm:$0x10]
  %vm417 = vcmask 1044484
  %v418 = vsel %vm417, %v416, %v414
  %s419 = scalar_lea.vmem %s0, 344
  %v420 = vld [vmem:[%s419] sm:$0x20]
  %vm421 = vcmask 1045509
  %v422 = vsel %vm421, %v420, %v418
  %s423 = scalar_lea.vmem %s0, 407
  %v424 = vld [vmem:[%s423] sm:$0x40]
  %vm425 = vcmask 1046534
  %v426 = vsel %vm425, %v424, %v422
  %s427 = scalar_lea.vmem %s0, 470
  %v428 = vld [vmem:[%s427] sm:$0x80]
  %vm429 = vcmask 1047559
  %v430 = vsel %vm429, %v428, %v426
  %431 = vrot.lane.b32.xlu0 %v430, 104
  %v432 = vpop.permute.xlu0 %431
  %vm433 = vcmask 917312
  %s434 = scalar_lea.vmem %s1, 8
  %435 = vst.msk [vmem:[%s434] sm:$0xff] %vm433, %v432
  %s436 = scalar_lea.vmem %s0, 45
  %v437 = vld [vmem:[%s436] sm:$0x1]
  %s438 = scalar_lea.vmem %s0, 108
  %v439 = vld [vmem:[%s438] sm:$0x2]
  %vm440 = vcmask 1041409
  %v441 = vsel %vm440, %v439, %v437
  %s442 = scalar_lea.vmem %s0, 171
  %v443 = vld [vmem:[%s442] sm:$0x4]
  %vm444 = vcmask 1042434
  %v445 = vsel %vm444, %v443, %v441
  %s446 = scalar_lea.vmem %s0, 234
  %v447 = vld [vmem:[%s446] sm:$0x8]
  %vm448 = vcmask 1043459
  %v449 = vsel %vm448, %v447, %v445
  %s450 = scalar_lea.vmem %s0, 297
  %v451 = vld [vmem:[%s450] sm:$0x10]
  %vm452 = vcmask 1044484
  %v453 = vsel %vm452, %v451, %v449
  %s454 = scalar_lea.vmem %s0, 360
  %v455 = vld [vmem:[%s454] sm:$0x20]
  %vm456 = vcmask 1045509
  %v457 = vsel %vm456, %v455, %v453
  %s458 = scalar_lea.vmem %s0, 423
  %v459 = vld [vmem:[%s458] sm:$0x40]
  %vm460 = vcmask 1046534
  %v461 = vsel %vm460, %v459, %v457
  %s462 = scalar_lea.vmem %s0, 486
  %v463 = vld [vmem:[%s462] sm:$0x80]
  %vm464 = vcmask 1047559
  %v465 = vsel %vm464, %v463, %v461
  %466 = vrot.lane.b32.xlu0 %v465, 104
  %v467 = vpop.permute.xlu0 %466
  %vm468 = vcmask 917312
  %s469 = scalar_lea.vmem %s1, 16
  %470 = vst.msk [vmem:[%s469] sm:$0xff] %vm468, %v467
  %s471 = scalar_lea.vmem %s0, 61
  %v472 = vld [vmem:[%s471] sm:$0x1]
  %s473 = scalar_lea.vmem %s0, 124
  %v474 = vld [vmem:[%s473] sm:$0x2]
  %vm475 = vcmask 1041409
  %v476 = vsel %vm475, %v474, %v472
  %s477 = scalar_lea.vmem %s0, 187
  %v478 = vld [vmem:[%s477] sm:$0x4]
  %vm479 = vcmask 1042434
  %v480 = vsel %vm479, %v478, %v476
  %s481 = scalar_lea.vmem %s0, 250
  %v482 = vld [vmem:[%s481] sm:$0x8]
  %vm483 = vcmask 1043459
  %v484 = vsel %vm483, %v482, %v480
  %s485 = scalar_lea.vmem %s0, 313
  %v486 = vld [vmem:[%s485] sm:$0x10]
  %vm487 = vcmask 1044484
  %v488 = vsel %vm487, %v486, %v484
  %s489 = scalar_lea.vmem %s0, 376
  %v490 = vld [vmem:[%s489] sm:$0x20]
  %vm491 = vcmask 1045509
  %v492 = vsel %vm491, %v490, %v488
  %s493 = scalar_lea.vmem %s0, 439
  %v494 = vld [vmem:[%s493] sm:$0x40]
  %vm495 = vcmask 1046534
  %v496 = vsel %vm495, %v494, %v492
  %s497 = scalar_lea.vmem %s0, 502
  %v498 = vld [vmem:[%s497] sm:$0x80]
  %vm499 = vcmask 1047559
  %v500 = vsel %vm499, %v498, %v496
  %501 = vrot.lane.b32.xlu0 %v500, 104
  %v502 = vpop.permute.xlu0 %501
  %vm503 = vcmask 917312
  %s504 = scalar_lea.vmem %s1, 24
  %505 = vst.msk [vmem:[%s504] sm:$0xff] %vm503, %v502
  %s506 = scalar_lea.vmem %s0, 12
  %v507 = vld [vmem:[%s506] sm:$0x1]
  %s508 = scalar_lea.vmem %s0, 75
  %v509 = vld [vmem:[%s508] sm:$0x2]
  %vm510 = vcmask 1041409
  %v511 = vsel %vm510, %v509, %v507
  %s512 = scalar_lea.vmem %s0, 138
  %v513 = vld [vmem:[%s512] sm:$0x4]
  %vm514 = vcmask 1042434
  %v515 = vsel %vm514, %v513, %v511
  %s516 = scalar_lea.vmem %s0, 201
  %v517 = vld [vmem:[%s516] sm:$0x8]
  %vm518 = vcmask 1043459
  %v519 = vsel %vm518, %v517, %v515
  %s520 = scalar_lea.vmem %s0, 264
  %v521 = vld [vmem:[%s520] sm:$0x10]
  %vm522 = vcmask 1044484
  %v523 = vsel %vm522, %v521, %v519
  %s524 = scalar_lea.vmem %s0, 327
  %v525 = vld [vmem:[%s524] sm:$0x20]
  %vm526 = vcmask 1045509
  %v527 = vsel %vm526, %v525, %v523
  %s528 = scalar_lea.vmem %s0, 390
  %v529 = vld [vmem:[%s528] sm:$0x40]
  %vm530 = vcmask 1046534
  %v531 = vsel %vm530, %v529, %v527
  %s532 = scalar_lea.vmem %s0, 453
  %v533 = vld [vmem:[%s532] sm:$0x80]
  %vm534 = vcmask 1047559
  %v535 = vsel %vm534, %v533, %v531
  %536 = vrot.lane.b32.xlu0 %v535, 96
  %v537 = vpop.permute.xlu0 %536
  %vm538 = vcmask 851712
  %539 = vst.msk [vmem:[%s1] sm:$0xff] %vm538, %v537
  %s540 = scalar_lea.vmem %s0, 28
  %v541 = vld [vmem:[%s540] sm:$0x1]
  %s542 = scalar_lea.vmem %s0, 91
  %v543 = vld [vmem:[%s542] sm:$0x2]
  %vm544 = vcmask 1041409
  %v545 = vsel %vm544, %v543, %v541
  %s546 = scalar_lea.vmem %s0, 154
  %v547 = vld [vmem:[%s546] sm:$0x4]
  %vm548 = vcmask 1042434
  %v549 = vsel %vm548, %v547, %v545
  %s550 = scalar_lea.vmem %s0, 217
  %v551 = vld [vmem:[%s550] sm:$0x8]
  %vm552 = vcmask 1043459
  %v553 = vsel %vm552, %v551, %v549
  %s554 = scalar_lea.vmem %s0, 280
  %v555 = vld [vmem:[%s554] sm:$0x10]
  %vm556 = vcmask 1044484
  %v557 = vsel %vm556, %v555, %v553
  %s558 = scalar_lea.vmem %s0, 343
  %v559 = vld [vmem:[%s558] sm:$0x20]
  %vm560 = vcmask 1045509
  %v561 = vsel %vm560, %v559, %v557
  %s562 = scalar_lea.vmem %s0, 406
  %v563 = vld [vmem:[%s562] sm:$0x40]
  %vm564 = vcmask 1046534
  %v565 = vsel %vm564, %v563, %v561
  %s566 = scalar_lea.vmem %s0, 469
  %v567 = vld [vmem:[%s566] sm:$0x80]
  %vm568 = vcmask 1047559
  %v569 = vsel %vm568, %v567, %v565
  %570 = vrot.lane.b32.xlu0 %v569, 96
  %v571 = vpop.permute.xlu0 %570
  %vm572 = vcmask 851712
  %s573 = scalar_lea.vmem %s1, 8
  %574 = vst.msk [vmem:[%s573] sm:$0xff] %vm572, %v571
  %s575 = scalar_lea.vmem %s0, 44
  %v576 = vld [vmem:[%s575] sm:$0x1]
  %s577 = scalar_lea.vmem %s0, 107
  %v578 = vld [vmem:[%s577] sm:$0x2]
  %vm579 = vcmask 1041409
  %v580 = vsel %vm579, %v578, %v576
  %s581 = scalar_lea.vmem %s0, 170
  %v582 = vld [vmem:[%s581] sm:$0x4]
  %vm583 = vcmask 1042434
  %v584 = vsel %vm583, %v582, %v580
  %s585 = scalar_lea.vmem %s0, 233
  %v586 = vld [vmem:[%s585] sm:$0x8]
  %vm587 = vcmask 1043459
  %v588 = vsel %vm587, %v586, %v584
  %s589 = scalar_lea.vmem %s0, 296
  %v590 = vld [vmem:[%s589] sm:$0x10]
  %vm591 = vcmask 1044484
  %v592 = vsel %vm591, %v590, %v588
  %s593 = scalar_lea.vmem %s0, 359
  %v594 = vld [vmem:[%s593] sm:$0x20]
  %vm595 = vcmask 1045509
  %v596 = vsel %vm595, %v594, %v592
  %s597 = scalar_lea.vmem %s0, 422
  %v598 = vld [vmem:[%s597] sm:$0x40]
  %vm599 = vcmask 1046534
  %v600 = vsel %vm599, %v598, %v596
  %s601 = scalar_lea.vmem %s0, 485
  %v602 = vld [vmem:[%s601] sm:$0x80]
  %vm603 = vcmask 1047559
  %v604 = vsel %vm603, %v602, %v600
  %605 = vrot.lane.b32.xlu0 %v604, 96
  %v606 = vpop.permute.xlu0 %605
  %vm607 = vcmask 851712
  %s608 = scalar_lea.vmem %s1, 16
  %609 = vst.msk [vmem:[%s608] sm:$0xff] %vm607, %v606
  %s610 = scalar_lea.vmem %s0, 60
  %v611 = vld [vmem:[%s610] sm:$0x1]
  %s612 = scalar_lea.vmem %s0, 123
  %v613 = vld [vmem:[%s612] sm:$0x2]
  %vm614 = vcmask 1041409
  %v615 = vsel %vm614, %v613, %v611
  %s616 = scalar_lea.vmem %s0, 186
  %v617 = vld [vmem:[%s616] sm:$0x4]
  %vm618 = vcmask 1042434
  %v619 = vsel %vm618, %v617, %v615
  %s620 = scalar_lea.vmem %s0, 249
  %v621 = vld [vmem:[%s620] sm:$0x8]
  %vm622 = vcmask 1043459
  %v623 = vsel %vm622, %v621, %v619
  %s624 = scalar_lea.vmem %s0, 312
  %v625 = vld [vmem:[%s624] sm:$0x10]
  %vm626 = vcmask 1044484
  %v627 = vsel %vm626, %v625, %v623
  %s628 = scalar_lea.vmem %s0, 375
  %v629 = vld [vmem:[%s628] sm:$0x20]
  %vm630 = vcmask 1045509
  %v631 = vsel %vm630, %v629, %v627
  %s632 = scalar_lea.vmem %s0, 438
  %v633 = vld [vmem:[%s632] sm:$0x40]
  %vm634 = vcmask 1046534
  %v635 = vsel %vm634, %v633, %v631
  %s636 = scalar_lea.vmem %s0, 501
  %v637 = vld [vmem:[%s636] sm:$0x80]
  %vm638 = vcmask 1047559
  %v639 = vsel %vm638, %v637, %v635
  %640 = vrot.lane.b32.xlu0 %v639, 96
  %v641 = vpop.permute.xlu0 %640
  %vm642 = vcmask 851712
  %s643 = scalar_lea.vmem %s1, 24
  %644 = vst.msk [vmem:[%s643] sm:$0xff] %vm642, %v641
  %s645 = scalar_lea.vmem %s0, 11
  %v646 = vld [vmem:[%s645] sm:$0x1]
  %s647 = scalar_lea.vmem %s0, 74
  %v648 = vld [vmem:[%s647] sm:$0x2]
  %vm649 = vcmask 1041409
  %v650 = vsel %vm649, %v648, %v646
  %s651 = scalar_lea.vmem %s0, 137
  %v652 = vld [vmem:[%s651] sm:$0x4]
  %vm653 = vcmask 1042434
  %v654 = vsel %vm653, %v652, %v650
  %s655 = scalar_lea.vmem %s0, 200
  %v656 = vld [vmem:[%s655] sm:$0x8]
  %vm657 = vcmask 1043459
  %v658 = vsel %vm657, %v656, %v654
  %s659 = scalar_lea.vmem %s0, 263
  %v660 = vld [vmem:[%s659] sm:$0x10]
  %vm661 = vcmask 1044484
  %v662 = vsel %vm661, %v660, %v658
  %s663 = scalar_lea.vmem %s0, 326
  %v664 = vld [vmem:[%s663] sm:$0x20]
  %vm665 = vcmask 1045509
  %v666 = vsel %vm665, %v664, %v662
  %s667 = scalar_lea.vmem %s0, 389
  %v668 = vld [vmem:[%s667] sm:$0x40]
  %vm669 = vcmask 1046534
  %v670 = vsel %vm669, %v668, %v666
  %s671 = scalar_lea.vmem %s0, 452
  %v672 = vld [vmem:[%s671] sm:$0x80]
  %vm673 = vcmask 1047559
  %v674 = vsel %vm673, %v672, %v670
  %675 = vrot.lane.b32.xlu0 %v674, 88
  %v676 = vpop.permute.xlu0 %675
  %vm677 = vcmask 786112
  %678 = vst.msk [vmem:[%s1] sm:$0xff] %vm677, %v676
  %s679 = scalar_lea.vmem %s0, 27
  %v680 = vld [vmem:[%s679] sm:$0x1]
  %s681 = scalar_lea.vmem %s0, 90
  %v682 = vld [vmem:[%s681] sm:$0x2]
  %vm683 = vcmask 1041409
  %v684 = vsel %vm683, %v682, %v680
  %s685 = scalar_lea.vmem %s0, 153
  %v686 = vld [vmem:[%s685] sm:$0x4]
  %vm687 = vcmask 1042434
  %v688 = vsel %vm687, %v686, %v684
  %s689 = scalar_lea.vmem %s0, 216
  %v690 = vld [vmem:[%s689] sm:$0x8]
  %vm691 = vcmask 1043459
  %v692 = vsel %vm691, %v690, %v688
  %s693 = scalar_lea.vmem %s0, 279
  %v694 = vld [vmem:[%s693] sm:$0x10]
  %vm695 = vcmask 1044484
  %v696 = vsel %vm695, %v694, %v692
  %s697 = scalar_lea.vmem %s0, 342
  %v698 = vld [vmem:[%s697] sm:$0x20]
  %vm699 = vcmask 1045509
  %v700 = vsel %vm699, %v698, %v696
  %s701 = scalar_lea.vmem %s0, 405
  %v702 = vld [vmem:[%s701] sm:$0x40]
  %vm703 = vcmask 1046534
  %v704 = vsel %vm703, %v702, %v700
  %s705 = scalar_lea.vmem %s0, 468
  %v706 = vld [vmem:[%s705] sm:$0x80]
  %vm707 = vcmask 1047559
  %v708 = vsel %vm707, %v706, %v704
  %709 = vrot.lane.b32.xlu0 %v708, 88
  %v710 = vpop.permute.xlu0 %709
  %vm711 = vcmask 786112
  %s712 = scalar_lea.vmem %s1, 8
  %713 = vst.msk [vmem:[%s712] sm:$0xff] %vm711, %v710
  %s714 = scalar_lea.vmem %s0, 43
  %v715 = vld [vmem:[%s714] sm:$0x1]
  %s716 = scalar_lea.vmem %s0, 106
  %v717 = vld [vmem:[%s716] sm:$0x2]
  %vm718 = vcmask 1041409
  %v719 = vsel %vm718, %v717, %v715
  %s720 = scalar_lea.vmem %s0, 169
  %v721 = vld [vmem:[%s720] sm:$0x4]
  %vm722 = vcmask 1042434
  %v723 = vsel %vm722, %v721, %v719
  %s724 = scalar_lea.vmem %s0, 232
  %v725 = vld [vmem:[%s724] sm:$0x8]
  %vm726 = vcmask 1043459
  %v727 = vsel %vm726, %v725, %v723
  %s728 = scalar_lea.vmem %s0, 295
  %v729 = vld [vmem:[%s728] sm:$0x10]
  %vm730 = vcmask 1044484
  %v731 = vsel %vm730, %v729, %v727
  %s732 = scalar_lea.vmem %s0, 358
  %v733 = vld [vmem:[%s732] sm:$0x20]
  %vm734 = vcmask 1045509
  %v735 = vsel %vm734, %v733, %v731
  %s736 = scalar_lea.vmem %s0, 421
  %v737 = vld [vmem:[%s736] sm:$0x40]
  %vm738 = vcmask 1046534
  %v739 = vsel %vm738, %v737, %v735
  %s740 = scalar_lea.vmem %s0, 484
  %v741 = vld [vmem:[%s740] sm:$0x80]
  %vm742 = vcmask 1047559
  %v743 = vsel %vm742, %v741, %v739
  %744 = vrot.lane.b32.xlu0 %v743, 88
  %v745 = vpop.permute.xlu0 %744
  %vm746 = vcmask 786112
  %s747 = scalar_lea.vmem %s1, 16
  %748 = vst.msk [vmem:[%s747] sm:$0xff] %vm746, %v745
  %s749 = scalar_lea.vmem %s0, 59
  %v750 = vld [vmem:[%s749] sm:$0x1]
  %s751 = scalar_lea.vmem %s0, 122
  %v752 = vld [vmem:[%s751] sm:$0x2]
  %vm753 = vcmask 1041409
  %v754 = vsel %vm753, %v752, %v750
  %s755 = scalar_lea.vmem %s0, 185
  %v756 = vld [vmem:[%s755] sm:$0x4]
  %vm757 = vcmask 1042434
  %v758 = vsel %vm757, %v756, %v754
  %s759 = scalar_lea.vmem %s0, 248
  %v760 = vld [vmem:[%s759] sm:$0x8]
  %vm761 = vcmask 1043459
  %v762 = vsel %vm761, %v760, %v758
  %s763 = scalar_lea.vmem %s0, 311
  %v764 = vld [vmem:[%s763] sm:$0x10]
  %vm765 = vcmask 1044484
  %v766 = vsel %vm765, %v764, %v762
  %s767 = scalar_lea.vmem %s0, 374
  %v768 = vld [vmem:[%s767] sm:$0x20]
  %vm769 = vcmask 1045509
  %v770 = vsel %vm769, %v768, %v766
  %s771 = scalar_lea.vmem %s0, 437
  %v772 = vld [vmem:[%s771] sm:$0x40]
  %vm773 = vcmask 1046534
  %v774 = vsel %vm773, %v772, %v770
  %s775 = scalar_lea.vmem %s0, 500
  %v776 = vld [vmem:[%s775] sm:$0x80]
  %vm777 = vcmask 1047559
  %v778 = vsel %vm777, %v776, %v774
  %779 = vrot.lane.b32.xlu0 %v778, 88
  %v780 = vpop.permute.xlu0 %779
  %vm781 = vcmask 786112
  %s782 = scalar_lea.vmem %s1, 24
  %783 = vst.msk [vmem:[%s782] sm:$0xff] %vm781, %v780
  %s784 = scalar_lea.vmem %s0, 10
  %v785 = vld [vmem:[%s784] sm:$0x1]
  %s786 = scalar_lea.vmem %s0, 73
  %v787 = vld [vmem:[%s786] sm:$0x2]
  %vm788 = vcmask 1041409
  %v789 = vsel %vm788, %v787, %v785
  %s790 = scalar_lea.vmem %s0, 136
  %v791 = vld [vmem:[%s790] sm:$0x4]
  %vm792 = vcmask 1042434
  %v793 = vsel %vm792, %v791, %v789
  %s794 = scalar_lea.vmem %s0, 199
  %v795 = vld [vmem:[%s794] sm:$0x8]
  %vm796 = vcmask 1043459
  %v797 = vsel %vm796, %v795, %v793
  %s798 = scalar_lea.vmem %s0, 262
  %v799 = vld [vmem:[%s798] sm:$0x10]
  %vm800 = vcmask 1044484
  %v801 = vsel %vm800, %v799, %v797
  %s802 = scalar_lea.vmem %s0, 325
  %v803 = vld [vmem:[%s802] sm:$0x20]
  %vm804 = vcmask 1045509
  %v805 = vsel %vm804, %v803, %v801
  %s806 = scalar_lea.vmem %s0, 388
  %v807 = vld [vmem:[%s806] sm:$0x40]
  %vm808 = vcmask 1046534
  %v809 = vsel %vm808, %v807, %v805
  %s810 = scalar_lea.vmem %s0, 451
  %v811 = vld [vmem:[%s810] sm:$0x80]
  %vm812 = vcmask 1047559
  %v813 = vsel %vm812, %v811, %v809
  %814 = vrot.lane.b32.xlu0 %v813, 80
  %v815 = vpop.permute.xlu0 %814
  %vm816 = vcmask 720512
  %817 = vst.msk [vmem:[%s1] sm:$0xff] %vm816, %v815
  %s818 = scalar_lea.vmem %s0, 26
  %v819 = vld [vmem:[%s818] sm:$0x1]
  %s820 = scalar_lea.vmem %s0, 89
  %v821 = vld [vmem:[%s820] sm:$0x2]
  %vm822 = vcmask 1041409
  %v823 = vsel %vm822, %v821, %v819
  %s824 = scalar_lea.vmem %s0, 152
  %v825 = vld [vmem:[%s824] sm:$0x4]
  %vm826 = vcmask 1042434
  %v827 = vsel %vm826, %v825, %v823
  %s828 = scalar_lea.vmem %s0, 215
  %v829 = vld [vmem:[%s828] sm:$0x8]
  %vm830 = vcmask 1043459
  %v831 = vsel %vm830, %v829, %v827
  %s832 = scalar_lea.vmem %s0, 278
  %v833 = vld [vmem:[%s832] sm:$0x10]
  %vm834 = vcmask 1044484
  %v835 = vsel %vm834, %v833, %v831
  %s836 = scalar_lea.vmem %s0, 341
  %v837 = vld [vmem:[%s836] sm:$0x20]
  %vm838 = vcmask 1045509
  %v839 = vsel %vm838, %v837, %v835
  %s840 = scalar_lea.vmem %s0, 404
  %v841 = vld [vmem:[%s840] sm:$0x40]
  %vm842 = vcmask 1046534
  %v843 = vsel %vm842, %v841, %v839
  %s844 = scalar_lea.vmem %s0, 467
  %v845 = vld [vmem:[%s844] sm:$0x80]
  %vm846 = vcmask 1047559
  %v847 = vsel %vm846, %v845, %v843
  %848 = vrot.lane.b32.xlu0 %v847, 80
  %v849 = vpop.permute.xlu0 %848
  %vm850 = vcmask 720512
  %s851 = scalar_lea.vmem %s1, 8
  %852 = vst.msk [vmem:[%s851] sm:$0xff] %vm850, %v849
  %s853 = scalar_lea.vmem %s0, 42
  %v854 = vld [vmem:[%s853] sm:$0x1]
  %s855 = scalar_lea.vmem %s0, 105
  %v856 = vld [vmem:[%s855] sm:$0x2]
  %vm857 = vcmask 1041409
  %v858 = vsel %vm857, %v856, %v854
  %s859 = scalar_lea.vmem %s0, 168
  %v860 = vld [vmem:[%s859] sm:$0x4]
  %vm861 = vcmask 1042434
  %v862 = vsel %vm861, %v860, %v858
  %s863 = scalar_lea.vmem %s0, 231
  %v864 = vld [vmem:[%s863] sm:$0x8]
  %vm865 = vcmask 1043459
  %v866 = vsel %vm865, %v864, %v862
  %s867 = scalar_lea.vmem %s0, 294
  %v868 = vld [vmem:[%s867] sm:$0x10]
  %vm869 = vcmask 1044484
  %v870 = vsel %vm869, %v868, %v866
  %s871 = scalar_lea.vmem %s0, 357
  %v872 = vld [vmem:[%s871] sm:$0x20]
  %vm873 = vcmask 1045509
  %v874 = vsel %vm873, %v872, %v870
  %s875 = scalar_lea.vmem %s0, 420
  %v876 = vld [vmem:[%s875] sm:$0x40]
  %vm877 = vcmask 1046534
  %v878 = vsel %vm877, %v876, %v874
  %s879 = scalar_lea.vmem %s0, 483
  %v880 = vld [vmem:[%s879] sm:$0x80]
  %vm881 = vcmask 1047559
  %v882 = vsel %vm881, %v880, %v878
  %883 = vrot.lane.b32.xlu0 %v882, 80
  %v884 = vpop.permute.xlu0 %883
  %vm885 = vcmask 720512
  %s886 = scalar_lea.vmem %s1, 16
  %887 = vst.msk [vmem:[%s886] sm:$0xff] %vm885, %v884
  %s888 = scalar_lea.vmem %s0, 58
  %v889 = vld [vmem:[%s888] sm:$0x1]
  %s890 = scalar_lea.vmem %s0, 121
  %v891 = vld [vmem:[%s890] sm:$0x2]
  %vm892 = vcmask 1041409
  %v893 = vsel %vm892, %v891, %v889
  %s894 = scalar_lea.vmem %s0, 184
  %v895 = vld [vmem:[%s894] sm:$0x4]
  %vm896 = vcmask 1042434
  %v897 = vsel %vm896, %v895, %v893
  %s898 = scalar_lea.vmem %s0, 247
  %v899 = vld [vmem:[%s898] sm:$0x8]
  %vm900 = vcmask 1043459
  %v901 = vsel %vm900, %v899, %v897
  %s902 = scalar_lea.vmem %s0, 310
  %v903 = vld [vmem:[%s902] sm:$0x10]
  %vm904 = vcmask 1044484
  %v905 = vsel %vm904, %v903, %v901
  %s906 = scalar_lea.vmem %s0, 373
  %v907 = vld [vmem:[%s906] sm:$0x20]
  %vm908 = vcmask 1045509
  %v909 = vsel %vm908, %v907, %v905
  %s910 = scalar_lea.vmem %s0, 436
  %v911 = vld [vmem:[%s910] sm:$0x40]
  %vm912 = vcmask 1046534
  %v913 = vsel %vm912, %v911, %v909
  %s914 = scalar_lea.vmem %s0, 499
  %v915 = vld [vmem:[%s914] sm:$0x80]
  %vm916 = vcmask 1047559
  %v917 = vsel %vm916, %v915, %v913
  %918 = vrot.lane.b32.xlu0 %v917, 80
  %v919 = vpop.permute.xlu0 %918
  %vm920 = vcmask 720512
  %s921 = scalar_lea.vmem %s1, 24
  %922 = vst.msk [vmem:[%s921] sm:$0xff] %vm920, %v919
  %s923 = scalar_lea.vmem %s0, 9
  %v924 = vld [vmem:[%s923] sm:$0x1]
  %s925 = scalar_lea.vmem %s0, 72
  %v926 = vld [vmem:[%s925] sm:$0x2]
  %vm927 = vcmask 1041409
  %v928 = vsel %vm927, %v926, %v924
  %s929 = scalar_lea.vmem %s0, 135
  %v930 = vld [vmem:[%s929] sm:$0x4]
  %vm931 = vcmask 1042434
  %v932 = vsel %vm931, %v930, %v928
  %s933 = scalar_lea.vmem %s0, 198
  %v934 = vld [vmem:[%s933] sm:$0x8]
  %vm935 = vcmask 1043459
  %v936 = vsel %vm935, %v934, %v932
  %s937 = scalar_lea.vmem %s0, 261
  %v938 = vld [vmem:[%s937] sm:$0x10]
  %vm939 = vcmask 1044484
  %v940 = vsel %vm939, %v938, %v936
  %s941 = scalar_lea.vmem %s0, 324
  %v942 = vld [vmem:[%s941] sm:$0x20]
  %vm943 = vcmask 1045509
  %v944 = vsel %vm943, %v942, %v940
  %s945 = scalar_lea.vmem %s0, 387
  %v946 = vld [vmem:[%s945] sm:$0x40]
  %vm947 = vcmask 1046534
  %v948 = vsel %vm947, %v946, %v944
  %s949 = scalar_lea.vmem %s0, 450
  %v950 = vld [vmem:[%s949] sm:$0x80]
  %vm951 = vcmask 1047559
  %v952 = vsel %vm951, %v950, %v948
  %953 = vrot.lane.b32.xlu0 %v952, 72
  %v954 = vpop.permute.xlu0 %953
  %vm955 = vcmask 654912
  %956 = vst.msk [vmem:[%s1] sm:$0xff] %vm955, %v954
  %s957 = scalar_lea.vmem %s0, 25
  %v958 = vld [vmem:[%s957] sm:$0x1]
  %s959 = scalar_lea.vmem %s0, 88
  %v960 = vld [vmem:[%s959] sm:$0x2]
  %vm961 = vcmask 1041409
  %v962 = vsel %vm961, %v960, %v958
  %s963 = scalar_lea.vmem %s0, 151
  %v964 = vld [vmem:[%s963] sm:$0x4]
  %vm965 = vcmask 1042434
  %v966 = vsel %vm965, %v964, %v962
  %s967 = scalar_lea.vmem %s0, 214
  %v968 = vld [vmem:[%s967] sm:$0x8]
  %vm969 = vcmask 1043459
  %v970 = vsel %vm969, %v968, %v966
  %s971 = scalar_lea.vmem %s0, 277
  %v972 = vld [vmem:[%s971] sm:$0x10]
  %vm973 = vcmask 1044484
  %v974 = vsel %vm973, %v972, %v970
  %s975 = scalar_lea.vmem %s0, 340
  %v976 = vld [vmem:[%s975] sm:$0x20]
  %vm977 = vcmask 1045509
  %v978 = vsel %vm977, %v976, %v974
  %s979 = scalar_lea.vmem %s0, 403
  %v980 = vld [vmem:[%s979] sm:$0x40]
  %vm981 = vcmask 1046534
  %v982 = vsel %vm981, %v980, %v978
  %s983 = scalar_lea.vmem %s0, 466
  %v984 = vld [vmem:[%s983] sm:$0x80]
  %vm985 = vcmask 1047559
  %v986 = vsel %vm985, %v984, %v982
  %987 = vrot.lane.b32.xlu0 %v986, 72
  %v988 = vpop.permute.xlu0 %987
  %vm989 = vcmask 654912
  %s990 = scalar_lea.vmem %s1, 8
  %991 = vst.msk [vmem:[%s990] sm:$0xff] %vm989, %v988
  %s992 = scalar_lea.vmem %s0, 41
  %v993 = vld [vmem:[%s992] sm:$0x1]
  %s994 = scalar_lea.vmem %s0, 104
  %v995 = vld [vmem:[%s994] sm:$0x2]
  %vm996 = vcmask 1041409
  %v997 = vsel %vm996, %v995, %v993
  %s998 = scalar_lea.vmem %s0, 167
  %v999 = vld [vmem:[%s998] sm:$0x4]
  %vm1000 = vcmask 1042434
  %v1001 = vsel %vm1000, %v999, %v997
  %s1002 = scalar_lea.vmem %s0, 230
  %v1003 = vld [vmem:[%s1002] sm:$0x8]
  %vm1004 = vcmask 1043459
  %v1005 = vsel %vm1004, %v1003, %v1001
  %s1006 = scalar_lea.vmem %s0, 293
  %v1007 = vld [vmem:[%s1006] sm:$0x10]
  %vm1008 = vcmask 1044484
  %v1009 = vsel %vm1008, %v1007, %v1005
  %s1010 = scalar_lea.vmem %s0, 356
  %v1011 = vld [vmem:[%s1010] sm:$0x20]
  %vm1012 = vcmask 1045509
  %v1013 = vsel %vm1012, %v1011, %v1009
  %s1014 = scalar_lea.vmem %s0, 419
  %v1015 = vld [vmem:[%s1014] sm:$0x40]
  %vm1016 = vcmask 1046534
  %v1017 = vsel %vm1016, %v1015, %v1013
  %s1018 = scalar_lea.vmem %s0, 482
  %v1019 = vld [vmem:[%s1018] sm:$0x80]
  %vm1020 = vcmask 1047559
  %v1021 = vsel %vm1020, %v1019, %v1017
  %1022 = vrot.lane.b32.xlu0 %v1021, 72
  %v1023 = vpop.permute.xlu0 %1022
  %vm1024 = vcmask 654912
  %s1025 = scalar_lea.vmem %s1, 16
  %1026 = vst.msk [vmem:[%s1025] sm:$0xff] %vm1024, %v1023
  %s1027 = scalar_lea.vmem %s0, 57
  %v1028 = vld [vmem:[%s1027] sm:$0x1]
  %s1029 = scalar_lea.vmem %s0, 120
  %v1030 = vld [vmem:[%s1029] sm:$0x2]
  %vm1031 = vcmask 1041409
  %v1032 = vsel %vm1031, %v1030, %v1028
  %s1033 = scalar_lea.vmem %s0, 183
  %v1034 = vld [vmem:[%s1033] sm:$0x4]
  %vm1035 = vcmask 1042434
  %v1036 = vsel %vm1035, %v1034, %v1032
  %s1037 = scalar_lea.vmem %s0, 246
  %v1038 = vld [vmem:[%s1037] sm:$0x8]
  %vm1039 = vcmask 1043459
  %v1040 = vsel %vm1039, %v1038, %v1036
  %s1041 = scalar_lea.vmem %s0, 309
  %v1042 = vld [vmem:[%s1041] sm:$0x10]
  %vm1043 = vcmask 1044484
  %v1044 = vsel %vm1043, %v1042, %v1040
  %s1045 = scalar_lea.vmem %s0, 372
  %v1046 = vld [vmem:[%s1045] sm:$0x20]
  %vm1047 = vcmask 1045509
  %v1048 = vsel %vm1047, %v1046, %v1044
  %s1049 = scalar_lea.vmem %s0, 435
  %v1050 = vld [vmem:[%s1049] sm:$0x40]
  %vm1051 = vcmask 1046534
  %v1052 = vsel %vm1051, %v1050, %v1048
  %s1053 = scalar_lea.vmem %s0, 498
  %v1054 = vld [vmem:[%s1053] sm:$0x80]
  %vm1055 = vcmask 1047559
  %v1056 = vsel %vm1055, %v1054, %v1052
  %1057 = vrot.lane.b32.xlu0 %v1056, 72
  %v1058 = vpop.permute.xlu0 %1057
  %vm1059 = vcmask 654912
  %s1060 = scalar_lea.vmem %s1, 24
  %1061 = vst.msk [vmem:[%s1060] sm:$0xff] %vm1059, %v1058
  %s1062 = scalar_lea.vmem %s0, 8
  %v1063 = vld [vmem:[%s1062] sm:$0x1]
  %s1064 = scalar_lea.vmem %s0, 71
  %v1065 = vld [vmem:[%s1064] sm:$0x2]
  %vm1066 = vcmask 1041409
  %v1067 = vsel %vm1066, %v1065, %v1063
  %s1068 = scalar_lea.vmem %s0, 134
  %v1069 = vld [vmem:[%s1068] sm:$0x4]
  %vm1070 = vcmask 1042434
  %v1071 = vsel %vm1070, %v1069, %v1067
  %s1072 = scalar_lea.vmem %s0, 197
  %v1073 = vld [vmem:[%s1072] sm:$0x8]
  %vm1074 = vcmask 1043459
  %v1075 = vsel %vm1074, %v1073, %v1071
  %s1076 = scalar_lea.vmem %s0, 260
  %v1077 = vld [vmem:[%s1076] sm:$0x10]
  %vm1078 = vcmask 1044484
  %v1079 = vsel %vm1078, %v1077, %v1075
  %s1080 = scalar_lea.vmem %s0, 323
  %v1081 = vld [vmem:[%s1080] sm:$0x20]
  %vm1082 = vcmask 1045509
  %v1083 = vsel %vm1082, %v1081, %v1079
  %s1084 = scalar_lea.vmem %s0, 386
  %v1085 = vld [vmem:[%s1084] sm:$0x40]
  %vm1086 = vcmask 1046534
  %v1087 = vsel %vm1086, %v1085, %v1083
  %s1088 = scalar_lea.vmem %s0, 449
  %v1089 = vld [vmem:[%s1088] sm:$0x80]
  %vm1090 = vcmask 1047559
  %v1091 = vsel %vm1090, %v1089, %v1087
  %1092 = vrot.lane.b32.xlu0 %v1091, 64
  %v1093 = vpop.permute.xlu0 %1092
  %vm1094 = vcmask 589312
  %1095 = vst.msk [vmem:[%s1] sm:$0xff] %vm1094, %v1093
  %s1096 = scalar_lea.vmem %s0, 24
  %v1097 = vld [vmem:[%s1096] sm:$0x1]
  %s1098 = scalar_lea.vmem %s0, 87
  %v1099 = vld [vmem:[%s1098] sm:$0x2]
  %vm1100 = vcmask 1041409
  %v1101 = vsel %vm1100, %v1099, %v1097
  %s1102 = scalar_lea.vmem %s0, 150
  %v1103 = vld [vmem:[%s1102] sm:$0x4]
  %vm1104 = vcmask 1042434
  %v1105 = vsel %vm1104, %v1103, %v1101
  %s1106 = scalar_lea.vmem %s0, 213
  %v1107 = vld [vmem:[%s1106] sm:$0x8]
  %vm1108 = vcmask 1043459
  %v1109 = vsel %vm1108, %v1107, %v1105
  %s1110 = scalar_lea.vmem %s0, 276
  %v1111 = vld [vmem:[%s1110] sm:$0x10]
  %vm1112 = vcmask 1044484
  %v1113 = vsel %vm1112, %v1111, %v1109
  %s1114 = scalar_lea.vmem %s0, 339
  %v1115 = vld [vmem:[%s1114] sm:$0x20]
  %vm1116 = vcmask 1045509
  %v1117 = vsel %vm1116, %v1115, %v1113
  %s1118 = scalar_lea.vmem %s0, 402
  %v1119 = vld [vmem:[%s1118] sm:$0x40]
  %vm1120 = vcmask 1046534
  %v1121 = vsel %vm1120, %v1119, %v1117
  %s1122 = scalar_lea.vmem %s0, 465
  %v1123 = vld [vmem:[%s1122] sm:$0x80]
  %vm1124 = vcmask 1047559
  %v1125 = vsel %vm1124, %v1123, %v1121
  %1126 = vrot.lane.b32.xlu0 %v1125, 64
  %v1127 = vpop.permute.xlu0 %1126
  %vm1128 = vcmask 589312
  %s1129 = scalar_lea.vmem %s1, 8
  %1130 = vst.msk [vmem:[%s1129] sm:$0xff] %vm1128, %v1127
  %s1131 = scalar_lea.vmem %s0, 40
  %v1132 = vld [vmem:[%s1131] sm:$0x1]
  %s1133 = scalar_lea.vmem %s0, 103
  %v1134 = vld [vmem:[%s1133] sm:$0x2]
  %vm1135 = vcmask 1041409
  %v1136 = vsel %vm1135, %v1134, %v1132
  %s1137 = scalar_lea.vmem %s0, 166
  %v1138 = vld [vmem:[%s1137] sm:$0x4]
  %vm1139 = vcmask 1042434
  %v1140 = vsel %vm1139, %v1138, %v1136
  %s1141 = scalar_lea.vmem %s0, 229
  %v1142 = vld [vmem:[%s1141] sm:$0x8]
  %vm1143 = vcmask 1043459
  %v1144 = vsel %vm1143, %v1142, %v1140
  %s1145 = scalar_lea.vmem %s0, 292
  %v1146 = vld [vmem:[%s1145] sm:$0x10]
  %vm1147 = vcmask 1044484
  %v1148 = vsel %vm1147, %v1146, %v1144
  %s1149 = scalar_lea.vmem %s0, 355
  %v1150 = vld [vmem:[%s1149] sm:$0x20]
  %vm1151 = vcmask 1045509
  %v1152 = vsel %vm1151, %v1150, %v1148
  %s1153 = scalar_lea.vmem %s0, 418
  %v1154 = vld [vmem:[%s1153] sm:$0x40]
  %vm1155 = vcmask 1046534
  %v1156 = vsel %vm1155, %v1154, %v1152
  %s1157 = scalar_lea.vmem %s0, 481
  %v1158 = vld [vmem:[%s1157] sm:$0x80]
  %vm1159 = vcmask 1047559
  %v1160 = vsel %vm1159, %v1158, %v1156
  %1161 = vrot.lane.b32.xlu0 %v1160, 64
  %v1162 = vpop.permute.xlu0 %1161
  %vm1163 = vcmask 589312
  %s1164 = scalar_lea.vmem %s1, 16
  %1165 = vst.msk [vmem:[%s1164] sm:$0xff] %vm1163, %v1162
  %s1166 = scalar_lea.vmem %s0, 56
  %v1167 = vld [vmem:[%s1166] sm:$0x1]
  %s1168 = scalar_lea.vmem %s0, 119
  %v1169 = vld [vmem:[%s1168] sm:$0x2]
  %vm1170 = vcmask 1041409
  %v1171 = vsel %vm1170, %v1169, %v1167
  %s1172 = scalar_lea.vmem %s0, 182
  %v1173 = vld [vmem:[%s1172] sm:$0x4]
  %vm1174 = vcmask 1042434
  %v1175 = vsel %vm1174, %v1173, %v1171
  %s1176 = scalar_lea.vmem %s0, 245
  %v1177 = vld [vmem:[%s1176] sm:$0x8]
  %vm1178 = vcmask 1043459
  %v1179 = vsel %vm1178, %v1177, %v1175
  %s1180 = scalar_lea.vmem %s0, 308
  %v1181 = vld [vmem:[%s1180] sm:$0x10]
  %vm1182 = vcmask 1044484
  %v1183 = vsel %vm1182, %v1181, %v1179
  %s1184 = scalar_lea.vmem %s0, 371
  %v1185 = vld [vmem:[%s1184] sm:$0x20]
  %vm1186 = vcmask 1045509
  %v1187 = vsel %vm1186, %v1185, %v1183
  %s1188 = scalar_lea.vmem %s0, 434
  %v1189 = vld [vmem:[%s1188] sm:$0x40]
  %vm1190 = vcmask 1046534
  %v1191 = vsel %vm1190, %v1189, %v1187
  %s1192 = scalar_lea.vmem %s0, 497
  %v1193 = vld [vmem:[%s1192] sm:$0x80]
  %vm1194 = vcmask 1047559
  %v1195 = vsel %vm1194, %v1193, %v1191
  %1196 = vrot.lane.b32.xlu0 %v1195, 64
  %v1197 = vpop.permute.xlu0 %1196
  %vm1198 = vcmask 589312
  %s1199 = scalar_lea.vmem %s1, 24
  %1200 = vst.msk [vmem:[%s1199] sm:$0xff] %vm1198, %v1197
  %s1201 = scalar_lea.vmem %s0, 7
  %v1202 = vld [vmem:[%s1201] sm:$0x1]
  %s1203 = scalar_lea.vmem %s0, 70
  %v1204 = vld [vmem:[%s1203] sm:$0x2]
  %vm1205 = vcmask 1041409
  %v1206 = vsel %vm1205, %v1204, %v1202
  %s1207 = scalar_lea.vmem %s0, 133
  %v1208 = vld [vmem:[%s1207] sm:$0x4]
  %vm1209 = vcmask 1042434
  %v1210 = vsel %vm1209, %v1208, %v1206
  %s1211 = scalar_lea.vmem %s0, 196
  %v1212 = vld [vmem:[%s1211] sm:$0x8]
  %vm1213 = vcmask 1043459
  %v1214 = vsel %vm1213, %v1212, %v1210
  %s1215 = scalar_lea.vmem %s0, 259
  %v1216 = vld [vmem:[%s1215] sm:$0x10]
  %vm1217 = vcmask 1044484
  %v1218 = vsel %vm1217, %v1216, %v1214
  %s1219 = scalar_lea.vmem %s0, 322
  %v1220 = vld [vmem:[%s1219] sm:$0x20]
  %vm1221 = vcmask 1045509
  %v1222 = vsel %vm1221, %v1220, %v1218
  %s1223 = scalar_lea.vmem %s0, 385
  %v1224 = vld [vmem:[%s1223] sm:$0x40]
  %vm1225 = vcmask 1046534
  %v1226 = vsel %vm1225, %v1224, %v1222
  %s1227 = scalar_lea.vmem %s0, 448
  %v1228 = vld [vmem:[%s1227] sm:$0x80]
  %vm1229 = vcmask 1047559
  %v1230 = vsel %vm1229, %v1228, %v1226
  %1231 = vrot.lane.b32.xlu0 %v1230, 56
  %v1232 = vpop.permute.xlu0 %1231
  %vm1233 = vcmask 523712
  %1234 = vst.msk [vmem:[%s1] sm:$0xff] %vm1233, %v1232
  %s1235 = scalar_lea.vmem %s0, 23
  %v1236 = vld [vmem:[%s1235] sm:$0x1]
  %s1237 = scalar_lea.vmem %s0, 86
  %v1238 = vld [vmem:[%s1237] sm:$0x2]
  %vm1239 = vcmask 1041409
  %v1240 = vsel %vm1239, %v1238, %v1236
  %s1241 = scalar_lea.vmem %s0, 149
  %v1242 = vld [vmem:[%s1241] sm:$0x4]
  %vm1243 = vcmask 1042434
  %v1244 = vsel %vm1243, %v1242, %v1240
  %s1245 = scalar_lea.vmem %s0, 212
  %v1246 = vld [vmem:[%s1245] sm:$0x8]
  %vm1247 = vcmask 1043459
  %v1248 = vsel %vm1247, %v1246, %v1244
  %s1249 = scalar_lea.vmem %s0, 275
  %v1250 = vld [vmem:[%s1249] sm:$0x10]
  %vm1251 = vcmask 1044484
  %v1252 = vsel %vm1251, %v1250, %v1248
  %s1253 = scalar_lea.vmem %s0, 338
  %v1254 = vld [vmem:[%s1253] sm:$0x20]
  %vm1255 = vcmask 1045509
  %v1256 = vsel %vm1255, %v1254, %v1252
  %s1257 = scalar_lea.vmem %s0, 401
  %v1258 = vld [vmem:[%s1257] sm:$0x40]
  %vm1259 = vcmask 1046534
  %v1260 = vsel %vm1259, %v1258, %v1256
  %s1261 = scalar_lea.vmem %s0, 464
  %v1262 = vld [vmem:[%s1261] sm:$0x80]
  %vm1263 = vcmask 1047559
  %v1264 = vsel %vm1263, %v1262, %v1260
  %1265 = vrot.lane.b32.xlu0 %v1264, 56
  %v1266 = vpop.permute.xlu0 %1265
  %vm1267 = vcmask 523712
  %s1268 = scalar_lea.vmem %s1, 8
  %1269 = vst.msk [vmem:[%s1268] sm:$0xff] %vm1267, %v1266
  %s1270 = scalar_lea.vmem %s0, 39
  %v1271 = vld [vmem:[%s1270] sm:$0x1]
  %s1272 = scalar_lea.vmem %s0, 102
  %v1273 = vld [vmem:[%s1272] sm:$0x2]
  %vm1274 = vcmask 1041409
  %v1275 = vsel %vm1274, %v1273, %v1271
  %s1276 = scalar_lea.vmem %s0, 165
  %v1277 = vld [vmem:[%s1276] sm:$0x4]
  %vm1278 = vcmask 1042434
  %v1279 = vsel %vm1278, %v1277, %v1275
  %s1280 = scalar_lea.vmem %s0, 228
  %v1281 = vld [vmem:[%s1280] sm:$0x8]
  %vm1282 = vcmask 1043459
  %v1283 = vsel %vm1282, %v1281, %v1279
  %s1284 = scalar_lea.vmem %s0, 291
  %v1285 = vld [vmem:[%s1284] sm:$0x10]
  %vm1286 = vcmask 1044484
  %v1287 = vsel %vm1286, %v1285, %v1283
  %s1288 = scalar_lea.vmem %s0, 354
  %v1289 = vld [vmem:[%s1288] sm:$0x20]
  %vm1290 = vcmask 1045509
  %v1291 = vsel %vm1290, %v1289, %v1287
  %s1292 = scalar_lea.vmem %s0, 417
  %v1293 = vld [vmem:[%s1292] sm:$0x40]
  %vm1294 = vcmask 1046534
  %v1295 = vsel %vm1294, %v1293, %v1291
  %s1296 = scalar_lea.vmem %s0, 480
  %v1297 = vld [vmem:[%s1296] sm:$0x80]
  %vm1298 = vcmask 1047559
  %v1299 = vsel %vm1298, %v1297, %v1295
  %1300 = vrot.lane.b32.xlu0 %v1299, 56
  %v1301 = vpop.permute.xlu0 %1300
  %vm1302 = vcmask 523712
  %s1303 = scalar_lea.vmem %s1, 16
  %1304 = vst.msk [vmem:[%s1303] sm:$0xff] %vm1302, %v1301
  %s1305 = scalar_lea.vmem %s0, 55
  %v1306 = vld [vmem:[%s1305] sm:$0x1]
  %s1307 = scalar_lea.vmem %s0, 118
  %v1308 = vld [vmem:[%s1307] sm:$0x2]
  %vm1309 = vcmask 1041409
  %v1310 = vsel %vm1309, %v1308, %v1306
  %s1311 = scalar_lea.vmem %s0, 181
  %v1312 = vld [vmem:[%s1311] sm:$0x4]
  %vm1313 = vcmask 1042434
  %v1314 = vsel %vm1313, %v1312, %v1310
  %s1315 = scalar_lea.vmem %s0, 244
  %v1316 = vld [vmem:[%s1315] sm:$0x8]
  %vm1317 = vcmask 1043459
  %v1318 = vsel %vm1317, %v1316, %v1314
  %s1319 = scalar_lea.vmem %s0, 307
  %v1320 = vld [vmem:[%s1319] sm:$0x10]
  %vm1321 = vcmask 1044484
  %v1322 = vsel %vm1321, %v1320, %v1318
  %s1323 = scalar_lea.vmem %s0, 370
  %v1324 = vld [vmem:[%s1323] sm:$0x20]
  %vm1325 = vcmask 1045509
  %v1326 = vsel %vm1325, %v1324, %v1322
  %s1327 = scalar_lea.vmem %s0, 433
  %v1328 = vld [vmem:[%s1327] sm:$0x40]
  %vm1329 = vcmask 1046534
  %v1330 = vsel %vm1329, %v1328, %v1326
  %s1331 = scalar_lea.vmem %s0, 496
  %v1332 = vld [vmem:[%s1331] sm:$0x80]
  %vm1333 = vcmask 1047559
  %v1334 = vsel %vm1333, %v1332, %v1330
  %1335 = vrot.lane.b32.xlu0 %v1334, 56
  %v1336 = vpop.permute.xlu0 %1335
  %vm1337 = vcmask 523712
  %s1338 = scalar_lea.vmem %s1, 24
  %1339 = vst.msk [vmem:[%s1338] sm:$0xff] %vm1337, %v1336
  %s1340 = scalar_lea.vmem %s0, 6
  %v1341 = vld [vmem:[%s1340] sm:$0x1]
  %s1342 = scalar_lea.vmem %s0, 69
  %v1343 = vld [vmem:[%s1342] sm:$0x2]
  %vm1344 = vcmask 1041409
  %v1345 = vsel %vm1344, %v1343, %v1341
  %s1346 = scalar_lea.vmem %s0, 132
  %v1347 = vld [vmem:[%s1346] sm:$0x4]
  %vm1348 = vcmask 1042434
  %v1349 = vsel %vm1348, %v1347, %v1345
  %s1350 = scalar_lea.vmem %s0, 195
  %v1351 = vld [vmem:[%s1350] sm:$0x8]
  %vm1352 = vcmask 1043459
  %v1353 = vsel %vm1352, %v1351, %v1349
  %s1354 = scalar_lea.vmem %s0, 258
  %v1355 = vld [vmem:[%s1354] sm:$0x10]
  %vm1356 = vcmask 1044484
  %v1357 = vsel %vm1356, %v1355, %v1353
  %s1358 = scalar_lea.vmem %s0, 321
  %v1359 = vld [vmem:[%s1358] sm:$0x20]
  %vm1360 = vcmask 1045509
  %v1361 = vsel %vm1360, %v1359, %v1357
  %s1362 = scalar_lea.vmem %s0, 384
  %v1363 = vld [vmem:[%s1362] sm:$0x40]
  %vm1364 = vcmask 1046534
  %v1365 = vsel %vm1364, %v1363, %v1361
  %s1366 = scalar_lea.vmem %s0, 447
  %v1367 = vld [vmem:[%s1366] sm:$0x80]
  %vm1368 = vcmask 1047559
  %v1369 = vsel %vm1368, %v1367, %v1365
  %1370 = vrot.lane.b32.xlu0 %v1369, 48
  %v1371 = vpop.permute.xlu0 %1370
  %vm1372 = vcmask 458112
  %1373 = vst.msk [vmem:[%s1] sm:$0xff] %vm1372, %v1371
  %s1374 = scalar_lea.vmem %s0, 22
  %v1375 = vld [vmem:[%s1374] sm:$0x1]
  %s1376 = scalar_lea.vmem %s0, 85
  %v1377 = vld [vmem:[%s1376] sm:$0x2]
  %vm1378 = vcmask 1041409
  %v1379 = vsel %vm1378, %v1377, %v1375
  %s1380 = scalar_lea.vmem %s0, 148
  %v1381 = vld [vmem:[%s1380] sm:$0x4]
  %vm1382 = vcmask 1042434
  %v1383 = vsel %vm1382, %v1381, %v1379
  %s1384 = scalar_lea.vmem %s0, 211
  %v1385 = vld [vmem:[%s1384] sm:$0x8]
  %vm1386 = vcmask 1043459
  %v1387 = vsel %vm1386, %v1385, %v1383
  %s1388 = scalar_lea.vmem %s0, 274
  %v1389 = vld [vmem:[%s1388] sm:$0x10]
  %vm1390 = vcmask 1044484
  %v1391 = vsel %vm1390, %v1389, %v1387
  %s1392 = scalar_lea.vmem %s0, 337
  %v1393 = vld [vmem:[%s1392] sm:$0x20]
  %vm1394 = vcmask 1045509
  %v1395 = vsel %vm1394, %v1393, %v1391
  %s1396 = scalar_lea.vmem %s0, 400
  %v1397 = vld [vmem:[%s1396] sm:$0x40]
  %vm1398 = vcmask 1046534
  %v1399 = vsel %vm1398, %v1397, %v1395
  %s1400 = scalar_lea.vmem %s0, 463
  %v1401 = vld [vmem:[%s1400] sm:$0x80]
  %vm1402 = vcmask 1047559
  %v1403 = vsel %vm1402, %v1401, %v1399
  %1404 = vrot.lane.b32.xlu0 %v1403, 48
  %v1405 = vpop.permute.xlu0 %1404
  %vm1406 = vcmask 458112
  %s1407 = scalar_lea.vmem %s1, 8
  %1408 = vst.msk [vmem:[%s1407] sm:$0xff] %vm1406, %v1405
  %s1409 = scalar_lea.vmem %s0, 38
  %v1410 = vld [vmem:[%s1409] sm:$0x1]
  %s1411 = scalar_lea.vmem %s0, 101
  %v1412 = vld [vmem:[%s1411] sm:$0x2]
  %vm1413 = vcmask 1041409
  %v1414 = vsel %vm1413, %v1412, %v1410
  %s1415 = scalar_lea.vmem %s0, 164
  %v1416 = vld [vmem:[%s1415] sm:$0x4]
  %vm1417 = vcmask 1042434
  %v1418 = vsel %vm1417, %v1416, %v1414
  %s1419 = scalar_lea.vmem %s0, 227
  %v1420 = vld [vmem:[%s1419] sm:$0x8]
  %vm1421 = vcmask 1043459
  %v1422 = vsel %vm1421, %v1420, %v1418
  %s1423 = scalar_lea.vmem %s0, 290
  %v1424 = vld [vmem:[%s1423] sm:$0x10]
  %vm1425 = vcmask 1044484
  %v1426 = vsel %vm1425, %v1424, %v1422
  %s1427 = scalar_lea.vmem %s0, 353
  %v1428 = vld [vmem:[%s1427] sm:$0x20]
  %vm1429 = vcmask 1045509
  %v1430 = vsel %vm1429, %v1428, %v1426
  %s1431 = scalar_lea.vmem %s0, 416
  %v1432 = vld [vmem:[%s1431] sm:$0x40]
  %vm1433 = vcmask 1046534
  %v1434 = vsel %vm1433, %v1432, %v1430
  %s1435 = scalar_lea.vmem %s0, 479
  %v1436 = vld [vmem:[%s1435] sm:$0x80]
  %vm1437 = vcmask 1047559
  %v1438 = vsel %vm1437, %v1436, %v1434
  %1439 = vrot.lane.b32.xlu0 %v1438, 48
  %v1440 = vpop.permute.xlu0 %1439
  %vm1441 = vcmask 458112
  %s1442 = scalar_lea.vmem %s1, 16
  %1443 = vst.msk [vmem:[%s1442] sm:$0xff] %vm1441, %v1440
  %s1444 = scalar_lea.vmem %s0, 54
  %v1445 = vld [vmem:[%s1444] sm:$0x1]
  %s1446 = scalar_lea.vmem %s0, 117
  %v1447 = vld [vmem:[%s1446] sm:$0x2]
  %vm1448 = vcmask 1041409
  %v1449 = vsel %vm1448, %v1447, %v1445
  %s1450 = scalar_lea.vmem %s0, 180
  %v1451 = vld [vmem:[%s1450] sm:$0x4]
  %vm1452 = vcmask 1042434
  %v1453 = vsel %vm1452, %v1451, %v1449
  %s1454 = scalar_lea.vmem %s0, 243
  %v1455 = vld [vmem:[%s1454] sm:$0x8]
  %vm1456 = vcmask 1043459
  %v1457 = vsel %vm1456, %v1455, %v1453
  %s1458 = scalar_lea.vmem %s0, 306
  %v1459 = vld [vmem:[%s1458] sm:$0x10]
  %vm1460 = vcmask 1044484
  %v1461 = vsel %vm1460, %v1459, %v1457
  %s1462 = scalar_lea.vmem %s0, 369
  %v1463 = vld [vmem:[%s1462] sm:$0x20]
  %vm1464 = vcmask 1045509
  %v1465 = vsel %vm1464, %v1463, %v1461
  %s1466 = scalar_lea.vmem %s0, 432
  %v1467 = vld [vmem:[%s1466] sm:$0x40]
  %vm1468 = vcmask 1046534
  %v1469 = vsel %vm1468, %v1467, %v1465
  %s1470 = scalar_lea.vmem %s0, 495
  %v1471 = vld [vmem:[%s1470] sm:$0x80]
  %vm1472 = vcmask 1047559
  %v1473 = vsel %vm1472, %v1471, %v1469
  %1474 = vrot.lane.b32.xlu0 %v1473, 48
  %v1475 = vpop.permute.xlu0 %1474
  %vm1476 = vcmask 458112
  %s1477 = scalar_lea.vmem %s1, 24
  %1478 = vst.msk [vmem:[%s1477] sm:$0xff] %vm1476, %v1475
  %s1479 = scalar_lea.vmem %s0, 5
  %v1480 = vld [vmem:[%s1479] sm:$0x1]
  %s1481 = scalar_lea.vmem %s0, 68
  %v1482 = vld [vmem:[%s1481] sm:$0x2]
  %vm1483 = vcmask 1041409
  %v1484 = vsel %vm1483, %v1482, %v1480
  %s1485 = scalar_lea.vmem %s0, 131
  %v1486 = vld [vmem:[%s1485] sm:$0x4]
  %vm1487 = vcmask 1042434
  %v1488 = vsel %vm1487, %v1486, %v1484
  %s1489 = scalar_lea.vmem %s0, 194
  %v1490 = vld [vmem:[%s1489] sm:$0x8]
  %vm1491 = vcmask 1043459
  %v1492 = vsel %vm1491, %v1490, %v1488
  %s1493 = scalar_lea.vmem %s0, 257
  %v1494 = vld [vmem:[%s1493] sm:$0x10]
  %vm1495 = vcmask 1044484
  %v1496 = vsel %vm1495, %v1494, %v1492
  %s1497 = scalar_lea.vmem %s0, 320
  %v1498 = vld [vmem:[%s1497] sm:$0x20]
  %vm1499 = vcmask 1045509
  %v1500 = vsel %vm1499, %v1498, %v1496
  %s1501 = scalar_lea.vmem %s0, 383
  %v1502 = vld [vmem:[%s1501] sm:$0x40]
  %vm1503 = vcmask 1046534
  %v1504 = vsel %vm1503, %v1502, %v1500
  %s1505 = scalar_lea.vmem %s0, 446
  %v1506 = vld [vmem:[%s1505] sm:$0x80]
  %vm1507 = vcmask 1047559
  %v1508 = vsel %vm1507, %v1506, %v1504
  %1509 = vrot.lane.b32.xlu0 %v1508, 40
  %v1510 = vpop.permute.xlu0 %1509
  %vm1511 = vcmask 392512
  %1512 = vst.msk [vmem:[%s1] sm:$0xff] %vm1511, %v1510
  %s1513 = scalar_lea.vmem %s0, 21
  %v1514 = vld [vmem:[%s1513] sm:$0x1]
  %s1515 = scalar_lea.vmem %s0, 84
  %v1516 = vld [vmem:[%s1515] sm:$0x2]
  %vm1517 = vcmask 1041409
  %v1518 = vsel %vm1517, %v1516, %v1514
  %s1519 = scalar_lea.vmem %s0, 147
  %v1520 = vld [vmem:[%s1519] sm:$0x4]
  %vm1521 = vcmask 1042434
  %v1522 = vsel %vm1521, %v1520, %v1518
  %s1523 = scalar_lea.vmem %s0, 210
  %v1524 = vld [vmem:[%s1523] sm:$0x8]
  %vm1525 = vcmask 1043459
  %v1526 = vsel %vm1525, %v1524, %v1522
  %s1527 = scalar_lea.vmem %s0, 273
  %v1528 = vld [vmem:[%s1527] sm:$0x10]
  %vm1529 = vcmask 1044484
  %v1530 = vsel %vm1529, %v1528, %v1526
  %s1531 = scalar_lea.vmem %s0, 336
  %v1532 = vld [vmem:[%s1531] sm:$0x20]
  %vm1533 = vcmask 1045509
  %v1534 = vsel %vm1533, %v1532, %v1530
  %s1535 = scalar_lea.vmem %s0, 399
  %v1536 = vld [vmem:[%s1535] sm:$0x40]
  %vm1537 = vcmask 1046534
  %v1538 = vsel %vm1537, %v1536, %v1534
  %s1539 = scalar_lea.vmem %s0, 462
  %v1540 = vld [vmem:[%s1539] sm:$0x80]
  %vm1541 = vcmask 1047559
  %v1542 = vsel %vm1541, %v1540, %v1538
  %1543 = vrot.lane.b32.xlu0 %v1542, 40
  %v1544 = vpop.permute.xlu0 %1543
  %vm1545 = vcmask 392512
  %s1546 = scalar_lea.vmem %s1, 8
  %1547 = vst.msk [vmem:[%s1546] sm:$0xff] %vm1545, %v1544
  %s1548 = scalar_lea.vmem %s0, 37
  %v1549 = vld [vmem:[%s1548] sm:$0x1]
  %s1550 = scalar_lea.vmem %s0, 100
  %v1551 = vld [vmem:[%s1550] sm:$0x2]
  %vm1552 = vcmask 1041409
  %v1553 = vsel %vm1552, %v1551, %v1549
  %s1554 = scalar_lea.vmem %s0, 163
  %v1555 = vld [vmem:[%s1554] sm:$0x4]
  %vm1556 = vcmask 1042434
  %v1557 = vsel %vm1556, %v1555, %v1553
  %s1558 = scalar_lea.vmem %s0, 226
  %v1559 = vld [vmem:[%s1558] sm:$0x8]
  %vm1560 = vcmask 1043459
  %v1561 = vsel %vm1560, %v1559, %v1557
  %s1562 = scalar_lea.vmem %s0, 289
  %v1563 = vld [vmem:[%s1562] sm:$0x10]
  %vm1564 = vcmask 1044484
  %v1565 = vsel %vm1564, %v1563, %v1561
  %s1566 = scalar_lea.vmem %s0, 352
  %v1567 = vld [vmem:[%s1566] sm:$0x20]
  %vm1568 = vcmask 1045509
  %v1569 = vsel %vm1568, %v1567, %v1565
  %s1570 = scalar_lea.vmem %s0, 415
  %v1571 = vld [vmem:[%s1570] sm:$0x40]
  %vm1572 = vcmask 1046534
  %v1573 = vsel %vm1572, %v1571, %v1569
  %s1574 = scalar_lea.vmem %s0, 478
  %v1575 = vld [vmem:[%s1574] sm:$0x80]
  %vm1576 = vcmask 1047559
  %v1577 = vsel %vm1576, %v1575, %v1573
  %1578 = vrot.lane.b32.xlu0 %v1577, 40
  %v1579 = vpop.permute.xlu0 %1578
  %vm1580 = vcmask 392512
  %s1581 = scalar_lea.vmem %s1, 16
  %1582 = vst.msk [vmem:[%s1581] sm:$0xff] %vm1580, %v1579
  %s1583 = scalar_lea.vmem %s0, 53
  %v1584 = vld [vmem:[%s1583] sm:$0x1]
  %s1585 = scalar_lea.vmem %s0, 116
  %v1586 = vld [vmem:[%s1585] sm:$0x2]
  %vm1587 = vcmask 1041409
  %v1588 = vsel %vm1587, %v1586, %v1584
  %s1589 = scalar_lea.vmem %s0, 179
  %v1590 = vld [vmem:[%s1589] sm:$0x4]
  %vm1591 = vcmask 1042434
  %v1592 = vsel %vm1591, %v1590, %v1588
  %s1593 = scalar_lea.vmem %s0, 242
  %v1594 = vld [vmem:[%s1593] sm:$0x8]
  %vm1595 = vcmask 1043459
  %v1596 = vsel %vm1595, %v1594, %v1592
  %s1597 = scalar_lea.vmem %s0, 305
  %v1598 = vld [vmem:[%s1597] sm:$0x10]
  %vm1599 = vcmask 1044484
  %v1600 = vsel %vm1599, %v1598, %v1596
  %s1601 = scalar_lea.vmem %s0, 368
  %v1602 = vld [vmem:[%s1601] sm:$0x20]
  %vm1603 = vcmask 1045509
  %v1604 = vsel %vm1603, %v1602, %v1600
  %s1605 = scalar_lea.vmem %s0, 431
  %v1606 = vld [vmem:[%s1605] sm:$0x40]
  %vm1607 = vcmask 1046534
  %v1608 = vsel %vm1607, %v1606, %v1604
  %s1609 = scalar_lea.vmem %s0, 494
  %v1610 = vld [vmem:[%s1609] sm:$0x80]
  %vm1611 = vcmask 1047559
  %v1612 = vsel %vm1611, %v1610, %v1608
  %1613 = vrot.lane.b32.xlu0 %v1612, 40
  %v1614 = vpop.permute.xlu0 %1613
  %vm1615 = vcmask 392512
  %s1616 = scalar_lea.vmem %s1, 24
  %1617 = vst.msk [vmem:[%s1616] sm:$0xff] %vm1615, %v1614
  %s1618 = scalar_lea.vmem %s0, 4
  %v1619 = vld [vmem:[%s1618] sm:$0x1]
  %s1620 = scalar_lea.vmem %s0, 67
  %v1621 = vld [vmem:[%s1620] sm:$0x2]
  %vm1622 = vcmask 1041409
  %v1623 = vsel %vm1622, %v1621, %v1619
  %s1624 = scalar_lea.vmem %s0, 130
  %v1625 = vld [vmem:[%s1624] sm:$0x4]
  %vm1626 = vcmask 1042434
  %v1627 = vsel %vm1626, %v1625, %v1623
  %s1628 = scalar_lea.vmem %s0, 193
  %v1629 = vld [vmem:[%s1628] sm:$0x8]
  %vm1630 = vcmask 1043459
  %v1631 = vsel %vm1630, %v1629, %v1627
  %s1632 = scalar_lea.vmem %s0, 256
  %v1633 = vld [vmem:[%s1632] sm:$0x10]
  %vm1634 = vcmask 1044484
  %v1635 = vsel %vm1634, %v1633, %v1631
  %s1636 = scalar_lea.vmem %s0, 319
  %v1637 = vld [vmem:[%s1636] sm:$0x20]
  %vm1638 = vcmask 1045509
  %v1639 = vsel %vm1638, %v1637, %v1635
  %s1640 = scalar_lea.vmem %s0, 382
  %v1641 = vld [vmem:[%s1640] sm:$0x40]
  %vm1642 = vcmask 1046534
  %v1643 = vsel %vm1642, %v1641, %v1639
  %s1644 = scalar_lea.vmem %s0, 445
  %v1645 = vld [vmem:[%s1644] sm:$0x80]
  %vm1646 = vcmask 1047559
  %v1647 = vsel %vm1646, %v1645, %v1643
  %1648 = vrot.lane.b32.xlu0 %v1647, 32
  %v1649 = vpop.permute.xlu0 %1648
  %vm1650 = vcmask 326912
  %1651 = vst.msk [vmem:[%s1] sm:$0xff] %vm1650, %v1649
  %s1652 = scalar_lea.vmem %s0, 20
  %v1653 = vld [vmem:[%s1652] sm:$0x1]
  %s1654 = scalar_lea.vmem %s0, 83
  %v1655 = vld [vmem:[%s1654] sm:$0x2]
  %vm1656 = vcmask 1041409
  %v1657 = vsel %vm1656, %v1655, %v1653
  %s1658 = scalar_lea.vmem %s0, 146
  %v1659 = vld [vmem:[%s1658] sm:$0x4]
  %vm1660 = vcmask 1042434
  %v1661 = vsel %vm1660, %v1659, %v1657
  %s1662 = scalar_lea.vmem %s0, 209
  %v1663 = vld [vmem:[%s1662] sm:$0x8]
  %vm1664 = vcmask 1043459
  %v1665 = vsel %vm1664, %v1663, %v1661
  %s1666 = scalar_lea.vmem %s0, 272
  %v1667 = vld [vmem:[%s1666] sm:$0x10]
  %vm1668 = vcmask 1044484
  %v1669 = vsel %vm1668, %v1667, %v1665
  %s1670 = scalar_lea.vmem %s0, 335
  %v1671 = vld [vmem:[%s1670] sm:$0x20]
  %vm1672 = vcmask 1045509
  %v1673 = vsel %vm1672, %v1671, %v1669
  %s1674 = scalar_lea.vmem %s0, 398
  %v1675 = vld [vmem:[%s1674] sm:$0x40]
  %vm1676 = vcmask 1046534
  %v1677 = vsel %vm1676, %v1675, %v1673
  %s1678 = scalar_lea.vmem %s0, 461
  %v1679 = vld [vmem:[%s1678] sm:$0x80]
  %vm1680 = vcmask 1047559
  %v1681 = vsel %vm1680, %v1679, %v1677
  %1682 = vrot.lane.b32.xlu0 %v1681, 32
  %v1683 = vpop.permute.xlu0 %1682
  %vm1684 = vcmask 326912
  %s1685 = scalar_lea.vmem %s1, 8
  %1686 = vst.msk [vmem:[%s1685] sm:$0xff] %vm1684, %v1683
  %s1687 = scalar_lea.vmem %s0, 36
  %v1688 = vld [vmem:[%s1687] sm:$0x1]
  %s1689 = scalar_lea.vmem %s0, 99
  %v1690 = vld [vmem:[%s1689] sm:$0x2]
  %vm1691 = vcmask 1041409
  %v1692 = vsel %vm1691, %v1690, %v1688
  %s1693 = scalar_lea.vmem %s0, 162
  %v1694 = vld [vmem:[%s1693] sm:$0x4]
  %vm1695 = vcmask 1042434
  %v1696 = vsel %vm1695, %v1694, %v1692
  %s1697 = scalar_lea.vmem %s0, 225
  %v1698 = vld [vmem:[%s1697] sm:$0x8]
  %vm1699 = vcmask 1043459
  %v1700 = vsel %vm1699, %v1698, %v1696
  %s1701 = scalar_lea.vmem %s0, 288
  %v1702 = vld [vmem:[%s1701] sm:$0x10]
  %vm1703 = vcmask 1044484
  %v1704 = vsel %vm1703, %v1702, %v1700
  %s1705 = scalar_lea.vmem %s0, 351
  %v1706 = vld [vmem:[%s1705] sm:$0x20]
  %vm1707 = vcmask 1045509
  %v1708 = vsel %vm1707, %v1706, %v1704
  %s1709 = scalar_lea.vmem %s0, 414
  %v1710 = vld [vmem:[%s1709] sm:$0x40]
  %vm1711 = vcmask 1046534
  %v1712 = vsel %vm1711, %v1710, %v1708
  %s1713 = scalar_lea.vmem %s0, 477
  %v1714 = vld [vmem:[%s1713] sm:$0x80]
  %vm1715 = vcmask 1047559
  %v1716 = vsel %vm1715, %v1714, %v1712
  %1717 = vrot.lane.b32.xlu0 %v1716, 32
  %v1718 = vpop.permute.xlu0 %1717
  %vm1719 = vcmask 326912
  %s1720 = scalar_lea.vmem %s1, 16
  %1721 = vst.msk [vmem:[%s1720] sm:$0xff] %vm1719, %v1718
  %s1722 = scalar_lea.vmem %s0, 52
  %v1723 = vld [vmem:[%s1722] sm:$0x1]
  %s1724 = scalar_lea.vmem %s0, 115
  %v1725 = vld [vmem:[%s1724] sm:$0x2]
  %vm1726 = vcmask 1041409
  %v1727 = vsel %vm1726, %v1725, %v1723
  %s1728 = scalar_lea.vmem %s0, 178
  %v1729 = vld [vmem:[%s1728] sm:$0x4]
  %vm1730 = vcmask 1042434
  %v1731 = vsel %vm1730, %v1729, %v1727
  %s1732 = scalar_lea.vmem %s0, 241
  %v1733 = vld [vmem:[%s1732] sm:$0x8]
  %vm1734 = vcmask 1043459
  %v1735 = vsel %vm1734, %v1733, %v1731
  %s1736 = scalar_lea.vmem %s0, 304
  %v1737 = vld [vmem:[%s1736] sm:$0x10]
  %vm1738 = vcmask 1044484
  %v1739 = vsel %vm1738, %v1737, %v1735
  %s1740 = scalar_lea.vmem %s0, 367
  %v1741 = vld [vmem:[%s1740] sm:$0x20]
  %vm1742 = vcmask 1045509
  %v1743 = vsel %vm1742, %v1741, %v1739
  %s1744 = scalar_lea.vmem %s0, 430
  %v1745 = vld [vmem:[%s1744] sm:$0x40]
  %vm1746 = vcmask 1046534
  %v1747 = vsel %vm1746, %v1745, %v1743
  %s1748 = scalar_lea.vmem %s0, 493
  %v1749 = vld [vmem:[%s1748] sm:$0x80]
  %vm1750 = vcmask 1047559
  %v1751 = vsel %vm1750, %v1749, %v1747
  %1752 = vrot.lane.b32.xlu0 %v1751, 32
  %v1753 = vpop.permute.xlu0 %1752
  %vm1754 = vcmask 326912
  %s1755 = scalar_lea.vmem %s1, 24
  %1756 = vst.msk [vmem:[%s1755] sm:$0xff] %vm1754, %v1753
  %s1757 = scalar_lea.vmem %s0, 3
  %v1758 = vld [vmem:[%s1757] sm:$0x1]
  %s1759 = scalar_lea.vmem %s0, 66
  %v1760 = vld [vmem:[%s1759] sm:$0x2]
  %vm1761 = vcmask 1041409
  %v1762 = vsel %vm1761, %v1760, %v1758
  %s1763 = scalar_lea.vmem %s0, 129
  %v1764 = vld [vmem:[%s1763] sm:$0x4]
  %vm1765 = vcmask 1042434
  %v1766 = vsel %vm1765, %v1764, %v1762
  %s1767 = scalar_lea.vmem %s0, 192
  %v1768 = vld [vmem:[%s1767] sm:$0x8]
  %vm1769 = vcmask 1043459
  %v1770 = vsel %vm1769, %v1768, %v1766
  %s1771 = scalar_lea.vmem %s0, 255
  %v1772 = vld [vmem:[%s1771] sm:$0x10]
  %vm1773 = vcmask 1044484
  %v1774 = vsel %vm1773, %v1772, %v1770
  %s1775 = scalar_lea.vmem %s0, 318
  %v1776 = vld [vmem:[%s1775] sm:$0x20]
  %vm1777 = vcmask 1045509
  %v1778 = vsel %vm1777, %v1776, %v1774
  %s1779 = scalar_lea.vmem %s0, 381
  %v1780 = vld [vmem:[%s1779] sm:$0x40]
  %vm1781 = vcmask 1046534
  %v1782 = vsel %vm1781, %v1780, %v1778
  %s1783 = scalar_lea.vmem %s0, 444
  %v1784 = vld [vmem:[%s1783] sm:$0x80]
  %vm1785 = vcmask 1047559
  %v1786 = vsel %vm1785, %v1784, %v1782
  %1787 = vrot.lane.b32.xlu0 %v1786, 24
  %v1788 = vpop.permute.xlu0 %1787
  %vm1789 = vcmask 261312
  %1790 = vst.msk [vmem:[%s1] sm:$0xff] %vm1789, %v1788
  %s1791 = scalar_lea.vmem %s0, 19
  %v1792 = vld [vmem:[%s1791] sm:$0x1]
  %s1793 = scalar_lea.vmem %s0, 82
  %v1794 = vld [vmem:[%s1793] sm:$0x2]
  %vm1795 = vcmask 1041409
  %v1796 = vsel %vm1795, %v1794, %v1792
  %s1797 = scalar_lea.vmem %s0, 145
  %v1798 = vld [vmem:[%s1797] sm:$0x4]
  %vm1799 = vcmask 1042434
  %v1800 = vsel %vm1799, %v1798, %v1796
  %s1801 = scalar_lea.vmem %s0, 208
  %v1802 = vld [vmem:[%s1801] sm:$0x8]
  %vm1803 = vcmask 1043459
  %v1804 = vsel %vm1803, %v1802, %v1800
  %s1805 = scalar_lea.vmem %s0, 271
  %v1806 = vld [vmem:[%s1805] sm:$0x10]
  %vm1807 = vcmask 1044484
  %v1808 = vsel %vm1807, %v1806, %v1804
  %s1809 = scalar_lea.vmem %s0, 334
  %v1810 = vld [vmem:[%s1809] sm:$0x20]
  %vm1811 = vcmask 1045509
  %v1812 = vsel %vm1811, %v1810, %v1808
  %s1813 = scalar_lea.vmem %s0, 397
  %v1814 = vld [vmem:[%s1813] sm:$0x40]
  %vm1815 = vcmask 1046534
  %v1816 = vsel %vm1815, %v1814, %v1812
  %s1817 = scalar_lea.vmem %s0, 460
  %v1818 = vld [vmem:[%s1817] sm:$0x80]
  %vm1819 = vcmask 1047559
  %v1820 = vsel %vm1819, %v1818, %v1816
  %1821 = vrot.lane.b32.xlu0 %v1820, 24
  %v1822 = vpop.permute.xlu0 %1821
  %vm1823 = vcmask 261312
  %s1824 = scalar_lea.vmem %s1, 8
  %1825 = vst.msk [vmem:[%s1824] sm:$0xff] %vm1823, %v1822
  %s1826 = scalar_lea.vmem %s0, 35
  %v1827 = vld [vmem:[%s1826] sm:$0x1]
  %s1828 = scalar_lea.vmem %s0, 98
  %v1829 = vld [vmem:[%s1828] sm:$0x2]
  %vm1830 = vcmask 1041409
  %v1831 = vsel %vm1830, %v1829, %v1827
  %s1832 = scalar_lea.vmem %s0, 161
  %v1833 = vld [vmem:[%s1832] sm:$0x4]
  %vm1834 = vcmask 1042434
  %v1835 = vsel %vm1834, %v1833, %v1831
  %s1836 = scalar_lea.vmem %s0, 224
  %v1837 = vld [vmem:[%s1836] sm:$0x8]
  %vm1838 = vcmask 1043459
  %v1839 = vsel %vm1838, %v1837, %v1835
  %s1840 = scalar_lea.vmem %s0, 287
  %v1841 = vld [vmem:[%s1840] sm:$0x10]
  %vm1842 = vcmask 1044484
  %v1843 = vsel %vm1842, %v1841, %v1839
  %s1844 = scalar_lea.vmem %s0, 350
  %v1845 = vld [vmem:[%s1844] sm:$0x20]
  %vm1846 = vcmask 1045509
  %v1847 = vsel %vm1846, %v1845, %v1843
  %s1848 = scalar_lea.vmem %s0, 413
  %v1849 = vld [vmem:[%s1848] sm:$0x40]
  %vm1850 = vcmask 1046534
  %v1851 = vsel %vm1850, %v1849, %v1847
  %s1852 = scalar_lea.vmem %s0, 476
  %v1853 = vld [vmem:[%s1852] sm:$0x80]
  %vm1854 = vcmask 1047559
  %v1855 = vsel %vm1854, %v1853, %v1851
  %1856 = vrot.lane.b32.xlu0 %v1855, 24
  %v1857 = vpop.permute.xlu0 %1856
  %vm1858 = vcmask 261312
  %s1859 = scalar_lea.vmem %s1, 16
  %1860 = vst.msk [vmem:[%s1859] sm:$0xff] %vm1858, %v1857
  %s1861 = scalar_lea.vmem %s0, 51
  %v1862 = vld [vmem:[%s1861] sm:$0x1]
  %s1863 = scalar_lea.vmem %s0, 114
  %v1864 = vld [vmem:[%s1863] sm:$0x2]
  %vm1865 = vcmask 1041409
  %v1866 = vsel %vm1865, %v1864, %v1862
  %s1867 = scalar_lea.vmem %s0, 177
  %v1868 = vld [vmem:[%s1867] sm:$0x4]
  %vm1869 = vcmask 1042434
  %v1870 = vsel %vm1869, %v1868, %v1866
  %s1871 = scalar_lea.vmem %s0, 240
  %v1872 = vld [vmem:[%s1871] sm:$0x8]
  %vm1873 = vcmask 1043459
  %v1874 = vsel %vm1873, %v1872, %v1870
  %s1875 = scalar_lea.vmem %s0, 303
  %v1876 = vld [vmem:[%s1875] sm:$0x10]
  %vm1877 = vcmask 1044484
  %v1878 = vsel %vm1877, %v1876, %v1874
  %s1879 = scalar_lea.vmem %s0, 366
  %v1880 = vld [vmem:[%s1879] sm:$0x20]
  %vm1881 = vcmask 1045509
  %v1882 = vsel %vm1881, %v1880, %v1878
  %s1883 = scalar_lea.vmem %s0, 429
  %v1884 = vld [vmem:[%s1883] sm:$0x40]
  %vm1885 = vcmask 1046534
  %v1886 = vsel %vm1885, %v1884, %v1882
  %s1887 = scalar_lea.vmem %s0, 492
  %v1888 = vld [vmem:[%s1887] sm:$0x80]
  %vm1889 = vcmask 1047559
  %v1890 = vsel %vm1889, %v1888, %v1886
  %1891 = vrot.lane.b32.xlu0 %v1890, 24
  %v1892 = vpop.permute.xlu0 %1891
  %vm1893 = vcmask 261312
  %s1894 = scalar_lea.vmem %s1, 24
  %1895 = vst.msk [vmem:[%s1894] sm:$0xff] %vm1893, %v1892
  %s1896 = scalar_lea.vmem %s0, 2
  %v1897 = vld [vmem:[%s1896] sm:$0x1]
  %s1898 = scalar_lea.vmem %s0, 65
  %v1899 = vld [vmem:[%s1898] sm:$0x2]
  %vm1900 = vcmask 1041409
  %v1901 = vsel %vm1900, %v1899, %v1897
  %s1902 = scalar_lea.vmem %s0, 128
  %v1903 = vld [vmem:[%s1902] sm:$0x4]
  %vm1904 = vcmask 1042434
  %v1905 = vsel %vm1904, %v1903, %v1901
  %s1906 = scalar_lea.vmem %s0, 191
  %v1907 = vld [vmem:[%s1906] sm:$0x8]
  %vm1908 = vcmask 1043459
  %v1909 = vsel %vm1908, %v1907, %v1905
  %s1910 = scalar_lea.vmem %s0, 254
  %v1911 = vld [vmem:[%s1910] sm:$0x10]
  %vm1912 = vcmask 1044484
  %v1913 = vsel %vm1912, %v1911, %v1909
  %s1914 = scalar_lea.vmem %s0, 317
  %v1915 = vld [vmem:[%s1914] sm:$0x20]
  %vm1916 = vcmask 1045509
  %v1917 = vsel %vm1916, %v1915, %v1913
  %s1918 = scalar_lea.vmem %s0, 380
  %v1919 = vld [vmem:[%s1918] sm:$0x40]
  %vm1920 = vcmask 1046534
  %v1921 = vsel %vm1920, %v1919, %v1917
  %s1922 = scalar_lea.vmem %s0, 443
  %v1923 = vld [vmem:[%s1922] sm:$0x80]
  %vm1924 = vcmask 1047559
  %v1925 = vsel %vm1924, %v1923, %v1921
  %1926 = vrot.lane.b32.xlu0 %v1925, 16
  %v1927 = vpop.permute.xlu0 %1926
  %vm1928 = vcmask 195712
  %1929 = vst.msk [vmem:[%s1] sm:$0xff] %vm1928, %v1927
  %s1930 = scalar_lea.vmem %s0, 18
  %v1931 = vld [vmem:[%s1930] sm:$0x1]
  %s1932 = scalar_lea.vmem %s0, 81
  %v1933 = vld [vmem:[%s1932] sm:$0x2]
  %vm1934 = vcmask 1041409
  %v1935 = vsel %vm1934, %v1933, %v1931
  %s1936 = scalar_lea.vmem %s0, 144
  %v1937 = vld [vmem:[%s1936] sm:$0x4]
  %vm1938 = vcmask 1042434
  %v1939 = vsel %vm1938, %v1937, %v1935
  %s1940 = scalar_lea.vmem %s0, 207
  %v1941 = vld [vmem:[%s1940] sm:$0x8]
  %vm1942 = vcmask 1043459
  %v1943 = vsel %vm1942, %v1941, %v1939
  %s1944 = scalar_lea.vmem %s0, 270
  %v1945 = vld [vmem:[%s1944] sm:$0x10]
  %vm1946 = vcmask 1044484
  %v1947 = vsel %vm1946, %v1945, %v1943
  %s1948 = scalar_lea.vmem %s0, 333
  %v1949 = vld [vmem:[%s1948] sm:$0x20]
  %vm1950 = vcmask 1045509
  %v1951 = vsel %vm1950, %v1949, %v1947
  %s1952 = scalar_lea.vmem %s0, 396
  %v1953 = vld [vmem:[%s1952] sm:$0x40]
  %vm1954 = vcmask 1046534
  %v1955 = vsel %vm1954, %v1953, %v1951
  %s1956 = scalar_lea.vmem %s0, 459
  %v1957 = vld [vmem:[%s1956] sm:$0x80]
  %vm1958 = vcmask 1047559
  %v1959 = vsel %vm1958, %v1957, %v1955
  %1960 = vrot.lane.b32.xlu0 %v1959, 16
  %v1961 = vpop.permute.xlu0 %1960
  %vm1962 = vcmask 195712
  %s1963 = scalar_lea.vmem %s1, 8
  %1964 = vst.msk [vmem:[%s1963] sm:$0xff] %vm1962, %v1961
  %s1965 = scalar_lea.vmem %s0, 34
  %v1966 = vld [vmem:[%s1965] sm:$0x1]
  %s1967 = scalar_lea.vmem %s0, 97
  %v1968 = vld [vmem:[%s1967] sm:$0x2]
  %vm1969 = vcmask 1041409
  %v1970 = vsel %vm1969, %v1968, %v1966
  %s1971 = scalar_lea.vmem %s0, 160
  %v1972 = vld [vmem:[%s1971] sm:$0x4]
  %vm1973 = vcmask 1042434
  %v1974 = vsel %vm1973, %v1972, %v1970
  %s1975 = scalar_lea.vmem %s0, 223
  %v1976 = vld [vmem:[%s1975] sm:$0x8]
  %vm1977 = vcmask 1043459
  %v1978 = vsel %vm1977, %v1976, %v1974
  %s1979 = scalar_lea.vmem %s0, 286
  %v1980 = vld [vmem:[%s1979] sm:$0x10]
  %vm1981 = vcmask 1044484
  %v1982 = vsel %vm1981, %v1980, %v1978
  %s1983 = scalar_lea.vmem %s0, 349
  %v1984 = vld [vmem:[%s1983] sm:$0x20]
  %vm1985 = vcmask 1045509
  %v1986 = vsel %vm1985, %v1984, %v1982
  %s1987 = scalar_lea.vmem %s0, 412
  %v1988 = vld [vmem:[%s1987] sm:$0x40]
  %vm1989 = vcmask 1046534
  %v1990 = vsel %vm1989, %v1988, %v1986
  %s1991 = scalar_lea.vmem %s0, 475
  %v1992 = vld [vmem:[%s1991] sm:$0x80]
  %vm1993 = vcmask 1047559
  %v1994 = vsel %vm1993, %v1992, %v1990
  %1995 = vrot.lane.b32.xlu0 %v1994, 16
  %v1996 = vpop.permute.xlu0 %1995
  %vm1997 = vcmask 195712
  %s1998 = scalar_lea.vmem %s1, 16
  %1999 = vst.msk [vmem:[%s1998] sm:$0xff] %vm1997, %v1996
  %s2000 = scalar_lea.vmem %s0, 50
  %v2001 = vld [vmem:[%s2000] sm:$0x1]
  %s2002 = scalar_lea.vmem %s0, 113
  %v2003 = vld [vmem:[%s2002] sm:$0x2]
  %vm2004 = vcmask 1041409
  %v2005 = vsel %vm2004, %v2003, %v2001
  %s2006 = scalar_lea.vmem %s0, 176
  %v2007 = vld [vmem:[%s2006] sm:$0x4]
  %vm2008 = vcmask 1042434
  %v2009 = vsel %vm2008, %v2007, %v2005
  %s2010 = scalar_lea.vmem %s0, 239
  %v2011 = vld [vmem:[%s2010] sm:$0x8]
  %vm2012 = vcmask 1043459
  %v2013 = vsel %vm2012, %v2011, %v2009
  %s2014 = scalar_lea.vmem %s0, 302
  %v2015 = vld [vmem:[%s2014] sm:$0x10]
  %vm2016 = vcmask 1044484
  %v2017 = vsel %vm2016, %v2015, %v2013
  %s2018 = scalar_lea.vmem %s0, 365
  %v2019 = vld [vmem:[%s2018] sm:$0x20]
  %vm2020 = vcmask 1045509
  %v2021 = vsel %vm2020, %v2019, %v2017
  %s2022 = scalar_lea.vmem %s0, 428
  %v2023 = vld [vmem:[%s2022] sm:$0x40]
  %vm2024 = vcmask 1046534
  %v2025 = vsel %vm2024, %v2023, %v2021
  %s2026 = scalar_lea.vmem %s0, 491
  %v2027 = vld [vmem:[%s2026] sm:$0x80]
  %vm2028 = vcmask 1047559
  %v2029 = vsel %vm2028, %v2027, %v2025
  %2030 = vrot.lane.b32.xlu0 %v2029, 16
  %v2031 = vpop.permute.xlu0 %2030
  %vm2032 = vcmask 195712
  %s2033 = scalar_lea.vmem %s1, 24
  %2034 = vst.msk [vmem:[%s2033] sm:$0xff] %vm2032, %v2031
  %s2035 = scalar_lea.vmem %s0, 1
  %v2036 = vld [vmem:[%s2035] sm:$0x1]
  %s2037 = scalar_lea.vmem %s0, 64
  %v2038 = vld [vmem:[%s2037] sm:$0x2]
  %vm2039 = vcmask 1041409
  %v2040 = vsel %vm2039, %v2038, %v2036
  %s2041 = scalar_lea.vmem %s0, 127
  %v2042 = vld [vmem:[%s2041] sm:$0x4]
  %vm2043 = vcmask 1042434
  %v2044 = vsel %vm2043, %v2042, %v2040
  %s2045 = scalar_lea.vmem %s0, 190
  %v2046 = vld [vmem:[%s2045] sm:$0x8]
  %vm2047 = vcmask 1043459
  %v2048 = vsel %vm2047, %v2046, %v2044
  %s2049 = scalar_lea.vmem %s0, 253
  %v2050 = vld [vmem:[%s2049] sm:$0x10]
  %vm2051 = vcmask 1044484
  %v2052 = vsel %vm2051, %v2050, %v2048
  %s2053 = scalar_lea.vmem %s0, 316
  %v2054 = vld [vmem:[%s2053] sm:$0x20]
  %vm2055 = vcmask 1045509
  %v2056 = vsel %vm2055, %v2054, %v2052
  %s2057 = scalar_lea.vmem %s0, 379
  %v2058 = vld [vmem:[%s2057] sm:$0x40]
  %vm2059 = vcmask 1046534
  %v2060 = vsel %vm2059, %v2058, %v2056
  %s2061 = scalar_lea.vmem %s0, 442
  %v2062 = vld [vmem:[%s2061] sm:$0x80]
  %vm2063 = vcmask 1047559
  %v2064 = vsel %vm2063, %v2062, %v2060
  %2065 = vrot.lane.b32.xlu0 %v2064, 8
  %v2066 = vpop.permute.xlu0 %2065
  %vm2067 = vcmask 130112
  %2068 = vst.msk [vmem:[%s1] sm:$0xff] %vm2067, %v2066
  %s2069 = scalar_lea.vmem %s0, 17
  %v2070 = vld [vmem:[%s2069] sm:$0x1]
  %s2071 = scalar_lea.vmem %s0, 80
  %v2072 = vld [vmem:[%s2071] sm:$0x2]
  %vm2073 = vcmask 1041409
  %v2074 = vsel %vm2073, %v2072, %v2070
  %s2075 = scalar_lea.vmem %s0, 143
  %v2076 = vld [vmem:[%s2075] sm:$0x4]
  %vm2077 = vcmask 1042434
  %v2078 = vsel %vm2077, %v2076, %v2074
  %s2079 = scalar_lea.vmem %s0, 206
  %v2080 = vld [vmem:[%s2079] sm:$0x8]
  %vm2081 = vcmask 1043459
  %v2082 = vsel %vm2081, %v2080, %v2078
  %s2083 = scalar_lea.vmem %s0, 269
  %v2084 = vld [vmem:[%s2083] sm:$0x10]
  %vm2085 = vcmask 1044484
  %v2086 = vsel %vm2085, %v2084, %v2082
  %s2087 = scalar_lea.vmem %s0, 332
  %v2088 = vld [vmem:[%s2087] sm:$0x20]
  %vm2089 = vcmask 1045509
  %v2090 = vsel %vm2089, %v2088, %v2086
  %s2091 = scalar_lea.vmem %s0, 395
  %v2092 = vld [vmem:[%s2091] sm:$0x40]
  %vm2093 = vcmask 1046534
  %v2094 = vsel %vm2093, %v2092, %v2090
  %s2095 = scalar_lea.vmem %s0, 458
  %v2096 = vld [vmem:[%s2095] sm:$0x80]
  %vm2097 = vcmask 1047559
  %v2098 = vsel %vm2097, %v2096, %v2094
  %2099 = vrot.lane.b32.xlu0 %v2098, 8
  %v2100 = vpop.permute.xlu0 %2099
  %vm2101 = vcmask 130112
  %s2102 = scalar_lea.vmem %s1, 8
  %2103 = vst.msk [vmem:[%s2102] sm:$0xff] %vm2101, %v2100
  %s2104 = scalar_lea.vmem %s0, 33
  %v2105 = vld [vmem:[%s2104] sm:$0x1]
  %s2106 = scalar_lea.vmem %s0, 96
  %v2107 = vld [vmem:[%s2106] sm:$0x2]
  %vm2108 = vcmask 1041409
  %v2109 = vsel %vm2108, %v2107, %v2105
  %s2110 = scalar_lea.vmem %s0, 159
  %v2111 = vld [vmem:[%s2110] sm:$0x4]
  %vm2112 = vcmask 1042434
  %v2113 = vsel %vm2112, %v2111, %v2109
  %s2114 = scalar_lea.vmem %s0, 222
  %v2115 = vld [vmem:[%s2114] sm:$0x8]
  %vm2116 = vcmask 1043459
  %v2117 = vsel %vm2116, %v2115, %v2113
  %s2118 = scalar_lea.vmem %s0, 285
  %v2119 = vld [vmem:[%s2118] sm:$0x10]
  %vm2120 = vcmask 1044484
  %v2121 = vsel %vm2120, %v2119, %v2117
  %s2122 = scalar_lea.vmem %s0, 348
  %v2123 = vld [vmem:[%s2122] sm:$0x20]
  %vm2124 = vcmask 1045509
  %v2125 = vsel %vm2124, %v2123, %v2121
  %s2126 = scalar_lea.vmem %s0, 411
  %v2127 = vld [vmem:[%s2126] sm:$0x40]
  %vm2128 = vcmask 1046534
  %v2129 = vsel %vm2128, %v2127, %v2125
  %s2130 = scalar_lea.vmem %s0, 474
  %v2131 = vld [vmem:[%s2130] sm:$0x80]
  %vm2132 = vcmask 1047559
  %v2133 = vsel %vm2132, %v2131, %v2129
  %2134 = vrot.lane.b32.xlu0 %v2133, 8
  %v2135 = vpop.permute.xlu0 %2134
  %vm2136 = vcmask 130112
  %s2137 = scalar_lea.vmem %s1, 16
  %2138 = vst.msk [vmem:[%s2137] sm:$0xff] %vm2136, %v2135
  %s2139 = scalar_lea.vmem %s0, 49
  %v2140 = vld [vmem:[%s2139] sm:$0x1]
  %s2141 = scalar_lea.vmem %s0, 112
  %v2142 = vld [vmem:[%s2141] sm:$0x2]
  %vm2143 = vcmask 1041409
  %v2144 = vsel %vm2143, %v2142, %v2140
  %s2145 = scalar_lea.vmem %s0, 175
  %v2146 = vld [vmem:[%s2145] sm:$0x4]
  %vm2147 = vcmask 1042434
  %v2148 = vsel %vm2147, %v2146, %v2144
  %s2149 = scalar_lea.vmem %s0, 238
  %v2150 = vld [vmem:[%s2149] sm:$0x8]
  %vm2151 = vcmask 1043459
  %v2152 = vsel %vm2151, %v2150, %v2148
  %s2153 = scalar_lea.vmem %s0, 301
  %v2154 = vld [vmem:[%s2153] sm:$0x10]
  %vm2155 = vcmask 1044484
  %v2156 = vsel %vm2155, %v2154, %v2152
  %s2157 = scalar_lea.vmem %s0, 364
  %v2158 = vld [vmem:[%s2157] sm:$0x20]
  %vm2159 = vcmask 1045509
  %v2160 = vsel %vm2159, %v2158, %v2156
  %s2161 = scalar_lea.vmem %s0, 427
  %v2162 = vld [vmem:[%s2161] sm:$0x40]
  %vm2163 = vcmask 1046534
  %v2164 = vsel %vm2163, %v2162, %v2160
  %s2165 = scalar_lea.vmem %s0, 490
  %v2166 = vld [vmem:[%s2165] sm:$0x80]
  %vm2167 = vcmask 1047559
  %v2168 = vsel %vm2167, %v2166, %v2164
  %2169 = vrot.lane.b32.xlu0 %v2168, 8
  %v2170 = vpop.permute.xlu0 %2169
  %vm2171 = vcmask 130112
  %s2172 = scalar_lea.vmem %s1, 24
  %2173 = vst.msk [vmem:[%s2172] sm:$0xff] %vm2171, %v2170

// kernel: squeeze.3
$region0: #{squeeze.3}
  %s0 = inlined_call_operand.vmem [shape: f32[1,4,6,6,6], index: 0, kind: input, shape index: {}]
  %s1 = inlined_call_operand.vmem [shape: f32[4,216], index: 1, kind: output, shape index: {}]
  $region1: #{squeeze.3} parent=0
    #allocation0 [shape = 'u8[8192]{0}', space=vmem, size = 0x2000, scoped, tag = 'scoped mem for output reshape']
    %s2 = smov 3
    %v3 = vld [vmem:[%s0] ss:$48 sm:%s2]
    %s4 = smov 12
    %v5 = vld [vmem:[%s0] ss:$48 sm:%s4]
    %vm6 = vcmask 1043458
    %v7 = vsel %vm6, %v5, %v3
    %vm8 = vcmask 48128
    %9 = vst.msk [vmem:[#allocation0] sm:$0xf] %vm8, %v7
    %s10 = scalar_lea.vmem %s0, 27
    %s11 = smov 3
    %v12 = vld [vmem:[%s10] ss:$48 sm:%s11]
    %s13 = scalar_lea.vmem %s0, 27
    %s14 = smov 12
    %v15 = vld [vmem:[%s13] ss:$48 sm:%s14]
    %vm16 = vcmask 1043458
    %v17 = vsel %vm16, %v15, %v12
    %s18 = scalar_lea.vmem %s0, 27
    %s19 = smov 3
    %v20 = vld [vmem:[%s18] ss:$48 sm:%s19]
    %s21 = scalar_lea.vmem %s0, 27
    %s22 = smov 12
    %v23 = vld [vmem:[%s21] ss:$48 sm:%s22]
    %vm24 = vcmask 1043458
    %v25 = vsel %vm24, %v23, %v20
    %vm26 = vcmask 15360
    %v27 = vsel %vm26, %v25, %v17
    %28 = vrot.lane.b32.xlu0 %v27, 126
    %v29 = vpop.permute.xlu0 %28
    %vm30 = vcmask 31744
    %s31 = scalar_lea.vmem [#allocation0], 8
    %32 = vst.msk [vmem:[%s31] sm:$0xf] %vm30, %v29
    %vm33 = vcmask 1048560
    %34 = vst.msk [vmem:[#allocation0] sm:$0xf] %vm33, %v29
    %s35 = scalar_lea.vmem %s0, 26
    %s36 = smov 3
    %v37 = vld [vmem:[%s35] ss:$48 sm:%s36]
    %s38 = scalar_lea.vmem %s0, 26
    %s39 = smov 12
    %v40 = vld [vmem:[%s38] ss:$48 sm:%s39]
    %vm41 = vcmask 1043458
    %v42 = vsel %vm41, %v40, %v37
    %43 = vrot.lane.b32.xlu0 %v42, 120
    %v44 = vpop.permute.xlu0 %43
    %vm45 = vcmask 1032128
    %46 = vst.msk [vmem:[#allocation0] sm:$0xf] %vm45, %v44
    %s47 = scalar_lea.vmem %s0, 25
    %s48 = smov 3
    %v49 = vld [vmem:[%s47] ss:$48 sm:%s48]
    %s50 = scalar_lea.vmem %s0, 25
    %s51 = smov 12
    %v52 = vld [vmem:[%s50] ss:$48 sm:%s51]
    %vm53 = vcmask 1043458
    %v54 = vsel %vm53, %v52, %v49
    %55 = vrot.lane.b32.xlu0 %v54, 114
    %v56 = vpop.permute.xlu0 %55
    %vm57 = vcmask 982928
    %58 = vst.msk [vmem:[#allocation0] sm:$0xf] %vm57, %v56
    %s59 = scalar_lea.vmem %s0, 24
    %s60 = smov 3
    %v61 = vld [vmem:[%s59] ss:$48 sm:%s60]
    %s62 = scalar_lea.vmem %s0, 24
    %s63 = smov 12
    %v64 = vld [vmem:[%s62] ss:$48 sm:%s63]
    %vm65 = vcmask 1043458
    %v66 = vsel %vm65, %v64, %v61
    %67 = vrot.lane.b32.xlu0 %v66, 108
    %v68 = vpop.permute.xlu0 %67
    %vm69 = vcmask 933728
    %70 = vst.msk [vmem:[#allocation0] sm:$0xf] %vm69, %v68
    %s71 = scalar_lea.vmem %s0, 21
    %s72 = smov 3
    %v73 = vld [vmem:[%s71] ss:$48 sm:%s72]
    %s74 = scalar_lea.vmem %s0, 21
    %s75 = smov 12
    %v76 = vld [vmem:[%s74] ss:$48 sm:%s75]
    %vm77 = vcmask 1043458
    %v78 = vsel %vm77, %v76, %v73
    %79 = vrot.lane.b32.xlu0 %v78, 102
    %v80 = vpop.permute.xlu0 %79
    %vm81 = vcmask 884528
    %82 = vst.msk [vmem:[#allocation0] sm:$0xf] %vm81, %v80
    %s83 = scalar_lea.vmem %s0, 20
    %s84 = smov 3
    %v85 = vld [vmem:[%s83] ss:$48 sm:%s84]
    %s86 = scalar_lea.vmem %s0, 20
    %s87 = smov 12
    %v88 = vld [vmem:[%s86] ss:$48 sm:%s87]
    %vm89 = vcmask 1043458
    %v90 = vsel %vm89, %v88, %v85
    %91 = vrot.lane.b32.xlu0 %v90, 96
    %v92 = vpop.permute.xlu0 %91
    %vm93 = vcmask 835328
    %94 = vst.msk [vmem:[#allocation0] sm:$0xf] %vm93, %v92
    %s95 = scalar_lea.vmem %s0, 19
    %s96 = smov 3
    %v97 = vld [vmem:[%s95] ss:$48 sm:%s96]
    %s98 = scalar_lea.vmem %s0, 19
    %s99 = smov 12
    %v100 = vld [vmem:[%s98] ss:$48 sm:%s99]
    %vm101 = vcmask 1043458
    %v102 = vsel %vm101, %v100, %v97
    %103 = vrot.lane.b32.xlu0 %v102, 90
    %v104 = vpop.permute.xlu0 %103
    %vm105 = vcmask 786128
    %106 = vst.msk [vmem:[#allocation0] sm:$0xf] %vm105, %v104
    %s107 = scalar_lea.vmem %s0, 18
    %s108 = smov 3
    %v109 = vld [vmem:[%s107] ss:$48 sm:%s108]
    %s110 = scalar_lea.vmem %s0, 18
    %s111 = smov 12
    %v112 = vld [vmem:[%s110] ss:$48 sm:%s111]
    %vm113 = vcmask 1043458
    %v114 = vsel %vm113, %v112, %v109
    %115 = vrot.lane.b32.xlu0 %v114, 84
    %v116 = vpop.permute.xlu0 %115
    %vm117 = vcmask 736928
    %118 = vst.msk [vmem:[#allocation0] sm:$0xf] %vm117, %v116
    %s119 = scalar_lea.vmem %s0, 45
    %s120 = smov 3
    %v121 = vld [vmem:[%s119] ss:$48 sm:%s120]
    %s122 = scalar_lea.vmem %s0, 45
    %s123 = smov 12
    %v124 = vld [vmem:[%s122] ss:$48 sm:%s123]
    %vm125 = vcmask 1043458
    %v126 = vsel %vm125, %v124, %v121
    %127 = vrot.lane.b32.xlu0 %v126, 82
    %v128 = vpop.permute.xlu0 %127
    %vm129 = vcmask 720528
    %s130 = scalar_lea.vmem [#allocation0], 8
    %131 = vst.msk [vmem:[%s130] sm:$0xf] %vm129, %v128
    %s132 = scalar_lea.vmem %s0, 17
    %s133 = smov 3
    %v134 = vld [vmem:[%s132] ss:$48 sm:%s133]
    %s135 = scalar_lea.vmem %s0, 17
    %s136 = smov 12
    %v137 = vld [vmem:[%s135] ss:$48 sm:%s136]
    %vm138 = vcmask 1043458
    %v139 = vsel %vm138, %v137, %v134
    %140 = vrot.lane.b32.xlu0 %v139, 78
    %v141 = vpop.permute.xlu0 %140
    %vm142 = vcmask 687728
    %143 = vst.msk [vmem:[#allocation0] sm:$0xf] %vm142, %v141
    %s144 = scalar_lea.vmem %s0, 44
    %s145 = smov 3
    %v146 = vld [vmem:[%s144] ss:$48 sm:%s145]
    %s147 = scalar_lea.vmem %s0, 44
    %s148 = smov 12
    %v149 = vld [vmem:[%s147] ss:$48 sm:%s148]
    %vm150 = vcmask 1043458
    %v151 = vsel %vm150, %v149, %v146
    %152 = vrot.lane.b32.xlu0 %v151, 76
    %v153 = vpop.permute.xlu0 %152
    %vm154 = vcmask 671328
    %s155 = scalar_lea.vmem [#allocation0], 8
    %156 = vst.msk [vmem:[%s155] sm:$0xf] %vm154, %v153
    %s157 = scalar_lea.vmem %s0, 16
    %s158 = smov 3
    %v159 = vld [vmem:[%s157] ss:$48 sm:%s158]
    %s160 = scalar_lea.vmem %s0, 16
    %s161 = smov 12
    %v162 = vld [vmem:[%s160] ss:$48 sm:%s161]
    %vm163 = vcmask 1043458
    %v164 = vsel %vm163, %v162, %v159
    %165 = vrot.lane.b32.xlu0 %v164, 72
    %v166 = vpop.permute.xlu0 %165
    %vm167 = vcmask 638528
    %168 = vst.msk [vmem:[#allocation0] sm:$0xf] %vm167, %v166
    %s169 = scalar_lea.vmem %s0, 43
    %s170 = smov 3
    %v171 = vld [vmem:[%s169] ss:$48 sm:%s170]
    %s172 = scalar_lea.vmem %s0, 43
    %s173 = smov 12
    %v174 = vld [vmem:[%s172] ss:$48 sm:%s173]
    %vm175 = vcmask 1043458
    %v176 = vsel %vm175, %v174, %v171
    %177 = vrot.lane.b32.xlu0 %v176, 70
    %v178 = vpop.permute.xlu0 %177
    %vm179 = vcmask 622128
    %s180 = scalar_lea.vmem [#allocation0], 8
    %181 = vst.msk [vmem:[%s180] sm:$0xf] %vm179, %v178
    %s182 = scalar_lea.vmem %s0, 13
    %s183 = smov 3
    %v184 = vld [vmem:[%s182] ss:$48 sm:%s183]
    %s185 = scalar_lea.vmem %s0, 13
    %s186 = smov 12
    %v187 = vld [vmem:[%s185] ss:$48 sm:%s186]
    %vm188 = vcmask 1043458
    %v189 = vsel %vm188, %v187, %v184
    %190 = vrot.lane.b32.xlu0 %v189, 66
    %v191 = vpop.permute.xlu0 %190
    %vm192 = vcmask 589328
    %193 = vst.msk [vmem:[#allocation0] sm:$0xf] %vm192, %v191
    %s194 = scalar_lea.vmem %s0, 42
    %s195 = smov 3
    %v196 = vld [vmem:[%s194] ss:$48 sm:%s195]
    %s197 = scalar_lea.vmem %s0, 42
    %s198 = smov 12
    %v199 = vld [vmem:[%s197] ss:$48 sm:%s198]
    %vm200 = vcmask 1043458
    %v201 = vsel %vm200, %v199, %v196
    %202 = vrot.lane.b32.xlu0 %v201, 64
    %v203 = vpop.permute.xlu0 %202
    %vm204 = vcmask 572928
    %s205 = scalar_lea.vmem [#allocation0], 8
    %206 = vst.msk [vmem:[%s205] sm:$0xf] %vm204, %v203
    %s207 = scalar_lea.vmem %s0, 12
    %s208 = smov 3
    %v209 = vld [vmem:[%s207] ss:$48 sm:%s208]
    %s210 = scalar_lea.vmem %s0, 12
    %s211 = smov 12
    %v212 = vld [vmem:[%s210] ss:$48 sm:%s211]
    %vm213 = vcmask 1043458
    %v214 = vsel %vm213, %v212, %v209
    %215 = vrot.lane.b32.xlu0 %v214, 60
    %v216 = vpop.permute.xlu0 %215
    %vm217 = vcmask 540128
    %218 = vst.msk [vmem:[#allocation0] sm:$0xf] %vm217, %v216
    %s219 = scalar_lea.vmem %s0, 41
    %s220 = smov 3
    %v221 = vld [vmem:[%s219] ss:$48 sm:%s220]
    %s222 = scalar_lea.vmem %s0, 41
    %s223 = smov 12
    %v224 = vld [vmem:[%s222] ss:$48 sm:%s223]
    %vm225 = vcmask 1043458
    %v226 = vsel %vm225, %v224, %v221
    %227 = vrot.lane.b32.xlu0 %v226, 58
    %v228 = vpop.permute.xlu0 %227
    %vm229 = vcmask 523728
    %s230 = scalar_lea.vmem [#allocation0], 8
    %231 = vst.msk [vmem:[%s230] sm:$0xf] %vm229, %v228
    %s232 = scalar_lea.vmem %s0, 11
    %s233 = smov 3
    %v234 = vld [vmem:[%s232] ss:$48 sm:%s233]
    %s235 = scalar_lea.vmem %s0, 11
    %s236 = smov 12
    %v237 = vld [vmem:[%s235] ss:$48 sm:%s236]
    %vm238 = vcmask 1043458
    %v239 = vsel %vm238, %v237, %v234
    %240 = vrot.lane.b32.xlu0 %v239, 54
    %v241 = vpop.permute.xlu0 %240
    %vm242 = vcmask 490928
    %243 = vst.msk [vmem:[#allocation0] sm:$0xf] %vm242, %v241
    %s244 = scalar_lea.vmem %s0, 40
    %s245 = smov 3
    %v246 = vld [vmem:[%s244] ss:$48 sm:%s245]
    %s247 = scalar_lea.vmem %s0, 40
    %s248 = smov 12
    %v249 = vld [vmem:[%s247] ss:$48 sm:%s248]
    %vm250 = vcmask 1043458
    %v251 = vsel %vm250, %v249, %v246
    %252 = vrot.lane.b32.xlu0 %v251, 52
    %v253 = vpop.permute.xlu0 %252
    %vm254 = vcmask 474528
    %s255 = scalar_lea.vmem [#allocation0], 8
    %256 = vst.msk [vmem:[%s255] sm:$0xf] %vm254, %v253
    %s257 = scalar_lea.vmem %s0, 10
    %s258 = smov 3
    %v259 = vld [vmem:[%s257] ss:$48 sm:%s258]
    %s260 = scalar_lea.vmem %s0, 10
    %s261 = smov 12
    %v262 = vld [vmem:[%s260] ss:$48 sm:%s261]
    %vm263 = vcmask 1043458
    %v264 = vsel %vm263, %v262, %v259
    %265 = vrot.lane.b32.xlu0 %v264, 48
    %v266 = vpop.permute.xlu0 %265
    %vm267 = vcmask 441728
    %268 = vst.msk [vmem:[#allocation0] sm:$0xf] %vm267, %v266
    %s269 = scalar_lea.vmem %s0, 37
    %s270 = smov 3
    %v271 = vld [vmem:[%s269] ss:$48 sm:%s270]
    %s272 = scalar_lea.vmem %s0, 37
    %s273 = smov 12
    %v274 = vld [vmem:[%s272] ss:$48 sm:%s273]
    %vm275 = vcmask 1043458
    %v276 = vsel %vm275, %v274, %v271
    %277 = vrot.lane.b32.xlu0 %v276, 46
    %v278 = vpop.permute.xlu0 %277
    %vm279 = vcmask 425328
    %s280 = scalar_lea.vmem [#allocation0], 8
    %281 = vst.msk [vmem:[%s280] sm:$0xf] %vm279, %v278
    %s282 = scalar_lea.vmem %s0, 9
    %s283 = smov 3
    %v284 = vld [vmem:[%s282] ss:$48 sm:%s283]
    %s285 = scalar_lea.vmem %s0, 9
    %s286 = smov 12
    %v287 = vld [vmem:[%s285] ss:$48 sm:%s286]
    %vm288 = vcmask 1043458
    %v289 = vsel %vm288, %v287, %v284
    %290 = vrot.lane.b32.xlu0 %v289, 42
    %v291 = vpop.permute.xlu0 %290
    %vm292 = vcmask 392528
    %293 = vst.msk [vmem:[#allocation0] sm:$0xf] %vm292, %v291
    %s294 = scalar_lea.vmem %s0, 36
    %s295 = smov 3
    %v296 = vld [vmem:[%s294] ss:$48 sm:%s295]
    %s297 = scalar_lea.vmem %s0, 36
    %s298 = smov 12
    %v299 = vld [vmem:[%s297] ss:$48 sm:%s298]
    %vm300 = vcmask 1043458
    %v301 = vsel %vm300, %v299, %v296
    %302 = vrot.lane.b32.xlu0 %v301, 40
    %v303 = vpop.permute.xlu0 %302
    %vm304 = vcmask 376128
    %s305 = scalar_lea.vmem [#allocation0], 8
    %306 = vst.msk [vmem:[%s305] sm:$0xf] %vm304, %v303
    %s307 = scalar_lea.vmem %s0, 8
    %s308 = smov 3
    %v309 = vld [vmem:[%s307] ss:$48 sm:%s308]
    %s310 = scalar_lea.vmem %s0, 8
    %s311 = smov 12
    %v312 = vld [vmem:[%s310] ss:$48 sm:%s311]
    %vm313 = vcmask 1043458
    %v314 = vsel %vm313, %v312, %v309
    %315 = vrot.lane.b32.xlu0 %v314, 36
    %v316 = vpop.permute.xlu0 %315
    %vm317 = vcmask 343328
    %318 = vst.msk [vmem:[#allocation0] sm:$0xf] %vm317, %v316
    %s319 = scalar_lea.vmem %s0, 35
    %s320 = smov 3
    %v321 = vld [vmem:[%s319] ss:$48 sm:%s320]
    %s322 = scalar_lea.vmem %s0, 35
    %s323 = smov 12
    %v324 = vld [vmem:[%s322] ss:$48 sm:%s323]
    %vm325 = vcmask 1043458
    %v326 = vsel %vm325, %v324, %v321
    %327 = vrot.lane.b32.xlu0 %v326, 34
    %v328 = vpop.permute.xlu0 %327
    %vm329 = vcmask 326928
    %s330 = scalar_lea.vmem [#allocation0], 8
    %331 = vst.msk [vmem:[%s330] sm:$0xf] %vm329, %v328
    %s332 = scalar_lea.vmem %s0, 5
    %s333 = smov 3
    %v334 = vld [vmem:[%s332] ss:$48 sm:%s333]
    %s335 = scalar_lea.vmem %s0, 5
    %s336 = smov 12
    %v337 = vld [vmem:[%s335] ss:$48 sm:%s336]
    %vm338 = vcmask 1043458
    %v339 = vsel %vm338, %v337, %v334
    %340 = vrot.lane.b32.xlu0 %v339, 30
    %v341 = vpop.permute.xlu0 %340
    %vm342 = vcmask 294128
    %343 = vst.msk [vmem:[#allocation0] sm:$0xf] %vm342, %v341
    %s344 = scalar_lea.vmem %s0, 34
    %s345 = smov 3
    %v346 = vld [vmem:[%s344] ss:$48 sm:%s345]
    %s347 = scalar_lea.vmem %s0, 34
    %s348 = smov 12
    %v349 = vld [vmem:[%s347] ss:$48 sm:%s348]
    %vm350 = vcmask 1043458
    %v351 = vsel %vm350, %v349, %v346
    %352 = vrot.lane.b32.xlu0 %v351, 28
    %v353 = vpop.permute.xlu0 %352
    %vm354 = vcmask 277728
    %s355 = scalar_lea.vmem [#allocation0], 8
    %356 = vst.msk [vmem:[%s355] sm:$0xf] %vm354, %v353
    %s357 = scalar_lea.vmem %s0, 4
    %s358 = smov 3
    %v359 = vld [vmem:[%s357] ss:$48 sm:%s358]
    %s360 = scalar_lea.vmem %s0, 4
    %s361 = smov 12
    %v362 = vld [vmem:[%s360] ss:$48 sm:%s361]
    %vm363 = vcmask 1043458
    %v364 = vsel %vm363, %v362, %v359
    %365 = vrot.lane.b32.xlu0 %v364, 24
    %v366 = vpop.permute.xlu0 %365
    %vm367 = vcmask 244928
    %368 = vst.msk [vmem:[#allocation0] sm:$0xf] %vm367, %v366
    %s369 = scalar_lea.vmem %s0, 33
    %s370 = smov 3
    %v371 = vld [vmem:[%s369] ss:$48 sm:%s370]
    %s372 = scalar_lea.vmem %s0, 33
    %s373 = smov 12
    %v374 = vld [vmem:[%s372] ss:$48 sm:%s373]
    %vm375 = vcmask 1043458
    %v376 = vsel %vm375, %v374, %v371
    %377 = vrot.lane.b32.xlu0 %v376, 22
    %v378 = vpop.permute.xlu0 %377
    %vm379 = vcmask 228528
    %s380 = scalar_lea.vmem [#allocation0], 8
    %381 = vst.msk [vmem:[%s380] sm:$0xf] %vm379, %v378
    %s382 = scalar_lea.vmem %s0, 3
    %s383 = smov 3
    %v384 = vld [vmem:[%s382] ss:$48 sm:%s383]
    %s385 = scalar_lea.vmem %s0, 3
    %s386 = smov 12
    %v387 = vld [vmem:[%s385] ss:$48 sm:%s386]
    %vm388 = vcmask 1043458
    %v389 = vsel %vm388, %v387, %v384
    %390 = vrot.lane.b32.xlu0 %v389, 18
    %v391 = vpop.permute.xlu0 %390
    %vm392 = vcmask 195728
    %393 = vst.msk [vmem:[#allocation0] sm:$0xf] %vm392, %v391
    %s394 = scalar_lea.vmem %s0, 32
    %s395 = smov 3
    %v396 = vld [vmem:[%s394] ss:$48 sm:%s395]
    %s397 = scalar_lea.vmem %s0, 32
    %s398 = smov 12
    %v399 = vld [vmem:[%s397] ss:$48 sm:%s398]
    %vm400 = vcmask 1043458
    %v401 = vsel %vm400, %v399, %v396
    %402 = vrot.lane.b32.xlu0 %v401, 16
    %v403 = vpop.permute.xlu0 %402
    %vm404 = vcmask 179328
    %s405 = scalar_lea.vmem [#allocation0], 8
    %406 = vst.msk [vmem:[%s405] sm:$0xf] %vm404, %v403
    %s407 = scalar_lea.vmem %s0, 2
    %s408 = smov 3
    %v409 = vld [vmem:[%s407] ss:$48 sm:%s408]
    %s410 = scalar_lea.vmem %s0, 2
    %s411 = smov 12
    %v412 = vld [vmem:[%s410] ss:$48 sm:%s411]
    %vm413 = vcmask 1043458
    %v414 = vsel %vm413, %v412, %v409
    %415 = vrot.lane.b32.xlu0 %v414, 12
    %v416 = vpop.permute.xlu0 %415
    %vm417 = vcmask 146528
    %418 = vst.msk [vmem:[#allocation0] sm:$0xf] %vm417, %v416
    %s419 = scalar_lea.vmem %s0, 29
    %s420 = smov 3
    %v421 = vld [vmem:[%s419] ss:$48 sm:%s420]
    %s422 = scalar_lea.vmem %s0, 29
    %s423 = smov 12
    %v424 = vld [vmem:[%s422] ss:$48 sm:%s423]
    %vm425 = vcmask 1043458
    %v426 = vsel %vm425, %v424, %v421
    %427 = vrot.lane.b32.xlu0 %v426, 10
    %v428 = vpop.permute.xlu0 %427
    %vm429 = vcmask 130128
    %s430 = scalar_lea.vmem [#allocation0], 8
    %431 = vst.msk [vmem:[%s430] sm:$0xf] %vm429, %v428
    %s432 = scalar_lea.vmem %s0, 1
    %s433 = smov 3
    %v434 = vld [vmem:[%s432] ss:$48 sm:%s433]
    %s435 = scalar_lea.vmem %s0, 1
    %s436 = smov 12
    %v437 = vld [vmem:[%s435] ss:$48 sm:%s436]
    %vm438 = vcmask 1043458
    %v439 = vsel %vm438, %v437, %v434
    %440 = vrot.lane.b32.xlu0 %v439, 6
    %v441 = vpop.permute.xlu0 %440
    %vm442 = vcmask 97328
    %443 = vst.msk [vmem:[#allocation0] sm:$0xf] %vm442, %v441
    %s444 = scalar_lea.vmem %s0, 28
    %s445 = smov 3
    %v446 = vld [vmem:[%s444] ss:$48 sm:%s445]
    %s447 = scalar_lea.vmem %s0, 28
    %s448 = smov 12
    %v449 = vld [vmem:[%s447] ss:$48 sm:%s448]
    %vm450 = vcmask 1043458
    %v451 = vsel %vm450, %v449, %v446
    %452 = vrot.lane.b32.xlu0 %v451, 4
    %v453 = vpop.permute.xlu0 %452
    %vm454 = vcmask 80928
    %s455 = scalar_lea.vmem [#allocation0], 8
    %456 = vst.msk [vmem:[%s455] sm:$0xf] %vm454, %v453
    %s458 = sshllo.u32 0, 4
    %v460 = vld [vmem:[#allocation0] sm:%s458]
    %s461 = sshllo.u32 0, 4
    %462 = vst [vmem:[%s1] sm:%s461] %v460
    %s463 = scalar_lea.vmem [#allocation0], 8
    %v464 = vld [vmem:[%s463] sm:%s458]
    %s465 = sshllo.u32 0, 4
    %s466 = scalar_lea.vmem %s1, 4
    %467 = vst [vmem:[%s466] sm:%s465] %v464

// kernel: squeeze.5
$region0: #{squeeze.5}
  %s0 = inlined_call_operand.vmem [shape: f32[1,2,10,10,10], index: 0, kind: input, shape index: {}]
  %s1 = inlined_call_operand.vmem [shape: f32[2,1000], index: 1, kind: output, shape index: {}]
  $region1: #{squeeze.5} parent=0
    #allocation0 [shape = 'u8[32768]{0}', space=vmem, size = 0x8000, scoped, tag = 'scoped mem for output reshape']
    %s2 = smov 3
    %v3 = vld [vmem:[%s0] ss:$100 sm:%s2]
    %vm4 = vcmask 80896
    %5 = vst.msk [vmem:[#allocation0] ss:$40 sm:$0x3] %vm4, %v3
    %s6 = scalar_lea.vmem %s0, 160
    %s7 = smov 3
    %v8 = vld [vmem:[%s6] ss:$100 sm:%s7]
    %vm9 = vcmask 80896
    %s10 = scalar_lea.vmem [#allocation0], 1
    %11 = vst.msk [vmem:[%s10] ss:$40 sm:$0x3] %vm9, %v8
    %s12 = scalar_lea.vmem %s0, 81
    %v13 = vld [vmem:[%s12] sm:$0x1]
    %s14 = scalar_lea.vmem %s0, 240
    %v15 = vld [vmem:[%s14] sm:$0x2]
    %vm16 = vcmask 1041409
    %v17 = vsel %vm16, %v15, %v13
    %s18 = scalar_lea.vmem %s0, 81
    %v19 = vld [vmem:[%s18] sm:$0x1]
    %s20 = scalar_lea.vmem %s0, 240
    %v21 = vld [vmem:[%s20] sm:$0x2]
    %vm22 = vcmask 1041409
    %v23 = vsel %vm22, %v21, %v19
    %vm24 = vcmask 15360
    %v25 = vsel %vm24, %v23, %v17
    %26 = vrot.lane.b32.xlu0 %v25, 126
    %v27 = vpop.permute.xlu0 %26
    %vm28 = vcmask 64512
    %s29 = scalar_lea.vmem [#allocation0], 32
    %30 = vst.msk [vmem:[%s29] sm:$0x3] %vm28, %v27
    %vm31 = vcmask 1048560
    %s32 = scalar_lea.vmem [#allocation0], 24
    %33 = vst.msk [vmem:[%s32] sm:$0x3] %vm31, %v27
    %s34 = scalar_lea.vmem %s0, 56
    %v35 = vld [vmem:[%s34] sm:$0x1]
    %s36 = scalar_lea.vmem %s0, 215
    %v37 = vld [vmem:[%s36] sm:$0x2]
    %vm38 = vcmask 1041409
    %v39 = vsel %vm38, %v37, %v35
    %s40 = scalar_lea.vmem %s0, 56
    %v41 = vld [vmem:[%s40] sm:$0x1]
    %s42 = scalar_lea.vmem %s0, 215
    %v43 = vld [vmem:[%s42] sm:$0x2]
    %vm44 = vcmask 1041409
    %v45 = vsel %vm44, %v43, %v41
    %vm46 = vcmask 31744
    %v47 = vsel %vm46, %v45, %v39
    %48 = vrot.lane.b32.xlu0 %v47, 124
    %v49 = vpop.permute.xlu0 %48
    %vm50 = vcmask 48128
    %s51 = scalar_lea.vmem [#allocation0], 24
    %52 = vst.msk [vmem:[%s51] sm:$0x3] %vm50, %v49
    %vm53 = vcmask 1048544
    %s54 = scalar_lea.vmem [#allocation0], 16
    %55 = vst.msk [vmem:[%s54] sm:$0x3] %vm53, %v49
    %s56 = scalar_lea.vmem %s0, 37
    %v57 = vld [vmem:[%s56] sm:$0x1]
    %s58 = scalar_lea.vmem %s0, 257
    %s59 = smov 6
    %v60 = vld [vmem:[%s58] ss:$-60 sm:%s59]
    %vm61 = vcmask 1042433
    %v62 = vsel %vm61, %v60, %v57
    %s63 = scalar_lea.vmem %s0, 294
    %v64 = vld [vmem:[%s63] sm:$0x8]
    %vm65 = vcmask 1043459
    %v66 = vsel %vm65, %v64, %v62
    %s67 = scalar_lea.vmem %s0, 37
    %v68 = vld [vmem:[%s67] sm:$0x1]
    %s69 = scalar_lea.vmem %s0, 257
    %s70 = smov 6
    %v71 = vld [vmem:[%s69] ss:$-60 sm:%s70]
    %vm72 = vcmask 1042433
    %v73 = vsel %vm72, %v71, %v68
    %s74 = scalar_lea.vmem %s0, 294
    %v75 = vld [vmem:[%s74] sm:$0x8]
    %vm76 = vcmask 1043459
    %v77 = vsel %vm76, %v75, %v73
    %vm78 = vcmask 48128
    %v79 = vsel %vm78, %v77, %v66
    %80 = vrot.lane.b32.xlu0 %v79, 122
    %v81 = vpop.permute.xlu0 %80
    %vm82 = vcmask 31744
    %s83 = scalar_lea.vmem [#allocation0], 16
    %84 = vst.msk [vmem:[%s83] sm:$0x3] %vm82, %v81
    %s85 = scalar_lea.vmem [#allocation0], 54
    %86 = vst.msk [vmem:[%s85] sm:$0xc] %vm82, %v81
    %vm87 = vcmask 1048528
    %s88 = scalar_lea.vmem [#allocation0], 8
    %89 = vst.msk [vmem:[%s88] sm:$0x3] %vm87, %v81
    %s90 = scalar_lea.vmem [#allocation0], 46
    %91 = vst.msk [vmem:[%s90] sm:$0xc] %vm87, %v81
    %s92 = scalar_lea.vmem %s0, 18
    %v93 = vld [vmem:[%s92] sm:$0x1]
    %s94 = scalar_lea.vmem %s0, 238
    %s95 = smov 6
    %v96 = vld [vmem:[%s94] ss:$-60 sm:%s95]
    %vm97 = vcmask 1042433
    %v98 = vsel %vm97, %v96, %v93
    %s99 = scalar_lea.vmem %s0, 275
    %v100 = vld [vmem:[%s99] sm:$0x8]
    %vm101 = vcmask 1043459
    %v102 = vsel %vm101, %v100, %v98
    %s103 = scalar_lea.vmem %s0, 18
    %v104 = vld [vmem:[%s103] sm:$0x1]
    %s105 = scalar_lea.vmem %s0, 238
    %s106 = smov 6
    %v107 = vld [vmem:[%s105] ss:$-60 sm:%s106]
    %vm108 = vcmask 1042433
    %v109 = vsel %vm108, %v107, %v104
    %s110 = scalar_lea.vmem %s0, 275
    %v111 = vld [vmem:[%s110] sm:$0x8]
    %vm112 = vcmask 1043459
    %v113 = vsel %vm112, %v111, %v109
    %vm114 = vcmask 64512
    %v115 = vsel %vm114, %v113, %v102
    %116 = vrot.lane.b32.xlu0 %v115, 120
    %v117 = vpop.permute.xlu0 %116
    %vm118 = vcmask 15360
    %s119 = scalar_lea.vmem [#allocation0], 8
    %120 = vst.msk [vmem:[%s119] sm:$0x3] %vm118, %v117
    %s121 = scalar_lea.vmem [#allocation0], 46
    %122 = vst.msk [vmem:[%s121] sm:$0xc] %vm118, %v117
    %vm123 = vcmask 1048512
    %124 = vst.msk [vmem:[#allocation0] sm:$0x3] %vm123, %v117
    %s125 = scalar_lea.vmem [#allocation0], 38
    %126 = vst.msk [vmem:[%s125] sm:$0xc] %vm123, %v117
    %s127 = scalar_lea.vmem %s0, 99
    %v128 = vld [vmem:[%s127] sm:$0x1]
    %s129 = scalar_lea.vmem %s0, 258
    %v130 = vld [vmem:[%s129] sm:$0x2]
    %vm131 = vcmask 1041409
    %v132 = vsel %vm131, %v130, %v128
    %133 = vrot.lane.b32.xlu0 %v132, 118
    %v134 = vpop.permute.xlu0 %133
    %vm135 = vcmask 1048496
    %s136 = scalar_lea.vmem [#allocation0], 32
    %137 = vst.msk [vmem:[%s136] sm:$0x3] %vm135, %v134
    %s138 = scalar_lea.vmem %s0, 80
    %v139 = vld [vmem:[%s138] sm:$0x1]
    %s140 = scalar_lea.vmem %s0, 239
    %v141 = vld [vmem:[%s140] sm:$0x2]
    %vm142 = vcmask 1041409
    %v143 = vsel %vm142, %v141, %v139
    %144 = vrot.lane.b32.xlu0 %v143, 116
    %v145 = vpop.permute.xlu0 %144
    %vm146 = vcmask 1032096
    %s147 = scalar_lea.vmem [#allocation0], 24
    %148 = vst.msk [vmem:[%s147] sm:$0x3] %vm146, %v145
    %s149 = scalar_lea.vmem %s0, 55
    %v150 = vld [vmem:[%s149] sm:$0x1]
    %s151 = scalar_lea.vmem %s0, 214
    %v152 = vld [vmem:[%s151] sm:$0x2]
    %vm153 = vcmask 1041409
    %v154 = vsel %vm153, %v152, %v150
    %155 = vrot.lane.b32.xlu0 %v154, 114
    %v156 = vpop.permute.xlu0 %155
    %vm157 = vcmask 1015696
    %s158 = scalar_lea.vmem [#allocation0], 16
    %159 = vst.msk [vmem:[%s158] sm:$0x3] %vm157, %v156
    %s160 = scalar_lea.vmem %s0, 36
    %v161 = vld [vmem:[%s160] sm:$0x1]
    %s162 = scalar_lea.vmem %s0, 256
    %s163 = smov 6
    %v164 = vld [vmem:[%s162] ss:$-60 sm:%s163]
    %vm165 = vcmask 1042433
    %v166 = vsel %vm165, %v164, %v161
    %s167 = scalar_lea.vmem %s0, 293
    %v168 = vld [vmem:[%s167] sm:$0x8]
    %vm169 = vcmask 1043459
    %v170 = vsel %vm169, %v168, %v166
    %171 = vrot.lane.b32.xlu0 %v170, 112
    %v172 = vpop.permute.xlu0 %171
    %vm173 = vcmask 999296
    %s174 = scalar_lea.vmem [#allocation0], 8
    %175 = vst.msk [vmem:[%s174] sm:$0x3] %vm173, %v172
    %s176 = scalar_lea.vmem [#allocation0], 46
    %177 = vst.msk [vmem:[%s176] sm:$0xc] %vm173, %v172
    %s178 = scalar_lea.vmem %s0, 17
    %v179 = vld [vmem:[%s178] sm:$0x1]
    %s180 = scalar_lea.vmem %s0, 237
    %s181 = smov 6
    %v182 = vld [vmem:[%s180] ss:$-60 sm:%s181]
    %vm183 = vcmask 1042433
    %v184 = vsel %vm183, %v182, %v179
    %s185 = scalar_lea.vmem %s0, 274
    %v186 = vld [vmem:[%s185] sm:$0x8]
    %vm187 = vcmask 1043459
    %v188 = vsel %vm187, %v186, %v184
    %189 = vrot.lane.b32.xlu0 %v188, 110
    %v190 = vpop.permute.xlu0 %189
    %vm191 = vcmask 982896
    %192 = vst.msk [vmem:[#allocation0] sm:$0x3] %vm191, %v190
    %s193 = scalar_lea.vmem [#allocation0], 38
    %194 = vst.msk [vmem:[%s193] sm:$0xc] %vm191, %v190
    %s195 = scalar_lea.vmem %s0, 98
    %v196 = vld [vmem:[%s195] sm:$0x1]
    %s197 = scalar_lea.vmem %s0, 257
    %v198 = vld [vmem:[%s197] sm:$0x2]
    %vm199 = vcmask 1041409
    %v200 = vsel %vm199, %v198, %v196
    %201 = vrot.lane.b32.xlu0 %v200, 108
    %v202 = vpop.permute.xlu0 %201
    %vm203 = vcmask 966496
    %s204 = scalar_lea.vmem [#allocation0], 32
    %205 = vst.msk [vmem:[%s204] sm:$0x3] %vm203, %v202
    %s206 = scalar_lea.vmem %s0, 73
    %v207 = vld [vmem:[%s206] sm:$0x1]
    %s208 = scalar_lea.vmem %s0, 232
    %v209 = vld [vmem:[%s208] sm:$0x2]
    %vm210 = vcmask 1041409
    %v211 = vsel %vm210, %v209, %v207
    %212 = vrot.lane.b32.xlu0 %v211, 106
    %v213 = vpop.permute.xlu0 %212
    %vm214 = vcmask 950096
    %s215 = scalar_lea.vmem [#allocation0], 24
    %216 = vst.msk [vmem:[%s215] sm:$0x3] %vm214, %v213
    %s217 = scalar_lea.vmem %s0, 54
    %v218 = vld [vmem:[%s217] sm:$0x1]
    %s219 = scalar_lea.vmem %s0, 213
    %v220 = vld [vmem:[%s219] sm:$0x2]
    %vm221 = vcmask 1041409
    %v222 = vsel %vm221, %v220, %v218
    %223 = vrot.lane.b32.xlu0 %v222, 104
    %v224 = vpop.permute.xlu0 %223
    %vm225 = vcmask 933696
    %s226 = scalar_lea.vmem [#allocation0], 16
    %227 = vst.msk [vmem:[%s226] sm:$0x3] %vm225, %v224
    %s228 = scalar_lea.vmem %s0, 35
    %v229 = vld [vmem:[%s228] sm:$0x1]
    %s230 = scalar_lea.vmem %s0, 255
    %s231 = smov 6
    %v232 = vld [vmem:[%s230] ss:$-60 sm:%s231]
    %vm233 = vcmask 1042433
    %v234 = vsel %vm233, %v232, %v229
    %s235 = scalar_lea.vmem %s0, 292
    %v236 = vld [vmem:[%s235] sm:$0x8]
    %vm237 = vcmask 1043459
    %v238 = vsel %vm237, %v236, %v234
    %239 = vrot.lane.b32.xlu0 %v238, 102
    %v240 = vpop.permute.xlu0 %239
    %vm241 = vcmask 917296
    %s242 = scalar_lea.vmem [#allocation0], 8
    %243 = vst.msk [vmem:[%s242] sm:$0x3] %vm241, %v240
    %s244 = scalar_lea.vmem [#allocation0], 46
    %245 = vst.msk [vmem:[%s244] sm:$0xc] %vm241, %v240
    %s246 = scalar_lea.vmem %s0, 16
    %v247 = vld [vmem:[%s246] sm:$0x1]
    %s248 = scalar_lea.vmem %s0, 236
    %s249 = smov 6
    %v250 = vld [vmem:[%s248] ss:$-60 sm:%s249]
    %vm251 = vcmask 1042433
    %v252 = vsel %vm251, %v250, %v247
    %s253 = scalar_lea.vmem %s0, 273
    %v254 = vld [vmem:[%s253] sm:$0x8]
    %vm255 = vcmask 1043459
    %v256 = vsel %vm255, %v254, %v252
    %257 = vrot.lane.b32.xlu0 %v256, 100
    %v258 = vpop.permute.xlu0 %257
    %vm259 = vcmask 900896
    %260 = vst.msk [vmem:[#allocation0] sm:$0x3] %vm259, %v258
    %s261 = scalar_lea.vmem [#allocation0], 38
    %262 = vst.msk [vmem:[%s261] sm:$0xc] %vm259, %v258
    %s263 = scalar_lea.vmem %s0, 97
    %v264 = vld [vmem:[%s263] sm:$0x1]
    %s265 = scalar_lea.vmem %s0, 256
    %v266 = vld [vmem:[%s265] sm:$0x2]
    %vm267 = vcmask 1041409
    %v268 = vsel %vm267, %v266, %v264
    %269 = vrot.lane.b32.xlu0 %v268, 98
    %v270 = vpop.permute.xlu0 %269
    %vm271 = vcmask 884496
    %s272 = scalar_lea.vmem [#allocation0], 32
    %273 = vst.msk [vmem:[%s272] sm:$0x3] %vm271, %v270
    %s274 = scalar_lea.vmem %s0, 72
    %v275 = vld [vmem:[%s274] sm:$0x1]
    %s276 = scalar_lea.vmem %s0, 231
    %v277 = vld [vmem:[%s276] sm:$0x2]
    %vm278 = vcmask 1041409
    %v279 = vsel %vm278, %v277, %v275
    %280 = vrot.lane.b32.xlu0 %v279, 96
    %v281 = vpop.permute.xlu0 %280
    %vm282 = vcmask 868096
    %s283 = scalar_lea.vmem [#allocation0], 24
    %284 = vst.msk [vmem:[%s283] sm:$0x3] %vm282, %v281
    %s285 = scalar_lea.vmem %s0, 53
    %v286 = vld [vmem:[%s285] sm:$0x1]
    %s287 = scalar_lea.vmem %s0, 273
    %s288 = smov 6
    %v289 = vld [vmem:[%s287] ss:$-60 sm:%s288]
    %vm290 = vcmask 1042433
    %v291 = vsel %vm290, %v289, %v286
    %s292 = scalar_lea.vmem %s0, 310
    %v293 = vld [vmem:[%s292] sm:$0x8]
    %vm294 = vcmask 1043459
    %v295 = vsel %vm294, %v293, %v291
    %296 = vrot.lane.b32.xlu0 %v295, 94
    %v297 = vpop.permute.xlu0 %296
    %vm298 = vcmask 851696
    %s299 = scalar_lea.vmem [#allocation0], 16
    %300 = vst.msk [vmem:[%s299] sm:$0x3] %vm298, %v297
    %s301 = scalar_lea.vmem [#allocation0], 54
    %302 = vst.msk [vmem:[%s301] sm:$0xc] %vm298, %v297
    %s303 = scalar_lea.vmem %s0, 34
    %v304 = vld [vmem:[%s303] sm:$0x1]
    %s305 = scalar_lea.vmem %s0, 254
    %s306 = smov 6
    %v307 = vld [vmem:[%s305] ss:$-60 sm:%s306]
    %vm308 = vcmask 1042433
    %v309 = vsel %vm308, %v307, %v304
    %s310 = scalar_lea.vmem %s0, 291
    %v311 = vld [vmem:[%s310] sm:$0x8]
    %vm312 = vcmask 1043459
    %v313 = vsel %vm312, %v311, %v309
    %314 = vrot.lane.b32.xlu0 %v313, 92
    %v315 = vpop.permute.xlu0 %314
    %vm316 = vcmask 835296
    %s317 = scalar_lea.vmem [#allocation0], 8
    %318 = vst.msk [vmem:[%s317] sm:$0x3] %vm316, %v315
    %s319 = scalar_lea.vmem [#allocation0], 46
    %320 = vst.msk [vmem:[%s319] sm:$0xc] %vm316, %v315
    %s321 = scalar_lea.vmem %s0, 9
    %v322 = vld [vmem:[%s321] sm:$0x1]
    %s323 = scalar_lea.vmem %s0, 223
    %s324 = smov 6
    %v325 = vld [vmem:[%s323] ss:$-54 sm:%s324]
    %vm326 = vcmask 1042433
    %v327 = vsel %vm326, %v325, %v322
    %s328 = scalar_lea.vmem %s0, 272
    %v329 = vld [vmem:[%s328] sm:$0x8]
    %vm330 = vcmask 1043459
    %v331 = vsel %vm330, %v329, %v327
    %332 = vrot.lane.b32.xlu0 %v331, 90
    %v333 = vpop.permute.xlu0 %332
    %vm334 = vcmask 818896
    %335 = vst.msk [vmem:[#allocation0] sm:$0x3] %vm334, %v333
    %s336 = scalar_lea.vmem [#allocation0], 38
    %337 = vst.msk [vmem:[%s336] sm:$0xc] %vm334, %v333
    %s338 = scalar_lea.vmem %s0, 96
    %v339 = vld [vmem:[%s338] sm:$0x1]
    %s340 = scalar_lea.vmem %s0, 255
    %v341 = vld [vmem:[%s340] sm:$0x2]
    %vm342 = vcmask 1041409
    %v343 = vsel %vm342, %v341, %v339
    %344 = vrot.lane.b32.xlu0 %v343, 88
    %v345 = vpop.permute.xlu0 %344
    %vm346 = vcmask 802496
    %s347 = scalar_lea.vmem [#allocation0], 32
    %348 = vst.msk [vmem:[%s347] sm:$0x3] %vm346, %v345
    %s349 = scalar_lea.vmem %s0, 71
    %v350 = vld [vmem:[%s349] sm:$0x1]
    %s351 = scalar_lea.vmem %s0, 230
    %v352 = vld [vmem:[%s351] sm:$0x2]
    %vm353 = vcmask 1041409
    %v354 = vsel %vm353, %v352, %v350
    %355 = vrot.lane.b32.xlu0 %v354, 86
    %v356 = vpop.permute.xlu0 %355
    %vm357 = vcmask 786096
    %s358 = scalar_lea.vmem [#allocation0], 24
    %359 = vst.msk [vmem:[%s358] sm:$0x3] %vm357, %v356
    %s360 = scalar_lea.vmem %s0, 52
    %v361 = vld [vmem:[%s360] sm:$0x1]
    %s362 = scalar_lea.vmem %s0, 272
    %s363 = smov 6
    %v364 = vld [vmem:[%s362] ss:$-60 sm:%s363]
    %vm365 = vcmask 1042433
    %v366 = vsel %vm365, %v364, %v361
    %s367 = scalar_lea.vmem %s0, 309
    %v368 = vld [vmem:[%s367] sm:$0x8]
    %vm369 = vcmask 1043459
    %v370 = vsel %vm369, %v368, %v366
    %371 = vrot.lane.b32.xlu0 %v370, 84
    %v372 = vpop.permute.xlu0 %371
    %vm373 = vcmask 769696
    %s374 = scalar_lea.vmem [#allocation0], 16
    %375 = vst.msk [vmem:[%s374] sm:$0x3] %vm373, %v372
    %s376 = scalar_lea.vmem [#allocation0], 54
    %377 = vst.msk [vmem:[%s376] sm:$0xc] %vm373, %v372
    %s378 = scalar_lea.vmem %s0, 33
    %v379 = vld [vmem:[%s378] sm:$0x1]
    %s380 = scalar_lea.vmem %s0, 253
    %s381 = smov 6
    %v382 = vld [vmem:[%s380] ss:$-60 sm:%s381]
    %vm383 = vcmask 1042433
    %v384 = vsel %vm383, %v382, %v379
    %s385 = scalar_lea.vmem %s0, 290
    %v386 = vld [vmem:[%s385] sm:$0x8]
    %vm387 = vcmask 1043459
    %v388 = vsel %vm387, %v386, %v384
    %389 = vrot.lane.b32.xlu0 %v388, 82
    %v390 = vpop.permute.xlu0 %389
    %vm391 = vcmask 753296
    %s392 = scalar_lea.vmem [#allocation0], 8
    %393 = vst.msk [vmem:[%s392] sm:$0x3] %vm391, %v390
    %s394 = scalar_lea.vmem [#allocation0], 46
    %395 = vst.msk [vmem:[%s394] sm:$0xc] %vm391, %v390
    %s396 = scalar_lea.vmem %s0, 8
    %v397 = vld [vmem:[%s396] sm:$0x1]
    %s398 = scalar_lea.vmem %s0, 222
    %s399 = smov 6
    %v400 = vld [vmem:[%s398] ss:$-54 sm:%s399]
    %vm401 = vcmask 1042433
    %v402 = vsel %vm401, %v400, %v397
    %s403 = scalar_lea.vmem %s0, 271
    %v404 = vld [vmem:[%s403] sm:$0x8]
    %vm405 = vcmask 1043459
    %v406 = vsel %vm405, %v404, %v402
    %407 = vrot.lane.b32.xlu0 %v406, 80
    %v408 = vpop.permute.xlu0 %407
    %vm409 = vcmask 736896
    %410 = vst.msk [vmem:[#allocation0] sm:$0x3] %vm409, %v408
    %s411 = scalar_lea.vmem [#allocation0], 38
    %412 = vst.msk [vmem:[%s411] sm:$0xc] %vm409, %v408
    %s413 = scalar_lea.vmem %s0, 89
    %v414 = vld [vmem:[%s413] sm:$0x1]
    %s415 = scalar_lea.vmem %s0, 248
    %v416 = vld [vmem:[%s415] sm:$0x2]
    %vm417 = vcmask 1041409
    %v418 = vsel %vm417, %v416, %v414
    %419 = vrot.lane.b32.xlu0 %v418, 78
    %v420 = vpop.permute.xlu0 %419
    %vm421 = vcmask 720496
    %s422 = scalar_lea.vmem [#allocation0], 32
    %423 = vst.msk [vmem:[%s422] sm:$0x3] %vm421, %v420
    %s424 = scalar_lea.vmem %s0, 70
    %v425 = vld [vmem:[%s424] sm:$0x1]
    %s426 = scalar_lea.vmem %s0, 229
    %v427 = vld [vmem:[%s426] sm:$0x2]
    %vm428 = vcmask 1041409
    %v429 = vsel %vm428, %v427, %v425
    %430 = vrot.lane.b32.xlu0 %v429, 76
    %v431 = vpop.permute.xlu0 %430
    %vm432 = vcmask 704096
    %s433 = scalar_lea.vmem [#allocation0], 24
    %434 = vst.msk [vmem:[%s433] sm:$0x3] %vm432, %v431
    %s435 = scalar_lea.vmem %s0, 51
    %v436 = vld [vmem:[%s435] sm:$0x1]
    %s437 = scalar_lea.vmem %s0, 271
    %s438 = smov 6
    %v439 = vld [vmem:[%s437] ss:$-60 sm:%s438]
    %vm440 = vcmask 1042433
    %v441 = vsel %vm440, %v439, %v436
    %s442 = scalar_lea.vmem %s0, 308
    %v443 = vld [vmem:[%s442] sm:$0x8]
    %vm444 = vcmask 1043459
    %v445 = vsel %vm444, %v443, %v441
    %446 = vrot.lane.b32.xlu0 %v445, 74
    %v447 = vpop.permute.xlu0 %446
    %vm448 = vcmask 687696
    %s449 = scalar_lea.vmem [#allocation0], 16
    %450 = vst.msk [vmem:[%s449] sm:$0x3] %vm448, %v447
    %s451 = scalar_lea.vmem [#allocation0], 54
    %452 = vst.msk [vmem:[%s451] sm:$0xc] %vm448, %v447
    %s453 = scalar_lea.vmem %s0, 32
    %v454 = vld [vmem:[%s453] sm:$0x1]
    %s455 = scalar_lea.vmem %s0, 252
    %s456 = smov 6
    %v457 = vld [vmem:[%s455] ss:$-60 sm:%s456]
    %vm458 = vcmask 1042433
    %v459 = vsel %vm458, %v457, %v454
    %s460 = scalar_lea.vmem %s0, 289
    %v461 = vld [vmem:[%s460] sm:$0x8]
    %vm462 = vcmask 1043459
    %v463 = vsel %vm462, %v461, %v459
    %464 = vrot.lane.b32.xlu0 %v463, 72
    %v465 = vpop.permute.xlu0 %464
    %vm466 = vcmask 671296
    %s467 = scalar_lea.vmem [#allocation0], 8
    %468 = vst.msk [vmem:[%s467] sm:$0x3] %vm466, %v465
    %s469 = scalar_lea.vmem [#allocation0], 46
    %470 = vst.msk [vmem:[%s469] sm:$0xc] %vm466, %v465
    %s471 = scalar_lea.vmem %s0, 7
    %v472 = vld [vmem:[%s471] sm:$0x1]
    %s473 = scalar_lea.vmem %s0, 221
    %s474 = smov 6
    %v475 = vld [vmem:[%s473] ss:$-54 sm:%s474]
    %vm476 = vcmask 1042433
    %v477 = vsel %vm476, %v475, %v472
    %s478 = scalar_lea.vmem %s0, 270
    %v479 = vld [vmem:[%s478] sm:$0x8]
    %vm480 = vcmask 1043459
    %v481 = vsel %vm480, %v479, %v477
    %482 = vrot.lane.b32.xlu0 %v481, 70
    %v483 = vpop.permute.xlu0 %482
    %vm484 = vcmask 654896
    %485 = vst.msk [vmem:[#allocation0] sm:$0x3] %vm484, %v483
    %s486 = scalar_lea.vmem [#allocation0], 38
    %487 = vst.msk [vmem:[%s486] sm:$0xc] %vm484, %v483
    %s488 = scalar_lea.vmem %s0, 88
    %v489 = vld [vmem:[%s488] sm:$0x1]
    %s490 = scalar_lea.vmem %s0, 247
    %v491 = vld [vmem:[%s490] sm:$0x2]
    %vm492 = vcmask 1041409
    %v493 = vsel %vm492, %v491, %v489
    %494 = vrot.lane.b32.xlu0 %v493, 68
    %v495 = vpop.permute.xlu0 %494
    %vm496 = vcmask 638496
    %s497 = scalar_lea.vmem [#allocation0], 32
    %498 = vst.msk [vmem:[%s497] sm:$0x3] %vm496, %v495
    %s499 = scalar_lea.vmem %s0, 69
    %v500 = vld [vmem:[%s499] sm:$0x1]
    %s501 = scalar_lea.vmem %s0, 228
    %v502 = vld [vmem:[%s501] sm:$0x2]
    %vm503 = vcmask 1041409
    %v504 = vsel %vm503, %v502, %v500
    %505 = vrot.lane.b32.xlu0 %v504, 66
    %v506 = vpop.permute.xlu0 %505
    %vm507 = vcmask 622096
    %s508 = scalar_lea.vmem [#allocation0], 24
    %509 = vst.msk [vmem:[%s508] sm:$0x3] %vm507, %v506
    %s510 = scalar_lea.vmem %s0, 50
    %v511 = vld [vmem:[%s510] sm:$0x1]
    %s512 = scalar_lea.vmem %s0, 270
    %s513 = smov 6
    %v514 = vld [vmem:[%s512] ss:$-60 sm:%s513]
    %vm515 = vcmask 1042433
    %v516 = vsel %vm515, %v514, %v511
    %s517 = scalar_lea.vmem %s0, 307
    %v518 = vld [vmem:[%s517] sm:$0x8]
    %vm519 = vcmask 1043459
    %v520 = vsel %vm519, %v518, %v516
    %521 = vrot.lane.b32.xlu0 %v520, 64
    %v522 = vpop.permute.xlu0 %521
    %vm523 = vcmask 605696
    %s524 = scalar_lea.vmem [#allocation0], 16
    %525 = vst.msk [vmem:[%s524] sm:$0x3] %vm523, %v522
    %s526 = scalar_lea.vmem [#allocation0], 54
    %527 = vst.msk [vmem:[%s526] sm:$0xc] %vm523, %v522
    %s528 = scalar_lea.vmem %s0, 25
    %v529 = vld [vmem:[%s528] sm:$0x1]
    %s530 = scalar_lea.vmem %s0, 239
    %s531 = smov 6
    %v532 = vld [vmem:[%s530] ss:$-54 sm:%s531]
    %vm533 = vcmask 1042433
    %v534 = vsel %vm533, %v532, %v529
    %s535 = scalar_lea.vmem %s0, 288
    %v536 = vld [vmem:[%s535] sm:$0x8]
    %vm537 = vcmask 1043459
    %v538 = vsel %vm537, %v536, %v534
    %539 = vrot.lane.b32.xlu0 %v538, 62
    %v540 = vpop.permute.xlu0 %539
    %vm541 = vcmask 589296
    %s542 = scalar_lea.vmem [#allocation0], 8
    %543 = vst.msk [vmem:[%s542] sm:$0x3] %vm541, %v540
    %s544 = scalar_lea.vmem [#allocation0], 46
    %545 = vst.msk [vmem:[%s544] sm:$0xc] %vm541, %v540
    %s546 = scalar_lea.vmem %s0, 6
    %v547 = vld [vmem:[%s546] sm:$0x1]
    %s548 = scalar_lea.vmem %s0, 220
    %s549 = smov 6
    %v550 = vld [vmem:[%s548] ss:$-54 sm:%s549]
    %vm551 = vcmask 1042433
    %v552 = vsel %vm551, %v550, %v547
    %s553 = scalar_lea.vmem %s0, 269
    %v554 = vld [vmem:[%s553] sm:$0x8]
    %vm555 = vcmask 1043459
    %v556 = vsel %vm555, %v554, %v552
    %557 = vrot.lane.b32.xlu0 %v556, 60
    %v558 = vpop.permute.xlu0 %557
    %vm559 = vcmask 572896
    %560 = vst.msk [vmem:[#allocation0] sm:$0x3] %vm559, %v558
    %s561 = scalar_lea.vmem [#allocation0], 38
    %562 = vst.msk [vmem:[%s561] sm:$0xc] %vm559, %v558
    %s563 = scalar_lea.vmem %s0, 87
    %v564 = vld [vmem:[%s563] sm:$0x1]
    %s565 = scalar_lea.vmem %s0, 246
    %v566 = vld [vmem:[%s565] sm:$0x2]
    %vm567 = vcmask 1041409
    %v568 = vsel %vm567, %v566, %v564
    %569 = vrot.lane.b32.xlu0 %v568, 58
    %v570 = vpop.permute.xlu0 %569
    %vm571 = vcmask 556496
    %s572 = scalar_lea.vmem [#allocation0], 32
    %573 = vst.msk [vmem:[%s572] sm:$0x3] %vm571, %v570
    %s574 = scalar_lea.vmem %s0, 68
    %v575 = vld [vmem:[%s574] sm:$0x1]
    %s576 = scalar_lea.vmem %s0, 227
    %v577 = vld [vmem:[%s576] sm:$0x2]
    %vm578 = vcmask 1041409
    %v579 = vsel %vm578, %v577, %v575
    %580 = vrot.lane.b32.xlu0 %v579, 56
    %v581 = vpop.permute.xlu0 %580
    %vm582 = vcmask 540096
    %s583 = scalar_lea.vmem [#allocation0], 24
    %584 = vst.msk [vmem:[%s583] sm:$0x3] %vm582, %v581
    %s585 = scalar_lea.vmem %s0, 49
    %v586 = vld [vmem:[%s585] sm:$0x1]
    %s587 = scalar_lea.vmem %s0, 269
    %s588 = smov 6
    %v589 = vld [vmem:[%s587] ss:$-60 sm:%s588]
    %vm590 = vcmask 1042433
    %v591 = vsel %vm590, %v589, %v586
    %s592 = scalar_lea.vmem %s0, 306
    %v593 = vld [vmem:[%s592] sm:$0x8]
    %vm594 = vcmask 1043459
    %v595 = vsel %vm594, %v593, %v591
    %596 = vrot.lane.b32.xlu0 %v595, 54
    %v597 = vpop.permute.xlu0 %596
    %vm598 = vcmask 523696
    %s599 = scalar_lea.vmem [#allocation0], 16
    %600 = vst.msk [vmem:[%s599] sm:$0x3] %vm598, %v597
    %s601 = scalar_lea.vmem [#allocation0], 54
    %602 = vst.msk [vmem:[%s601] sm:$0xc] %vm598, %v597
    %s603 = scalar_lea.vmem %s0, 24
    %v604 = vld [vmem:[%s603] sm:$0x1]
    %s605 = scalar_lea.vmem %s0, 238
    %s606 = smov 6
    %v607 = vld [vmem:[%s605] ss:$-54 sm:%s606]
    %vm608 = vcmask 1042433
    %v609 = vsel %vm608, %v607, %v604
    %s610 = scalar_lea.vmem %s0, 287
    %v611 = vld [vmem:[%s610] sm:$0x8]
    %vm612 = vcmask 1043459
    %v613 = vsel %vm612, %v611, %v609
    %614 = vrot.lane.b32.xlu0 %v613, 52
    %v615 = vpop.permute.xlu0 %614
    %vm616 = vcmask 507296
    %s617 = scalar_lea.vmem [#allocation0], 8
    %618 = vst.msk [vmem:[%s617] sm:$0x3] %vm616, %v615
    %s619 = scalar_lea.vmem [#allocation0], 46
    %620 = vst.msk [vmem:[%s619] sm:$0xc] %vm616, %v615
    %s621 = scalar_lea.vmem %s0, 5
    %v622 = vld [vmem:[%s621] sm:$0x1]
    %s623 = scalar_lea.vmem %s0, 225
    %s624 = smov 6
    %v625 = vld [vmem:[%s623] ss:$-60 sm:%s624]
    %vm626 = vcmask 1042433
    %v627 = vsel %vm626, %v625, %v622
    %s628 = scalar_lea.vmem %s0, 262
    %v629 = vld [vmem:[%s628] sm:$0x8]
    %vm630 = vcmask 1043459
    %v631 = vsel %vm630, %v629, %v627
    %632 = vrot.lane.b32.xlu0 %v631, 50
    %v633 = vpop.permute.xlu0 %632
    %vm634 = vcmask 490896
    %635 = vst.msk [vmem:[#allocation0] sm:$0x3] %vm634, %v633
    %s636 = scalar_lea.vmem [#allocation0], 38
    %637 = vst.msk [vmem:[%s636] sm:$0xc] %vm634, %v633
    %s638 = scalar_lea.vmem %s0, 86
    %v639 = vld [vmem:[%s638] sm:$0x1]
    %s640 = scalar_lea.vmem %s0, 245
    %v641 = vld [vmem:[%s640] sm:$0x2]
    %vm642 = vcmask 1041409
    %v643 = vsel %vm642, %v641, %v639
    %644 = vrot.lane.b32.xlu0 %v643, 48
    %v645 = vpop.permute.xlu0 %644
    %vm646 = vcmask 474496
    %s647 = scalar_lea.vmem [#allocation0], 32
    %648 = vst.msk [vmem:[%s647] sm:$0x3] %vm646, %v645
    %s649 = scalar_lea.vmem %s0, 67
    %v650 = vld [vmem:[%s649] sm:$0x1]
    %s651 = scalar_lea.vmem %s0, 226
    %v652 = vld [vmem:[%s651] sm:$0x2]
    %vm653 = vcmask 1041409
    %v654 = vsel %vm653, %v652, %v650
    %655 = vrot.lane.b32.xlu0 %v654, 46
    %v656 = vpop.permute.xlu0 %655
    %vm657 = vcmask 458096
    %s658 = scalar_lea.vmem [#allocation0], 24
    %659 = vst.msk [vmem:[%s658] sm:$0x3] %vm657, %v656
    %s660 = scalar_lea.vmem %s0, 48
    %v661 = vld [vmem:[%s660] sm:$0x1]
    %s662 = scalar_lea.vmem %s0, 268
    %s663 = smov 6
    %v664 = vld [vmem:[%s662] ss:$-60 sm:%s663]
    %vm665 = vcmask 1042433
    %v666 = vsel %vm665, %v664, %v661
    %s667 = scalar_lea.vmem %s0, 305
    %v668 = vld [vmem:[%s667] sm:$0x8]
    %vm669 = vcmask 1043459
    %v670 = vsel %vm669, %v668, %v666
    %671 = vrot.lane.b32.xlu0 %v670, 44
    %v672 = vpop.permute.xlu0 %671
    %vm673 = vcmask 441696
    %s674 = scalar_lea.vmem [#allocation0], 16
    %675 = vst.msk [vmem:[%s674] sm:$0x3] %vm673, %v672
    %s676 = scalar_lea.vmem [#allocation0], 54
    %677 = vst.msk [vmem:[%s676] sm:$0xc] %vm673, %v672
    %s678 = scalar_lea.vmem %s0, 23
    %v679 = vld [vmem:[%s678] sm:$0x1]
    %s680 = scalar_lea.vmem %s0, 237
    %s681 = smov 6
    %v682 = vld [vmem:[%s680] ss:$-54 sm:%s681]
    %vm683 = vcmask 1042433
    %v684 = vsel %vm683, %v682, %v679
    %s685 = scalar_lea.vmem %s0, 286
    %v686 = vld [vmem:[%s685] sm:$0x8]
    %vm687 = vcmask 1043459
    %v688 = vsel %vm687, %v686, %v684
    %689 = vrot.lane.b32.xlu0 %v688, 42
    %v690 = vpop.permute.xlu0 %689
    %vm691 = vcmask 425296
    %s692 = scalar_lea.vmem [#allocation0], 8
    %693 = vst.msk [vmem:[%s692] sm:$0x3] %vm691, %v690
    %s694 = scalar_lea.vmem [#allocation0], 46
    %695 = vst.msk [vmem:[%s694] sm:$0xc] %vm691, %v690
    %s696 = scalar_lea.vmem %s0, 4
    %v697 = vld [vmem:[%s696] sm:$0x1]
    %s698 = scalar_lea.vmem %s0, 224
    %s699 = smov 6
    %v700 = vld [vmem:[%s698] ss:$-60 sm:%s699]
    %vm701 = vcmask 1042433
    %v702 = vsel %vm701, %v700, %v697
    %s703 = scalar_lea.vmem %s0, 261
    %v704 = vld [vmem:[%s703] sm:$0x8]
    %vm705 = vcmask 1043459
    %v706 = vsel %vm705, %v704, %v702
    %707 = vrot.lane.b32.xlu0 %v706, 40
    %v708 = vpop.permute.xlu0 %707
    %vm709 = vcmask 408896
    %710 = vst.msk [vmem:[#allocation0] sm:$0x3] %vm709, %v708
    %s711 = scalar_lea.vmem [#allocation0], 38
    %712 = vst.msk [vmem:[%s711] sm:$0xc] %vm709, %v708
    %s713 = scalar_lea.vmem %s0, 85
    %v714 = vld [vmem:[%s713] sm:$0x1]
    %s715 = scalar_lea.vmem %s0, 244
    %v716 = vld [vmem:[%s715] sm:$0x2]
    %vm717 = vcmask 1041409
    %v718 = vsel %vm717, %v716, %v714
    %719 = vrot.lane.b32.xlu0 %v718, 38
    %v720 = vpop.permute.xlu0 %719
    %vm721 = vcmask 392496
    %s722 = scalar_lea.vmem [#allocation0], 32
    %723 = vst.msk [vmem:[%s722] sm:$0x3] %vm721, %v720
    %s724 = scalar_lea.vmem %s0, 66
    %v725 = vld [vmem:[%s724] sm:$0x1]
    %s726 = scalar_lea.vmem %s0, 225
    %v727 = vld [vmem:[%s726] sm:$0x2]
    %vm728 = vcmask 1041409
    %v729 = vsel %vm728, %v727, %v725
    %730 = vrot.lane.b32.xlu0 %v729, 36
    %v731 = vpop.permute.xlu0 %730
    %vm732 = vcmask 376096
    %s733 = scalar_lea.vmem [#allocation0], 24
    %734 = vst.msk [vmem:[%s733] sm:$0x3] %vm732, %v731
    %s735 = scalar_lea.vmem %s0, 41
    %v736 = vld [vmem:[%s735] sm:$0x1]
    %s737 = scalar_lea.vmem %s0, 255
    %s738 = smov 6
    %v739 = vld [vmem:[%s737] ss:$-54 sm:%s738]
    %vm740 = vcmask 1042433
    %v741 = vsel %vm740, %v739, %v736
    %s742 = scalar_lea.vmem %s0, 304
    %v743 = vld [vmem:[%s742] sm:$0x8]
    %vm744 = vcmask 1043459
    %v745 = vsel %vm744, %v743, %v741
    %746 = vrot.lane.b32.xlu0 %v745, 34
    %v747 = vpop.permute.xlu0 %746
    %vm748 = vcmask 359696
    %s749 = scalar_lea.vmem [#allocation0], 16
    %750 = vst.msk [vmem:[%s749] sm:$0x3] %vm748, %v747
    %s751 = scalar_lea.vmem [#allocation0], 54
    %752 = vst.msk [vmem:[%s751] sm:$0xc] %vm748, %v747
    %s753 = scalar_lea.vmem %s0, 22
    %v754 = vld [vmem:[%s753] sm:$0x1]
    %s755 = scalar_lea.vmem %s0, 236
    %s756 = smov 6
    %v757 = vld [vmem:[%s755] ss:$-54 sm:%s756]
    %vm758 = vcmask 1042433
    %v759 = vsel %vm758, %v757, %v754
    %s760 = scalar_lea.vmem %s0, 285
    %v761 = vld [vmem:[%s760] sm:$0x8]
    %vm762 = vcmask 1043459
    %v763 = vsel %vm762, %v761, %v759
    %764 = vrot.lane.b32.xlu0 %v763, 32
    %v765 = vpop.permute.xlu0 %764
    %vm766 = vcmask 343296
    %s767 = scalar_lea.vmem [#allocation0], 8
    %768 = vst.msk [vmem:[%s767] sm:$0x3] %vm766, %v765
    %s769 = scalar_lea.vmem [#allocation0], 46
    %770 = vst.msk [vmem:[%s769] sm:$0xc] %vm766, %v765
    %s771 = scalar_lea.vmem %s0, 3
    %v772 = vld [vmem:[%s771] sm:$0x1]
    %s773 = scalar_lea.vmem %s0, 223
    %s774 = smov 6
    %v775 = vld [vmem:[%s773] ss:$-60 sm:%s774]
    %vm776 = vcmask 1042433
    %v777 = vsel %vm776, %v775, %v772
    %s778 = scalar_lea.vmem %s0, 260
    %v779 = vld [vmem:[%s778] sm:$0x8]
    %vm780 = vcmask 1043459
    %v781 = vsel %vm780, %v779, %v777
    %782 = vrot.lane.b32.xlu0 %v781, 30
    %v783 = vpop.permute.xlu0 %782
    %vm784 = vcmask 326896
    %785 = vst.msk [vmem:[#allocation0] sm:$0x3] %vm784, %v783
    %s786 = scalar_lea.vmem [#allocation0], 38
    %787 = vst.msk [vmem:[%s786] sm:$0xc] %vm784, %v783
    %s788 = scalar_lea.vmem %s0, 84
    %v789 = vld [vmem:[%s788] sm:$0x1]
    %s790 = scalar_lea.vmem %s0, 243
    %v791 = vld [vmem:[%s790] sm:$0x2]
    %vm792 = vcmask 1041409
    %v793 = vsel %vm792, %v791, %v789
    %794 = vrot.lane.b32.xlu0 %v793, 28
    %v795 = vpop.permute.xlu0 %794
    %vm796 = vcmask 310496
    %s797 = scalar_lea.vmem [#allocation0], 32
    %798 = vst.msk [vmem:[%s797] sm:$0x3] %vm796, %v795
    %s799 = scalar_lea.vmem %s0, 65
    %v800 = vld [vmem:[%s799] sm:$0x1]
    %s801 = scalar_lea.vmem %s0, 224
    %v802 = vld [vmem:[%s801] sm:$0x2]
    %vm803 = vcmask 1041409
    %v804 = vsel %vm803, %v802, %v800
    %805 = vrot.lane.b32.xlu0 %v804, 26
    %v806 = vpop.permute.xlu0 %805
    %vm807 = vcmask 294096
    %s808 = scalar_lea.vmem [#allocation0], 24
    %809 = vst.msk [vmem:[%s808] sm:$0x3] %vm807, %v806
    %s810 = scalar_lea.vmem %s0, 40
    %v811 = vld [vmem:[%s810] sm:$0x1]
    %s812 = scalar_lea.vmem %s0, 254
    %s813 = smov 6
    %v814 = vld [vmem:[%s812] ss:$-54 sm:%s813]
    %vm815 = vcmask 1042433
    %v816 = vsel %vm815, %v814, %v811
    %s817 = scalar_lea.vmem %s0, 303
    %v818 = vld [vmem:[%s817] sm:$0x8]
    %vm819 = vcmask 1043459
    %v820 = vsel %vm819, %v818, %v816
    %821 = vrot.lane.b32.xlu0 %v820, 24
    %v822 = vpop.permute.xlu0 %821
    %vm823 = vcmask 277696
    %s824 = scalar_lea.vmem [#allocation0], 16
    %825 = vst.msk [vmem:[%s824] sm:$0x3] %vm823, %v822
    %s826 = scalar_lea.vmem [#allocation0], 54
    %827 = vst.msk [vmem:[%s826] sm:$0xc] %vm823, %v822
    %s828 = scalar_lea.vmem %s0, 21
    %v829 = vld [vmem:[%s828] sm:$0x1]
    %s830 = scalar_lea.vmem %s0, 241
    %s831 = smov 6
    %v832 = vld [vmem:[%s830] ss:$-60 sm:%s831]
    %vm833 = vcmask 1042433
    %v834 = vsel %vm833, %v832, %v829
    %s835 = scalar_lea.vmem %s0, 278
    %v836 = vld [vmem:[%s835] sm:$0x8]
    %vm837 = vcmask 1043459
    %v838 = vsel %vm837, %v836, %v834
    %839 = vrot.lane.b32.xlu0 %v838, 22
    %v840 = vpop.permute.xlu0 %839
    %vm841 = vcmask 261296
    %s842 = scalar_lea.vmem [#allocation0], 8
    %843 = vst.msk [vmem:[%s842] sm:$0x3] %vm841, %v840
    %s844 = scalar_lea.vmem [#allocation0], 46
    %845 = vst.msk [vmem:[%s844] sm:$0xc] %vm841, %v840
    %s846 = scalar_lea.vmem %s0, 2
    %v847 = vld [vmem:[%s846] sm:$0x1]
    %s848 = scalar_lea.vmem %s0, 222
    %s849 = smov 6
    %v850 = vld [vmem:[%s848] ss:$-60 sm:%s849]
    %vm851 = vcmask 1042433
    %v852 = vsel %vm851, %v850, %v847
    %s853 = scalar_lea.vmem %s0, 259
    %v854 = vld [vmem:[%s853] sm:$0x8]
    %vm855 = vcmask 1043459
    %v856 = vsel %vm855, %v854, %v852
    %857 = vrot.lane.b32.xlu0 %v856, 20
    %v858 = vpop.permute.xlu0 %857
    %vm859 = vcmask 244896
    %860 = vst.msk [vmem:[#allocation0] sm:$0x3] %vm859, %v858
    %s861 = scalar_lea.vmem [#allocation0], 38
    %862 = vst.msk [vmem:[%s861] sm:$0xc] %vm859, %v858
    %s863 = scalar_lea.vmem %s0, 83
    %v864 = vld [vmem:[%s863] sm:$0x1]
    %s865 = scalar_lea.vmem %s0, 242
    %v866 = vld [vmem:[%s865] sm:$0x2]
    %vm867 = vcmask 1041409
    %v868 = vsel %vm867, %v866, %v864
    %869 = vrot.lane.b32.xlu0 %v868, 18
    %v870 = vpop.permute.xlu0 %869
    %vm871 = vcmask 228496
    %s872 = scalar_lea.vmem [#allocation0], 32
    %873 = vst.msk [vmem:[%s872] sm:$0x3] %vm871, %v870
    %s874 = scalar_lea.vmem %s0, 64
    %v875 = vld [vmem:[%s874] sm:$0x1]
    %s876 = scalar_lea.vmem %s0, 223
    %v877 = vld [vmem:[%s876] sm:$0x2]
    %vm878 = vcmask 1041409
    %v879 = vsel %vm878, %v877, %v875
    %880 = vrot.lane.b32.xlu0 %v879, 16
    %v881 = vpop.permute.xlu0 %880
    %vm882 = vcmask 212096
    %s883 = scalar_lea.vmem [#allocation0], 24
    %884 = vst.msk [vmem:[%s883] sm:$0x3] %vm882, %v881
    %s885 = scalar_lea.vmem %s0, 39
    %v886 = vld [vmem:[%s885] sm:$0x1]
    %s887 = scalar_lea.vmem %s0, 253
    %s888 = smov 6
    %v889 = vld [vmem:[%s887] ss:$-54 sm:%s888]
    %vm890 = vcmask 1042433
    %v891 = vsel %vm890, %v889, %v886
    %s892 = scalar_lea.vmem %s0, 302
    %v893 = vld [vmem:[%s892] sm:$0x8]
    %vm894 = vcmask 1043459
    %v895 = vsel %vm894, %v893, %v891
    %896 = vrot.lane.b32.xlu0 %v895, 14
    %v897 = vpop.permute.xlu0 %896
    %vm898 = vcmask 195696
    %s899 = scalar_lea.vmem [#allocation0], 16
    %900 = vst.msk [vmem:[%s899] sm:$0x3] %vm898, %v897
    %s901 = scalar_lea.vmem [#allocation0], 54
    %902 = vst.msk [vmem:[%s901] sm:$0xc] %vm898, %v897
    %s903 = scalar_lea.vmem %s0, 20
    %v904 = vld [vmem:[%s903] sm:$0x1]
    %s905 = scalar_lea.vmem %s0, 240
    %s906 = smov 6
    %v907 = vld [vmem:[%s905] ss:$-60 sm:%s906]
    %vm908 = vcmask 1042433
    %v909 = vsel %vm908, %v907, %v904
    %s910 = scalar_lea.vmem %s0, 277
    %v911 = vld [vmem:[%s910] sm:$0x8]
    %vm912 = vcmask 1043459
    %v913 = vsel %vm912, %v911, %v909
    %914 = vrot.lane.b32.xlu0 %v913, 12
    %v915 = vpop.permute.xlu0 %914
    %vm916 = vcmask 179296
    %s917 = scalar_lea.vmem [#allocation0], 8
    %918 = vst.msk [vmem:[%s917] sm:$0x3] %vm916, %v915
    %s919 = scalar_lea.vmem [#allocation0], 46
    %920 = vst.msk [vmem:[%s919] sm:$0xc] %vm916, %v915
    %s921 = scalar_lea.vmem %s0, 1
    %v922 = vld [vmem:[%s921] sm:$0x1]
    %s923 = scalar_lea.vmem %s0, 221
    %s924 = smov 6
    %v925 = vld [vmem:[%s923] ss:$-60 sm:%s924]
    %vm926 = vcmask 1042433
    %v927 = vsel %vm926, %v925, %v922
    %s928 = scalar_lea.vmem %s0, 258
    %v929 = vld [vmem:[%s928] sm:$0x8]
    %vm930 = vcmask 1043459
    %v931 = vsel %vm930, %v929, %v927
    %932 = vrot.lane.b32.xlu0 %v931, 10
    %v933 = vpop.permute.xlu0 %932
    %vm934 = vcmask 162896
    %935 = vst.msk [vmem:[#allocation0] sm:$0x3] %vm934, %v933
    %s936 = scalar_lea.vmem [#allocation0], 38
    %937 = vst.msk [vmem:[%s936] sm:$0xc] %vm934, %v933
    %s938 = scalar_lea.vmem %s0, 82
    %v939 = vld [vmem:[%s938] sm:$0x1]
    %s940 = scalar_lea.vmem %s0, 241
    %v941 = vld [vmem:[%s940] sm:$0x2]
    %vm942 = vcmask 1041409
    %v943 = vsel %vm942, %v941, %v939
    %944 = vrot.lane.b32.xlu0 %v943, 8
    %v945 = vpop.permute.xlu0 %944
    %vm946 = vcmask 146496
    %s947 = scalar_lea.vmem [#allocation0], 32
    %948 = vst.msk [vmem:[%s947] sm:$0x3] %vm946, %v945
    %s949 = scalar_lea.vmem %s0, 57
    %v950 = vld [vmem:[%s949] sm:$0x1]
    %s951 = scalar_lea.vmem %s0, 216
    %v952 = vld [vmem:[%s951] sm:$0x2]
    %vm953 = vcmask 1041409
    %v954 = vsel %vm953, %v952, %v950
    %955 = vrot.lane.b32.xlu0 %v954, 6
    %v956 = vpop.permute.xlu0 %955
    %vm957 = vcmask 130096
    %s958 = scalar_lea.vmem [#allocation0], 24
    %959 = vst.msk [vmem:[%s958] sm:$0x3] %vm957, %v956
    %s960 = scalar_lea.vmem %s0, 38
    %v961 = vld [vmem:[%s960] sm:$0x1]
    %s962 = scalar_lea.vmem %s0, 252
    %s963 = smov 6
    %v964 = vld [vmem:[%s962] ss:$-54 sm:%s963]
    %vm965 = vcmask 1042433
    %v966 = vsel %vm965, %v964, %v961
    %s967 = scalar_lea.vmem %s0, 301
    %v968 = vld [vmem:[%s967] sm:$0x8]
    %vm969 = vcmask 1043459
    %v970 = vsel %vm969, %v968, %v966
    %971 = vrot.lane.b32.xlu0 %v970, 4
    %v972 = vpop.permute.xlu0 %971
    %vm973 = vcmask 113696
    %s974 = scalar_lea.vmem [#allocation0], 16
    %975 = vst.msk [vmem:[%s974] sm:$0x3] %vm973, %v972
    %s976 = scalar_lea.vmem [#allocation0], 54
    %977 = vst.msk [vmem:[%s976] sm:$0xc] %vm973, %v972
    %s978 = scalar_lea.vmem %s0, 19
    %v979 = vld [vmem:[%s978] sm:$0x1]
    %s980 = scalar_lea.vmem %s0, 239
    %s981 = smov 6
    %v982 = vld [vmem:[%s980] ss:$-60 sm:%s981]
    %vm983 = vcmask 1042433
    %v984 = vsel %vm983, %v982, %v979
    %s985 = scalar_lea.vmem %s0, 276
    %v986 = vld [vmem:[%s985] sm:$0x8]
    %vm987 = vcmask 1043459
    %v988 = vsel %vm987, %v986, %v984
    %989 = vrot.lane.b32.xlu0 %v988, 2
    %v990 = vpop.permute.xlu0 %989
    %vm991 = vcmask 97296
    %s992 = scalar_lea.vmem [#allocation0], 8
    %993 = vst.msk [vmem:[%s992] sm:$0x3] %vm991, %v990
    %s994 = scalar_lea.vmem [#allocation0], 46
    %995 = vst.msk [vmem:[%s994] sm:$0xc] %vm991, %v990
    %s997 = sshllo.u32 0, 2
    %v999 = vld [vmem:[#allocation0] sm:%s997]
    %s1000 = sshllo.u32 0, 2
    %1001 = vst [vmem:[%s1] sm:%s1000] %v999
    %s1002 = scalar_lea.vmem [#allocation0], 8
    %v1003 = vld [vmem:[%s1002] sm:%s997]
    %s1004 = sshllo.u32 0, 2
    %s1005 = scalar_lea.vmem %s1, 2
    %1006 = vst [vmem:[%s1005] sm:%s1004] %v1003
    %s1007 = scalar_lea.vmem [#allocation0], 16
    %v1008 = vld [vmem:[%s1007] sm:%s997]
    %s1009 = sshllo.u32 0, 2
    %s1010 = smul.addr 2, 2
    %s1011 = scalar_lea.vmem %s1, %s1010
    %1012 = vst [vmem:[%s1011] sm:%s1009] %v1008
    %s1013 = scalar_lea.vmem [#allocation0], 24
    %v1014 = vld [vmem:[%s1013] sm:%s997]
    %s1015 = sshllo.u32 0, 2
    %s1016 = smul.addr 2, 3
    %s1017 = scalar_lea.vmem %s1, %s1016
    %1018 = vst [vmem:[%s1017] sm:%s1015] %v1014
    %s1019 = scalar_lea.vmem [#allocation0], 32
    %v1020 = vld [vmem:[%s1019] sm:%s997]
    %s1021 = sshllo.u32 0, 2
    %s1022 = smul.addr 2, 4
    %s1023 = scalar_lea.vmem %s1, %s1022
    %1024 = vst [vmem:[%s1023] sm:%s1021] %v1020
    %s1025 = scalar_lea.vmem [#allocation0], 40
    %v1026 = vld [vmem:[%s1025] sm:%s997]
    %s1027 = sshllo.u32 0, 2
    %s1028 = smul.addr 2, 5
    %s1029 = scalar_lea.vmem %s1, %s1028
    %1030 = vst [vmem:[%s1029] sm:%s1027] %v1026
    %s1031 = scalar_lea.vmem [#allocation0], 48
    %v1032 = vld [vmem:[%s1031] sm:%s997]
    %s1033 = sshllo.u32 0, 2
    %s1034 = smul.addr 2, 6
    %s1035 = scalar_lea.vmem %s1, %s1034
    %1036 = vst [vmem:[%s1035] sm:%s1033] %v1032
    %s1037 = scalar_lea.vmem [#allocation0], 56
    %v1038 = vld [vmem:[%s1037] sm:%s997]
    %s1039 = sshllo.u32 0, 2
    %s1040 = smul.addr 2, 7
    %s1041 = scalar_lea.vmem %s1, %s1040
    %1042 = vst [vmem:[%s1041] sm:%s1039] %v1038

// kernel: decoder3d_forward.3
$region0: #{decoder3d_forward.3}
  #allocation0 [shape = 'u32[]', space=smem, size = 0x4, offset = 0x4, fixed_abs, tag = 'smem constant byte address 0x4 - core index']
  #allocation1 [shape = 'u32[144,128]{1,0:T(1,128)}', space=vmem, size = 0x12000, scoped, tag = 'internal scratch']
  %s0 = inlined_call_operand.vmem [shape: f32[108,216], index: 0, kind: input, shape index: {}]
  %s1 = inlined_call_operand.vmem [shape: f32[8,108], index: 1, kind: input, shape index: {}]
  %s2 = inlined_call_operand.vmem [shape: f32[8,1], index: 2, kind: input, shape index: {}]
  %s3 = inlined_call_operand.vmem [shape: f32[4,216], index: 3, kind: input, shape index: {}]
  %s4 = inlined_call_operand.vmem [shape: f32[12,1], index: 4, kind: input, shape index: {}]
  %s5 = inlined_call_operand.vmem [shape: f32[12,1], index: 5, kind: input, shape index: {}]
  %s6 = inlined_call_operand.vmem [shape: f32[12,216], index: 6, kind: output, shape index: {}]
  %s7 = sld [smem:[#allocation0]]
  $region34: #{decoder3d_forward.3} parent=0
    _
  %s9 = ssub.s32 1, %s7
  %s10 = scalar_select 0, %s9, %s7
  // Predicated region
  $region2: #{decoder3d_forward.3} parent=0 // pred_check
    _
  $region3: #{decoder3d_forward.3} parent=0 // pred_check_branch
    %12 = sbr.rel (0) target = $region5
  $region4: #{decoder3d_forward.3} parent=0 // pred_region
    _
  $region5: #{decoder3d_forward.3} parent=0 // pred_fallthru
    _
  // Predicated region
  $region6: #{decoder3d_forward.3} parent=0 // pred_check
    _
  $region7: #{decoder3d_forward.3} parent=0 // pred_check_branch
    %14 = sbr.rel (0) target = $region9
  $region8: #{decoder3d_forward.3} parent=0 // pred_region
    _
  $region9: #{decoder3d_forward.3} parent=0 // pred_fallthru
    _
  // Predicated region
  $region10: #{decoder3d_forward.3} parent=0 // pred_check
    _
  $region11: #{decoder3d_forward.3} parent=0 // pred_check_branch
    %16 = sbr.rel (0) target = $region13
  $region12: #{decoder3d_forward.3} parent=0 // pred_region
    _
  $region13: #{decoder3d_forward.3} parent=0 // pred_fallthru
    _
  // Predicated region
  $region14: #{decoder3d_forward.3} parent=0 // pred_check
    _
  $region15: #{decoder3d_forward.3} parent=0 // pred_check_branch
    %18 = sbr.rel (0) target = $region17
  $region16: #{decoder3d_forward.3} parent=0 // pred_region
    _
  $region17: #{decoder3d_forward.3} parent=0 // pred_fallthru
    _
  // Predicated region
  $region18: #{decoder3d_forward.3} parent=0 // pred_check
    _
  $region19: #{decoder3d_forward.3} parent=0 // pred_check_branch
    %20 = sbr.rel (0) target = $region21
  $region20: #{decoder3d_forward.3} parent=0 // pred_region
    _
  $region21: #{decoder3d_forward.3} parent=0 // pred_fallthru
    _
  // Predicated region
  $region22: #{decoder3d_forward.3} parent=0 // pred_check
    _
  $region23: #{decoder3d_forward.3} parent=0 // pred_check_branch
    %22 = sbr.rel (0) target = $region25
  $region24: #{decoder3d_forward.3} parent=0 // pred_region
    _
  $region25: #{decoder3d_forward.3} parent=0 // pred_fallthru
    _
  %v23 = vld [vmem:[%s1] sm:$0xff]
  %v24 = vld [vmem:[%s0] sm:$0xff]
  %v25 = vld [vmem:[%s0 + $0x8] sm:$0xff]
  %v26 = vld [vmem:[%s0 + $0x10] sm:$0xff]
  %v27 = vld [vmem:[%s0 + $0x18] sm:$0xff]
  %v28 = vld [vmem:[%s0 + $0x20] sm:$0xff]
  %v29 = vld [vmem:[%s0 + $0x28] sm:$0xff]
  %v30 = vld [vmem:[%s0 + $0x30] sm:$0xff]
  %v31 = vld [vmem:[%s0 + $0x38] sm:$0xff]
  %v32 = vld [vmem:[%s0 + $0x40] sm:$0xff]
  %v33 = vld [vmem:[%s0 + $0x48] sm:$0xff]
  %v34 = vld [vmem:[%s0 + $0x50] sm:$0xff]
  %v35 = vld [vmem:[%s0 + $0x58] sm:$0xff]
  %v36 = vld [vmem:[%s0 + $0x60] sm:$0xff]
  %v37 = vld [vmem:[%s0 + $0x68] sm:$0xff]
  %v38 = vld [vmem:[%s0 + $0x70] sm:$0xff]
  %v39 = vld [vmem:[%s0 + $0x78] sm:$0xff]
  %v40 = vld [vmem:[%s0 + $0x80] sm:$0xff]
  %v41 = vld [vmem:[%s0 + $0x88] sm:$0xff]
  %v42 = vld [vmem:[%s0 + $0x90] sm:$0xff]
  %v43 = vld [vmem:[%s0 + $0x98] sm:$0xff]
  %v44 = vld [vmem:[%s0 + $0xa0] sm:$0xff]
  %v45 = vld [vmem:[%s0 + $0xa8] sm:$0xff]
  %v46 = vld [vmem:[%s0 + $0xb0] sm:$0xff]
  %v47 = vld [vmem:[%s0 + $0xb8] sm:$0xff]
  %v48 = vld [vmem:[%s0 + $0xc0] sm:$0xff]
  %v49 = vld [vmem:[%s0 + $0xc8] sm:$0xff]
  %v50 = vld [vmem:[%s0 + $0xd0] sm:$0xf]
  %v51 = vld [vmem:[%s0 + $0xd8] sm:$0xf]
  %v52 = vld [vmem:[%s2] sm:$0xff]
  %54 = vset.pattern.permute.xlu0 0
  %55 = vperm.xlu0 %54, %v52
  %v56 = vpop.permute.xlu0 %55
  %vm58 = vcmask 883712
  %v60 = vsel %vm58, %v23, 0
  %vm62 = vcmask 1043456
  %v64 = vsel %vm62, %v50, 0
  %v67 = vsel %vm62, %v51, 0
  %69 = vmatprep.subr.mxu0 %v25
  %70 = vmatpush1.msra.mxu0 %v24
  %71 = vmatprep.subr.mxu0 %v27
  %72 = vmatpush1.msra.mxu0 %v26
  %73 = vmatprep.subr.mxu0 %v29
  %74 = vmatpush1.msra.mxu0 %v28
  %75 = vmatprep.subr.mxu0 %v31
  %76 = vmatpush1.msra.mxu0 %v30
  %77 = vmatprep.subr.mxu0 %v33
  %78 = vmatpush1.msra.mxu0 %v32
  %79 = vmatprep.subr.mxu0 %v35
  %80 = vmatpush1.msra.mxu0 %v34
  %81 = vmatprep.subr.mxu0 %v37
  %82 = vmatpush1.msra.mxu0 %v36
  %83 = vmatprep.subr.mxu0 %v39
  %84 = vmatpush1.msra.mxu0 %v38
  %85 = vmatprep.subr.mxu0 %v41
  %86 = vmatpush1.msra.mxu0 %v40
  %87 = vmatprep.subr.mxu0 %v43
  %88 = vmatpush1.msra.mxu0 %v42
  %89 = vmatprep.subr.mxu0 %v45
  %90 = vmatpush1.msra.mxu0 %v44
  %91 = vmatprep.subr.mxu0 %v47
  %92 = vmatpush1.msra.mxu0 %v46
  %93 = vmatprep.subr.mxu0 %v49
  %94 = vmatpush1.msra.mxu0 %v48
  %95 = vmatprep.subr.mxu0 %v67
  %96 = vmatpush1.msra.mxu0 %v64
  %97 = vmatprep.subr.mxu0 0.0
  %98 = vmatpush1.msra.mxu0 0.0
  %99 = vmatprep.subr.mxu0 0.0
  %100 = vmatpush1.msra.mxu0 0.0
  %101 = vmatprep.subr.mxu0 0.0
  %102 = vmatpush1.msra.mxu0 0.0
  %103 = vmatprep.subr.mxu0 0.0
  %104 = vmatpush1.msra.mxu0 0.0
  %105 = vmatprep.subr.mxu0 0.0
  %106 = vmatpush1.msra.mxu0 0.0
  %107 = vmatprep.subr.mxu0 0.0
  %108 = vmatpush1.msra.mxu0 0.0
  %109 = vmatprep.subr.mxu0 0.0
  %110 = vmatpush1.msra.mxu0 0.0
  %111 = vmatprep.subr.mxu0 0.0
  %112 = vmatpush1.msra.mxu0 0.0
  %113 = vmatprep.subr.mxu0 0.0
  %114 = vmatpush1.msra.mxu0 0.0
  %115 = vmatprep.subr.mxu0 0.0
  %116 = vmatpush1.msra.mxu0 0.0
  %117 = vmatprep.subr.mxu0 0.0
  %118 = vmatpush1.msra.mxu0 0.0
  %119 = vmatprep.subr.mxu0 0.0
  %120 = vmatpush1.msra.mxu0 0.0
  %121 = vmatprep.subr.mxu0 0.0
  %122 = vmatpush1.msra.mxu0 0.0
  %123 = vmatprep.subr.mxu0 0.0
  %124 = vmatpush1.msra.mxu0 0.0
  %125 = vmatprep.subr.mxu0 0.0
  %126 = vmatpush1.msra.mxu0 0.0
  %127 = vmatprep.subr.mxu0 0.0
  %128 = vmatpush1.msra.mxu0 0.0
  %129 = vmatprep.subr.mxu0 0.0
  %130 = vmatpush1.msra.mxu0 0.0
  %131 = vmatprep.subr.mxu0 0.0
  %132 = vmatpush1.msra.mxu0 0.0
  %133 = vmatprep.mubr.f32.mxu0 0.0
  %134 = vmatmul.mubr.f32.gmra.mrb[0].mxu0 %v60
  %v135 = vpop.f32.mrb[0].mxu0
  %v136 = vadd.f32 %v56, %v135
  %v137 = vpop.f32.mrb[0].mxu0
  %v138 = vadd.f32 %v56, %v137
  %139 = vdwg.mxu0
  %v140 = vld [vmem:[%s4] sm:$0xff]
  %v141 = vld [vmem:[%s4 + $0x8] sm:$0xf]
  %v142 = vld [vmem:[%s5] sm:$0xff]
  %v143 = vld [vmem:[%s5 + $0x8] sm:$0xf]
  %vm144 = vcmask 719872
  %v145 = vsel %vm144, %v138, 0.0
  %v146 = vadd.f32 %v136, %v145
  %147 = vadd.xlane.f32.xlu0 %v146
  %v148 = vpop.xlane.xlu0 %147
  %v149 = vmul.f32 %v136, %v136
  %v150 = vmul.f32 %v138, %v138
  %v151 = vsel %vm144, %v150, 0.0
  %v152 = vadd.f32 %v149, %v151
  %153 = vadd.xlane.f32.xlu0 %v152
  %v154 = vpop.xlane.xlu0 %153
  %v155 = vmul.f32 %v148, 0.0046296297
  %v156 = vmul.f32 %v154, 0.0046296297
  %v157 = vmul.f32 %v155, %v155
  %v158 = vsub.f32 %v156, %v157
  %v159 = vadd.f32 %v158, 1e-05
  %v160 = vrsqrt.pop %v159
  %v161 = vsub.f32 %v136, %v155
  %v162 = vsub.f32 %v138, %v155
  %v163 = vmul.f32 %v160, %v140
  %165 = vset.pattern.permute.xlu0 0
  %166 = vperm.xlu0 %165, %v163
  %v167 = vpop.permute.xlu0 %166
  %v169 = vmul.f32 %v161, %v167
  %v170 = vmul.f32 %v162, %v167
  %172 = vset.pattern.permute.xlu0 0
  %173 = vperm.xlu0 %172, %v142
  %v174 = vpop.permute.xlu0 %173
  %v176 = vadd.f32 %v169, %v174
  %v177 = vadd.f32 %v170, %v174
  %v178 = vmax.f32 %v176, 0.0
  %v179 = vmax.f32 %v177, 0.0
  %180 = vst [vmem:[%s6] sm:$0xff] %v178
  %181 = vst.msk [vmem:[%s6 + $0x8] sm:$0xff] %vm144, %v179
  %v182 = vld [vmem:[%s3] sm:$0xff]
  %v184 = vcombine.high %v182, %v182
  %v186 = vsel %vm62, %v182, 0.0
  %vm187 = vcmask 715776
  %v188 = vsel %vm187, %v184, 0.0
  %v189 = vadd.f32 %v186, %v188
  %190 = vadd.xlane.f32.xlu0 %v189
  %v191 = vpop.xlane.xlu0 %190
  %v192 = vmul.f32 %v182, %v182
  %v194 = vcombine.high %v192, %v192
  %v196 = vsel %vm62, %v192, 0.0
  %v197 = vsel %vm187, %v194, 0.0
  %v198 = vadd.f32 %v196, %v197
  %199 = vadd.xlane.f32.xlu0 %v198
  %v200 = vpop.xlane.xlu0 %199
  %v201 = vmul.f32 %v191, 0.0046296297
  %v202 = vmul.f32 %v200, 0.0046296297
  %v203 = vmul.f32 %v201, %v201
  %v204 = vsub.f32 %v202, %v203
  %v205 = vadd.f32 %v204, 1e-05
  %v206 = vrsqrt.pop %v205
  %v209 = vunpack.c.l.s4 839922192
  %v210 = vunpack.c.0.s8 %v209
  %v211 = vlaneseq
  %v212 = vshrl.u32 %v211, 7
  %v213 = vsub.s32 %v210, %v212
  %v214 = vrot.slane %v201, %v213
  %v216 = vsub.f32 %v182, %v214
  %v217 = vmul.f32 %v206, %v141
  %219 = vset.pattern.permute.xlu0 0
  %220 = vperm.xlu0 %219, %v217
  %v221 = vpop.permute.xlu0 %220
  %v223 = vunpack.c.l.s4 839922192
  %v224 = vunpack.c.0.s8 %v223
  %v225 = vlaneseq
  %v226 = vshrl.u32 %v225, 7
  %v227 = vsub.s32 %v224, %v226
  %v228 = vrot.slane %v221, %v227
  %v230 = vmul.f32 %v216, %v228
  %232 = vset.pattern.permute.xlu0 0
  %233 = vperm.xlu0 %232, %v143
  %v234 = vpop.permute.xlu0 %233
  %v236 = vunpack.c.l.s4 839922192
  %v237 = vunpack.c.0.s8 %v236
  %v238 = vlaneseq
  %v239 = vshrl.u32 %v238, 7
  %v240 = vsub.s32 %v237, %v239
  %v241 = vrot.slane %v234, %v240
  %v243 = vadd.f32 %v230, %v241
  %v244 = vmax.f32 %v243, 0.0
  %v246 = vcombine.high %v244, %v244
  %248 = vst [vmem:[%s6 + $0x10] sm:$0xf] %v244
  %249 = vst.msk [vmem:[%s6 + $0x18] sm:$0xf] %vm187, %v246
  // Predicated region
  $region26: #{decoder3d_forward.3} parent=0 // pred_check
    _
  $region27: #{decoder3d_forward.3} parent=0 // pred_check_branch
    %251 = sbr.rel (0) target = $region29
  $region28: #{decoder3d_forward.3} parent=0 // pred_region
    _
  $region29: #{decoder3d_forward.3} parent=0 // pred_fallthru
    _
  // Predicated region
  $region30: #{decoder3d_forward.3} parent=0 // pred_check
    _
  $region31: #{decoder3d_forward.3} parent=0 // pred_check_branch
    %253 = sbr.rel (0) target = $region33
  $region32: #{decoder3d_forward.3} parent=0 // pred_region
    _
  $region33: #{decoder3d_forward.3} parent=0 // pred_fallthru
    _

// kernel: decoder3d_forward.4
$region0: #{decoder3d_forward.4}
  #allocation0 [shape = 'u32[]', space=smem, size = 0x4, offset = 0x4, fixed_abs, tag = 'smem constant byte address 0x4 - core index']
  #allocation1 [shape = 'u32[144,128]{1,0:T(1,128)}', space=vmem, size = 0x12000, scoped, tag = 'internal scratch']
  %s0 = inlined_call_operand.vmem [shape: f32[324,512], index: 0, kind: input, shape index: {}]
  %s1 = inlined_call_operand.vmem [shape: f32[16,324], index: 1, kind: input, shape index: {}]
  %s2 = inlined_call_operand.vmem [shape: f32[16,1], index: 2, kind: input, shape index: {}]
  %s3 = inlined_call_operand.vmem [shape: f32[8,512], index: 3, kind: input, shape index: {}]
  %s4 = inlined_call_operand.vmem [shape: f32[24,1], index: 4, kind: input, shape index: {}]
  %s5 = inlined_call_operand.vmem [shape: f32[24,1], index: 5, kind: input, shape index: {}]
  %s6 = inlined_call_operand.vmem [shape: f32[24,512], index: 6, kind: output, shape index: {}]
  %s7 = sld [smem:[#allocation0]]
  $region34: #{decoder3d_forward.4} parent=0
    _
  %s9 = ssub.s32 1, %s7
  %s10 = scalar_select 0, %s9, %s7
  // Predicated region
  $region2: #{decoder3d_forward.4} parent=0 // pred_check
    _
  $region3: #{decoder3d_forward.4} parent=0 // pred_check_branch
    %12 = sbr.rel (0) target = $region5
  $region4: #{decoder3d_forward.4} parent=0 // pred_region
    _
  $region5: #{decoder3d_forward.4} parent=0 // pred_fallthru
    _
  // Predicated region
  $region6: #{decoder3d_forward.4} parent=0 // pred_check
    _
  $region7: #{decoder3d_forward.4} parent=0 // pred_check_branch
    %14 = sbr.rel (0) target = $region9
  $region8: #{decoder3d_forward.4} parent=0 // pred_region
    _
  $region9: #{decoder3d_forward.4} parent=0 // pred_fallthru
    _
  // Predicated region
  $region10: #{decoder3d_forward.4} parent=0 // pred_check
    _
  $region11: #{decoder3d_forward.4} parent=0 // pred_check_branch
    %16 = sbr.rel (0) target = $region13
  $region12: #{decoder3d_forward.4} parent=0 // pred_region
    _
  $region13: #{decoder3d_forward.4} parent=0 // pred_fallthru
    _
  // Predicated region
  $region14: #{decoder3d_forward.4} parent=0 // pred_check
    _
  $region15: #{decoder3d_forward.4} parent=0 // pred_check_branch
    %18 = sbr.rel (0) target = $region17
  $region16: #{decoder3d_forward.4} parent=0 // pred_region
    _
  $region17: #{decoder3d_forward.4} parent=0 // pred_fallthru
    _
  // Predicated region
  $region18: #{decoder3d_forward.4} parent=0 // pred_check
    _
  $region19: #{decoder3d_forward.4} parent=0 // pred_check_branch
    %20 = sbr.rel (0) target = $region21
  $region20: #{decoder3d_forward.4} parent=0 // pred_region
    _
  $region21: #{decoder3d_forward.4} parent=0 // pred_fallthru
    _
  // Predicated region
  $region22: #{decoder3d_forward.4} parent=0 // pred_check
    _
  $region23: #{decoder3d_forward.4} parent=0 // pred_check_branch
    %22 = sbr.rel (0) target = $region25
  $region24: #{decoder3d_forward.4} parent=0 // pred_region
    _
  $region25: #{decoder3d_forward.4} parent=0 // pred_fallthru
    _
  %v23 = vld [vmem:[%s1] sm:$0xff]
  %v24 = vld [vmem:[%s1 + $0x8] sm:$0xff]
  %v25 = vld [vmem:[%s1 + $0x10] sm:$0xff]
  %v26 = vld [vmem:[%s1 + $0x18] sm:$0xff]
  %v27 = vld [vmem:[%s1 + $0x20] sm:$0xff]
  %v28 = vld [vmem:[%s1 + $0x28] sm:$0xff]
  %v29 = vld [vmem:[%s0] sm:$0xff]
  %v30 = vld [vmem:[%s0 + $0x8] sm:$0xff]
  %v31 = vld [vmem:[%s0 + $0x10] sm:$0xff]
  %v32 = vld [vmem:[%s0 + $0x18] sm:$0xff]
  %v33 = vld [vmem:[%s0 + $0x20] sm:$0xff]
  %v34 = vld [vmem:[%s0 + $0x28] sm:$0xff]
  %v35 = vld [vmem:[%s0 + $0x30] sm:$0xff]
  %v36 = vld [vmem:[%s0 + $0x38] sm:$0xff]
  %v37 = vld [vmem:[%s0 + $0x40] sm:$0xff]
  %v38 = vld [vmem:[%s0 + $0x48] sm:$0xff]
  %v39 = vld [vmem:[%s0 + $0x50] sm:$0xff]
  %v40 = vld [vmem:[%s0 + $0x58] sm:$0xff]
  %v41 = vld [vmem:[%s0 + $0x60] sm:$0xff]
  %v42 = vld [vmem:[%s0 + $0x68] sm:$0xff]
  %v43 = vld [vmem:[%s0 + $0x70] sm:$0xff]
  %v44 = vld [vmem:[%s0 + $0x78] sm:$0xff]
  %v45 = vld [vmem:[%s0 + $0x80] sm:$0xff]
  %v46 = vld [vmem:[%s0 + $0x88] sm:$0xff]
  %v47 = vld [vmem:[%s0 + $0x90] sm:$0xff]
  %v48 = vld [vmem:[%s0 + $0x98] sm:$0xff]
  %v49 = vld [vmem:[%s0 + $0xa0] sm:$0xff]
  %v50 = vld [vmem:[%s0 + $0xa8] sm:$0xff]
  %v51 = vld [vmem:[%s0 + $0xb0] sm:$0xff]
  %v52 = vld [vmem:[%s0 + $0xb8] sm:$0xff]
  %v53 = vld [vmem:[%s0 + $0xc0] sm:$0xff]
  %v54 = vld [vmem:[%s0 + $0xc8] sm:$0xff]
  %v55 = vld [vmem:[%s0 + $0xd0] sm:$0xff]
  %v56 = vld [vmem:[%s0 + $0xd8] sm:$0xff]
  %v57 = vld [vmem:[%s0 + $0xe0] sm:$0xff]
  %v58 = vld [vmem:[%s0 + $0xe8] sm:$0xff]
  %v59 = vld [vmem:[%s0 + $0xf0] sm:$0xff]
  %v60 = vld [vmem:[%s0 + $0xf8] sm:$0xff]
  %v61 = vld [vmem:[%s0 + $0x100] sm:$0xff]
  %v62 = vld [vmem:[%s0 + $0x108] sm:$0xff]
  %v63 = vld [vmem:[%s0 + $0x110] sm:$0xff]
  %v64 = vld [vmem:[%s0 + $0x118] sm:$0xff]
  %v65 = vld [vmem:[%s0 + $0x120] sm:$0xff]
  %v66 = vld [vmem:[%s0 + $0x128] sm:$0xff]
  %v67 = vld [vmem:[%s0 + $0x130] sm:$0xff]
  %v68 = vld [vmem:[%s0 + $0x138] sm:$0xff]
  %v69 = vld [vmem:[%s0 + $0x140] sm:$0xff]
  %v70 = vld [vmem:[%s0 + $0x148] sm:$0xff]
  %v71 = vld [vmem:[%s0 + $0x150] sm:$0xff]
  %v72 = vld [vmem:[%s0 + $0x158] sm:$0xff]
  %v73 = vld [vmem:[%s0 + $0x160] sm:$0xff]
  %v74 = vld [vmem:[%s0 + $0x168] sm:$0xff]
  %v75 = vld [vmem:[%s0 + $0x170] sm:$0xff]
  %v76 = vld [vmem:[%s0 + $0x178] sm:$0xff]
  %v77 = vld [vmem:[%s0 + $0x180] sm:$0xff]
  %v78 = vld [vmem:[%s0 + $0x188] sm:$0xff]
  %v79 = vld [vmem:[%s0 + $0x190] sm:$0xff]
  %v80 = vld [vmem:[%s0 + $0x198] sm:$0xff]
  %v81 = vld [vmem:[%s0 + $0x1a0] sm:$0xff]
  %v82 = vld [vmem:[%s0 + $0x1a8] sm:$0xff]
  %v83 = vld [vmem:[%s0 + $0x1b0] sm:$0xff]
  %v84 = vld [vmem:[%s0 + $0x1b8] sm:$0xff]
  %v85 = vld [vmem:[%s0 + $0x1c0] sm:$0xff]
  %v86 = vld [vmem:[%s0 + $0x1c8] sm:$0xff]
  %v87 = vld [vmem:[%s0 + $0x1d0] sm:$0xff]
  %v88 = vld [vmem:[%s0 + $0x1d8] sm:$0xff]
  %v89 = vld [vmem:[%s0 + $0x1e0] sm:$0xff]
  %v90 = vld [vmem:[%s0 + $0x1e8] sm:$0xff]
  %v91 = vld [vmem:[%s0 + $0x1f0] sm:$0xff]
  %v92 = vld [vmem:[%s0 + $0x1f8] sm:$0xff]
  %v93 = vld [vmem:[%s0 + $0x200] sm:$0xff]
  %v94 = vld [vmem:[%s0 + $0x208] sm:$0xff]
  %v95 = vld [vmem:[%s0 + $0x210] sm:$0xff]
  %v96 = vld [vmem:[%s0 + $0x218] sm:$0xff]
  %v97 = vld [vmem:[%s0 + $0x220] sm:$0xff]
  %v98 = vld [vmem:[%s0 + $0x228] sm:$0xff]
  %v99 = vld [vmem:[%s0 + $0x230] sm:$0xff]
  %v100 = vld [vmem:[%s0 + $0x238] sm:$0xff]
  %v101 = vld [vmem:[%s0 + $0x240] sm:$0xff]
  %v102 = vld [vmem:[%s0 + $0x248] sm:$0xff]
  %v103 = vld [vmem:[%s0 + $0x250] sm:$0xff]
  %v104 = vld [vmem:[%s0 + $0x258] sm:$0xff]
  %v105 = vld [vmem:[%s0 + $0x260] sm:$0xff]
  %v106 = vld [vmem:[%s0 + $0x268] sm:$0xff]
  %v107 = vld [vmem:[%s0 + $0x270] sm:$0xff]
  %v108 = vld [vmem:[%s0 + $0x278] sm:$0xff]
  %v109 = vld [vmem:[%s0 + $0x280] sm:$0xff]
  %v110 = vld [vmem:[%s0 + $0x288] sm:$0xff]
  %v111 = vld [vmem:[%s0 + $0x290] sm:$0xff]
  %v112 = vld [vmem:[%s0 + $0x298] sm:$0xff]
  %v113 = vld [vmem:[%s0 + $0x2a0] sm:$0xff]
  %v114 = vld [vmem:[%s0 + $0x2a8] sm:$0xff]
  %v115 = vld [vmem:[%s0 + $0x2b0] sm:$0xff]
  %v116 = vld [vmem:[%s0 + $0x2b8] sm:$0xff]
  %v117 = vld [vmem:[%s0 + $0x2c0] sm:$0xff]
  %v118 = vld [vmem:[%s0 + $0x2c8] sm:$0xff]
  %v119 = vld [vmem:[%s0 + $0x2d0] sm:$0xff]
  %v120 = vld [vmem:[%s0 + $0x2d8] sm:$0xff]
  %v121 = vld [vmem:[%s0 + $0x2e0] sm:$0xff]
  %v122 = vld [vmem:[%s0 + $0x2e8] sm:$0xff]
  %v123 = vld [vmem:[%s0 + $0x2f0] sm:$0xff]
  %v124 = vld [vmem:[%s0 + $0x2f8] sm:$0xff]
  %v125 = vld [vmem:[%s0 + $0x300] sm:$0xff]
  %v126 = vld [vmem:[%s0 + $0x308] sm:$0xff]
  %v127 = vld [vmem:[%s0 + $0x310] sm:$0xff]
  %v128 = vld [vmem:[%s0 + $0x318] sm:$0xff]
  %v129 = vld [vmem:[%s0 + $0x320] sm:$0xff]
  %v130 = vld [vmem:[%s0 + $0x328] sm:$0xff]
  %v131 = vld [vmem:[%s0 + $0x330] sm:$0xff]
  %v132 = vld [vmem:[%s0 + $0x338] sm:$0xff]
  %v133 = vld [vmem:[%s0 + $0x340] sm:$0xff]
  %v134 = vld [vmem:[%s0 + $0x348] sm:$0xff]
  %v135 = vld [vmem:[%s0 + $0x350] sm:$0xff]
  %v136 = vld [vmem:[%s0 + $0x358] sm:$0xff]
  %v137 = vld [vmem:[%s0 + $0x360] sm:$0xff]
  %v138 = vld [vmem:[%s0 + $0x368] sm:$0xff]
  %v139 = vld [vmem:[%s0 + $0x370] sm:$0xff]
  %v140 = vld [vmem:[%s0 + $0x378] sm:$0xff]
  %v141 = vld [vmem:[%s0 + $0x380] sm:$0xff]
  %v142 = vld [vmem:[%s0 + $0x388] sm:$0xff]
  %v143 = vld [vmem:[%s0 + $0x390] sm:$0xff]
  %v144 = vld [vmem:[%s0 + $0x398] sm:$0xff]
  %v145 = vld [vmem:[%s0 + $0x3a0] sm:$0xff]
  %v146 = vld [vmem:[%s0 + $0x3a8] sm:$0xff]
  %v147 = vld [vmem:[%s0 + $0x3b0] sm:$0xff]
  %v148 = vld [vmem:[%s0 + $0x3b8] sm:$0xff]
  %v149 = vld [vmem:[%s0 + $0x3c0] sm:$0xff]
  %v150 = vld [vmem:[%s0 + $0x3c8] sm:$0xff]
  %v151 = vld [vmem:[%s0 + $0x3d0] sm:$0xff]
  %v152 = vld [vmem:[%s0 + $0x3d8] sm:$0xff]
  %v153 = vld [vmem:[%s0 + $0x3e0] sm:$0xff]
  %v154 = vld [vmem:[%s0 + $0x3e8] sm:$0xff]
  %v155 = vld [vmem:[%s0 + $0x3f0] sm:$0xff]
  %v156 = vld [vmem:[%s0 + $0x3f8] sm:$0xff]
  %v157 = vld [vmem:[%s0 + $0x400] sm:$0xff]
  %v158 = vld [vmem:[%s0 + $0x408] sm:$0xff]
  %v159 = vld [vmem:[%s0 + $0x410] sm:$0xff]
  %v160 = vld [vmem:[%s0 + $0x418] sm:$0xff]
  %v161 = vld [vmem:[%s0 + $0x420] sm:$0xff]
  %v162 = vld [vmem:[%s0 + $0x428] sm:$0xff]
  %v163 = vld [vmem:[%s0 + $0x430] sm:$0xff]
  %v164 = vld [vmem:[%s0 + $0x438] sm:$0xff]
  %v165 = vld [vmem:[%s0 + $0x440] sm:$0xff]
  %v166 = vld [vmem:[%s0 + $0x448] sm:$0xff]
  %v167 = vld [vmem:[%s0 + $0x450] sm:$0xff]
  %v168 = vld [vmem:[%s0 + $0x458] sm:$0xff]
  %v169 = vld [vmem:[%s0 + $0x460] sm:$0xff]
  %v170 = vld [vmem:[%s0 + $0x468] sm:$0xff]
  %v171 = vld [vmem:[%s0 + $0x470] sm:$0xff]
  %v172 = vld [vmem:[%s0 + $0x478] sm:$0xff]
  %v173 = vld [vmem:[%s0 + $0x480] sm:$0xff]
  %v174 = vld [vmem:[%s0 + $0x488] sm:$0xff]
  %v175 = vld [vmem:[%s0 + $0x490] sm:$0xff]
  %v176 = vld [vmem:[%s0 + $0x498] sm:$0xff]
  %v177 = vld [vmem:[%s0 + $0x4a0] sm:$0xff]
  %v178 = vld [vmem:[%s0 + $0x4a8] sm:$0xff]
  %v179 = vld [vmem:[%s0 + $0x4b0] sm:$0xff]
  %v180 = vld [vmem:[%s0 + $0x4b8] sm:$0xff]
  %v181 = vld [vmem:[%s0 + $0x4c0] sm:$0xff]
  %v182 = vld [vmem:[%s0 + $0x4c8] sm:$0xff]
  %v183 = vld [vmem:[%s0 + $0x4d0] sm:$0xff]
  %v184 = vld [vmem:[%s0 + $0x4d8] sm:$0xff]
  %v185 = vld [vmem:[%s0 + $0x4e0] sm:$0xff]
  %v186 = vld [vmem:[%s0 + $0x4e8] sm:$0xff]
  %v187 = vld [vmem:[%s0 + $0x4f0] sm:$0xff]
  %v188 = vld [vmem:[%s0 + $0x4f8] sm:$0xff]
  %v189 = vld [vmem:[%s0 + $0x500] sm:$0xf]
  %v190 = vld [vmem:[%s0 + $0x508] sm:$0xf]
  %v191 = vld [vmem:[%s0 + $0x510] sm:$0xf]
  %v192 = vld [vmem:[%s0 + $0x518] sm:$0xf]
  %v193 = vld [vmem:[%s2] sm:$0xff]
  %v194 = vld [vmem:[%s2 + $0x8] sm:$0xff]
  %196 = vset.pattern.permute.xlu0 0
  %197 = vperm.xlu0 %196, %v193
  %v198 = vpop.permute.xlu0 %197
  %201 = vset.pattern.permute.xlu0 0
  %202 = vperm.xlu0 %201, %v194
  %v203 = vpop.permute.xlu0 %202
  %vm205 = vcmask 556032
  %v207 = vsel %vm205, %v25, 0
  %v210 = vsel %vm205, %v28, 0
  %vm212 = vcmask 1043456
  %v214 = vsel %vm212, %v189, 0
  %v217 = vsel %vm212, %v190, 0
  %v220 = vsel %vm212, %v191, 0
  %v223 = vsel %vm212, %v192, 0
  %225 = vmatprep.subr.mxu0 %v30
  %226 = vmatpush1.msra.mxu0 %v29
  %227 = vmatprep.subr.mxu0 %v34
  %228 = vmatpush1.msra.mxu0 %v33
  %229 = vmatprep.subr.mxu0 %v38
  %230 = vmatpush1.msra.mxu0 %v37
  %231 = vmatprep.subr.mxu0 %v42
  %232 = vmatpush1.msra.mxu0 %v41
  %233 = vmatprep.subr.mxu0 %v46
  %234 = vmatpush1.msra.mxu0 %v45
  %235 = vmatprep.subr.mxu0 %v50
  %236 = vmatpush1.msra.mxu0 %v49
  %237 = vmatprep.subr.mxu0 %v54
  %238 = vmatpush1.msra.mxu0 %v53
  %239 = vmatprep.subr.mxu0 %v58
  %240 = vmatpush1.msra.mxu0 %v57
  %241 = vmatprep.subr.mxu0 %v62
  %242 = vmatpush1.msra.mxu0 %v61
  %243 = vmatprep.subr.mxu0 %v66
  %244 = vmatpush1.msra.mxu0 %v65
  %245 = vmatprep.subr.mxu0 %v70
  %246 = vmatpush1.msra.mxu0 %v69
  %247 = vmatprep.subr.mxu0 %v74
  %248 = vmatpush1.msra.mxu0 %v73
  %249 = vmatprep.subr.mxu0 %v78
  %250 = vmatpush1.msra.mxu0 %v77
  %251 = vmatprep.subr.mxu0 %v82
  %252 = vmatpush1.msra.mxu0 %v81
  %253 = vmatprep.subr.mxu0 %v86
  %254 = vmatpush1.msra.mxu0 %v85
  %255 = vmatprep.subr.mxu0 %v90
  %256 = vmatpush1.msra.mxu0 %v89
  %257 = vmatprep.subr.mxu0 %v94
  %258 = vmatpush1.msra.mxu0 %v93
  %259 = vmatprep.subr.mxu0 %v98
  %260 = vmatpush1.msra.mxu0 %v97
  %261 = vmatprep.subr.mxu0 %v102
  %262 = vmatpush1.msra.mxu0 %v101
  %263 = vmatprep.subr.mxu0 %v106
  %264 = vmatpush1.msra.mxu0 %v105
  %265 = vmatprep.subr.mxu0 %v110
  %266 = vmatpush1.msra.mxu0 %v109
  %267 = vmatprep.subr.mxu0 %v114
  %268 = vmatpush1.msra.mxu0 %v113
  %269 = vmatprep.subr.mxu0 %v118
  %270 = vmatpush1.msra.mxu0 %v117
  %271 = vmatprep.subr.mxu0 %v122
  %272 = vmatpush1.msra.mxu0 %v121
  %273 = vmatprep.subr.mxu0 %v126
  %274 = vmatpush1.msra.mxu0 %v125
  %275 = vmatprep.subr.mxu0 %v130
  %276 = vmatpush1.msra.mxu0 %v129
  %277 = vmatprep.subr.mxu0 %v134
  %278 = vmatpush1.msra.mxu0 %v133
  %279 = vmatprep.subr.mxu0 %v138
  %280 = vmatpush1.msra.mxu0 %v137
  %281 = vmatprep.subr.mxu0 %v142
  %282 = vmatpush1.msra.mxu0 %v141
  %283 = vmatprep.subr.mxu0 %v146
  %284 = vmatpush1.msra.mxu0 %v145
  %285 = vmatprep.subr.mxu0 %v150
  %286 = vmatpush1.msra.mxu0 %v149
  %287 = vmatprep.subr.mxu0 %v154
  %288 = vmatpush1.msra.mxu0 %v153
  %289 = vmatprep.mubr.f32.mxu0 %v24
  %290 = vmatmul.mubr.f32.gmra.mrb[0].mxu0 %v23
  %v291 = vpop.f32.mrb[0].mxu0
  %v292 = vadd.f32 %v198, %v291
  %v293 = vpop.f32.mrb[0].mxu0
  %v294 = vadd.f32 %v198, %v293
  %295 = vmatprep.mubr.f32.mxu0 %v27
  %296 = vmatmul.mubr.f32.gmra.mrb[0].mxu0 %v26
  %v297 = vpop.f32.mrb[0].mxu0
  %v298 = vadd.f32 %v203, %v297
  %v299 = vpop.f32.mrb[0].mxu0
  %v300 = vadd.f32 %v203, %v299
  %301 = vdwg.mxu0
  %302 = vmatprep.subr.mxu0 %v158
  %303 = vmatpush1.msra.mxu0 %v157
  %304 = vmatprep.subr.mxu0 %v162
  %305 = vmatpush1.msra.mxu0 %v161
  %306 = vmatprep.subr.mxu0 %v166
  %307 = vmatpush1.msra.mxu0 %v165
  %308 = vmatprep.subr.mxu0 %v170
  %309 = vmatpush1.msra.mxu0 %v169
  %310 = vmatprep.subr.mxu0 %v174
  %311 = vmatpush1.msra.mxu0 %v173
  %312 = vmatprep.subr.mxu0 %v178
  %313 = vmatpush1.msra.mxu0 %v177
  %314 = vmatprep.subr.mxu0 %v182
  %315 = vmatpush1.msra.mxu0 %v181
  %316 = vmatprep.subr.mxu0 %v186
  %317 = vmatpush1.msra.mxu0 %v185
  %318 = vmatprep.subr.mxu0 %v217
  %319 = vmatpush1.msra.mxu0 %v214
  %320 = vmatprep.subr.mxu0 0.0
  %321 = vmatpush1.msra.mxu0 0.0
  %322 = vmatprep.subr.mxu0 0.0
  %323 = vmatpush1.msra.mxu0 0.0
  %324 = vmatprep.subr.mxu0 0.0
  %325 = vmatpush1.msra.mxu0 0.0
  %326 = vmatprep.subr.mxu0 0.0
  %327 = vmatpush1.msra.mxu0 0.0
  %328 = vmatprep.subr.mxu0 0.0
  %329 = vmatpush1.msra.mxu0 0.0
  %330 = vmatprep.subr.mxu0 0.0
  %331 = vmatpush1.msra.mxu0 0.0
  %332 = vmatprep.subr.mxu0 0.0
  %333 = vmatpush1.msra.mxu0 0.0
  %334 = vmatprep.subr.mxu0 0.0
  %335 = vmatpush1.msra.mxu0 0.0
  %336 = vmatprep.subr.mxu0 0.0
  %337 = vmatpush1.msra.mxu0 0.0
  %338 = vmatprep.subr.mxu0 0.0
  %339 = vmatpush1.msra.mxu0 0.0
  %340 = vmatprep.subr.mxu0 0.0
  %341 = vmatpush1.msra.mxu0 0.0
  %342 = vmatprep.subr.mxu0 0.0
  %343 = vmatpush1.msra.mxu0 0.0
  %344 = vmatprep.subr.mxu0 0.0
  %345 = vmatpush1.msra.mxu0 0.0
  %346 = vmatprep.subr.mxu0 0.0
  %347 = vmatpush1.msra.mxu0 0.0
  %348 = vmatprep.subr.mxu0 0.0
  %349 = vmatpush1.msra.mxu0 0.0
  %350 = vmatprep.subr.mxu0 0.0
  %351 = vmatpush1.msra.mxu0 0.0
  %352 = vmatprep.subr.mxu0 0.0
  %353 = vmatpush1.msra.mxu0 0.0
  %354 = vmatprep.subr.mxu0 0.0
  %355 = vmatpush1.msra.mxu0 0.0
  %356 = vmatprep.subr.mxu0 0.0
  %357 = vmatpush1.msra.mxu0 0.0
  %358 = vmatprep.subr.mxu0 0.0
  %359 = vmatpush1.msra.mxu0 0.0
  %360 = vmatprep.subr.mxu0 0.0
  %361 = vmatpush1.msra.mxu0 0.0
  %362 = vmatprep.subr.mxu0 0.0
  %363 = vmatpush1.msra.mxu0 0.0
  %364 = vmatprep.subr.mxu0 0.0
  %365 = vmatpush1.msra.mxu0 0.0
  %366 = vmatprep.mubr.f32.mxu0 0.0
  %367 = vmatmul.mubr.f32.gmra.mrb[0].mxu0 %v207
  %v368 = vpop.f32.mrb[0].mxu0
  %v369 = vadd.f32 %v292, %v368
  %v370 = vpop.f32.mrb[0].mxu0
  %v371 = vadd.f32 %v294, %v370
  %372 = vmatprep.mubr.f32.mxu0 0.0
  %373 = vmatmul.mubr.f32.gmra.mrb[0].mxu0 %v210
  %v374 = vpop.f32.mrb[0].mxu0
  %v375 = vadd.f32 %v298, %v374
  %v376 = vpop.f32.mrb[0].mxu0
  %v377 = vadd.f32 %v300, %v376
  %378 = vdwg.mxu0
  %379 = vmatprep.subr.mxu0 %v32
  %380 = vmatpush1.msra.mxu0 %v31
  %381 = vmatprep.subr.mxu0 %v36
  %382 = vmatpush1.msra.mxu0 %v35
  %383 = vmatprep.subr.mxu0 %v40
  %384 = vmatpush1.msra.mxu0 %v39
  %385 = vmatprep.subr.mxu0 %v44
  %386 = vmatpush1.msra.mxu0 %v43
  %387 = vmatprep.subr.mxu0 %v48
  %388 = vmatpush1.msra.mxu0 %v47
  %389 = vmatprep.subr.mxu0 %v52
  %390 = vmatpush1.msra.mxu0 %v51
  %391 = vmatprep.subr.mxu0 %v56
  %392 = vmatpush1.msra.mxu0 %v55
  %393 = vmatprep.subr.mxu0 %v60
  %394 = vmatpush1.msra.mxu0 %v59
  %395 = vmatprep.subr.mxu0 %v64
  %396 = vmatpush1.msra.mxu0 %v63
  %397 = vmatprep.subr.mxu0 %v68
  %398 = vmatpush1.msra.mxu0 %v67
  %399 = vmatprep.subr.mxu0 %v72
  %400 = vmatpush1.msra.mxu0 %v71
  %401 = vmatprep.subr.mxu0 %v76
  %402 = vmatpush1.msra.mxu0 %v75
  %403 = vmatprep.subr.mxu0 %v80
  %404 = vmatpush1.msra.mxu0 %v79
  %405 = vmatprep.subr.mxu0 %v84
  %406 = vmatpush1.msra.mxu0 %v83
  %407 = vmatprep.subr.mxu0 %v88
  %408 = vmatpush1.msra.mxu0 %v87
  %409 = vmatprep.subr.mxu0 %v92
  %410 = vmatpush1.msra.mxu0 %v91
  %411 = vmatprep.subr.mxu0 %v96
  %412 = vmatpush1.msra.mxu0 %v95
  %413 = vmatprep.subr.mxu0 %v100
  %414 = vmatpush1.msra.mxu0 %v99
  %415 = vmatprep.subr.mxu0 %v104
  %416 = vmatpush1.msra.mxu0 %v103
  %417 = vmatprep.subr.mxu0 %v108
  %418 = vmatpush1.msra.mxu0 %v107
  %419 = vmatprep.subr.mxu0 %v112
  %420 = vmatpush1.msra.mxu0 %v111
  %421 = vmatprep.subr.mxu0 %v116
  %422 = vmatpush1.msra.mxu0 %v115
  %423 = vmatprep.subr.mxu0 %v120
  %424 = vmatpush1.msra.mxu0 %v119
  %425 = vmatprep.subr.mxu0 %v124
  %426 = vmatpush1.msra.mxu0 %v123
  %427 = vmatprep.subr.mxu0 %v128
  %428 = vmatpush1.msra.mxu0 %v127
  %429 = vmatprep.subr.mxu0 %v132
  %430 = vmatpush1.msra.mxu0 %v131
  %431 = vmatprep.subr.mxu0 %v136
  %432 = vmatpush1.msra.mxu0 %v135
  %433 = vmatprep.subr.mxu0 %v140
  %434 = vmatpush1.msra.mxu0 %v139
  %435 = vmatprep.subr.mxu0 %v144
  %436 = vmatpush1.msra.mxu0 %v143
  %437 = vmatprep.subr.mxu0 %v148
  %438 = vmatpush1.msra.mxu0 %v147
  %439 = vmatprep.subr.mxu0 %v152
  %440 = vmatpush1.msra.mxu0 %v151
  %441 = vmatprep.subr.mxu0 %v156
  %442 = vmatpush1.msra.mxu0 %v155
  %443 = vmatprep.mubr.f32.mxu0 %v24
  %444 = vmatmul.mubr.f32.gmra.mrb[0].mxu0 %v23
  %v445 = vpop.f32.mrb[0].mxu0
  %v446 = vadd.f32 %v198, %v445
  %v447 = vpop.f32.mrb[0].mxu0
  %v448 = vadd.f32 %v198, %v447
  %449 = vmatprep.mubr.f32.mxu0 %v27
  %450 = vmatmul.mubr.f32.gmra.mrb[0].mxu0 %v26
  %v451 = vpop.f32.mrb[0].mxu0
  %v452 = vadd.f32 %v203, %v451
  %v453 = vpop.f32.mrb[0].mxu0
  %v454 = vadd.f32 %v203, %v453
  %455 = vdwg.mxu0
  %456 = vmatprep.subr.mxu0 %v160
  %457 = vmatpush1.msra.mxu0 %v159
  %458 = vmatprep.subr.mxu0 %v164
  %459 = vmatpush1.msra.mxu0 %v163
  %460 = vmatprep.subr.mxu0 %v168
  %461 = vmatpush1.msra.mxu0 %v167
  %462 = vmatprep.subr.mxu0 %v172
  %463 = vmatpush1.msra.mxu0 %v171
  %464 = vmatprep.subr.mxu0 %v176
  %465 = vmatpush1.msra.mxu0 %v175
  %466 = vmatprep.subr.mxu0 %v180
  %467 = vmatpush1.msra.mxu0 %v179
  %468 = vmatprep.subr.mxu0 %v184
  %469 = vmatpush1.msra.mxu0 %v183
  %470 = vmatprep.subr.mxu0 %v188
  %471 = vmatpush1.msra.mxu0 %v187
  %472 = vmatprep.subr.mxu0 %v223
  %473 = vmatpush1.msra.mxu0 %v220
  %474 = vmatprep.subr.mxu0 0.0
  %475 = vmatpush1.msra.mxu0 0.0
  %476 = vmatprep.subr.mxu0 0.0
  %477 = vmatpush1.msra.mxu0 0.0
  %478 = vmatprep.subr.mxu0 0.0
  %479 = vmatpush1.msra.mxu0 0.0
  %480 = vmatprep.subr.mxu0 0.0
  %481 = vmatpush1.msra.mxu0 0.0
  %482 = vmatprep.subr.mxu0 0.0
  %483 = vmatpush1.msra.mxu0 0.0
  %484 = vmatprep.subr.mxu0 0.0
  %485 = vmatpush1.msra.mxu0 0.0
  %486 = vmatprep.subr.mxu0 0.0
  %487 = vmatpush1.msra.mxu0 0.0
  %488 = vmatprep.subr.mxu0 0.0
  %489 = vmatpush1.msra.mxu0 0.0
  %490 = vmatprep.subr.mxu0 0.0
  %491 = vmatpush1.msra.mxu0 0.0
  %492 = vmatprep.subr.mxu0 0.0
  %493 = vmatpush1.msra.mxu0 0.0
  %494 = vmatprep.subr.mxu0 0.0
  %495 = vmatpush1.msra.mxu0 0.0
  %496 = vmatprep.subr.mxu0 0.0
  %497 = vmatpush1.msra.mxu0 0.0
  %498 = vmatprep.subr.mxu0 0.0
  %499 = vmatpush1.msra.mxu0 0.0
  %500 = vmatprep.subr.mxu0 0.0
  %501 = vmatpush1.msra.mxu0 0.0
  %502 = vmatprep.subr.mxu0 0.0
  %503 = vmatpush1.msra.mxu0 0.0
  %504 = vmatprep.subr.mxu0 0.0
  %505 = vmatpush1.msra.mxu0 0.0
  %506 = vmatprep.subr.mxu0 0.0
  %507 = vmatpush1.msra.mxu0 0.0
  %508 = vmatprep.subr.mxu0 0.0
  %509 = vmatpush1.msra.mxu0 0.0
  %510 = vmatprep.subr.mxu0 0.0
  %511 = vmatpush1.msra.mxu0 0.0
  %512 = vmatprep.subr.mxu0 0.0
  %513 = vmatpush1.msra.mxu0 0.0
  %514 = vmatprep.subr.mxu0 0.0
  %515 = vmatpush1.msra.mxu0 0.0
  %516 = vmatprep.subr.mxu0 0.0
  %517 = vmatpush1.msra.mxu0 0.0
  %518 = vmatprep.subr.mxu0 0.0
  %519 = vmatpush1.msra.mxu0 0.0
  %520 = vmatprep.mubr.f32.mxu0 0.0
  %521 = vmatmul.mubr.f32.gmra.mrb[0].mxu0 %v207
  %v522 = vpop.f32.mrb[0].mxu0
  %v523 = vadd.f32 %v446, %v522
  %v524 = vpop.f32.mrb[0].mxu0
  %v525 = vadd.f32 %v448, %v524
  %526 = vmatprep.mubr.f32.mxu0 0.0
  %527 = vmatmul.mubr.f32.gmra.mrb[0].mxu0 %v210
  %v528 = vpop.f32.mrb[0].mxu0
  %v529 = vadd.f32 %v452, %v528
  %v530 = vpop.f32.mrb[0].mxu0
  %v531 = vadd.f32 %v454, %v530
  %532 = vdwg.mxu0
  %v533 = vld [vmem:[%s4] sm:$0xff]
  %v534 = vld [vmem:[%s4 + $0x8] sm:$0xff]
  %v535 = vld [vmem:[%s4 + $0x10] sm:$0xff]
  %v536 = vld [vmem:[%s5] sm:$0xff]
  %v537 = vld [vmem:[%s5 + $0x8] sm:$0xff]
  %v538 = vld [vmem:[%s5 + $0x10] sm:$0xff]
  %v539 = vadd.f32 %v369, %v371
  %v540 = vadd.f32 %v539, %v523
  %v541 = vadd.f32 %v540, %v525
  %542 = vadd.xlane.f32.xlu0 %v541
  %v543 = vpop.xlane.xlu0 %542
  %v544 = vadd.f32 %v375, %v377
  %v545 = vadd.f32 %v544, %v529
  %v546 = vadd.f32 %v545, %v531
  %547 = vadd.xlane.f32.xlu0 %v546
  %v548 = vpop.xlane.xlu0 %547
  %v549 = vmul.f32 %v369, %v369
  %v550 = vmul.f32 %v371, %v371
  %v551 = vmul.f32 %v523, %v523
  %v552 = vmul.f32 %v525, %v525
  %v553 = vmul.f32 %v375, %v375
  %v554 = vmul.f32 %v377, %v377
  %v555 = vmul.f32 %v529, %v529
  %v556 = vmul.f32 %v531, %v531
  %v557 = vadd.f32 %v549, %v550
  %v558 = vadd.f32 %v557, %v551
  %v559 = vadd.f32 %v558, %v552
  %560 = vadd.xlane.f32.xlu0 %v559
  %v561 = vpop.xlane.xlu0 %560
  %v562 = vadd.f32 %v553, %v554
  %v563 = vadd.f32 %v562, %v555
  %v564 = vadd.f32 %v563, %v556
  %565 = vadd.xlane.f32.xlu0 %v564
  %v566 = vpop.xlane.xlu0 %565
  %v567 = vmul.f32 %v543, 0.001953125
  %v568 = vmul.f32 %v548, 0.001953125
  %v569 = vmul.f32 %v561, 0.001953125
  %v570 = vmul.f32 %v566, 0.001953125
  %v571 = vmul.f32 %v567, %v567
  %v572 = vmul.f32 %v568, %v568
  %v573 = vsub.f32 %v569, %v571
  %v574 = vsub.f32 %v570, %v572
  %v575 = vadd.f32 %v573, 1e-05
  %v576 = vadd.f32 %v574, 1e-05
  %v577 = vrsqrt.pop %v575
  %v578 = vrsqrt.pop %v576
  %v579 = vsub.f32 %v369, %v567
  %v580 = vsub.f32 %v371, %v567
  %v581 = vsub.f32 %v523, %v567
  %v582 = vsub.f32 %v525, %v567
  %v583 = vsub.f32 %v375, %v568
  %v584 = vsub.f32 %v377, %v568
  %v585 = vsub.f32 %v529, %v568
  %v586 = vsub.f32 %v531, %v568
  %v587 = vmul.f32 %v577, %v533
  %v588 = vmul.f32 %v578, %v534
  %590 = vset.pattern.permute.xlu0 0
  %591 = vperm.xlu0 %590, %v587
  %v592 = vpop.permute.xlu0 %591
  %595 = vset.pattern.permute.xlu0 0
  %596 = vperm.xlu0 %595, %v588
  %v597 = vpop.permute.xlu0 %596
  %v599 = vmul.f32 %v579, %v592
  %v600 = vmul.f32 %v580, %v592
  %v601 = vmul.f32 %v581, %v592
  %v602 = vmul.f32 %v582, %v592
  %v603 = vmul.f32 %v583, %v597
  %v604 = vmul.f32 %v584, %v597
  %v605 = vmul.f32 %v585, %v597
  %v606 = vmul.f32 %v586, %v597
  %608 = vset.pattern.permute.xlu0 0
  %609 = vperm.xlu0 %608, %v536
  %v610 = vpop.permute.xlu0 %609
  %613 = vset.pattern.permute.xlu0 0
  %614 = vperm.xlu0 %613, %v537
  %v615 = vpop.permute.xlu0 %614
  %v617 = vadd.f32 %v599, %v610
  %v618 = vadd.f32 %v600, %v610
  %v619 = vadd.f32 %v601, %v610
  %v620 = vadd.f32 %v602, %v610
  %v621 = vadd.f32 %v603, %v615
  %v622 = vadd.f32 %v604, %v615
  %v623 = vadd.f32 %v605, %v615
  %v624 = vadd.f32 %v606, %v615
  %v625 = vmax.f32 %v617, 0.0
  %v626 = vmax.f32 %v618, 0.0
  %v627 = vmax.f32 %v619, 0.0
  %v628 = vmax.f32 %v620, 0.0
  %v629 = vmax.f32 %v621, 0.0
  %v630 = vmax.f32 %v622, 0.0
  %v631 = vmax.f32 %v623, 0.0
  %v632 = vmax.f32 %v624, 0.0
  %633 = vst [vmem:[%s6] sm:$0xff] %v625
  %634 = vst [vmem:[%s6 + $0x8] sm:$0xff] %v626
  %635 = vst [vmem:[%s6 + $0x10] sm:$0xff] %v627
  %636 = vst [vmem:[%s6 + $0x18] sm:$0xff] %v628
  %637 = vst [vmem:[%s6 + $0x20] sm:$0xff] %v629
  %638 = vst [vmem:[%s6 + $0x28] sm:$0xff] %v630
  %639 = vst [vmem:[%s6 + $0x30] sm:$0xff] %v631
  %640 = vst [vmem:[%s6 + $0x38] sm:$0xff] %v632
  %v641 = vld [vmem:[%s3] sm:$0xff]
  %v642 = vld [vmem:[%s3 + $0x8] sm:$0xff]
  %v643 = vld [vmem:[%s3 + $0x10] sm:$0xff]
  %v644 = vld [vmem:[%s3 + $0x18] sm:$0xff]
  %v645 = vadd.f32 %v641, %v642
  %v646 = vadd.f32 %v645, %v643
  %v647 = vadd.f32 %v646, %v644
  %648 = vadd.xlane.f32.xlu0 %v647
  %v649 = vpop.xlane.xlu0 %648
  %v650 = vmul.f32 %v641, %v641
  %v651 = vmul.f32 %v642, %v642
  %v652 = vmul.f32 %v643, %v643
  %v653 = vmul.f32 %v644, %v644
  %v654 = vadd.f32 %v650, %v651
  %v655 = vadd.f32 %v654, %v652
  %v656 = vadd.f32 %v655, %v653
  %657 = vadd.xlane.f32.xlu0 %v656
  %v658 = vpop.xlane.xlu0 %657
  %v659 = vmul.f32 %v649, 0.001953125
  %v660 = vmul.f32 %v658, 0.001953125
  %v661 = vmul.f32 %v659, %v659
  %v662 = vsub.f32 %v660, %v661
  %v663 = vadd.f32 %v662, 1e-05
  %v664 = vrsqrt.pop %v663
  %v665 = vsub.f32 %v641, %v659
  %v666 = vsub.f32 %v642, %v659
  %v667 = vsub.f32 %v643, %v659
  %v668 = vsub.f32 %v644, %v659
  %v669 = vmul.f32 %v664, %v535
  %671 = vset.pattern.permute.xlu0 0
  %672 = vperm.xlu0 %671, %v669
  %v673 = vpop.permute.xlu0 %672
  %v675 = vmul.f32 %v665, %v673
  %v676 = vmul.f32 %v666, %v673
  %v677 = vmul.f32 %v667, %v673
  %v678 = vmul.f32 %v668, %v673
  %680 = vset.pattern.permute.xlu0 0
  %681 = vperm.xlu0 %680, %v538
  %v682 = vpop.permute.xlu0 %681
  %v684 = vadd.f32 %v675, %v682
  %v685 = vadd.f32 %v676, %v682
  %v686 = vadd.f32 %v677, %v682
  %v687 = vadd.f32 %v678, %v682
  %v688 = vmax.f32 %v684, 0.0
  %v689 = vmax.f32 %v685, 0.0
  %v690 = vmax.f32 %v686, 0.0
  %v691 = vmax.f32 %v687, 0.0
  %692 = vst [vmem:[%s6 + $0x40] sm:$0xff] %v688
  %693 = vst [vmem:[%s6 + $0x48] sm:$0xff] %v689
  %694 = vst [vmem:[%s6 + $0x50] sm:$0xff] %v690
  %695 = vst [vmem:[%s6 + $0x58] sm:$0xff] %v691
  // Predicated region
  $region26: #{decoder3d_forward.4} parent=0 // pred_check
    _
  $region27: #{decoder3d_forward.4} parent=0 // pred_check_branch
    %697 = sbr.rel (0) target = $region29
  $region28: #{decoder3d_forward.4} parent=0 // pred_region
    _
  $region29: #{decoder3d_forward.4} parent=0 // pred_fallthru
    _
  // Predicated region
  $region30: #{decoder3d_forward.4} parent=0 // pred_check
    _
  $region31: #{decoder3d_forward.4} parent=0 // pred_check_branch
    %699 = sbr.rel (0) target = $region33
  $region32: #{decoder3d_forward.4} parent=0 // pred_region
    _
  $region33: #{decoder3d_forward.4} parent=0 // pred_fallthru
    _

// kernel: decoder3d_forward.5
$region0: #{decoder3d_forward.5}
  #allocation0 [shape = 'u32[]', space=smem, size = 0x4, offset = 0x4, fixed_abs, tag = 'smem constant byte address 0x4 - core index']
  #allocation1 [shape = 'u32[144,128]{1,0:T(1,128)}', space=vmem, size = 0x12000, scoped, tag = 'internal scratch']
  #allocation2 [shape = 'f32[1,1]{1,0:T(1,128)S(1)}', space=vmem, size = 0x200, scoped, tag = 'scoped memory for decoder3d_forward.5']
  %s0 = inlined_call_operand.vmem [shape: f32[648,1000], index: 0, kind: input, shape index: {}]
  %s1 = inlined_call_operand.vmem [shape: f32[1,648], index: 1, kind: input, shape index: {}]
  %s2 = inlined_call_operand.<no memory space> [shape: f32[1,1], index: 2, kind: input, shape index: {}]
  %s3 = inlined_call_operand.vmem [shape: f32[2,1000], index: 3, kind: input, shape index: {}]
  %s4 = inlined_call_operand.vmem [shape: f32[3,1000], index: 4, kind: output, shape index: {}]
  %s5 = sld [smem:[#allocation0]]
  $region26: #{decoder3d_forward.5} parent=0
    _
  %s7 = ssub.s32 1, %s5
  %s8 = scalar_select 0, %s7, %s5
  %v9 = vstv %s2
  %10 = vst [vmem:[#allocation2] sm:$0x1] %v9
  // Predicated region
  $region2: #{decoder3d_forward.5} parent=0 // pred_check
    _
  $region3: #{decoder3d_forward.5} parent=0 // pred_check_branch
    %12 = sbr.rel (0) target = $region5
  $region4: #{decoder3d_forward.5} parent=0 // pred_region
    _
  $region5: #{decoder3d_forward.5} parent=0 // pred_fallthru
    _
  // Predicated region
  $region6: #{decoder3d_forward.5} parent=0 // pred_check
    _
  $region7: #{decoder3d_forward.5} parent=0 // pred_check_branch
    %14 = sbr.rel (0) target = $region9
  $region8: #{decoder3d_forward.5} parent=0 // pred_region
    _
  $region9: #{decoder3d_forward.5} parent=0 // pred_fallthru
    _
  // Predicated region
  $region10: #{decoder3d_forward.5} parent=0 // pred_check
    _
  $region11: #{decoder3d_forward.5} parent=0 // pred_check_branch
    %16 = sbr.rel (0) target = $region13
  $region12: #{decoder3d_forward.5} parent=0 // pred_region
    _
  $region13: #{decoder3d_forward.5} parent=0 // pred_fallthru
    _
  // Predicated region
  $region14: #{decoder3d_forward.5} parent=0 // pred_check
    _
  $region15: #{decoder3d_forward.5} parent=0 // pred_check_branch
    %18 = sbr.rel (0) target = $region17
  $region16: #{decoder3d_forward.5} parent=0 // pred_region
    _
  $region17: #{decoder3d_forward.5} parent=0 // pred_fallthru
    _
  %v19 = vld [vmem:[%s1] sm:$0x3f]
  %v20 = vld [vmem:[%s0] sm:$0xff]
  %v21 = vld [vmem:[%s0 + $0x8] sm:$0xff]
  %v22 = vld [vmem:[%s0 + $0x10] sm:$0xff]
  %v23 = vld [vmem:[%s0 + $0x18] sm:$0xff]
  %v24 = vld [vmem:[%s0 + $0x20] sm:$0xff]
  %v25 = vld [vmem:[%s0 + $0x28] sm:$0xff]
  %v26 = vld [vmem:[%s0 + $0x30] sm:$0xff]
  %v27 = vld [vmem:[%s0 + $0x38] sm:$0xff]
  %v28 = vld [vmem:[%s0 + $0x40] sm:$0xff]
  %v29 = vld [vmem:[%s0 + $0x48] sm:$0xff]
  %v30 = vld [vmem:[%s0 + $0x50] sm:$0xff]
  %v31 = vld [vmem:[%s0 + $0x58] sm:$0xff]
  %v32 = vld [vmem:[%s0 + $0x60] sm:$0xff]
  %v33 = vld [vmem:[%s0 + $0x68] sm:$0xff]
  %v34 = vld [vmem:[%s0 + $0x70] sm:$0xff]
  %v35 = vld [vmem:[%s0 + $0x78] sm:$0xff]
  %v36 = vld [vmem:[%s0 + $0x80] sm:$0xff]
  %v37 = vld [vmem:[%s0 + $0x88] sm:$0xff]
  %v38 = vld [vmem:[%s0 + $0x90] sm:$0xff]
  %v39 = vld [vmem:[%s0 + $0x98] sm:$0xff]
  %v40 = vld [vmem:[%s0 + $0xa0] sm:$0xff]
  %v41 = vld [vmem:[%s0 + $0xa8] sm:$0xff]
  %v42 = vld [vmem:[%s0 + $0xb0] sm:$0xff]
  %v43 = vld [vmem:[%s0 + $0xb8] sm:$0xff]
  %v44 = vld [vmem:[%s0 + $0xc0] sm:$0xff]
  %v45 = vld [vmem:[%s0 + $0xc8] sm:$0xff]
  %v46 = vld [vmem:[%s0 + $0xd0] sm:$0xff]
  %v47 = vld [vmem:[%s0 + $0xd8] sm:$0xff]
  %v48 = vld [vmem:[%s0 + $0xe0] sm:$0xff]
  %v49 = vld [vmem:[%s0 + $0xe8] sm:$0xff]
  %v50 = vld [vmem:[%s0 + $0xf0] sm:$0xff]
  %v51 = vld [vmem:[%s0 + $0xf8] sm:$0xff]
  %v52 = vld [vmem:[%s0 + $0x100] sm:$0xff]
  %v53 = vld [vmem:[%s0 + $0x108] sm:$0xff]
  %v54 = vld [vmem:[%s0 + $0x110] sm:$0xff]
  %v55 = vld [vmem:[%s0 + $0x118] sm:$0xff]
  %v56 = vld [vmem:[%s0 + $0x120] sm:$0xff]
  %v57 = vld [vmem:[%s0 + $0x128] sm:$0xff]
  %v58 = vld [vmem:[%s0 + $0x130] sm:$0xff]
  %v59 = vld [vmem:[%s0 + $0x138] sm:$0xff]
  %v60 = vld [vmem:[%s0 + $0x140] sm:$0xff]
  %v61 = vld [vmem:[%s0 + $0x148] sm:$0xff]
  %v62 = vld [vmem:[%s0 + $0x150] sm:$0xff]
  %v63 = vld [vmem:[%s0 + $0x158] sm:$0xff]
  %v64 = vld [vmem:[%s0 + $0x160] sm:$0xff]
  %v65 = vld [vmem:[%s0 + $0x168] sm:$0xff]
  %v66 = vld [vmem:[%s0 + $0x170] sm:$0xff]
  %v67 = vld [vmem:[%s0 + $0x178] sm:$0xff]
  %v68 = vld [vmem:[%s0 + $0x180] sm:$0xff]
  %v69 = vld [vmem:[%s0 + $0x188] sm:$0xff]
  %v70 = vld [vmem:[%s0 + $0x190] sm:$0xff]
  %v71 = vld [vmem:[%s0 + $0x198] sm:$0xff]
  %v72 = vld [vmem:[%s0 + $0x1a0] sm:$0xff]
  %v73 = vld [vmem:[%s0 + $0x1a8] sm:$0xff]
  %v74 = vld [vmem:[%s0 + $0x1b0] sm:$0xff]
  %v75 = vld [vmem:[%s0 + $0x1b8] sm:$0xff]
  %v76 = vld [vmem:[%s0 + $0x1c0] sm:$0xff]
  %v77 = vld [vmem:[%s0 + $0x1c8] sm:$0xff]
  %v78 = vld [vmem:[%s0 + $0x1d0] sm:$0xff]
  %v79 = vld [vmem:[%s0 + $0x1d8] sm:$0xff]
  %v80 = vld [vmem:[%s0 + $0x1e0] sm:$0xff]
  %v81 = vld [vmem:[%s0 + $0x1e8] sm:$0xff]
  %v82 = vld [vmem:[%s0 + $0x1f0] sm:$0xff]
  %v83 = vld [vmem:[%s0 + $0x1f8] sm:$0xff]
  %v84 = vld [vmem:[%s0 + $0x200] sm:$0xff]
  %v85 = vld [vmem:[%s0 + $0x208] sm:$0xff]
  %v86 = vld [vmem:[%s0 + $0x210] sm:$0xff]
  %v87 = vld [vmem:[%s0 + $0x218] sm:$0xff]
  %v88 = vld [vmem:[%s0 + $0x220] sm:$0xff]
  %v89 = vld [vmem:[%s0 + $0x228] sm:$0xff]
  %v90 = vld [vmem:[%s0 + $0x230] sm:$0xff]
  %v91 = vld [vmem:[%s0 + $0x238] sm:$0xff]
  %v92 = vld [vmem:[%s0 + $0x240] sm:$0xff]
  %v93 = vld [vmem:[%s0 + $0x248] sm:$0xff]
  %v94 = vld [vmem:[%s0 + $0x250] sm:$0xff]
  %v95 = vld [vmem:[%s0 + $0x258] sm:$0xff]
  %v96 = vld [vmem:[%s0 + $0x260] sm:$0xff]
  %v97 = vld [vmem:[%s0 + $0x268] sm:$0xff]
  %v98 = vld [vmem:[%s0 + $0x270] sm:$0xff]
  %v99 = vld [vmem:[%s0 + $0x278] sm:$0xff]
  %v100 = vld [vmem:[%s0 + $0x280] sm:$0xff]
  %v101 = vld [vmem:[%s0 + $0x288] sm:$0xff]
  %v102 = vld [vmem:[%s0 + $0x290] sm:$0xff]
  %v103 = vld [vmem:[%s0 + $0x298] sm:$0xff]
  %v104 = vld [vmem:[%s0 + $0x2a0] sm:$0xff]
  %v105 = vld [vmem:[%s0 + $0x2a8] sm:$0xff]
  %v106 = vld [vmem:[%s0 + $0x2b0] sm:$0xff]
  %v107 = vld [vmem:[%s0 + $0x2b8] sm:$0xff]
  %v108 = vld [vmem:[%s0 + $0x2c0] sm:$0xff]
  %v109 = vld [vmem:[%s0 + $0x2c8] sm:$0xff]
  %v110 = vld [vmem:[%s0 + $0x2d0] sm:$0xff]
  %v111 = vld [vmem:[%s0 + $0x2d8] sm:$0xff]
  %v112 = vld [vmem:[%s0 + $0x2e0] sm:$0xff]
  %v113 = vld [vmem:[%s0 + $0x2e8] sm:$0xff]
  %v114 = vld [vmem:[%s0 + $0x2f0] sm:$0xff]
  %v115 = vld [vmem:[%s0 + $0x2f8] sm:$0xff]
  %v116 = vld [vmem:[%s0 + $0x300] sm:$0xff]
  %v117 = vld [vmem:[%s0 + $0x308] sm:$0xff]
  %v118 = vld [vmem:[%s0 + $0x310] sm:$0xff]
  %v119 = vld [vmem:[%s0 + $0x318] sm:$0xff]
  %v120 = vld [vmem:[%s0 + $0x320] sm:$0xff]
  %v121 = vld [vmem:[%s0 + $0x328] sm:$0xff]
  %v122 = vld [vmem:[%s0 + $0x330] sm:$0xff]
  %v123 = vld [vmem:[%s0 + $0x338] sm:$0xff]
  %v124 = vld [vmem:[%s0 + $0x340] sm:$0xff]
  %v125 = vld [vmem:[%s0 + $0x348] sm:$0xff]
  %v126 = vld [vmem:[%s0 + $0x350] sm:$0xff]
  %v127 = vld [vmem:[%s0 + $0x358] sm:$0xff]
  %v128 = vld [vmem:[%s0 + $0x360] sm:$0xff]
  %v129 = vld [vmem:[%s0 + $0x368] sm:$0xff]
  %v130 = vld [vmem:[%s0 + $0x370] sm:$0xff]
  %v131 = vld [vmem:[%s0 + $0x378] sm:$0xff]
  %v132 = vld [vmem:[%s0 + $0x380] sm:$0xff]
  %v133 = vld [vmem:[%s0 + $0x388] sm:$0xff]
  %v134 = vld [vmem:[%s0 + $0x390] sm:$0xff]
  %v135 = vld [vmem:[%s0 + $0x398] sm:$0xff]
  %v136 = vld [vmem:[%s0 + $0x3a0] sm:$0xff]
  %v137 = vld [vmem:[%s0 + $0x3a8] sm:$0xff]
  %v138 = vld [vmem:[%s0 + $0x3b0] sm:$0xff]
  %v139 = vld [vmem:[%s0 + $0x3b8] sm:$0xff]
  %v140 = vld [vmem:[%s0 + $0x3c0] sm:$0xff]
  %v141 = vld [vmem:[%s0 + $0x3c8] sm:$0xff]
  %v142 = vld [vmem:[%s0 + $0x3d0] sm:$0xff]
  %v143 = vld [vmem:[%s0 + $0x3d8] sm:$0xff]
  %v144 = vld [vmem:[%s0 + $0x3e0] sm:$0xff]
  %v145 = vld [vmem:[%s0 + $0x3e8] sm:$0xff]
  %v146 = vld [vmem:[%s0 + $0x3f0] sm:$0xff]
  %v147 = vld [vmem:[%s0 + $0x3f8] sm:$0xff]
  %v148 = vld [vmem:[%s0 + $0x400] sm:$0xff]
  %v149 = vld [vmem:[%s0 + $0x408] sm:$0xff]
  %v150 = vld [vmem:[%s0 + $0x410] sm:$0xff]
  %v151 = vld [vmem:[%s0 + $0x418] sm:$0xff]
  %v152 = vld [vmem:[%s0 + $0x420] sm:$0xff]
  %v153 = vld [vmem:[%s0 + $0x428] sm:$0xff]
  %v154 = vld [vmem:[%s0 + $0x430] sm:$0xff]
  %v155 = vld [vmem:[%s0 + $0x438] sm:$0xff]
  %v156 = vld [vmem:[%s0 + $0x440] sm:$0xff]
  %v157 = vld [vmem:[%s0 + $0x448] sm:$0xff]
  %v158 = vld [vmem:[%s0 + $0x450] sm:$0xff]
  %v159 = vld [vmem:[%s0 + $0x458] sm:$0xff]
  %v160 = vld [vmem:[%s0 + $0x460] sm:$0xff]
  %v161 = vld [vmem:[%s0 + $0x468] sm:$0xff]
  %v162 = vld [vmem:[%s0 + $0x470] sm:$0xff]
  %v163 = vld [vmem:[%s0 + $0x478] sm:$0xff]
  %v164 = vld [vmem:[%s0 + $0x480] sm:$0xff]
  %v165 = vld [vmem:[%s0 + $0x488] sm:$0xff]
  %v166 = vld [vmem:[%s0 + $0x490] sm:$0xff]
  %v167 = vld [vmem:[%s0 + $0x498] sm:$0xff]
  %v168 = vld [vmem:[%s0 + $0x4a0] sm:$0xff]
  %v169 = vld [vmem:[%s0 + $0x4a8] sm:$0xff]
  %v170 = vld [vmem:[%s0 + $0x4b0] sm:$0xff]
  %v171 = vld [vmem:[%s0 + $0x4b8] sm:$0xff]
  %v172 = vld [vmem:[%s0 + $0x4c0] sm:$0xff]
  %v173 = vld [vmem:[%s0 + $0x4c8] sm:$0xff]
  %v174 = vld [vmem:[%s0 + $0x4d0] sm:$0xff]
  %v175 = vld [vmem:[%s0 + $0x4d8] sm:$0xff]
  %v176 = vld [vmem:[%s0 + $0x4e0] sm:$0xff]
  %v177 = vld [vmem:[%s0 + $0x4e8] sm:$0xff]
  %v178 = vld [vmem:[%s0 + $0x4f0] sm:$0xff]
  %v179 = vld [vmem:[%s0 + $0x4f8] sm:$0xff]
  %v180 = vld [vmem:[%s0 + $0x500] sm:$0xff]
  %v181 = vld [vmem:[%s0 + $0x508] sm:$0xff]
  %v182 = vld [vmem:[%s0 + $0x510] sm:$0xff]
  %v183 = vld [vmem:[%s0 + $0x518] sm:$0xff]
  %v184 = vld [vmem:[%s0 + $0x520] sm:$0xff]
  %v185 = vld [vmem:[%s0 + $0x528] sm:$0xff]
  %v186 = vld [vmem:[%s0 + $0x530] sm:$0xff]
  %v187 = vld [vmem:[%s0 + $0x538] sm:$0xff]
  %v188 = vld [vmem:[%s0 + $0x540] sm:$0xff]
  %v189 = vld [vmem:[%s0 + $0x548] sm:$0xff]
  %v190 = vld [vmem:[%s0 + $0x550] sm:$0xff]
  %v191 = vld [vmem:[%s0 + $0x558] sm:$0xff]
  %v192 = vld [vmem:[%s0 + $0x560] sm:$0xff]
  %v193 = vld [vmem:[%s0 + $0x568] sm:$0xff]
  %v194 = vld [vmem:[%s0 + $0x570] sm:$0xff]
  %v195 = vld [vmem:[%s0 + $0x578] sm:$0xff]
  %v196 = vld [vmem:[%s0 + $0x580] sm:$0xff]
  %v197 = vld [vmem:[%s0 + $0x588] sm:$0xff]
  %v198 = vld [vmem:[%s0 + $0x590] sm:$0xff]
  %v199 = vld [vmem:[%s0 + $0x598] sm:$0xff]
  %v200 = vld [vmem:[%s0 + $0x5a0] sm:$0xff]
  %v201 = vld [vmem:[%s0 + $0x5a8] sm:$0xff]
  %v202 = vld [vmem:[%s0 + $0x5b0] sm:$0xff]
  %v203 = vld [vmem:[%s0 + $0x5b8] sm:$0xff]
  %v204 = vld [vmem:[%s0 + $0x5c0] sm:$0xff]
  %v205 = vld [vmem:[%s0 + $0x5c8] sm:$0xff]
  %v206 = vld [vmem:[%s0 + $0x5d0] sm:$0xff]
  %v207 = vld [vmem:[%s0 + $0x5d8] sm:$0xff]
  %v208 = vld [vmem:[%s0 + $0x5e0] sm:$0xff]
  %v209 = vld [vmem:[%s0 + $0x5e8] sm:$0xff]
  %v210 = vld [vmem:[%s0 + $0x5f0] sm:$0xff]
  %v211 = vld [vmem:[%s0 + $0x5f8] sm:$0xff]
  %v212 = vld [vmem:[%s0 + $0x600] sm:$0xff]
  %v213 = vld [vmem:[%s0 + $0x608] sm:$0xff]
  %v214 = vld [vmem:[%s0 + $0x610] sm:$0xff]
  %v215 = vld [vmem:[%s0 + $0x618] sm:$0xff]
  %v216 = vld [vmem:[%s0 + $0x620] sm:$0xff]
  %v217 = vld [vmem:[%s0 + $0x628] sm:$0xff]
  %v218 = vld [vmem:[%s0 + $0x630] sm:$0xff]
  %v219 = vld [vmem:[%s0 + $0x638] sm:$0xff]
  %v220 = vld [vmem:[%s0 + $0x640] sm:$0xff]
  %v221 = vld [vmem:[%s0 + $0x648] sm:$0xff]
  %v222 = vld [vmem:[%s0 + $0x650] sm:$0xff]
  %v223 = vld [vmem:[%s0 + $0x658] sm:$0xff]
  %v224 = vld [vmem:[%s0 + $0x660] sm:$0xff]
  %v225 = vld [vmem:[%s0 + $0x668] sm:$0xff]
  %v226 = vld [vmem:[%s0 + $0x670] sm:$0xff]
  %v227 = vld [vmem:[%s0 + $0x678] sm:$0xff]
  %v228 = vld [vmem:[%s0 + $0x680] sm:$0xff]
  %v229 = vld [vmem:[%s0 + $0x688] sm:$0xff]
  %v230 = vld [vmem:[%s0 + $0x690] sm:$0xff]
  %v231 = vld [vmem:[%s0 + $0x698] sm:$0xff]
  %v232 = vld [vmem:[%s0 + $0x6a0] sm:$0xff]
  %v233 = vld [vmem:[%s0 + $0x6a8] sm:$0xff]
  %v234 = vld [vmem:[%s0 + $0x6b0] sm:$0xff]
  %v235 = vld [vmem:[%s0 + $0x6b8] sm:$0xff]
  %v236 = vld [vmem:[%s0 + $0x6c0] sm:$0xff]
  %v237 = vld [vmem:[%s0 + $0x6c8] sm:$0xff]
  %v238 = vld [vmem:[%s0 + $0x6d0] sm:$0xff]
  %v239 = vld [vmem:[%s0 + $0x6d8] sm:$0xff]
  %v240 = vld [vmem:[%s0 + $0x6e0] sm:$0xff]
  %v241 = vld [vmem:[%s0 + $0x6e8] sm:$0xff]
  %v242 = vld [vmem:[%s0 + $0x6f0] sm:$0xff]
  %v243 = vld [vmem:[%s0 + $0x6f8] sm:$0xff]
  %v244 = vld [vmem:[%s0 + $0x700] sm:$0xff]
  %v245 = vld [vmem:[%s0 + $0x708] sm:$0xff]
  %v246 = vld [vmem:[%s0 + $0x710] sm:$0xff]
  %v247 = vld [vmem:[%s0 + $0x718] sm:$0xff]
  %v248 = vld [vmem:[%s0 + $0x720] sm:$0xff]
  %v249 = vld [vmem:[%s0 + $0x728] sm:$0xff]
  %v250 = vld [vmem:[%s0 + $0x730] sm:$0xff]
  %v251 = vld [vmem:[%s0 + $0x738] sm:$0xff]
  %v252 = vld [vmem:[%s0 + $0x740] sm:$0xff]
  %v253 = vld [vmem:[%s0 + $0x748] sm:$0xff]
  %v254 = vld [vmem:[%s0 + $0x750] sm:$0xff]
  %v255 = vld [vmem:[%s0 + $0x758] sm:$0xff]
  %v256 = vld [vmem:[%s0 + $0x760] sm:$0xff]
  %v257 = vld [vmem:[%s0 + $0x768] sm:$0xff]
  %v258 = vld [vmem:[%s0 + $0x770] sm:$0xff]
  %v259 = vld [vmem:[%s0 + $0x778] sm:$0xff]
  %v260 = vld [vmem:[%s0 + $0x780] sm:$0xff]
  %v261 = vld [vmem:[%s0 + $0x788] sm:$0xff]
  %v262 = vld [vmem:[%s0 + $0x790] sm:$0xff]
  %v263 = vld [vmem:[%s0 + $0x798] sm:$0xff]
  %v264 = vld [vmem:[%s0 + $0x7a0] sm:$0xff]
  %v265 = vld [vmem:[%s0 + $0x7a8] sm:$0xff]
  %v266 = vld [vmem:[%s0 + $0x7b0] sm:$0xff]
  %v267 = vld [vmem:[%s0 + $0x7b8] sm:$0xff]
  %v268 = vld [vmem:[%s0 + $0x7c0] sm:$0xff]
  %v269 = vld [vmem:[%s0 + $0x7c8] sm:$0xff]
  %v270 = vld [vmem:[%s0 + $0x7d0] sm:$0xff]
  %v271 = vld [vmem:[%s0 + $0x7d8] sm:$0xff]
  %v272 = vld [vmem:[%s0 + $0x7e0] sm:$0xff]
  %v273 = vld [vmem:[%s0 + $0x7e8] sm:$0xff]
  %v274 = vld [vmem:[%s0 + $0x7f0] sm:$0xff]
  %v275 = vld [vmem:[%s0 + $0x7f8] sm:$0xff]
  %v276 = vld [vmem:[%s0 + $0x800] sm:$0xff]
  %v277 = vld [vmem:[%s0 + $0x808] sm:$0xff]
  %v278 = vld [vmem:[%s0 + $0x810] sm:$0xff]
  %v279 = vld [vmem:[%s0 + $0x818] sm:$0xff]
  %v280 = vld [vmem:[%s0 + $0x820] sm:$0xff]
  %v281 = vld [vmem:[%s0 + $0x828] sm:$0xff]
  %v282 = vld [vmem:[%s0 + $0x830] sm:$0xff]
  %v283 = vld [vmem:[%s0 + $0x838] sm:$0xff]
  %v284 = vld [vmem:[%s0 + $0x840] sm:$0xff]
  %v285 = vld [vmem:[%s0 + $0x848] sm:$0xff]
  %v286 = vld [vmem:[%s0 + $0x850] sm:$0xff]
  %v287 = vld [vmem:[%s0 + $0x858] sm:$0xff]
  %v288 = vld [vmem:[%s0 + $0x860] sm:$0xff]
  %v289 = vld [vmem:[%s0 + $0x868] sm:$0xff]
  %v290 = vld [vmem:[%s0 + $0x870] sm:$0xff]
  %v291 = vld [vmem:[%s0 + $0x878] sm:$0xff]
  %v292 = vld [vmem:[%s0 + $0x880] sm:$0xff]
  %v293 = vld [vmem:[%s0 + $0x888] sm:$0xff]
  %v294 = vld [vmem:[%s0 + $0x890] sm:$0xff]
  %v295 = vld [vmem:[%s0 + $0x898] sm:$0xff]
  %v296 = vld [vmem:[%s0 + $0x8a0] sm:$0xff]
  %v297 = vld [vmem:[%s0 + $0x8a8] sm:$0xff]
  %v298 = vld [vmem:[%s0 + $0x8b0] sm:$0xff]
  %v299 = vld [vmem:[%s0 + $0x8b8] sm:$0xff]
  %v300 = vld [vmem:[%s0 + $0x8c0] sm:$0xff]
  %v301 = vld [vmem:[%s0 + $0x8c8] sm:$0xff]
  %v302 = vld [vmem:[%s0 + $0x8d0] sm:$0xff]
  %v303 = vld [vmem:[%s0 + $0x8d8] sm:$0xff]
  %v304 = vld [vmem:[%s0 + $0x8e0] sm:$0xff]
  %v305 = vld [vmem:[%s0 + $0x8e8] sm:$0xff]
  %v306 = vld [vmem:[%s0 + $0x8f0] sm:$0xff]
  %v307 = vld [vmem:[%s0 + $0x8f8] sm:$0xff]
  %v308 = vld [vmem:[%s0 + $0x900] sm:$0xff]
  %v309 = vld [vmem:[%s0 + $0x908] sm:$0xff]
  %v310 = vld [vmem:[%s0 + $0x910] sm:$0xff]
  %v311 = vld [vmem:[%s0 + $0x918] sm:$0xff]
  %v312 = vld [vmem:[%s0 + $0x920] sm:$0xff]
  %v313 = vld [vmem:[%s0 + $0x928] sm:$0xff]
  %v314 = vld [vmem:[%s0 + $0x930] sm:$0xff]
  %v315 = vld [vmem:[%s0 + $0x938] sm:$0xff]
  %v316 = vld [vmem:[%s0 + $0x940] sm:$0xff]
  %v317 = vld [vmem:[%s0 + $0x948] sm:$0xff]
  %v318 = vld [vmem:[%s0 + $0x950] sm:$0xff]
  %v319 = vld [vmem:[%s0 + $0x958] sm:$0xff]
  %v320 = vld [vmem:[%s0 + $0x960] sm:$0xff]
  %v321 = vld [vmem:[%s0 + $0x968] sm:$0xff]
  %v322 = vld [vmem:[%s0 + $0x970] sm:$0xff]
  %v323 = vld [vmem:[%s0 + $0x978] sm:$0xff]
  %v324 = vld [vmem:[%s0 + $0x980] sm:$0xff]
  %v325 = vld [vmem:[%s0 + $0x988] sm:$0xff]
  %v326 = vld [vmem:[%s0 + $0x990] sm:$0xff]
  %v327 = vld [vmem:[%s0 + $0x998] sm:$0xff]
  %v328 = vld [vmem:[%s0 + $0x9a0] sm:$0xff]
  %v329 = vld [vmem:[%s0 + $0x9a8] sm:$0xff]
  %v330 = vld [vmem:[%s0 + $0x9b0] sm:$0xff]
  %v331 = vld [vmem:[%s0 + $0x9b8] sm:$0xff]
  %v332 = vld [vmem:[%s0 + $0x9c0] sm:$0xff]
  %v333 = vld [vmem:[%s0 + $0x9c8] sm:$0xff]
  %v334 = vld [vmem:[%s0 + $0x9d0] sm:$0xff]
  %v335 = vld [vmem:[%s0 + $0x9d8] sm:$0xff]
  %v336 = vld [vmem:[%s0 + $0x9e0] sm:$0xff]
  %v337 = vld [vmem:[%s0 + $0x9e8] sm:$0xff]
  %v338 = vld [vmem:[%s0 + $0x9f0] sm:$0xff]
  %v339 = vld [vmem:[%s0 + $0x9f8] sm:$0xff]
  %v340 = vld [vmem:[%s0 + $0xa00] sm:$0xff]
  %v341 = vld [vmem:[%s0 + $0xa08] sm:$0xff]
  %v342 = vld [vmem:[%s0 + $0xa10] sm:$0xff]
  %v343 = vld [vmem:[%s0 + $0xa18] sm:$0xff]
  %v344 = vld [vmem:[%s0 + $0xa20] sm:$0xff]
  %v345 = vld [vmem:[%s0 + $0xa28] sm:$0xff]
  %v346 = vld [vmem:[%s0 + $0xa30] sm:$0xff]
  %v347 = vld [vmem:[%s0 + $0xa38] sm:$0xff]
  %v348 = vld [vmem:[%s0 + $0xa40] sm:$0xff]
  %v349 = vld [vmem:[%s0 + $0xa48] sm:$0xff]
  %v350 = vld [vmem:[%s0 + $0xa50] sm:$0xff]
  %v351 = vld [vmem:[%s0 + $0xa58] sm:$0xff]
  %v352 = vld [vmem:[%s0 + $0xa60] sm:$0xff]
  %v353 = vld [vmem:[%s0 + $0xa68] sm:$0xff]
  %v354 = vld [vmem:[%s0 + $0xa70] sm:$0xff]
  %v355 = vld [vmem:[%s0 + $0xa78] sm:$0xff]
  %v356 = vld [vmem:[%s0 + $0xa80] sm:$0xff]
  %v357 = vld [vmem:[%s0 + $0xa88] sm:$0xff]
  %v358 = vld [vmem:[%s0 + $0xa90] sm:$0xff]
  %v359 = vld [vmem:[%s0 + $0xa98] sm:$0xff]
  %v360 = vld [vmem:[%s0 + $0xaa0] sm:$0xff]
  %v361 = vld [vmem:[%s0 + $0xaa8] sm:$0xff]
  %v362 = vld [vmem:[%s0 + $0xab0] sm:$0xff]
  %v363 = vld [vmem:[%s0 + $0xab8] sm:$0xff]
  %v364 = vld [vmem:[%s0 + $0xac0] sm:$0xff]
  %v365 = vld [vmem:[%s0 + $0xac8] sm:$0xff]
  %v366 = vld [vmem:[%s0 + $0xad0] sm:$0xff]
  %v367 = vld [vmem:[%s0 + $0xad8] sm:$0xff]
  %v368 = vld [vmem:[%s0 + $0xae0] sm:$0xff]
  %v369 = vld [vmem:[%s0 + $0xae8] sm:$0xff]
  %v370 = vld [vmem:[%s0 + $0xaf0] sm:$0xff]
  %v371 = vld [vmem:[%s0 + $0xaf8] sm:$0xff]
  %v372 = vld [vmem:[%s0 + $0xb00] sm:$0xff]
  %v373 = vld [vmem:[%s0 + $0xb08] sm:$0xff]
  %v374 = vld [vmem:[%s0 + $0xb10] sm:$0xff]
  %v375 = vld [vmem:[%s0 + $0xb18] sm:$0xff]
  %v376 = vld [vmem:[%s0 + $0xb20] sm:$0xff]
  %v377 = vld [vmem:[%s0 + $0xb28] sm:$0xff]
  %v378 = vld [vmem:[%s0 + $0xb30] sm:$0xff]
  %v379 = vld [vmem:[%s0 + $0xb38] sm:$0xff]
  %v380 = vld [vmem:[%s0 + $0xb40] sm:$0xff]
  %v381 = vld [vmem:[%s0 + $0xb48] sm:$0xff]
  %v382 = vld [vmem:[%s0 + $0xb50] sm:$0xff]
  %v383 = vld [vmem:[%s0 + $0xb58] sm:$0xff]
  %v384 = vld [vmem:[%s0 + $0xb60] sm:$0xff]
  %v385 = vld [vmem:[%s0 + $0xb68] sm:$0xff]
  %v386 = vld [vmem:[%s0 + $0xb70] sm:$0xff]
  %v387 = vld [vmem:[%s0 + $0xb78] sm:$0xff]
  %v388 = vld [vmem:[%s0 + $0xb80] sm:$0xff]
  %v389 = vld [vmem:[%s0 + $0xb88] sm:$0xff]
  %v390 = vld [vmem:[%s0 + $0xb90] sm:$0xff]
  %v391 = vld [vmem:[%s0 + $0xb98] sm:$0xff]
  %v392 = vld [vmem:[%s0 + $0xba0] sm:$0xff]
  %v393 = vld [vmem:[%s0 + $0xba8] sm:$0xff]
  %v394 = vld [vmem:[%s0 + $0xbb0] sm:$0xff]
  %v395 = vld [vmem:[%s0 + $0xbb8] sm:$0xff]
  %v396 = vld [vmem:[%s0 + $0xbc0] sm:$0xff]
  %v397 = vld [vmem:[%s0 + $0xbc8] sm:$0xff]
  %v398 = vld [vmem:[%s0 + $0xbd0] sm:$0xff]
  %v399 = vld [vmem:[%s0 + $0xbd8] sm:$0xff]
  %v400 = vld [vmem:[%s0 + $0xbe0] sm:$0xff]
  %v401 = vld [vmem:[%s0 + $0xbe8] sm:$0xff]
  %v402 = vld [vmem:[%s0 + $0xbf0] sm:$0xff]
  %v403 = vld [vmem:[%s0 + $0xbf8] sm:$0xff]
  %v404 = vld [vmem:[%s0 + $0xc00] sm:$0xff]
  %v405 = vld [vmem:[%s0 + $0xc08] sm:$0xff]
  %v406 = vld [vmem:[%s0 + $0xc10] sm:$0xff]
  %v407 = vld [vmem:[%s0 + $0xc18] sm:$0xff]
  %v408 = vld [vmem:[%s0 + $0xc20] sm:$0xff]
  %v409 = vld [vmem:[%s0 + $0xc28] sm:$0xff]
  %v410 = vld [vmem:[%s0 + $0xc30] sm:$0xff]
  %v411 = vld [vmem:[%s0 + $0xc38] sm:$0xff]
  %v412 = vld [vmem:[%s0 + $0xc40] sm:$0xff]
  %v413 = vld [vmem:[%s0 + $0xc48] sm:$0xff]
  %v414 = vld [vmem:[%s0 + $0xc50] sm:$0xff]
  %v415 = vld [vmem:[%s0 + $0xc58] sm:$0xff]
  %v416 = vld [vmem:[%s0 + $0xc60] sm:$0xff]
  %v417 = vld [vmem:[%s0 + $0xc68] sm:$0xff]
  %v418 = vld [vmem:[%s0 + $0xc70] sm:$0xff]
  %v419 = vld [vmem:[%s0 + $0xc78] sm:$0xff]
  %v420 = vld [vmem:[%s0 + $0xc80] sm:$0xff]
  %v421 = vld [vmem:[%s0 + $0xc88] sm:$0xff]
  %v422 = vld [vmem:[%s0 + $0xc90] sm:$0xff]
  %v423 = vld [vmem:[%s0 + $0xc98] sm:$0xff]
  %v424 = vld [vmem:[%s0 + $0xca0] sm:$0xff]
  %v425 = vld [vmem:[%s0 + $0xca8] sm:$0xff]
  %v426 = vld [vmem:[%s0 + $0xcb0] sm:$0xff]
  %v427 = vld [vmem:[%s0 + $0xcb8] sm:$0xff]
  %v428 = vld [vmem:[%s0 + $0xcc0] sm:$0xff]
  %v429 = vld [vmem:[%s0 + $0xcc8] sm:$0xff]
  %v430 = vld [vmem:[%s0 + $0xcd0] sm:$0xff]
  %v431 = vld [vmem:[%s0 + $0xcd8] sm:$0xff]
  %v432 = vld [vmem:[%s0 + $0xce0] sm:$0xff]
  %v433 = vld [vmem:[%s0 + $0xce8] sm:$0xff]
  %v434 = vld [vmem:[%s0 + $0xcf0] sm:$0xff]
  %v435 = vld [vmem:[%s0 + $0xcf8] sm:$0xff]
  %v436 = vld [vmem:[%s0 + $0xd00] sm:$0xff]
  %v437 = vld [vmem:[%s0 + $0xd08] sm:$0xff]
  %v438 = vld [vmem:[%s0 + $0xd10] sm:$0xff]
  %v439 = vld [vmem:[%s0 + $0xd18] sm:$0xff]
  %v440 = vld [vmem:[%s0 + $0xd20] sm:$0xff]
  %v441 = vld [vmem:[%s0 + $0xd28] sm:$0xff]
  %v442 = vld [vmem:[%s0 + $0xd30] sm:$0xff]
  %v443 = vld [vmem:[%s0 + $0xd38] sm:$0xff]
  %v444 = vld [vmem:[%s0 + $0xd40] sm:$0xff]
  %v445 = vld [vmem:[%s0 + $0xd48] sm:$0xff]
  %v446 = vld [vmem:[%s0 + $0xd50] sm:$0xff]
  %v447 = vld [vmem:[%s0 + $0xd58] sm:$0xff]
  %v448 = vld [vmem:[%s0 + $0xd60] sm:$0xff]
  %v449 = vld [vmem:[%s0 + $0xd68] sm:$0xff]
  %v450 = vld [vmem:[%s0 + $0xd70] sm:$0xff]
  %v451 = vld [vmem:[%s0 + $0xd78] sm:$0xff]
  %v452 = vld [vmem:[%s0 + $0xd80] sm:$0xff]
  %v453 = vld [vmem:[%s0 + $0xd88] sm:$0xff]
  %v454 = vld [vmem:[%s0 + $0xd90] sm:$0xff]
  %v455 = vld [vmem:[%s0 + $0xd98] sm:$0xff]
  %v456 = vld [vmem:[%s0 + $0xda0] sm:$0xff]
  %v457 = vld [vmem:[%s0 + $0xda8] sm:$0xff]
  %v458 = vld [vmem:[%s0 + $0xdb0] sm:$0xff]
  %v459 = vld [vmem:[%s0 + $0xdb8] sm:$0xff]
  %v460 = vld [vmem:[%s0 + $0xdc0] sm:$0xff]
  %v461 = vld [vmem:[%s0 + $0xdc8] sm:$0xff]
  %v462 = vld [vmem:[%s0 + $0xdd0] sm:$0xff]
  %v463 = vld [vmem:[%s0 + $0xdd8] sm:$0xff]
  %v464 = vld [vmem:[%s0 + $0xde0] sm:$0xff]
  %v465 = vld [vmem:[%s0 + $0xde8] sm:$0xff]
  %v466 = vld [vmem:[%s0 + $0xdf0] sm:$0xff]
  %v467 = vld [vmem:[%s0 + $0xdf8] sm:$0xff]
  %v468 = vld [vmem:[%s0 + $0xe00] sm:$0xff]
  %v469 = vld [vmem:[%s0 + $0xe08] sm:$0xff]
  %v470 = vld [vmem:[%s0 + $0xe10] sm:$0xff]
  %v471 = vld [vmem:[%s0 + $0xe18] sm:$0xff]
  %v472 = vld [vmem:[%s0 + $0xe20] sm:$0xff]
  %v473 = vld [vmem:[%s0 + $0xe28] sm:$0xff]
  %v474 = vld [vmem:[%s0 + $0xe30] sm:$0xff]
  %v475 = vld [vmem:[%s0 + $0xe38] sm:$0xff]
  %v476 = vld [vmem:[%s0 + $0xe40] sm:$0xff]
  %v477 = vld [vmem:[%s0 + $0xe48] sm:$0xff]
  %v478 = vld [vmem:[%s0 + $0xe50] sm:$0xff]
  %v479 = vld [vmem:[%s0 + $0xe58] sm:$0xff]
  %v480 = vld [vmem:[%s0 + $0xe60] sm:$0xff]
  %v481 = vld [vmem:[%s0 + $0xe68] sm:$0xff]
  %v482 = vld [vmem:[%s0 + $0xe70] sm:$0xff]
  %v483 = vld [vmem:[%s0 + $0xe78] sm:$0xff]
  %v484 = vld [vmem:[%s0 + $0xe80] sm:$0xff]
  %v485 = vld [vmem:[%s0 + $0xe88] sm:$0xff]
  %v486 = vld [vmem:[%s0 + $0xe90] sm:$0xff]
  %v487 = vld [vmem:[%s0 + $0xe98] sm:$0xff]
  %v488 = vld [vmem:[%s0 + $0xea0] sm:$0xff]
  %v489 = vld [vmem:[%s0 + $0xea8] sm:$0xff]
  %v490 = vld [vmem:[%s0 + $0xeb0] sm:$0xff]
  %v491 = vld [vmem:[%s0 + $0xeb8] sm:$0xff]
  %v492 = vld [vmem:[%s0 + $0xec0] sm:$0xff]
  %v493 = vld [vmem:[%s0 + $0xec8] sm:$0xff]
  %v494 = vld [vmem:[%s0 + $0xed0] sm:$0xff]
  %v495 = vld [vmem:[%s0 + $0xed8] sm:$0xff]
  %v496 = vld [vmem:[%s0 + $0xee0] sm:$0xff]
  %v497 = vld [vmem:[%s0 + $0xee8] sm:$0xff]
  %v498 = vld [vmem:[%s0 + $0xef0] sm:$0xff]
  %v499 = vld [vmem:[%s0 + $0xef8] sm:$0xff]
  %v500 = vld [vmem:[%s0 + $0xf00] sm:$0xff]
  %v501 = vld [vmem:[%s0 + $0xf08] sm:$0xff]
  %v502 = vld [vmem:[%s0 + $0xf10] sm:$0xff]
  %v503 = vld [vmem:[%s0 + $0xf18] sm:$0xff]
  %v504 = vld [vmem:[%s0 + $0xf20] sm:$0xff]
  %v505 = vld [vmem:[%s0 + $0xf28] sm:$0xff]
  %v506 = vld [vmem:[%s0 + $0xf30] sm:$0xff]
  %v507 = vld [vmem:[%s0 + $0xf38] sm:$0xff]
  %v508 = vld [vmem:[%s0 + $0xf40] sm:$0xff]
  %v509 = vld [vmem:[%s0 + $0xf48] sm:$0xff]
  %v510 = vld [vmem:[%s0 + $0xf50] sm:$0xff]
  %v511 = vld [vmem:[%s0 + $0xf58] sm:$0xff]
  %v512 = vld [vmem:[%s0 + $0xf60] sm:$0xff]
  %v513 = vld [vmem:[%s0 + $0xf68] sm:$0xff]
  %v514 = vld [vmem:[%s0 + $0xf70] sm:$0xff]
  %v515 = vld [vmem:[%s0 + $0xf78] sm:$0xff]
  %v516 = vld [vmem:[%s0 + $0xf80] sm:$0xff]
  %v517 = vld [vmem:[%s0 + $0xf88] sm:$0xff]
  %v518 = vld [vmem:[%s0 + $0xf90] sm:$0xff]
  %v519 = vld [vmem:[%s0 + $0xf98] sm:$0xff]
  %v520 = vld [vmem:[%s0 + $0xfa0] sm:$0xff]
  %v521 = vld [vmem:[%s0 + $0xfa8] sm:$0xff]
  %v522 = vld [vmem:[%s0 + $0xfb0] sm:$0xff]
  %v523 = vld [vmem:[%s0 + $0xfb8] sm:$0xff]
  %v524 = vld [vmem:[%s0 + $0xfc0] sm:$0xff]
  %v525 = vld [vmem:[%s0 + $0xfc8] sm:$0xff]
  %v526 = vld [vmem:[%s0 + $0xfd0] sm:$0xff]
  %v527 = vld [vmem:[%s0 + $0xfd8] sm:$0xff]
  %v528 = vld [vmem:[%s0 + $0xfe0] sm:$0xff]
  %v529 = vld [vmem:[%s0 + $0xfe8] sm:$0xff]
  %v530 = vld [vmem:[%s0 + $0xff0] sm:$0xff]
  %v531 = vld [vmem:[%s0 + $0xff8] sm:$0xff]
  %v532 = vld [vmem:[%s0 + $0x1000] sm:$0xff]
  %v533 = vld [vmem:[%s0 + $0x1008] sm:$0xff]
  %v534 = vld [vmem:[%s0 + $0x1010] sm:$0xff]
  %v535 = vld [vmem:[%s0 + $0x1018] sm:$0xff]
  %v536 = vld [vmem:[%s0 + $0x1020] sm:$0xff]
  %v537 = vld [vmem:[%s0 + $0x1028] sm:$0xff]
  %v538 = vld [vmem:[%s0 + $0x1030] sm:$0xff]
  %v539 = vld [vmem:[%s0 + $0x1038] sm:$0xff]
  %v540 = vld [vmem:[%s0 + $0x1040] sm:$0xff]
  %v541 = vld [vmem:[%s0 + $0x1048] sm:$0xff]
  %v542 = vld [vmem:[%s0 + $0x1050] sm:$0xff]
  %v543 = vld [vmem:[%s0 + $0x1058] sm:$0xff]
  %v544 = vld [vmem:[%s0 + $0x1060] sm:$0xff]
  %v545 = vld [vmem:[%s0 + $0x1068] sm:$0xff]
  %v546 = vld [vmem:[%s0 + $0x1070] sm:$0xff]
  %v547 = vld [vmem:[%s0 + $0x1078] sm:$0xff]
  %v548 = vld [vmem:[%s0 + $0x1080] sm:$0xff]
  %v549 = vld [vmem:[%s0 + $0x1088] sm:$0xff]
  %v550 = vld [vmem:[%s0 + $0x1090] sm:$0xff]
  %v551 = vld [vmem:[%s0 + $0x1098] sm:$0xff]
  %v552 = vld [vmem:[%s0 + $0x10a0] sm:$0xff]
  %v553 = vld [vmem:[%s0 + $0x10a8] sm:$0xff]
  %v554 = vld [vmem:[%s0 + $0x10b0] sm:$0xff]
  %v555 = vld [vmem:[%s0 + $0x10b8] sm:$0xff]
  %v556 = vld [vmem:[%s0 + $0x10c0] sm:$0xff]
  %v557 = vld [vmem:[%s0 + $0x10c8] sm:$0xff]
  %v558 = vld [vmem:[%s0 + $0x10d0] sm:$0xff]
  %v559 = vld [vmem:[%s0 + $0x10d8] sm:$0xff]
  %v560 = vld [vmem:[%s0 + $0x10e0] sm:$0xff]
  %v561 = vld [vmem:[%s0 + $0x10e8] sm:$0xff]
  %v562 = vld [vmem:[%s0 + $0x10f0] sm:$0xff]
  %v563 = vld [vmem:[%s0 + $0x10f8] sm:$0xff]
  %v564 = vld [vmem:[%s0 + $0x1100] sm:$0xff]
  %v565 = vld [vmem:[%s0 + $0x1108] sm:$0xff]
  %v566 = vld [vmem:[%s0 + $0x1110] sm:$0xff]
  %v567 = vld [vmem:[%s0 + $0x1118] sm:$0xff]
  %v568 = vld [vmem:[%s0 + $0x1120] sm:$0xff]
  %v569 = vld [vmem:[%s0 + $0x1128] sm:$0xff]
  %v570 = vld [vmem:[%s0 + $0x1130] sm:$0xff]
  %v571 = vld [vmem:[%s0 + $0x1138] sm:$0xff]
  %v572 = vld [vmem:[%s0 + $0x1140] sm:$0xff]
  %v573 = vld [vmem:[%s0 + $0x1148] sm:$0xff]
  %v574 = vld [vmem:[%s0 + $0x1150] sm:$0xff]
  %v575 = vld [vmem:[%s0 + $0x1158] sm:$0xff]
  %v576 = vld [vmem:[%s0 + $0x1160] sm:$0xff]
  %v577 = vld [vmem:[%s0 + $0x1168] sm:$0xff]
  %v578 = vld [vmem:[%s0 + $0x1170] sm:$0xff]
  %v579 = vld [vmem:[%s0 + $0x1178] sm:$0xff]
  %v580 = vld [vmem:[%s0 + $0x1180] sm:$0xff]
  %v581 = vld [vmem:[%s0 + $0x1188] sm:$0xff]
  %v582 = vld [vmem:[%s0 + $0x1190] sm:$0xff]
  %v583 = vld [vmem:[%s0 + $0x1198] sm:$0xff]
  %v584 = vld [vmem:[%s0 + $0x11a0] sm:$0xff]
  %v585 = vld [vmem:[%s0 + $0x11a8] sm:$0xff]
  %v586 = vld [vmem:[%s0 + $0x11b0] sm:$0xff]
  %v587 = vld [vmem:[%s0 + $0x11b8] sm:$0xff]
  %v588 = vld [vmem:[%s0 + $0x11c0] sm:$0xff]
  %v589 = vld [vmem:[%s0 + $0x11c8] sm:$0xff]
  %v590 = vld [vmem:[%s0 + $0x11d0] sm:$0xff]
  %v591 = vld [vmem:[%s0 + $0x11d8] sm:$0xff]
  %v592 = vld [vmem:[%s0 + $0x11e0] sm:$0xff]
  %v593 = vld [vmem:[%s0 + $0x11e8] sm:$0xff]
  %v594 = vld [vmem:[%s0 + $0x11f0] sm:$0xff]
  %v595 = vld [vmem:[%s0 + $0x11f8] sm:$0xff]
  %v596 = vld [vmem:[%s0 + $0x1200] sm:$0xff]
  %v597 = vld [vmem:[%s0 + $0x1208] sm:$0xff]
  %v598 = vld [vmem:[%s0 + $0x1210] sm:$0xff]
  %v599 = vld [vmem:[%s0 + $0x1218] sm:$0xff]
  %v600 = vld [vmem:[%s0 + $0x1220] sm:$0xff]
  %v601 = vld [vmem:[%s0 + $0x1228] sm:$0xff]
  %v602 = vld [vmem:[%s0 + $0x1230] sm:$0xff]
  %v603 = vld [vmem:[%s0 + $0x1238] sm:$0xff]
  %v604 = vld [vmem:[%s0 + $0x1240] sm:$0xff]
  %v605 = vld [vmem:[%s0 + $0x1248] sm:$0xff]
  %v606 = vld [vmem:[%s0 + $0x1250] sm:$0xff]
  %v607 = vld [vmem:[%s0 + $0x1258] sm:$0xff]
  %v608 = vld [vmem:[%s0 + $0x1260] sm:$0xff]
  %v609 = vld [vmem:[%s0 + $0x1268] sm:$0xff]
  %v610 = vld [vmem:[%s0 + $0x1270] sm:$0xff]
  %v611 = vld [vmem:[%s0 + $0x1278] sm:$0xff]
  %v612 = vld [vmem:[%s0 + $0x1280] sm:$0xff]
  %v613 = vld [vmem:[%s0 + $0x1288] sm:$0xff]
  %v614 = vld [vmem:[%s0 + $0x1290] sm:$0xff]
  %v615 = vld [vmem:[%s0 + $0x1298] sm:$0xff]
  %v616 = vld [vmem:[%s0 + $0x12a0] sm:$0xff]
  %v617 = vld [vmem:[%s0 + $0x12a8] sm:$0xff]
  %v618 = vld [vmem:[%s0 + $0x12b0] sm:$0xff]
  %v619 = vld [vmem:[%s0 + $0x12b8] sm:$0xff]
  %v620 = vld [vmem:[%s0 + $0x12c0] sm:$0xff]
  %v621 = vld [vmem:[%s0 + $0x12c8] sm:$0xff]
  %v622 = vld [vmem:[%s0 + $0x12d0] sm:$0xff]
  %v623 = vld [vmem:[%s0 + $0x12d8] sm:$0xff]
  %v624 = vld [vmem:[%s0 + $0x12e0] sm:$0xff]
  %v625 = vld [vmem:[%s0 + $0x12e8] sm:$0xff]
  %v626 = vld [vmem:[%s0 + $0x12f0] sm:$0xff]
  %v627 = vld [vmem:[%s0 + $0x12f8] sm:$0xff]
  %v628 = vld [vmem:[%s0 + $0x1300] sm:$0xff]
  %v629 = vld [vmem:[%s0 + $0x1308] sm:$0xff]
  %v630 = vld [vmem:[%s0 + $0x1310] sm:$0xff]
  %v631 = vld [vmem:[%s0 + $0x1318] sm:$0xff]
  %v632 = vld [vmem:[%s0 + $0x1320] sm:$0xff]
  %v633 = vld [vmem:[%s0 + $0x1328] sm:$0xff]
  %v634 = vld [vmem:[%s0 + $0x1330] sm:$0xff]
  %v635 = vld [vmem:[%s0 + $0x1338] sm:$0xff]
  %v636 = vld [vmem:[%s0 + $0x1340] sm:$0xff]
  %v637 = vld [vmem:[%s0 + $0x1348] sm:$0xff]
  %v638 = vld [vmem:[%s0 + $0x1350] sm:$0xff]
  %v639 = vld [vmem:[%s0 + $0x1358] sm:$0xff]
  %v640 = vld [vmem:[%s0 + $0x1360] sm:$0xff]
  %v641 = vld [vmem:[%s0 + $0x1368] sm:$0xff]
  %v642 = vld [vmem:[%s0 + $0x1370] sm:$0xff]
  %v643 = vld [vmem:[%s0 + $0x1378] sm:$0xff]
  %v644 = vld [vmem:[%s0 + $0x1380] sm:$0xff]
  %v645 = vld [vmem:[%s0 + $0x1388] sm:$0xff]
  %v646 = vld [vmem:[%s0 + $0x1390] sm:$0xff]
  %v647 = vld [vmem:[%s0 + $0x1398] sm:$0xff]
  %v648 = vld [vmem:[%s0 + $0x13a0] sm:$0xff]
  %v649 = vld [vmem:[%s0 + $0x13a8] sm:$0xff]
  %v650 = vld [vmem:[%s0 + $0x13b0] sm:$0xff]
  %v651 = vld [vmem:[%s0 + $0x13b8] sm:$0xff]
  %v652 = vld [vmem:[%s0 + $0x13c0] sm:$0xff]
  %v653 = vld [vmem:[%s0 + $0x13c8] sm:$0xff]
  %v654 = vld [vmem:[%s0 + $0x13d0] sm:$0xff]
  %v655 = vld [vmem:[%s0 + $0x13d8] sm:$0xff]
  %v656 = vld [vmem:[%s0 + $0x13e0] sm:$0xff]
  %v657 = vld [vmem:[%s0 + $0x13e8] sm:$0xff]
  %v658 = vld [vmem:[%s0 + $0x13f0] sm:$0xff]
  %v659 = vld [vmem:[%s0 + $0x13f8] sm:$0xff]
  %v660 = vld [vmem:[%s0 + $0x1400] sm:$0xff]
  %v661 = vld [vmem:[%s0 + $0x1408] sm:$0xff]
  %v662 = vld [vmem:[%s0 + $0x1410] sm:$0xff]
  %v663 = vld [vmem:[%s0 + $0x1418] sm:$0xff]
  %v664 = vld [vmem:[%s0 + $0x1420] sm:$0xff]
  %v665 = vld [vmem:[%s0 + $0x1428] sm:$0xff]
  %v666 = vld [vmem:[%s0 + $0x1430] sm:$0xff]
  %v667 = vld [vmem:[%s0 + $0x1438] sm:$0xff]
  %v668 = vld [vmem:[#allocation2] sm:$0x1]
  %670 = vset.pattern.permute.xlu0 0
  %671 = vperm.xlu0 %670, %v668
  %v672 = vpop.permute.xlu0 %671
  %v674 = vlaneseq
  %v675 = vshrl.u32 %v674, 7
  %v676 = vsub.s32 0, %v675
  %v677 = vrot.slane %v672, %v676
  %v679 = vlaneseq
  %v680 = vshrl.u32 %v679, 7
  %v681 = vsub.s32 0, %v680
  %v682 = vrot.slane %v19, %v681
  %v683 = vlaneseq
  %v684 = vshrl.u32 %v683, 7
  %v685 = vsub.s32 1, %v684
  %v686 = vrot.slane %v19, %v685
  %v687 = vlaneseq
  %v688 = vshrl.u32 %v687, 7
  %v689 = vsub.s32 2, %v688
  %v690 = vrot.slane %v19, %v689
  %v691 = vlaneseq
  %v692 = vshrl.u32 %v691, 7
  %v693 = vsub.s32 3, %v692
  %v694 = vrot.slane %v19, %v693
  %v695 = vlaneseq
  %v696 = vshrl.u32 %v695, 7
  %v697 = vsub.s32 4, %v696
  %v698 = vrot.slane %v19, %v697
  %v699 = vlaneseq
  %v700 = vshrl.u32 %v699, 7
  %v701 = vsub.s32 5, %v700
  %v702 = vrot.slane %v19, %v701
  %vm708 = vcmask 64512
  %v709 = vsel %vm708, %v702, 0
  %711 = vmatprep.subr.mxu0 %v21
  %712 = vmatpush1.msra.mxu0 %v20
  %713 = vmatprep.subr.mxu0 %v29
  %714 = vmatpush1.msra.mxu0 %v28
  %715 = vmatprep.subr.mxu0 %v37
  %716 = vmatpush1.msra.mxu0 %v36
  %717 = vmatprep.subr.mxu0 %v45
  %718 = vmatpush1.msra.mxu0 %v44
  %719 = vmatprep.subr.mxu0 %v53
  %720 = vmatpush1.msra.mxu0 %v52
  %721 = vmatprep.subr.mxu0 %v61
  %722 = vmatpush1.msra.mxu0 %v60
  %723 = vmatprep.subr.mxu0 %v69
  %724 = vmatpush1.msra.mxu0 %v68
  %725 = vmatprep.subr.mxu0 %v77
  %726 = vmatpush1.msra.mxu0 %v76
  %727 = vmatprep.subr.mxu0 %v85
  %728 = vmatpush1.msra.mxu0 %v84
  %729 = vmatprep.subr.mxu0 %v93
  %730 = vmatpush1.msra.mxu0 %v92
  %731 = vmatprep.subr.mxu0 %v101
  %732 = vmatpush1.msra.mxu0 %v100
  %733 = vmatprep.subr.mxu0 %v109
  %734 = vmatpush1.msra.mxu0 %v108
  %735 = vmatprep.subr.mxu0 %v117
  %736 = vmatpush1.msra.mxu0 %v116
  %737 = vmatprep.subr.mxu0 %v125
  %738 = vmatpush1.msra.mxu0 %v124
  %739 = vmatprep.subr.mxu0 %v133
  %740 = vmatpush1.msra.mxu0 %v132
  %741 = vmatprep.subr.mxu0 %v141
  %742 = vmatpush1.msra.mxu0 %v140
  %743 = vmatprep.subr.mxu0 %v149
  %744 = vmatpush1.msra.mxu0 %v148
  %745 = vmatprep.subr.mxu0 %v157
  %746 = vmatpush1.msra.mxu0 %v156
  %747 = vmatprep.subr.mxu0 %v165
  %748 = vmatpush1.msra.mxu0 %v164
  %749 = vmatprep.subr.mxu0 %v173
  %750 = vmatpush1.msra.mxu0 %v172
  %751 = vmatprep.subr.mxu0 %v181
  %752 = vmatpush1.msra.mxu0 %v180
  %753 = vmatprep.subr.mxu0 %v189
  %754 = vmatpush1.msra.mxu0 %v188
  %755 = vmatprep.subr.mxu0 %v197
  %756 = vmatpush1.msra.mxu0 %v196
  %757 = vmatprep.subr.mxu0 %v205
  %758 = vmatpush1.msra.mxu0 %v204
  %759 = vmatprep.subr.mxu0 %v213
  %760 = vmatpush1.msra.mxu0 %v212
  %761 = vmatprep.subr.mxu0 %v221
  %762 = vmatpush1.msra.mxu0 %v220
  %763 = vmatprep.subr.mxu0 %v229
  %764 = vmatpush1.msra.mxu0 %v228
  %765 = vmatprep.subr.mxu0 %v237
  %766 = vmatpush1.msra.mxu0 %v236
  %767 = vmatprep.subr.mxu0 %v245
  %768 = vmatpush1.msra.mxu0 %v244
  %769 = vmatprep.subr.mxu0 %v253
  %770 = vmatpush1.msra.mxu0 %v252
  %771 = vmatprep.subr.mxu0 %v261
  %772 = vmatpush1.msra.mxu0 %v260
  %773 = vmatprep.subr.mxu0 %v269
  %774 = vmatpush1.msra.mxu0 %v268
  %775 = vmatprep.mubr.f32.mxu0 %v686
  %776 = vmatmul.mubr.f32.gmra.mrb[0].mxu0 %v682
  %v777 = vpop.f32.mrb[0].mxu0
  %v778 = vadd.f32 %v677, %v777
  %v779 = vpop.f32.mrb[0].mxu0
  %v780 = vadd.f32 %v677, %v779
  %781 = vdwg.mxu0
  %782 = vmatprep.subr.mxu0 %v277
  %783 = vmatpush1.msra.mxu0 %v276
  %784 = vmatprep.subr.mxu0 %v285
  %785 = vmatpush1.msra.mxu0 %v284
  %786 = vmatprep.subr.mxu0 %v293
  %787 = vmatpush1.msra.mxu0 %v292
  %788 = vmatprep.subr.mxu0 %v301
  %789 = vmatpush1.msra.mxu0 %v300
  %790 = vmatprep.subr.mxu0 %v309
  %791 = vmatpush1.msra.mxu0 %v308
  %792 = vmatprep.subr.mxu0 %v317
  %793 = vmatpush1.msra.mxu0 %v316
  %794 = vmatprep.subr.mxu0 %v325
  %795 = vmatpush1.msra.mxu0 %v324
  %796 = vmatprep.subr.mxu0 %v333
  %797 = vmatpush1.msra.mxu0 %v332
  %798 = vmatprep.subr.mxu0 %v341
  %799 = vmatpush1.msra.mxu0 %v340
  %800 = vmatprep.subr.mxu0 %v349
  %801 = vmatpush1.msra.mxu0 %v348
  %802 = vmatprep.subr.mxu0 %v357
  %803 = vmatpush1.msra.mxu0 %v356
  %804 = vmatprep.subr.mxu0 %v365
  %805 = vmatpush1.msra.mxu0 %v364
  %806 = vmatprep.subr.mxu0 %v373
  %807 = vmatpush1.msra.mxu0 %v372
  %808 = vmatprep.subr.mxu0 %v381
  %809 = vmatpush1.msra.mxu0 %v380
  %810 = vmatprep.subr.mxu0 %v389
  %811 = vmatpush1.msra.mxu0 %v388
  %812 = vmatprep.subr.mxu0 %v397
  %813 = vmatpush1.msra.mxu0 %v396
  %814 = vmatprep.subr.mxu0 %v405
  %815 = vmatpush1.msra.mxu0 %v404
  %816 = vmatprep.subr.mxu0 %v413
  %817 = vmatpush1.msra.mxu0 %v412
  %818 = vmatprep.subr.mxu0 %v421
  %819 = vmatpush1.msra.mxu0 %v420
  %820 = vmatprep.subr.mxu0 %v429
  %821 = vmatpush1.msra.mxu0 %v428
  %822 = vmatprep.subr.mxu0 %v437
  %823 = vmatpush1.msra.mxu0 %v436
  %824 = vmatprep.subr.mxu0 %v445
  %825 = vmatpush1.msra.mxu0 %v444
  %826 = vmatprep.subr.mxu0 %v453
  %827 = vmatpush1.msra.mxu0 %v452
  %828 = vmatprep.subr.mxu0 %v461
  %829 = vmatpush1.msra.mxu0 %v460
  %830 = vmatprep.subr.mxu0 %v469
  %831 = vmatpush1.msra.mxu0 %v468
  %832 = vmatprep.subr.mxu0 %v477
  %833 = vmatpush1.msra.mxu0 %v476
  %834 = vmatprep.subr.mxu0 %v485
  %835 = vmatpush1.msra.mxu0 %v484
  %836 = vmatprep.subr.mxu0 %v493
  %837 = vmatpush1.msra.mxu0 %v492
  %838 = vmatprep.subr.mxu0 %v501
  %839 = vmatpush1.msra.mxu0 %v500
  %840 = vmatprep.subr.mxu0 %v509
  %841 = vmatpush1.msra.mxu0 %v508
  %842 = vmatprep.subr.mxu0 %v517
  %843 = vmatpush1.msra.mxu0 %v516
  %844 = vmatprep.subr.mxu0 %v525
  %845 = vmatpush1.msra.mxu0 %v524
  %846 = vmatprep.mubr.f32.mxu0 %v694
  %847 = vmatmul.mubr.f32.gmra.mrb[0].mxu0 %v690
  %v848 = vpop.f32.mrb[0].mxu0
  %v849 = vadd.f32 %v778, %v848
  %v850 = vpop.f32.mrb[0].mxu0
  %v851 = vadd.f32 %v780, %v850
  %852 = vdwg.mxu0
  %853 = vmatprep.subr.mxu0 %v533
  %854 = vmatpush1.msra.mxu0 %v532
  %855 = vmatprep.subr.mxu0 %v541
  %856 = vmatpush1.msra.mxu0 %v540
  %857 = vmatprep.subr.mxu0 %v549
  %858 = vmatpush1.msra.mxu0 %v548
  %859 = vmatprep.subr.mxu0 %v557
  %860 = vmatpush1.msra.mxu0 %v556
  %861 = vmatprep.subr.mxu0 %v565
  %862 = vmatpush1.msra.mxu0 %v564
  %863 = vmatprep.subr.mxu0 %v573
  %864 = vmatpush1.msra.mxu0 %v572
  %865 = vmatprep.subr.mxu0 %v581
  %866 = vmatpush1.msra.mxu0 %v580
  %867 = vmatprep.subr.mxu0 %v589
  %868 = vmatpush1.msra.mxu0 %v588
  %869 = vmatprep.subr.mxu0 %v597
  %870 = vmatpush1.msra.mxu0 %v596
  %871 = vmatprep.subr.mxu0 %v605
  %872 = vmatpush1.msra.mxu0 %v604
  %873 = vmatprep.subr.mxu0 %v613
  %874 = vmatpush1.msra.mxu0 %v612
  %875 = vmatprep.subr.mxu0 %v621
  %876 = vmatpush1.msra.mxu0 %v620
  %877 = vmatprep.subr.mxu0 %v629
  %878 = vmatpush1.msra.mxu0 %v628
  %879 = vmatprep.subr.mxu0 %v637
  %880 = vmatpush1.msra.mxu0 %v636
  %881 = vmatprep.subr.mxu0 %v645
  %882 = vmatpush1.msra.mxu0 %v644
  %883 = vmatprep.subr.mxu0 %v653
  %884 = vmatpush1.msra.mxu0 %v652
  %885 = vmatprep.subr.mxu0 %v661
  %886 = vmatpush1.msra.mxu0 %v660
  %887 = vmatprep.subr.mxu0 0.0
  %888 = vmatpush1.msra.mxu0 0.0
  %889 = vmatprep.subr.mxu0 0.0
  %890 = vmatpush1.msra.mxu0 0.0
  %891 = vmatprep.subr.mxu0 0.0
  %892 = vmatpush1.msra.mxu0 0.0
  %893 = vmatprep.subr.mxu0 0.0
  %894 = vmatpush1.msra.mxu0 0.0
  %895 = vmatprep.subr.mxu0 0.0
  %896 = vmatpush1.msra.mxu0 0.0
  %897 = vmatprep.subr.mxu0 0.0
  %898 = vmatpush1.msra.mxu0 0.0
  %899 = vmatprep.subr.mxu0 0.0
  %900 = vmatpush1.msra.mxu0 0.0
  %901 = vmatprep.subr.mxu0 0.0
  %902 = vmatpush1.msra.mxu0 0.0
  %903 = vmatprep.subr.mxu0 0.0
  %904 = vmatpush1.msra.mxu0 0.0
  %905 = vmatprep.subr.mxu0 0.0
  %906 = vmatpush1.msra.mxu0 0.0
  %907 = vmatprep.subr.mxu0 0.0
  %908 = vmatpush1.msra.mxu0 0.0
  %909 = vmatprep.subr.mxu0 0.0
  %910 = vmatpush1.msra.mxu0 0.0
  %911 = vmatprep.subr.mxu0 0.0
  %912 = vmatpush1.msra.mxu0 0.0
  %913 = vmatprep.subr.mxu0 0.0
  %914 = vmatpush1.msra.mxu0 0.0
  %915 = vmatprep.subr.mxu0 0.0
  %916 = vmatpush1.msra.mxu0 0.0
  %917 = vmatprep.mubr.f32.mxu0 %v709
  %918 = vmatmul.mubr.f32.gmra.mrb[0].mxu0 %v698
  %v919 = vpop.f32.mrb[0].mxu0
  %v920 = vadd.f32 %v849, %v919
  %v921 = vpop.f32.mrb[0].mxu0
  %v922 = vadd.f32 %v851, %v921
  %923 = vdwg.mxu0
  %924 = vmatprep.subr.mxu0 %v23
  %925 = vmatpush1.msra.mxu0 %v22
  %926 = vmatprep.subr.mxu0 %v31
  %927 = vmatpush1.msra.mxu0 %v30
  %928 = vmatprep.subr.mxu0 %v39
  %929 = vmatpush1.msra.mxu0 %v38
  %930 = vmatprep.subr.mxu0 %v47
  %931 = vmatpush1.msra.mxu0 %v46
  %932 = vmatprep.subr.mxu0 %v55
  %933 = vmatpush1.msra.mxu0 %v54
  %934 = vmatprep.subr.mxu0 %v63
  %935 = vmatpush1.msra.mxu0 %v62
  %936 = vmatprep.subr.mxu0 %v71
  %937 = vmatpush1.msra.mxu0 %v70
  %938 = vmatprep.subr.mxu0 %v79
  %939 = vmatpush1.msra.mxu0 %v78
  %940 = vmatprep.subr.mxu0 %v87
  %941 = vmatpush1.msra.mxu0 %v86
  %942 = vmatprep.subr.mxu0 %v95
  %943 = vmatpush1.msra.mxu0 %v94
  %944 = vmatprep.subr.mxu0 %v103
  %945 = vmatpush1.msra.mxu0 %v102
  %946 = vmatprep.subr.mxu0 %v111
  %947 = vmatpush1.msra.mxu0 %v110
  %948 = vmatprep.subr.mxu0 %v119
  %949 = vmatpush1.msra.mxu0 %v118
  %950 = vmatprep.subr.mxu0 %v127
  %951 = vmatpush1.msra.mxu0 %v126
  %952 = vmatprep.subr.mxu0 %v135
  %953 = vmatpush1.msra.mxu0 %v134
  %954 = vmatprep.subr.mxu0 %v143
  %955 = vmatpush1.msra.mxu0 %v142
  %956 = vmatprep.subr.mxu0 %v151
  %957 = vmatpush1.msra.mxu0 %v150
  %958 = vmatprep.subr.mxu0 %v159
  %959 = vmatpush1.msra.mxu0 %v158
  %960 = vmatprep.subr.mxu0 %v167
  %961 = vmatpush1.msra.mxu0 %v166
  %962 = vmatprep.subr.mxu0 %v175
  %963 = vmatpush1.msra.mxu0 %v174
  %964 = vmatprep.subr.mxu0 %v183
  %965 = vmatpush1.msra.mxu0 %v182
  %966 = vmatprep.subr.mxu0 %v191
  %967 = vmatpush1.msra.mxu0 %v190
  %968 = vmatprep.subr.mxu0 %v199
  %969 = vmatpush1.msra.mxu0 %v198
  %970 = vmatprep.subr.mxu0 %v207
  %971 = vmatpush1.msra.mxu0 %v206
  %972 = vmatprep.subr.mxu0 %v215
  %973 = vmatpush1.msra.mxu0 %v214
  %974 = vmatprep.subr.mxu0 %v223
  %975 = vmatpush1.msra.mxu0 %v222
  %976 = vmatprep.subr.mxu0 %v231
  %977 = vmatpush1.msra.mxu0 %v230
  %978 = vmatprep.subr.mxu0 %v239
  %979 = vmatpush1.msra.mxu0 %v238
  %980 = vmatprep.subr.mxu0 %v247
  %981 = vmatpush1.msra.mxu0 %v246
  %982 = vmatprep.subr.mxu0 %v255
  %983 = vmatpush1.msra.mxu0 %v254
  %984 = vmatprep.subr.mxu0 %v263
  %985 = vmatpush1.msra.mxu0 %v262
  %986 = vmatprep.subr.mxu0 %v271
  %987 = vmatpush1.msra.mxu0 %v270
  %988 = vmatprep.mubr.f32.mxu0 %v686
  %989 = vmatmul.mubr.f32.gmra.mrb[0].mxu0 %v682
  %v990 = vpop.f32.mrb[0].mxu0
  %v991 = vadd.f32 %v677, %v990
  %v992 = vpop.f32.mrb[0].mxu0
  %v993 = vadd.f32 %v677, %v992
  %994 = vdwg.mxu0
  %995 = vmatprep.subr.mxu0 %v279
  %996 = vmatpush1.msra.mxu0 %v278
  %997 = vmatprep.subr.mxu0 %v287
  %998 = vmatpush1.msra.mxu0 %v286
  %999 = vmatprep.subr.mxu0 %v295
  %1000 = vmatpush1.msra.mxu0 %v294
  %1001 = vmatprep.subr.mxu0 %v303
  %1002 = vmatpush1.msra.mxu0 %v302
  %1003 = vmatprep.subr.mxu0 %v311
  %1004 = vmatpush1.msra.mxu0 %v310
  %1005 = vmatprep.subr.mxu0 %v319
  %1006 = vmatpush1.msra.mxu0 %v318
  %1007 = vmatprep.subr.mxu0 %v327
  %1008 = vmatpush1.msra.mxu0 %v326
  %1009 = vmatprep.subr.mxu0 %v335
  %1010 = vmatpush1.msra.mxu0 %v334
  %1011 = vmatprep.subr.mxu0 %v343
  %1012 = vmatpush1.msra.mxu0 %v342
  %1013 = vmatprep.subr.mxu0 %v351
  %1014 = vmatpush1.msra.mxu0 %v350
  %1015 = vmatprep.subr.mxu0 %v359
  %1016 = vmatpush1.msra.mxu0 %v358
  %1017 = vmatprep.subr.mxu0 %v367
  %1018 = vmatpush1.msra.mxu0 %v366
  %1019 = vmatprep.subr.mxu0 %v375
  %1020 = vmatpush1.msra.mxu0 %v374
  %1021 = vmatprep.subr.mxu0 %v383
  %1022 = vmatpush1.msra.mxu0 %v382
  %1023 = vmatprep.subr.mxu0 %v391
  %1024 = vmatpush1.msra.mxu0 %v390
  %1025 = vmatprep.subr.mxu0 %v399
  %1026 = vmatpush1.msra.mxu0 %v398
  %1027 = vmatprep.subr.mxu0 %v407
  %1028 = vmatpush1.msra.mxu0 %v406
  %1029 = vmatprep.subr.mxu0 %v415
  %1030 = vmatpush1.msra.mxu0 %v414
  %1031 = vmatprep.subr.mxu0 %v423
  %1032 = vmatpush1.msra.mxu0 %v422
  %1033 = vmatprep.subr.mxu0 %v431
  %1034 = vmatpush1.msra.mxu0 %v430
  %1035 = vmatprep.subr.mxu0 %v439
  %1036 = vmatpush1.msra.mxu0 %v438
  %1037 = vmatprep.subr.mxu0 %v447
  %1038 = vmatpush1.msra.mxu0 %v446
  %1039 = vmatprep.subr.mxu0 %v455
  %1040 = vmatpush1.msra.mxu0 %v454
  %1041 = vmatprep.subr.mxu0 %v463
  %1042 = vmatpush1.msra.mxu0 %v462
  %1043 = vmatprep.subr.mxu0 %v471
  %1044 = vmatpush1.msra.mxu0 %v470
  %1045 = vmatprep.subr.mxu0 %v479
  %1046 = vmatpush1.msra.mxu0 %v478
  %1047 = vmatprep.subr.mxu0 %v487
  %1048 = vmatpush1.msra.mxu0 %v486
  %1049 = vmatprep.subr.mxu0 %v495
  %1050 = vmatpush1.msra.mxu0 %v494
  %1051 = vmatprep.subr.mxu0 %v503
  %1052 = vmatpush1.msra.mxu0 %v502
  %1053 = vmatprep.subr.mxu0 %v511
  %1054 = vmatpush1.msra.mxu0 %v510
  %1055 = vmatprep.subr.mxu0 %v519
  %1056 = vmatpush1.msra.mxu0 %v518
  %1057 = vmatprep.subr.mxu0 %v527
  %1058 = vmatpush1.msra.mxu0 %v526
  %1059 = vmatprep.mubr.f32.mxu0 %v694
  %1060 = vmatmul.mubr.f32.gmra.mrb[0].mxu0 %v690
  %v1061 = vpop.f32.mrb[0].mxu0
  %v1062 = vadd.f32 %v991, %v1061
  %v1063 = vpop.f32.mrb[0].mxu0
  %v1064 = vadd.f32 %v993, %v1063
  %1065 = vdwg.mxu0
  %1066 = vmatprep.subr.mxu0 %v535
  %1067 = vmatpush1.msra.mxu0 %v534
  %1068 = vmatprep.subr.mxu0 %v543
  %1069 = vmatpush1.msra.mxu0 %v542
  %1070 = vmatprep.subr.mxu0 %v551
  %1071 = vmatpush1.msra.mxu0 %v550
  %1072 = vmatprep.subr.mxu0 %v559
  %1073 = vmatpush1.msra.mxu0 %v558
  %1074 = vmatprep.subr.mxu0 %v567
  %1075 = vmatpush1.msra.mxu0 %v566
  %1076 = vmatprep.subr.mxu0 %v575
  %1077 = vmatpush1.msra.mxu0 %v574
  %1078 = vmatprep.subr.mxu0 %v583
  %1079 = vmatpush1.msra.mxu0 %v582
  %1080 = vmatprep.subr.mxu0 %v591
  %1081 = vmatpush1.msra.mxu0 %v590
  %1082 = vmatprep.subr.mxu0 %v599
  %1083 = vmatpush1.msra.mxu0 %v598
  %1084 = vmatprep.subr.mxu0 %v607
  %1085 = vmatpush1.msra.mxu0 %v606
  %1086 = vmatprep.subr.mxu0 %v615
  %1087 = vmatpush1.msra.mxu0 %v614
  %1088 = vmatprep.subr.mxu0 %v623
  %1089 = vmatpush1.msra.mxu0 %v622
  %1090 = vmatprep.subr.mxu0 %v631
  %1091 = vmatpush1.msra.mxu0 %v630
  %1092 = vmatprep.subr.mxu0 %v639
  %1093 = vmatpush1.msra.mxu0 %v638
  %1094 = vmatprep.subr.mxu0 %v647
  %1095 = vmatpush1.msra.mxu0 %v646
  %1096 = vmatprep.subr.mxu0 %v655
  %1097 = vmatpush1.msra.mxu0 %v654
  %1098 = vmatprep.subr.mxu0 %v663
  %1099 = vmatpush1.msra.mxu0 %v662
  %1100 = vmatprep.subr.mxu0 0.0
  %1101 = vmatpush1.msra.mxu0 0.0
  %1102 = vmatprep.subr.mxu0 0.0
  %1103 = vmatpush1.msra.mxu0 0.0
  %1104 = vmatprep.subr.mxu0 0.0
  %1105 = vmatpush1.msra.mxu0 0.0
  %1106 = vmatprep.subr.mxu0 0.0
  %1107 = vmatpush1.msra.mxu0 0.0
  %1108 = vmatprep.subr.mxu0 0.0
  %1109 = vmatpush1.msra.mxu0 0.0
  %1110 = vmatprep.subr.mxu0 0.0
  %1111 = vmatpush1.msra.mxu0 0.0
  %1112 = vmatprep.subr.mxu0 0.0
  %1113 = vmatpush1.msra.mxu0 0.0
  %1114 = vmatprep.subr.mxu0 0.0
  %1115 = vmatpush1.msra.mxu0 0.0
  %1116 = vmatprep.subr.mxu0 0.0
  %1117 = vmatpush1.msra.mxu0 0.0
  %1118 = vmatprep.subr.mxu0 0.0
  %1119 = vmatpush1.msra.mxu0 0.0
  %1120 = vmatprep.subr.mxu0 0.0
  %1121 = vmatpush1.msra.mxu0 0.0
  %1122 = vmatprep.subr.mxu0 0.0
  %1123 = vmatpush1.msra.mxu0 0.0
  %1124 = vmatprep.subr.mxu0 0.0
  %1125 = vmatpush1.msra.mxu0 0.0
  %1126 = vmatprep.subr.mxu0 0.0
  %1127 = vmatpush1.msra.mxu0 0.0
  %1128 = vmatprep.subr.mxu0 0.0
  %1129 = vmatpush1.msra.mxu0 0.0
  %1130 = vmatprep.mubr.f32.mxu0 %v709
  %1131 = vmatmul.mubr.f32.gmra.mrb[0].mxu0 %v698
  %v1132 = vpop.f32.mrb[0].mxu0
  %v1133 = vadd.f32 %v1062, %v1132
  %v1134 = vpop.f32.mrb[0].mxu0
  %v1135 = vadd.f32 %v1064, %v1134
  %1136 = vdwg.mxu0
  %1137 = vmatprep.subr.mxu0 %v25
  %1138 = vmatpush1.msra.mxu0 %v24
  %1139 = vmatprep.subr.mxu0 %v33
  %1140 = vmatpush1.msra.mxu0 %v32
  %1141 = vmatprep.subr.mxu0 %v41
  %1142 = vmatpush1.msra.mxu0 %v40
  %1143 = vmatprep.subr.mxu0 %v49
  %1144 = vmatpush1.msra.mxu0 %v48
  %1145 = vmatprep.subr.mxu0 %v57
  %1146 = vmatpush1.msra.mxu0 %v56
  %1147 = vmatprep.subr.mxu0 %v65
  %1148 = vmatpush1.msra.mxu0 %v64
  %1149 = vmatprep.subr.mxu0 %v73
  %1150 = vmatpush1.msra.mxu0 %v72
  %1151 = vmatprep.subr.mxu0 %v81
  %1152 = vmatpush1.msra.mxu0 %v80
  %1153 = vmatprep.subr.mxu0 %v89
  %1154 = vmatpush1.msra.mxu0 %v88
  %1155 = vmatprep.subr.mxu0 %v97
  %1156 = vmatpush1.msra.mxu0 %v96
  %1157 = vmatprep.subr.mxu0 %v105
  %1158 = vmatpush1.msra.mxu0 %v104
  %1159 = vmatprep.subr.mxu0 %v113
  %1160 = vmatpush1.msra.mxu0 %v112
  %1161 = vmatprep.subr.mxu0 %v121
  %1162 = vmatpush1.msra.mxu0 %v120
  %1163 = vmatprep.subr.mxu0 %v129
  %1164 = vmatpush1.msra.mxu0 %v128
  %1165 = vmatprep.subr.mxu0 %v137
  %1166 = vmatpush1.msra.mxu0 %v136
  %1167 = vmatprep.subr.mxu0 %v145
  %1168 = vmatpush1.msra.mxu0 %v144
  %1169 = vmatprep.subr.mxu0 %v153
  %1170 = vmatpush1.msra.mxu0 %v152
  %1171 = vmatprep.subr.mxu0 %v161
  %1172 = vmatpush1.msra.mxu0 %v160
  %1173 = vmatprep.subr.mxu0 %v169
  %1174 = vmatpush1.msra.mxu0 %v168
  %1175 = vmatprep.subr.mxu0 %v177
  %1176 = vmatpush1.msra.mxu0 %v176
  %1177 = vmatprep.subr.mxu0 %v185
  %1178 = vmatpush1.msra.mxu0 %v184
  %1179 = vmatprep.subr.mxu0 %v193
  %1180 = vmatpush1.msra.mxu0 %v192
  %1181 = vmatprep.subr.mxu0 %v201
  %1182 = vmatpush1.msra.mxu0 %v200
  %1183 = vmatprep.subr.mxu0 %v209
  %1184 = vmatpush1.msra.mxu0 %v208
  %1185 = vmatprep.subr.mxu0 %v217
  %1186 = vmatpush1.msra.mxu0 %v216
  %1187 = vmatprep.subr.mxu0 %v225
  %1188 = vmatpush1.msra.mxu0 %v224
  %1189 = vmatprep.subr.mxu0 %v233
  %1190 = vmatpush1.msra.mxu0 %v232
  %1191 = vmatprep.subr.mxu0 %v241
  %1192 = vmatpush1.msra.mxu0 %v240
  %1193 = vmatprep.subr.mxu0 %v249
  %1194 = vmatpush1.msra.mxu0 %v248
  %1195 = vmatprep.subr.mxu0 %v257
  %1196 = vmatpush1.msra.mxu0 %v256
  %1197 = vmatprep.subr.mxu0 %v265
  %1198 = vmatpush1.msra.mxu0 %v264
  %1199 = vmatprep.subr.mxu0 %v273
  %1200 = vmatpush1.msra.mxu0 %v272
  %1201 = vmatprep.mubr.f32.mxu0 %v686
  %1202 = vmatmul.mubr.f32.gmra.mrb[0].mxu0 %v682
  %v1203 = vpop.f32.mrb[0].mxu0
  %v1204 = vadd.f32 %v677, %v1203
  %v1205 = vpop.f32.mrb[0].mxu0
  %v1206 = vadd.f32 %v677, %v1205
  %1207 = vdwg.mxu0
  %1208 = vmatprep.subr.mxu0 %v281
  %1209 = vmatpush1.msra.mxu0 %v280
  %1210 = vmatprep.subr.mxu0 %v289
  %1211 = vmatpush1.msra.mxu0 %v288
  %1212 = vmatprep.subr.mxu0 %v297
  %1213 = vmatpush1.msra.mxu0 %v296
  %1214 = vmatprep.subr.mxu0 %v305
  %1215 = vmatpush1.msra.mxu0 %v304
  %1216 = vmatprep.subr.mxu0 %v313
  %1217 = vmatpush1.msra.mxu0 %v312
  %1218 = vmatprep.subr.mxu0 %v321
  %1219 = vmatpush1.msra.mxu0 %v320
  %1220 = vmatprep.subr.mxu0 %v329
  %1221 = vmatpush1.msra.mxu0 %v328
  %1222 = vmatprep.subr.mxu0 %v337
  %1223 = vmatpush1.msra.mxu0 %v336
  %1224 = vmatprep.subr.mxu0 %v345
  %1225 = vmatpush1.msra.mxu0 %v344
  %1226 = vmatprep.subr.mxu0 %v353
  %1227 = vmatpush1.msra.mxu0 %v352
  %1228 = vmatprep.subr.mxu0 %v361
  %1229 = vmatpush1.msra.mxu0 %v360
  %1230 = vmatprep.subr.mxu0 %v369
  %1231 = vmatpush1.msra.mxu0 %v368
  %1232 = vmatprep.subr.mxu0 %v377
  %1233 = vmatpush1.msra.mxu0 %v376
  %1234 = vmatprep.subr.mxu0 %v385
  %1235 = vmatpush1.msra.mxu0 %v384
  %1236 = vmatprep.subr.mxu0 %v393
  %1237 = vmatpush1.msra.mxu0 %v392
  %1238 = vmatprep.subr.mxu0 %v401
  %1239 = vmatpush1.msra.mxu0 %v400
  %1240 = vmatprep.subr.mxu0 %v409
  %1241 = vmatpush1.msra.mxu0 %v408
  %1242 = vmatprep.subr.mxu0 %v417
  %1243 = vmatpush1.msra.mxu0 %v416
  %1244 = vmatprep.subr.mxu0 %v425
  %1245 = vmatpush1.msra.mxu0 %v424
  %1246 = vmatprep.subr.mxu0 %v433
  %1247 = vmatpush1.msra.mxu0 %v432
  %1248 = vmatprep.subr.mxu0 %v441
  %1249 = vmatpush1.msra.mxu0 %v440
  %1250 = vmatprep.subr.mxu0 %v449
  %1251 = vmatpush1.msra.mxu0 %v448
  %1252 = vmatprep.subr.mxu0 %v457
  %1253 = vmatpush1.msra.mxu0 %v456
  %1254 = vmatprep.subr.mxu0 %v465
  %1255 = vmatpush1.msra.mxu0 %v464
  %1256 = vmatprep.subr.mxu0 %v473
  %1257 = vmatpush1.msra.mxu0 %v472
  %1258 = vmatprep.subr.mxu0 %v481
  %1259 = vmatpush1.msra.mxu0 %v480
  %1260 = vmatprep.subr.mxu0 %v489
  %1261 = vmatpush1.msra.mxu0 %v488
  %1262 = vmatprep.subr.mxu0 %v497
  %1263 = vmatpush1.msra.mxu0 %v496
  %1264 = vmatprep.subr.mxu0 %v505
  %1265 = vmatpush1.msra.mxu0 %v504
  %1266 = vmatprep.subr.mxu0 %v513
  %1267 = vmatpush1.msra.mxu0 %v512
  %1268 = vmatprep.subr.mxu0 %v521
  %1269 = vmatpush1.msra.mxu0 %v520
  %1270 = vmatprep.subr.mxu0 %v529
  %1271 = vmatpush1.msra.mxu0 %v528
  %1272 = vmatprep.mubr.f32.mxu0 %v694
  %1273 = vmatmul.mubr.f32.gmra.mrb[0].mxu0 %v690
  %v1274 = vpop.f32.mrb[0].mxu0
  %v1275 = vadd.f32 %v1204, %v1274
  %v1276 = vpop.f32.mrb[0].mxu0
  %v1277 = vadd.f32 %v1206, %v1276
  %1278 = vdwg.mxu0
  %1279 = vmatprep.subr.mxu0 %v537
  %1280 = vmatpush1.msra.mxu0 %v536
  %1281 = vmatprep.subr.mxu0 %v545
  %1282 = vmatpush1.msra.mxu0 %v544
  %1283 = vmatprep.subr.mxu0 %v553
  %1284 = vmatpush1.msra.mxu0 %v552
  %1285 = vmatprep.subr.mxu0 %v561
  %1286 = vmatpush1.msra.mxu0 %v560
  %1287 = vmatprep.subr.mxu0 %v569
  %1288 = vmatpush1.msra.mxu0 %v568
  %1289 = vmatprep.subr.mxu0 %v577
  %1290 = vmatpush1.msra.mxu0 %v576
  %1291 = vmatprep.subr.mxu0 %v585
  %1292 = vmatpush1.msra.mxu0 %v584
  %1293 = vmatprep.subr.mxu0 %v593
  %1294 = vmatpush1.msra.mxu0 %v592
  %1295 = vmatprep.subr.mxu0 %v601
  %1296 = vmatpush1.msra.mxu0 %v600
  %1297 = vmatprep.subr.mxu0 %v609
  %1298 = vmatpush1.msra.mxu0 %v608
  %1299 = vmatprep.subr.mxu0 %v617
  %1300 = vmatpush1.msra.mxu0 %v616
  %1301 = vmatprep.subr.mxu0 %v625
  %1302 = vmatpush1.msra.mxu0 %v624
  %1303 = vmatprep.subr.mxu0 %v633
  %1304 = vmatpush1.msra.mxu0 %v632
  %1305 = vmatprep.subr.mxu0 %v641
  %1306 = vmatpush1.msra.mxu0 %v640
  %1307 = vmatprep.subr.mxu0 %v649
  %1308 = vmatpush1.msra.mxu0 %v648
  %1309 = vmatprep.subr.mxu0 %v657
  %1310 = vmatpush1.msra.mxu0 %v656
  %1311 = vmatprep.subr.mxu0 %v665
  %1312 = vmatpush1.msra.mxu0 %v664
  %1313 = vmatprep.subr.mxu0 0.0
  %1314 = vmatpush1.msra.mxu0 0.0
  %1315 = vmatprep.subr.mxu0 0.0
  %1316 = vmatpush1.msra.mxu0 0.0
  %1317 = vmatprep.subr.mxu0 0.0
  %1318 = vmatpush1.msra.mxu0 0.0
  %1319 = vmatprep.subr.mxu0 0.0
  %1320 = vmatpush1.msra.mxu0 0.0
  %1321 = vmatprep.subr.mxu0 0.0
  %1322 = vmatpush1.msra.mxu0 0.0
  %1323 = vmatprep.subr.mxu0 0.0
  %1324 = vmatpush1.msra.mxu0 0.0
  %1325 = vmatprep.subr.mxu0 0.0
  %1326 = vmatpush1.msra.mxu0 0.0
  %1327 = vmatprep.subr.mxu0 0.0
  %1328 = vmatpush1.msra.mxu0 0.0
  %1329 = vmatprep.subr.mxu0 0.0
  %1330 = vmatpush1.msra.mxu0 0.0
  %1331 = vmatprep.subr.mxu0 0.0
  %1332 = vmatpush1.msra.mxu0 0.0
  %1333 = vmatprep.subr.mxu0 0.0
  %1334 = vmatpush1.msra.mxu0 0.0
  %1335 = vmatprep.subr.mxu0 0.0
  %1336 = vmatpush1.msra.mxu0 0.0
  %1337 = vmatprep.subr.mxu0 0.0
  %1338 = vmatpush1.msra.mxu0 0.0
  %1339 = vmatprep.subr.mxu0 0.0
  %1340 = vmatpush1.msra.mxu0 0.0
  %1341 = vmatprep.subr.mxu0 0.0
  %1342 = vmatpush1.msra.mxu0 0.0
  %1343 = vmatprep.mubr.f32.mxu0 %v709
  %1344 = vmatmul.mubr.f32.gmra.mrb[0].mxu0 %v698
  %v1345 = vpop.f32.mrb[0].mxu0
  %v1346 = vadd.f32 %v1275, %v1345
  %v1347 = vpop.f32.mrb[0].mxu0
  %v1348 = vadd.f32 %v1277, %v1347
  %1349 = vdwg.mxu0
  %1350 = vmatprep.subr.mxu0 %v27
  %1351 = vmatpush1.msra.mxu0 %v26
  %1352 = vmatprep.subr.mxu0 %v35
  %1353 = vmatpush1.msra.mxu0 %v34
  %1354 = vmatprep.subr.mxu0 %v43
  %1355 = vmatpush1.msra.mxu0 %v42
  %1356 = vmatprep.subr.mxu0 %v51
  %1357 = vmatpush1.msra.mxu0 %v50
  %1358 = vmatprep.subr.mxu0 %v59
  %1359 = vmatpush1.msra.mxu0 %v58
  %1360 = vmatprep.subr.mxu0 %v67
  %1361 = vmatpush1.msra.mxu0 %v66
  %1362 = vmatprep.subr.mxu0 %v75
  %1363 = vmatpush1.msra.mxu0 %v74
  %1364 = vmatprep.subr.mxu0 %v83
  %1365 = vmatpush1.msra.mxu0 %v82
  %1366 = vmatprep.subr.mxu0 %v91
  %1367 = vmatpush1.msra.mxu0 %v90
  %1368 = vmatprep.subr.mxu0 %v99
  %1369 = vmatpush1.msra.mxu0 %v98
  %1370 = vmatprep.subr.mxu0 %v107
  %1371 = vmatpush1.msra.mxu0 %v106
  %1372 = vmatprep.subr.mxu0 %v115
  %1373 = vmatpush1.msra.mxu0 %v114
  %1374 = vmatprep.subr.mxu0 %v123
  %1375 = vmatpush1.msra.mxu0 %v122
  %1376 = vmatprep.subr.mxu0 %v131
  %1377 = vmatpush1.msra.mxu0 %v130
  %1378 = vmatprep.subr.mxu0 %v139
  %1379 = vmatpush1.msra.mxu0 %v138
  %1380 = vmatprep.subr.mxu0 %v147
  %1381 = vmatpush1.msra.mxu0 %v146
  %1382 = vmatprep.subr.mxu0 %v155
  %1383 = vmatpush1.msra.mxu0 %v154
  %1384 = vmatprep.subr.mxu0 %v163
  %1385 = vmatpush1.msra.mxu0 %v162
  %1386 = vmatprep.subr.mxu0 %v171
  %1387 = vmatpush1.msra.mxu0 %v170
  %1388 = vmatprep.subr.mxu0 %v179
  %1389 = vmatpush1.msra.mxu0 %v178
  %1390 = vmatprep.subr.mxu0 %v187
  %1391 = vmatpush1.msra.mxu0 %v186
  %1392 = vmatprep.subr.mxu0 %v195
  %1393 = vmatpush1.msra.mxu0 %v194
  %1394 = vmatprep.subr.mxu0 %v203
  %1395 = vmatpush1.msra.mxu0 %v202
  %1396 = vmatprep.subr.mxu0 %v211
  %1397 = vmatpush1.msra.mxu0 %v210
  %1398 = vmatprep.subr.mxu0 %v219
  %1399 = vmatpush1.msra.mxu0 %v218
  %1400 = vmatprep.subr.mxu0 %v227
  %1401 = vmatpush1.msra.mxu0 %v226
  %1402 = vmatprep.subr.mxu0 %v235
  %1403 = vmatpush1.msra.mxu0 %v234
  %1404 = vmatprep.subr.mxu0 %v243
  %1405 = vmatpush1.msra.mxu0 %v242
  %1406 = vmatprep.subr.mxu0 %v251
  %1407 = vmatpush1.msra.mxu0 %v250
  %1408 = vmatprep.subr.mxu0 %v259
  %1409 = vmatpush1.msra.mxu0 %v258
  %1410 = vmatprep.subr.mxu0 %v267
  %1411 = vmatpush1.msra.mxu0 %v266
  %1412 = vmatprep.subr.mxu0 %v275
  %1413 = vmatpush1.msra.mxu0 %v274
  %1414 = vmatprep.mubr.f32.mxu0 %v686
  %1415 = vmatmul.mubr.f32.gmra.mrb[0].mxu0 %v682
  %v1416 = vpop.f32.mrb[0].mxu0
  %v1417 = vadd.f32 %v677, %v1416
  %v1418 = vpop.f32.mrb[0].mxu0
  %v1419 = vadd.f32 %v677, %v1418
  %1420 = vdwg.mxu0
  %1421 = vmatprep.subr.mxu0 %v283
  %1422 = vmatpush1.msra.mxu0 %v282
  %1423 = vmatprep.subr.mxu0 %v291
  %1424 = vmatpush1.msra.mxu0 %v290
  %1425 = vmatprep.subr.mxu0 %v299
  %1426 = vmatpush1.msra.mxu0 %v298
  %1427 = vmatprep.subr.mxu0 %v307
  %1428 = vmatpush1.msra.mxu0 %v306
  %1429 = vmatprep.subr.mxu0 %v315
  %1430 = vmatpush1.msra.mxu0 %v314
  %1431 = vmatprep.subr.mxu0 %v323
  %1432 = vmatpush1.msra.mxu0 %v322
  %1433 = vmatprep.subr.mxu0 %v331
  %1434 = vmatpush1.msra.mxu0 %v330
  %1435 = vmatprep.subr.mxu0 %v339
  %1436 = vmatpush1.msra.mxu0 %v338
  %1437 = vmatprep.subr.mxu0 %v347
  %1438 = vmatpush1.msra.mxu0 %v346
  %1439 = vmatprep.subr.mxu0 %v355
  %1440 = vmatpush1.msra.mxu0 %v354
  %1441 = vmatprep.subr.mxu0 %v363
  %1442 = vmatpush1.msra.mxu0 %v362
  %1443 = vmatprep.subr.mxu0 %v371
  %1444 = vmatpush1.msra.mxu0 %v370
  %1445 = vmatprep.subr.mxu0 %v379
  %1446 = vmatpush1.msra.mxu0 %v378
  %1447 = vmatprep.subr.mxu0 %v387
  %1448 = vmatpush1.msra.mxu0 %v386
  %1449 = vmatprep.subr.mxu0 %v395
  %1450 = vmatpush1.msra.mxu0 %v394
  %1451 = vmatprep.subr.mxu0 %v403
  %1452 = vmatpush1.msra.mxu0 %v402
  %1453 = vmatprep.subr.mxu0 %v411
  %1454 = vmatpush1.msra.mxu0 %v410
  %1455 = vmatprep.subr.mxu0 %v419
  %1456 = vmatpush1.msra.mxu0 %v418
  %1457 = vmatprep.subr.mxu0 %v427
  %1458 = vmatpush1.msra.mxu0 %v426
  %1459 = vmatprep.subr.mxu0 %v435
  %1460 = vmatpush1.msra.mxu0 %v434
  %1461 = vmatprep.subr.mxu0 %v443
  %1462 = vmatpush1.msra.mxu0 %v442
  %1463 = vmatprep.subr.mxu0 %v451
  %1464 = vmatpush1.msra.mxu0 %v450
  %1465 = vmatprep.subr.mxu0 %v459
  %1466 = vmatpush1.msra.mxu0 %v458
  %1467 = vmatprep.subr.mxu0 %v467
  %1468 = vmatpush1.msra.mxu0 %v466
  %1469 = vmatprep.subr.mxu0 %v475
  %1470 = vmatpush1.msra.mxu0 %v474
  %1471 = vmatprep.subr.mxu0 %v483
  %1472 = vmatpush1.msra.mxu0 %v482
  %1473 = vmatprep.subr.mxu0 %v491
  %1474 = vmatpush1.msra.mxu0 %v490
  %1475 = vmatprep.subr.mxu0 %v499
  %1476 = vmatpush1.msra.mxu0 %v498
  %1477 = vmatprep.subr.mxu0 %v507
  %1478 = vmatpush1.msra.mxu0 %v506
  %1479 = vmatprep.subr.mxu0 %v515
  %1480 = vmatpush1.msra.mxu0 %v514
  %1481 = vmatprep.subr.mxu0 %v523
  %1482 = vmatpush1.msra.mxu0 %v522
  %1483 = vmatprep.subr.mxu0 %v531
  %1484 = vmatpush1.msra.mxu0 %v530
  %1485 = vmatprep.mubr.f32.mxu0 %v694
  %1486 = vmatmul.mubr.f32.gmra.mrb[0].mxu0 %v690
  %v1487 = vpop.f32.mrb[0].mxu0
  %v1488 = vadd.f32 %v1417, %v1487
  %v1489 = vpop.f32.mrb[0].mxu0
  %v1490 = vadd.f32 %v1419, %v1489
  %1491 = vdwg.mxu0
  %1492 = vmatprep.subr.mxu0 %v539
  %1493 = vmatpush1.msra.mxu0 %v538
  %1494 = vmatprep.subr.mxu0 %v547
  %1495 = vmatpush1.msra.mxu0 %v546
  %1496 = vmatprep.subr.mxu0 %v555
  %1497 = vmatpush1.msra.mxu0 %v554
  %1498 = vmatprep.subr.mxu0 %v563
  %1499 = vmatpush1.msra.mxu0 %v562
  %1500 = vmatprep.subr.mxu0 %v571
  %1501 = vmatpush1.msra.mxu0 %v570
  %1502 = vmatprep.subr.mxu0 %v579
  %1503 = vmatpush1.msra.mxu0 %v578
  %1504 = vmatprep.subr.mxu0 %v587
  %1505 = vmatpush1.msra.mxu0 %v586
  %1506 = vmatprep.subr.mxu0 %v595
  %1507 = vmatpush1.msra.mxu0 %v594
  %1508 = vmatprep.subr.mxu0 %v603
  %1509 = vmatpush1.msra.mxu0 %v602
  %1510 = vmatprep.subr.mxu0 %v611
  %1511 = vmatpush1.msra.mxu0 %v610
  %1512 = vmatprep.subr.mxu0 %v619
  %1513 = vmatpush1.msra.mxu0 %v618
  %1514 = vmatprep.subr.mxu0 %v627
  %1515 = vmatpush1.msra.mxu0 %v626
  %1516 = vmatprep.subr.mxu0 %v635
  %1517 = vmatpush1.msra.mxu0 %v634
  %1518 = vmatprep.subr.mxu0 %v643
  %1519 = vmatpush1.msra.mxu0 %v642
  %1520 = vmatprep.subr.mxu0 %v651
  %1521 = vmatpush1.msra.mxu0 %v650
  %1522 = vmatprep.subr.mxu0 %v659
  %1523 = vmatpush1.msra.mxu0 %v658
  %1524 = vmatprep.subr.mxu0 %v667
  %1525 = vmatpush1.msra.mxu0 %v666
  %1526 = vmatprep.subr.mxu0 0.0
  %1527 = vmatpush1.msra.mxu0 0.0
  %1528 = vmatprep.subr.mxu0 0.0
  %1529 = vmatpush1.msra.mxu0 0.0
  %1530 = vmatprep.subr.mxu0 0.0
  %1531 = vmatpush1.msra.mxu0 0.0
  %1532 = vmatprep.subr.mxu0 0.0
  %1533 = vmatpush1.msra.mxu0 0.0
  %1534 = vmatprep.subr.mxu0 0.0
  %1535 = vmatpush1.msra.mxu0 0.0
  %1536 = vmatprep.subr.mxu0 0.0
  %1537 = vmatpush1.msra.mxu0 0.0
  %1538 = vmatprep.subr.mxu0 0.0
  %1539 = vmatpush1.msra.mxu0 0.0
  %1540 = vmatprep.subr.mxu0 0.0
  %1541 = vmatpush1.msra.mxu0 0.0
  %1542 = vmatprep.subr.mxu0 0.0
  %1543 = vmatpush1.msra.mxu0 0.0
  %1544 = vmatprep.subr.mxu0 0.0
  %1545 = vmatpush1.msra.mxu0 0.0
  %1546 = vmatprep.subr.mxu0 0.0
  %1547 = vmatpush1.msra.mxu0 0.0
  %1548 = vmatprep.subr.mxu0 0.0
  %1549 = vmatpush1.msra.mxu0 0.0
  %1550 = vmatprep.subr.mxu0 0.0
  %1551 = vmatpush1.msra.mxu0 0.0
  %1552 = vmatprep.subr.mxu0 0.0
  %1553 = vmatpush1.msra.mxu0 0.0
  %1554 = vmatprep.subr.mxu0 0.0
  %1555 = vmatpush1.msra.mxu0 0.0
  %1556 = vmatprep.mubr.f32.mxu0 %v709
  %1557 = vmatmul.mubr.f32.gmra.mrb[0].mxu0 %v698
  %v1558 = vpop.f32.mrb[0].mxu0
  %v1559 = vadd.f32 %v1488, %v1558
  %v1560 = vpop.f32.mrb[0].mxu0
  %v1561 = vadd.f32 %v1490, %v1560
  %1562 = vdwg.mxu0
  %v1563 = vxor.u32 %v920, 2147483648
  %v1564 = vxor.u32 %v922, 2147483648
  %v1565 = vxor.u32 %v1133, 2147483648
  %v1566 = vxor.u32 %v1135, 2147483648
  %v1567 = vxor.u32 %v1346, 2147483648
  %v1568 = vxor.u32 %v1348, 2147483648
  %v1569 = vxor.u32 %v1559, 2147483648
  %v1570 = vxor.u32 %v1561, 2147483648
  %v1571 = vmul.f32 %v1563, 1.442695
  %v1572 = vpow.pop %v1571
  %v1573 = vmul.f32 %v1564, 1.442695
  %v1574 = vpow.pop %v1573
  %v1575 = vmul.f32 %v1565, 1.442695
  %v1576 = vpow.pop %v1575
  %v1577 = vmul.f32 %v1566, 1.442695
  %v1578 = vpow.pop %v1577
  %v1579 = vmul.f32 %v1567, 1.442695
  %v1580 = vpow.pop %v1579
  %v1581 = vmul.f32 %v1568, 1.442695
  %v1582 = vpow.pop %v1581
  %v1583 = vmul.f32 %v1569, 1.442695
  %v1584 = vpow.pop %v1583
  %v1585 = vmul.f32 %v1570, 1.442695
  %v1586 = vpow.pop %v1585
  %v1587 = vadd.f32 %v1572, 1.0
  %v1588 = vadd.f32 %v1574, 1.0
  %v1589 = vadd.f32 %v1576, 1.0
  %v1590 = vadd.f32 %v1578, 1.0
  %v1591 = vadd.f32 %v1580, 1.0
  %v1592 = vadd.f32 %v1582, 1.0
  %v1593 = vadd.f32 %v1584, 1.0
  %v1594 = vadd.f32 %v1586, 1.0
  %v1595 = vrcp.pop %v1587
  %v1596 = vmul.f32 1.0, %v1595
  %v1597 = vrcp.pop %v1588
  %v1598 = vmul.f32 1.0, %v1597
  %v1599 = vrcp.pop %v1589
  %v1600 = vmul.f32 1.0, %v1599
  %v1601 = vrcp.pop %v1590
  %v1602 = vmul.f32 1.0, %v1601
  %v1603 = vrcp.pop %v1591
  %v1604 = vmul.f32 1.0, %v1603
  %v1605 = vrcp.pop %v1592
  %v1606 = vmul.f32 1.0, %v1605
  %v1607 = vrcp.pop %v1593
  %v1608 = vmul.f32 1.0, %v1607
  %v1609 = vrcp.pop %v1594
  %v1610 = vmul.f32 1.0, %v1609
  %v1619 = vcombine.low %v1596, %v1598
  %v1620 = vcombine.low %v1600, %v1602
  %v1621 = vcombine.low %v1604, %v1606
  %v1622 = vcombine.low %v1608, %v1610
  %v1624 = vunpack.c.l.s4 1966171168
  %v1625 = vunpack.c.0.s8 %v1624
  %v1626 = vlaneseq
  %v1627 = vshrl.u32 %v1626, 7
  %v1628 = vsub.s32 %v1625, %v1627
  %v1629 = vrot.slane %v1619, %v1628
  %v1631 = vunpack.c.l.s4 1966171168
  %v1632 = vunpack.c.0.s8 %v1631
  %v1633 = vlaneseq
  %v1634 = vshrl.u32 %v1633, 7
  %v1635 = vsub.s32 %v1632, %v1634
  %v1636 = vrot.slane %v1620, %v1635
  %v1638 = vunpack.c.l.s4 1966171168
  %v1639 = vunpack.c.0.s8 %v1638
  %v1640 = vlaneseq
  %v1641 = vshrl.u32 %v1640, 7
  %v1642 = vsub.s32 %v1639, %v1641
  %v1643 = vrot.slane %v1621, %v1642
  %v1645 = vunpack.c.l.s4 1966171168
  %v1646 = vunpack.c.0.s8 %v1645
  %v1647 = vlaneseq
  %v1648 = vshrl.u32 %v1647, 7
  %v1649 = vsub.s32 %v1646, %v1648
  %v1650 = vrot.slane %v1622, %v1649
  %v1651 = vcombine.low %v1629, %v1636
  %v1652 = vcombine.low %v1643, %v1650
  %v1654 = vunpack.c.l.s4 1966171168
  %v1655 = vunpack.c.0.s8 %v1654
  %v1656 = vlaneseq
  %v1657 = vshrl.u32 %v1656, 7
  %v1658 = vsub.s32 %v1655, %v1657
  %v1659 = vrot.slane %v1651, %v1658
  %v1661 = vunpack.c.l.s4 1966171168
  %v1662 = vunpack.c.0.s8 %v1661
  %v1663 = vlaneseq
  %v1664 = vshrl.u32 %v1663, 7
  %v1665 = vsub.s32 %v1662, %v1664
  %v1666 = vrot.slane %v1652, %v1665
  %v1667 = vcombine.low %v1659, %v1666
  %v1669 = vlaneseq
  %vm1670 = vcmp.ge.s32.totalorder %v1669, 0
  %vm1671 = vcmp.lt.s32.totalorder %v1669, 1000
  %vm1672 = vmand %vm1670, %vm1671
  %1673 = vst.msk [vmem:[%s4] ss:$4 sm:$0xff] %vm1672, %v1667
  %v1674 = vld [vmem:[%s3] sm:$0xff]
  %v1675 = vld [vmem:[%s3 + $0x8] sm:$0xff]
  %v1676 = vxor.u32 %v1674, 2147483648
  %v1677 = vxor.u32 %v1675, 2147483648
  %v1678 = vmul.f32 %v1676, 1.442695
  %v1679 = vpow.pop %v1678
  %v1680 = vmul.f32 %v1677, 1.442695
  %v1681 = vpow.pop %v1680
  %v1682 = vadd.f32 %v1679, 1.0
  %v1683 = vadd.f32 %v1681, 1.0
  %v1684 = vrcp.pop %v1682
  %v1685 = vmul.f32 1.0, %v1684
  %v1686 = vrcp.pop %v1683
  %v1687 = vmul.f32 1.0, %v1686
  %v1690 = vcombine.high %v1685, %v1685
  %v1692 = vunpack.c.l.s4 1983009808
  %v1693 = vunpack.c.0.s8 %v1692
  %v1694 = vlaneseq
  %v1695 = vshrl.u32 %v1694, 7
  %v1696 = vsub.s32 %v1693, %v1695
  %v1697 = vrot.slane %v1685, %v1696
  %v1699 = vunpack.c.l.s4 1983009808
  %v1700 = vunpack.c.0.s8 %v1699
  %v1701 = vlaneseq
  %v1702 = vshrl.u32 %v1701, 7
  %v1703 = vsub.s32 %v1700, %v1702
  %v1704 = vrot.slane %v1690, %v1703
  %v1705 = vcombine.high %v1687, %v1687
  %v1707 = vunpack.c.l.s4 1983009808
  %v1708 = vunpack.c.0.s8 %v1707
  %v1709 = vlaneseq
  %v1710 = vshrl.u32 %v1709, 7
  %v1711 = vsub.s32 %v1708, %v1710
  %v1712 = vrot.slane %v1687, %v1711
  %v1714 = vunpack.c.l.s4 1983009808
  %v1715 = vunpack.c.0.s8 %v1714
  %v1716 = vlaneseq
  %v1717 = vshrl.u32 %v1716, 7
  %v1718 = vsub.s32 %v1715, %v1717
  %v1719 = vrot.slane %v1705, %v1718
  %v1720 = vrot.slane %v1697, 7
  %v1721 = vrot.slane %v1704, 7
  %v1722 = vrot.slane %v1712, 7
  %v1723 = vrot.slane %v1719, 7
  %1728 = vst [vmem:[%s4] sm:$0x66] %v1720
  %1729 = vst [vmem:[%s4 + $0x8] sm:$0x66] %v1721
  %1730 = vst [vmem:[%s4 + $0x10] sm:$0x66] %v1722
  %vm1731 = vcmask 1042433
  %vm1732 = vcmask 849925
  %vm1733 = vmor %vm1732, %vm1731
  %1734 = vst.msk [vmem:[%s4 + $0x18] sm:$0x66] %vm1733, %v1723
  // Predicated region
  $region18: #{decoder3d_forward.5} parent=0 // pred_check
    _
  $region19: #{decoder3d_forward.5} parent=0 // pred_check_branch
    %1736 = sbr.rel (0) target = $region21
  $region20: #{decoder3d_forward.5} parent=0 // pred_region
    _
  $region21: #{decoder3d_forward.5} parent=0 // pred_fallthru
    _
  // Predicated region
  $region22: #{decoder3d_forward.5} parent=0 // pred_check
    _
  $region23: #{decoder3d_forward.5} parent=0 // pred_check_branch
    %1738 = sbr.rel (0) target = $region25
  $region24: #{decoder3d_forward.5} parent=0 // pred_region
    _
  $region25: #{decoder3d_forward.5} parent=0 // pred_fallthru
    _

</llo_original>
